<compile_context>
chip_gen: v7x
topology: tpu7x:2x2x1
jax: 0.10.0
libtpu: 0.0.40
codegen_flags: <defaults>
</compile_context>

<pallas_src>
import functools

import jax
import jax.numpy as jnp
from jax.experimental import pallas as pl
from jax.experimental.pallas import tpu as pltpu


# ----------------------------------------------------------------------------
# Helpers.
# ----------------------------------------------------------------------------
def _pick_td(d, h, w, max_td=8, cap_rows=4096):
    """Largest depth-chunk TD that divides D, keeps TD*H*W modest, and keeps the
    fused output block either full-extent (TD == D) or 128-lane aligned."""
    best = None
    for td in range(1, min(d, max_td) + 1):
        if d % td:
            continue
        if td * h * w > cap_rows:
            continue
        if td != d and (td * h * w) % 128 != 0:
            continue
        best = td
    return best if best is not None else d


def _volume_spec(block_shape, index_map):
    # The resident sample volume's block index only changes with `n`; double
    # buffering it only hides one DMA per sample but doubles the dominant VMEM
    # allocation (matters most on v7x's 64 MiB) -> request a single buffer.
    try:
        return pl.BlockSpec(block_shape, index_map, pipeline_mode=pl.Buffered(1))
    except Exception:  # older/newer Pallas without pipeline_mode support
        return pl.BlockSpec(block_shape, index_map)


# ----------------------------------------------------------------------------
# In-kernel fused im2col: 9 MXU dots of (TD*H*W, 3*Cin) x (3*Cin, Cout).
# ----------------------------------------------------------------------------
def _accumulate_conv3x3x3(x_ref, w_ref, d0, td):
    """x_ref: (1, D+2, H+2, W+2, Cin) resident padded sample (bf16).
    w_ref:   (9, 3*Cin, Cout) conv taps; tap index = kd*3 + kh, K = (kw, cin).
    Returns f32 pre-bias conv output (td*H*W, Cout) for depth chunk at d0."""
    _, _, hp, wp, cin = x_ref.shape
    h, w = hp - 2, wp - 2
    k3, cout = w_ref.shape[1], w_ref.shape[2]
    m = td * h * w

    # All padded depth planes needed by this chunk, loaded once (bf16).
    vol = x_ref[0, pl.ds(d0, td + 2)]                       # (td+2, hp, wp, cin)
    acc = jnp.zeros((m, cout), jnp.float32)
    for kd in range(3):
        for kh in range(3):
            rows = vol[kd:kd + td, kh:kh + h]               # leading-dim slices
            win = jnp.concatenate(                          # (td, h, w, 3*cin)
                [rows[:, :, kw:kw + w, :] for kw in range(3)], axis=-1)
            acc = acc + jnp.dot(win.reshape(m, k3), w_ref[kd * 3 + kh],
                                preferred_element_type=jnp.float32)
    return acc


def _conv3_relu_kernel(x_ref, w_ref, b_ref, o_ref, *, td):
    """Conv3d(3x3x3, pad=1) + bias + ReLU for one (n, depth-chunk) block."""
    d0 = pl.program_id(1) * td
    acc = _accumulate_conv3x3x3(x_ref, w_ref, d0, td)
    o_ref[0, 0] = jnp.maximum(acc + b_ref[...], 0.0).astype(o_ref.dtype)


def _conv3_relu_1x1_kernel(x_ref, w_ref, b_ref, w3_ref, b3_ref, o_ref, *, td):
    """Conv3d(3x3x3, pad=1) + bias + ReLU fused with Conv3d(1x1x1) + bias.
    The 1x1x1 conv is computed channel-major so the final store is lane-dense
    (lane axis = td*H*W) and the wrapper needs no exit transpose."""
    d0 = pl.program_id(1) * td
    acc = _accumulate_conv3x3x3(x_ref, w_ref, d0, td)
    hmid = jnp.maximum(acc + b_ref[...], 0.0).astype(jnp.bfloat16)        # (M, Cmid)
    y = jnp.dot(w3_ref[...], hmid.T, preferred_element_type=jnp.float32)  # (Cfin, M)
    o_ref[0] = (y + b3_ref[...]).astype(o_ref.dtype)


# ----------------------------------------------------------------------------
# pallas_call wrapper.
# ----------------------------------------------------------------------------
def _conv_block(xp, w9, b, *, td, w3=None, b3=None, out_dtype=jnp.float32):
    """xp: zero-padded NDHWC activations (N, D+2, H+2, W+2, Cin), bf16.
    Returns (N, D//td, td*H*W, Cout) [channels-last]  if w3 is None,
            (N, Cfin, D*H*W)         [channel-major]  if w3 is given."""
    n, dp, hp, wp, cin = xp.shape
    d, h, w = dp - 2, hp - 2, wp - 2
    k3, cout = w9.shape[1], w9.shape[2]
    assert w9.shape[0] == 9 and k3 == 3 * cin and d % td == 0
    nd = d // td
    m = td * h * w

    x_spec = _volume_spec((1, dp, hp, wp, cin), lambda i, dc: (i, 0, 0, 0, 0))
    in_specs = [
        x_spec,
        pl.BlockSpec((9, k3, cout), lambda i, dc: (0, 0, 0)),   # resident taps
        pl.BlockSpec((1, cout), lambda i, dc: (0, 0)),          # resident bias
    ]
    args = [xp, w9, b.reshape(1, cout).astype(jnp.float32)]

    if w3 is None:
        kernel = functools.partial(_conv3_relu_kernel, td=td)
        out_shape = jax.ShapeDtypeStruct((n, nd, m, cout), out_dtype)
        out_spec = pl.BlockSpec((1, 1, m, cout), lambda i, dc: (i, dc, 0, 0))
        out_block_bytes = m * cout * jnp.dtype(out_dtype).itemsize
    else:
        cfin = w3.shape[0]
        kernel = functools.partial(_conv3_relu_1x1_kernel, td=td)
        in_specs += [pl.BlockSpec((cfin, cout), lambda i, dc: (0, 0)),
                     pl.BlockSpec((cfin, 1), lambda i, dc: (0, 0))]
        args += [w3, b3.reshape(cfin, 1).astype(jnp.float32)]
        out_shape = jax.ShapeDtypeStruct((n, cfin, d * h * w), out_dtype)
        out_spec = pl.BlockSpec((1, cfin, m), lambda i, dc: (i, 0, dc))
        out_block_bytes = cfin * m * jnp.dtype(out_dtype).itemsize

    # Explicit scoped-VMEM budget: resident volume (x2), output (x2), weights,
    # plus in-kernel working set (loaded planes, windows, f32 accumulator).
    in_block_bytes = dp * hp * wp * cin * 2
    est = (2 * in_block_bytes + 2 * out_block_bytes
           + 9 * k3 * cout * 2
           + 3 * (td + 2) * hp * wp * cin * 2
           + 6 * m * cout * 4
           + (8 << 20))
    vmem_limit = int(min(max(est, 32 << 20), 110 << 20))

    return pl.pallas_call(
        kernel,
        out_shape=out_shape,
        grid=(n, nd),
        in_specs=in_specs,
        out_specs=out_spec,
        compiler_params=pltpu.CompilerParams(
            dimension_semantics=("parallel", "parallel"),
            vmem_limit_bytes=vmem_limit),
    )(*args)


# ----------------------------------------------------------------------------
# Parameter construction (PyTorch Conv3d weight layout OIDHW).
# ----------------------------------------------------------------------------
def init_params(key, channel):
    c, c2 = channel, channel * 2
    ks = jax.random.split(key, 6)

    def conv_w(k, co, ci, ksz):
        fan_in = ci * ksz ** 3
        return (jax.random.normal(k, (co, ci, ksz, ksz, ksz), jnp.float32)
                / jnp.sqrt(fan_in))

    w1 = conv_w(ks[0], c2, c, 3)
    b1 = 0.01 * jax.random.normal(ks[1], (c2,), jnp.float32)
    w2 = conv_w(ks[2], c, c2, 3)
    b2 = 0.01 * jax.random.normal(ks[3], (c,), jnp.float32)
    w3 = conv_w(ks[4], c, c, 1)
    b3 = 0.01 * jax.random.normal(ks[5], (c,), jnp.float32)

    def fold_taps(wt):
        # OIDHW -> (9, 3*Cin, Cout): tap index = kd*3 + kh, K index = kw*Cin+ci
        # (kw-major), matching the in-kernel kw concat order.  bf16 for the MXU.
        co, ci = wt.shape[0], wt.shape[1]
        return (jnp.transpose(wt, (2, 3, 4, 1, 0))
                .reshape(9, 3 * ci, co).astype(jnp.bfloat16))

    return {
        # f32 OIDHW tensors for the reference conv path
        "w1": w1, "b1": b1, "w2": w2, "b2": b2, "w3": w3, "b3": b3,
        # bf16 folded weights for the Pallas path
        "w1m": fold_taps(w1),
        "w2m": fold_taps(w2),
        "w3m": w3.reshape(c, c).astype(jnp.bfloat16),   # (Cout, Cin), channel-major 1x1
    }


# ----------------------------------------------------------------------------
# Forward pass (Pallas path).  Input/output are PyTorch-style NCDHW f32.
# ----------------------------------------------------------------------------
_HALO = ((0, 0), (1, 1), (1, 1), (1, 1), (0, 0))


def basic_adapter_forward(x_ncdhw, params):
    n, c, d, h, w = x_ncdhw.shape
    td = _pick_td(d, h, w)

    # NCDHW -> NDHWC once at entry, bf16 (halves transpose/pad HBM traffic).
    x = jnp.transpose(x_ncdhw.astype(jnp.bfloat16), (0, 2, 3, 4, 1))

    # BasicBlocks(1, C, 2C): Conv3d(3x3x3, pad=1) + ReLU, channels-last output.
    hmid = _conv_block(jnp.pad(x, _HALO), params["w1m"], params["b1"],
                       td=td, out_dtype=jnp.bfloat16)
    hmid = hmid.reshape(n, d, h, w, 2 * c)

    # BasicBlocks(1, 2C, C) + fused Conv3d(C, C, 1); channel-major output means
    # a lane-dense final store and no exit transpose.
    y = _conv_block(jnp.pad(hmid, _HALO), params["w2m"], params["b2"], td=td,
                    w3=params["w3m"], b3=params["b3"], out_dtype=jnp.float32)
    return y.reshape(n, c, d, h, w)


# ----------------------------------------------------------------------------
# Pure-JAX reference (independent path via lax.conv_general_dilated, f32).
# ----------------------------------------------------------------------------
def reference_forward(x_ncdhw, params):
    def conv3d(x, wt, b, pad):
        y = jax.lax.conv_general_dilated(
            x, wt, window_strides=(1, 1, 1),
            padding=[(pad, pad)] * 3,
            dimension_numbers=("NCDHW", "OIDHW", "NCDHW"),
            precision=jax.lax.Precision.HIGHEST,
        )
        return y + b[None, :, None, None, None]

    h = jax.nn.relu(conv3d(x_ncdhw, params["w1"], params["b1"], 1))
    h = jax.nn.relu(conv3d(h, params["w2"], params["b2"], 1))
    return conv3d(h, params["w3"], params["b3"], 0)


if __name__ == "__main__":
    key = jax.random.PRNGKey(0)
    k_x, k_p = jax.random.split(key)

    N, C, D, H, W = 2, 4, 4, 8, 8            # small NCDHW input
    x = jax.random.normal(k_x, (N, C, D, H, W), jnp.float32)
    params = init_params(k_p, C)

    fwd = jax.jit(basic_adapter_forward)
    out = jax.block_until_ready(fwd(x, params))

    ref = reference_forward(x, params)
    assert out.shape == (N, C, D, H, W)
    max_err = float(jnp.max(jnp.abs(out - ref)))
    # bf16 activation storage + bf16-fed MXU matmuls vs. an f32/HIGHEST
    # reference -> loosened tolerance (wrong tap ordering would give O(1) errors).
    assert jnp.allclose(out, ref, rtol=1e-1, atol=1e-1), max_err

    print("KERNEL_OK")
</pallas_src>

<mosaic_0001>
module attributes {stable_mosaic.version = 11 : i64} {
  func.func @_conv3_relu_kernel(%arg0: i32, %arg1: i32, %arg2: memref<1x6x10x10x4xbf16, #tpu.memory_space<vmem>>, %arg3: memref<9x12x8xbf16, #tpu.memory_space<vmem>>, %arg4: memref<1x8xf32, #tpu.memory_space<vmem>>, %arg5: memref<1x1x256x8xbf16, #tpu.memory_space<vmem>>) attributes {dimension_semantics = [#tpu.dimension_semantics<parallel>, #tpu.dimension_semantics<parallel>], iteration_bounds = array<i64: 2, 1>, scalar_prefetch = 0 : i64, scratch_operands = 0 : i64, tpu.core_type = #tpu.core_type<tc>, window_params = [{pipeline_mode = #tpu.pipeline_mode<synchronous>, transform_indices = @transform_0, window_bounds = array<i64: 1, 6, 10, 10, 4>}, {pipeline_mode = #tpu.pipeline_mode<synchronous>, transform_indices = @transform_1, window_bounds = array<i64: 9, 12, 8>}, {pipeline_mode = #tpu.pipeline_mode<synchronous>, transform_indices = @transform_2, window_bounds = array<i64: 1, 8>}, {transform_indices = @transform_3, window_bounds = array<i64: 1, 1, 256, 8>}]} {
    %c4_i32 = arith.constant 4 : i32
    %0 = arith.muli %arg1, %c4_i32 : i32
    %c0 = arith.constant 0 : index
    %1 = arith.index_cast %0 : i32 to index
    %c0_0 = arith.constant 0 : index
    %c0_1 = arith.constant 0 : index
    %c0_2 = arith.constant 0 : index
    %2 = vector.load %arg2[%c0, %1, %c0_0, %c0_1, %c0_2] : memref<1x6x10x10x4xbf16, #tpu.memory_space<vmem>>, vector<1x6x10x10x4xbf16>
    %3 = vector.shape_cast %2 : vector<1x6x10x10x4xbf16> to vector<6x10x10x4xbf16>
    %cst = arith.constant 0.000000e+00 : f32
    %4 = vector.broadcast %cst : f32 to vector<256x8xf32>
    %5 = vector.extract_strided_slice %3 {offsets = [0, 0, 0, 0], sizes = [4, 8, 10, 4], strides = [1, 1, 1, 1]} : vector<6x10x10x4xbf16> to vector<4x8x10x4xbf16>
    %6 = vector.extract_strided_slice %5 {offsets = [0, 0, 0, 0], sizes = [4, 8, 8, 4], strides = [1, 1, 1, 1]} : vector<4x8x10x4xbf16> to vector<4x8x8x4xbf16>
    %7 = vector.extract_strided_slice %5 {offsets = [0, 0, 1, 0], sizes = [4, 8, 8, 4], strides = [1, 1, 1, 1]} : vector<4x8x10x4xbf16> to vector<4x8x8x4xbf16>
    %8 = vector.extract_strided_slice %5 {offsets = [0, 0, 2, 0], sizes = [4, 8, 8, 4], strides = [1, 1, 1, 1]} : vector<4x8x10x4xbf16> to vector<4x8x8x4xbf16>
    %9 = tpu.concatenate %6, %7, %8 in 3 : vector<4x8x8x4xbf16>, vector<4x8x8x4xbf16>, vector<4x8x8x4xbf16> -> vector<4x8x8x12xbf16>
    %10 = vector.shape_cast %9 : vector<4x8x8x12xbf16> to vector<256x12xbf16>
    %c0_3 = arith.constant 0 : index
    %c0_4 = arith.constant 0 : index
    %c0_5 = arith.constant 0 : index
    %11 = vector.load %arg3[%c0_3, %c0_4, %c0_5] : memref<9x12x8xbf16, #tpu.memory_space<vmem>>, vector<1x12x8xbf16>
    %12 = vector.shape_cast %11 : vector<1x12x8xbf16> to vector<12x8xbf16>
    %cst_6 = arith.constant dense<0.000000e+00> : vector<256x8xf32>
    %13 = tpu.matmul %10, %12, %cst_6 {dimension_numbers = #tpu.dot_dimension_numbers<[1], [0], [0], [1], [0, 0, 1, 1], [], []>} : vector<256x12xbf16>, vector<12x8xbf16>, vector<256x8xf32> -> vector<256x8xf32>
    %14 = arith.addf %4, %13 : vector<256x8xf32>
    %15 = vector.extract_strided_slice %3 {offsets = [0, 1, 0, 0], sizes = [4, 8, 10, 4], strides = [1, 1, 1, 1]} : vector<6x10x10x4xbf16> to vector<4x8x10x4xbf16>
    %16 = vector.extract_strided_slice %15 {offsets = [0, 0, 0, 0], sizes = [4, 8, 8, 4], strides = [1, 1, 1, 1]} : vector<4x8x10x4xbf16> to vector<4x8x8x4xbf16>
    %17 = vector.extract_strided_slice %15 {offsets = [0, 0, 1, 0], sizes = [4, 8, 8, 4], strides = [1, 1, 1, 1]} : vector<4x8x10x4xbf16> to vector<4x8x8x4xbf16>
    %18 = vector.extract_strided_slice %15 {offsets = [0, 0, 2, 0], sizes = [4, 8, 8, 4], strides = [1, 1, 1, 1]} : vector<4x8x10x4xbf16> to vector<4x8x8x4xbf16>
    %19 = tpu.concatenate %16, %17, %18 in 3 : vector<4x8x8x4xbf16>, vector<4x8x8x4xbf16>, vector<4x8x8x4xbf16> -> vector<4x8x8x12xbf16>
    %20 = vector.shape_cast %19 : vector<4x8x8x12xbf16> to vector<256x12xbf16>
    %c1 = arith.constant 1 : index
    %c0_7 = arith.constant 0 : index
    %c0_8 = arith.constant 0 : index
    %21 = vector.load %arg3[%c1, %c0_7, %c0_8] : memref<9x12x8xbf16, #tpu.memory_space<vmem>>, vector<1x12x8xbf16>
    %22 = vector.shape_cast %21 : vector<1x12x8xbf16> to vector<12x8xbf16>
    %cst_9 = arith.constant dense<0.000000e+00> : vector<256x8xf32>
    %23 = tpu.matmul %20, %22, %cst_9 {dimension_numbers = #tpu.dot_dimension_numbers<[1], [0], [0], [1], [0, 0, 1, 1], [], []>} : vector<256x12xbf16>, vector<12x8xbf16>, vector<256x8xf32> -> vector<256x8xf32>
    %24 = arith.addf %14, %23 : vector<256x8xf32>
    %25 = vector.extract_strided_slice %3 {offsets = [0, 2, 0, 0], sizes = [4, 8, 10, 4], strides = [1, 1, 1, 1]} : vector<6x10x10x4xbf16> to vector<4x8x10x4xbf16>
    %26 = vector.extract_strided_slice %25 {offsets = [0, 0, 0, 0], sizes = [4, 8, 8, 4], strides = [1, 1, 1, 1]} : vector<4x8x10x4xbf16> to vector<4x8x8x4xbf16>
    %27 = vector.extract_strided_slice %25 {offsets = [0, 0, 1, 0], sizes = [4, 8, 8, 4], strides = [1, 1, 1, 1]} : vector<4x8x10x4xbf16> to vector<4x8x8x4xbf16>
    %28 = vector.extract_strided_slice %25 {offsets = [0, 0, 2, 0], sizes = [4, 8, 8, 4], strides = [1, 1, 1, 1]} : vector<4x8x10x4xbf16> to vector<4x8x8x4xbf16>
    %29 = tpu.concatenate %26, %27, %28 in 3 : vector<4x8x8x4xbf16>, vector<4x8x8x4xbf16>, vector<4x8x8x4xbf16> -> vector<4x8x8x12xbf16>
    %30 = vector.shape_cast %29 : vector<4x8x8x12xbf16> to vector<256x12xbf16>
    %c2 = arith.constant 2 : index
    %c0_10 = arith.constant 0 : index
    %c0_11 = arith.constant 0 : index
    %31 = vector.load %arg3[%c2, %c0_10, %c0_11] : memref<9x12x8xbf16, #tpu.memory_space<vmem>>, vector<1x12x8xbf16>
    %32 = vector.shape_cast %31 : vector<1x12x8xbf16> to vector<12x8xbf16>
    %cst_12 = arith.constant dense<0.000000e+00> : vector<256x8xf32>
    %33 = tpu.matmul %30, %32, %cst_12 {dimension_numbers = #tpu.dot_dimension_numbers<[1], [0], [0], [1], [0, 0, 1, 1], [], []>} : vector<256x12xbf16>, vector<12x8xbf16>, vector<256x8xf32> -> vector<256x8xf32>
    %34 = arith.addf %24, %33 : vector<256x8xf32>
    %35 = vector.extract_strided_slice %3 {offsets = [1, 0, 0, 0], sizes = [4, 8, 10, 4], strides = [1, 1, 1, 1]} : vector<6x10x10x4xbf16> to vector<4x8x10x4xbf16>
    %36 = vector.extract_strided_slice %35 {offsets = [0, 0, 0, 0], sizes = [4, 8, 8, 4], strides = [1, 1, 1, 1]} : vector<4x8x10x4xbf16> to vector<4x8x8x4xbf16>
    %37 = vector.extract_strided_slice %35 {offsets = [0, 0, 1, 0], sizes = [4, 8, 8, 4], strides = [1, 1, 1, 1]} : vector<4x8x10x4xbf16> to vector<4x8x8x4xbf16>
    %38 = vector.extract_strided_slice %35 {offsets = [0, 0, 2, 0], sizes = [4, 8, 8, 4], strides = [1, 1, 1, 1]} : vector<4x8x10x4xbf16> to vector<4x8x8x4xbf16>
    %39 = tpu.concatenate %36, %37, %38 in 3 : vector<4x8x8x4xbf16>, vector<4x8x8x4xbf16>, vector<4x8x8x4xbf16> -> vector<4x8x8x12xbf16>
    %40 = vector.shape_cast %39 : vector<4x8x8x12xbf16> to vector<256x12xbf16>
    %c3 = arith.constant 3 : index
    %c0_13 = arith.constant 0 : index
    %c0_14 = arith.constant 0 : index
    %41 = vector.load %arg3[%c3, %c0_13, %c0_14] : memref<9x12x8xbf16, #tpu.memory_space<vmem>>, vector<1x12x8xbf16>
    %42 = vector.shape_cast %41 : vector<1x12x8xbf16> to vector<12x8xbf16>
    %cst_15 = arith.constant dense<0.000000e+00> : vector<256x8xf32>
    %43 = tpu.matmul %40, %42, %cst_15 {dimension_numbers = #tpu.dot_dimension_numbers<[1], [0], [0], [1], [0, 0, 1, 1], [], []>} : vector<256x12xbf16>, vector<12x8xbf16>, vector<256x8xf32> -> vector<256x8xf32>
    %44 = arith.addf %34, %43 : vector<256x8xf32>
    %45 = vector.extract_strided_slice %3 {offsets = [1, 1, 0, 0], sizes = [4, 8, 10, 4], strides = [1, 1, 1, 1]} : vector<6x10x10x4xbf16> to vector<4x8x10x4xbf16>
    %46 = vector.extract_strided_slice %45 {offsets = [0, 0, 0, 0], sizes = [4, 8, 8, 4], strides = [1, 1, 1, 1]} : vector<4x8x10x4xbf16> to vector<4x8x8x4xbf16>
    %47 = vector.extract_strided_slice %45 {offsets = [0, 0, 1, 0], sizes = [4, 8, 8, 4], strides = [1, 1, 1, 1]} : vector<4x8x10x4xbf16> to vector<4x8x8x4xbf16>
    %48 = vector.extract_strided_slice %45 {offsets = [0, 0, 2, 0], sizes = [4, 8, 8, 4], strides = [1, 1, 1, 1]} : vector<4x8x10x4xbf16> to vector<4x8x8x4xbf16>
    %49 = tpu.concatenate %46, %47, %48 in 3 : vector<4x8x8x4xbf16>, vector<4x8x8x4xbf16>, vector<4x8x8x4xbf16> -> vector<4x8x8x12xbf16>
    %50 = vector.shape_cast %49 : vector<4x8x8x12xbf16> to vector<256x12xbf16>
    %c4 = arith.constant 4 : index
    %c0_16 = arith.constant 0 : index
    %c0_17 = arith.constant 0 : index
    %51 = vector.load %arg3[%c4, %c0_16, %c0_17] : memref<9x12x8xbf16, #tpu.memory_space<vmem>>, vector<1x12x8xbf16>
    %52 = vector.shape_cast %51 : vector<1x12x8xbf16> to vector<12x8xbf16>
    %cst_18 = arith.constant dense<0.000000e+00> : vector<256x8xf32>
    %53 = tpu.matmul %50, %52, %cst_18 {dimension_numbers = #tpu.dot_dimension_numbers<[1], [0], [0], [1], [0, 0, 1, 1], [], []>} : vector<256x12xbf16>, vector<12x8xbf16>, vector<256x8xf32> -> vector<256x8xf32>
    %54 = arith.addf %44, %53 : vector<256x8xf32>
    %55 = vector.extract_strided_slice %3 {offsets = [1, 2, 0, 0], sizes = [4, 8, 10, 4], strides = [1, 1, 1, 1]} : vector<6x10x10x4xbf16> to vector<4x8x10x4xbf16>
    %56 = vector.extract_strided_slice %55 {offsets = [0, 0, 0, 0], sizes = [4, 8, 8, 4], strides = [1, 1, 1, 1]} : vector<4x8x10x4xbf16> to vector<4x8x8x4xbf16>
    %57 = vector.extract_strided_slice %55 {offsets = [0, 0, 1, 0], sizes = [4, 8, 8, 4], strides = [1, 1, 1, 1]} : vector<4x8x10x4xbf16> to vector<4x8x8x4xbf16>
    %58 = vector.extract_strided_slice %55 {offsets = [0, 0, 2, 0], sizes = [4, 8, 8, 4], strides = [1, 1, 1, 1]} : vector<4x8x10x4xbf16> to vector<4x8x8x4xbf16>
    %59 = tpu.concatenate %56, %57, %58 in 3 : vector<4x8x8x4xbf16>, vector<4x8x8x4xbf16>, vector<4x8x8x4xbf16> -> vector<4x8x8x12xbf16>
    %60 = vector.shape_cast %59 : vector<4x8x8x12xbf16> to vector<256x12xbf16>
    %c5 = arith.constant 5 : index
    %c0_19 = arith.constant 0 : index
    %c0_20 = arith.constant 0 : index
    %61 = vector.load %arg3[%c5, %c0_19, %c0_20] : memref<9x12x8xbf16, #tpu.memory_space<vmem>>, vector<1x12x8xbf16>
    %62 = vector.shape_cast %61 : vector<1x12x8xbf16> to vector<12x8xbf16>
    %cst_21 = arith.constant dense<0.000000e+00> : vector<256x8xf32>
    %63 = tpu.matmul %60, %62, %cst_21 {dimension_numbers = #tpu.dot_dimension_numbers<[1], [0], [0], [1], [0, 0, 1, 1], [], []>} : vector<256x12xbf16>, vector<12x8xbf16>, vector<256x8xf32> -> vector<256x8xf32>
    %64 = arith.addf %54, %63 : vector<256x8xf32>
    %65 = vector.extract_strided_slice %3 {offsets = [2, 0, 0, 0], sizes = [4, 8, 10, 4], strides = [1, 1, 1, 1]} : vector<6x10x10x4xbf16> to vector<4x8x10x4xbf16>
    %66 = vector.extract_strided_slice %65 {offsets = [0, 0, 0, 0], sizes = [4, 8, 8, 4], strides = [1, 1, 1, 1]} : vector<4x8x10x4xbf16> to vector<4x8x8x4xbf16>
    %67 = vector.extract_strided_slice %65 {offsets = [0, 0, 1, 0], sizes = [4, 8, 8, 4], strides = [1, 1, 1, 1]} : vector<4x8x10x4xbf16> to vector<4x8x8x4xbf16>
    %68 = vector.extract_strided_slice %65 {offsets = [0, 0, 2, 0], sizes = [4, 8, 8, 4], strides = [1, 1, 1, 1]} : vector<4x8x10x4xbf16> to vector<4x8x8x4xbf16>
    %69 = tpu.concatenate %66, %67, %68 in 3 : vector<4x8x8x4xbf16>, vector<4x8x8x4xbf16>, vector<4x8x8x4xbf16> -> vector<4x8x8x12xbf16>
    %70 = vector.shape_cast %69 : vector<4x8x8x12xbf16> to vector<256x12xbf16>
    %c6 = arith.constant 6 : index
    %c0_22 = arith.constant 0 : index
    %c0_23 = arith.constant 0 : index
    %71 = vector.load %arg3[%c6, %c0_22, %c0_23] : memref<9x12x8xbf16, #tpu.memory_space<vmem>>, vector<1x12x8xbf16>
    %72 = vector.shape_cast %71 : vector<1x12x8xbf16> to vector<12x8xbf16>
    %cst_24 = arith.constant dense<0.000000e+00> : vector<256x8xf32>
    %73 = tpu.matmul %70, %72, %cst_24 {dimension_numbers = #tpu.dot_dimension_numbers<[1], [0], [0], [1], [0, 0, 1, 1], [], []>} : vector<256x12xbf16>, vector<12x8xbf16>, vector<256x8xf32> -> vector<256x8xf32>
    %74 = arith.addf %64, %73 : vector<256x8xf32>
    %75 = vector.extract_strided_slice %3 {offsets = [2, 1, 0, 0], sizes = [4, 8, 10, 4], strides = [1, 1, 1, 1]} : vector<6x10x10x4xbf16> to vector<4x8x10x4xbf16>
    %76 = vector.extract_strided_slice %75 {offsets = [0, 0, 0, 0], sizes = [4, 8, 8, 4], strides = [1, 1, 1, 1]} : vector<4x8x10x4xbf16> to vector<4x8x8x4xbf16>
    %77 = vector.extract_strided_slice %75 {offsets = [0, 0, 1, 0], sizes = [4, 8, 8, 4], strides = [1, 1, 1, 1]} : vector<4x8x10x4xbf16> to vector<4x8x8x4xbf16>
    %78 = vector.extract_strided_slice %75 {offsets = [0, 0, 2, 0], sizes = [4, 8, 8, 4], strides = [1, 1, 1, 1]} : vector<4x8x10x4xbf16> to vector<4x8x8x4xbf16>
    %79 = tpu.concatenate %76, %77, %78 in 3 : vector<4x8x8x4xbf16>, vector<4x8x8x4xbf16>, vector<4x8x8x4xbf16> -> vector<4x8x8x12xbf16>
    %80 = vector.shape_cast %79 : vector<4x8x8x12xbf16> to vector<256x12xbf16>
    %c7 = arith.constant 7 : index
    %c0_25 = arith.constant 0 : index
    %c0_26 = arith.constant 0 : index
    %81 = vector.load %arg3[%c7, %c0_25, %c0_26] : memref<9x12x8xbf16, #tpu.memory_space<vmem>>, vector<1x12x8xbf16>
    %82 = vector.shape_cast %81 : vector<1x12x8xbf16> to vector<12x8xbf16>
    %cst_27 = arith.constant dense<0.000000e+00> : vector<256x8xf32>
    %83 = tpu.matmul %80, %82, %cst_27 {dimension_numbers = #tpu.dot_dimension_numbers<[1], [0], [0], [1], [0, 0, 1, 1], [], []>} : vector<256x12xbf16>, vector<12x8xbf16>, vector<256x8xf32> -> vector<256x8xf32>
    %84 = arith.addf %74, %83 : vector<256x8xf32>
    %85 = vector.extract_strided_slice %3 {offsets = [2, 2, 0, 0], sizes = [4, 8, 10, 4], strides = [1, 1, 1, 1]} : vector<6x10x10x4xbf16> to vector<4x8x10x4xbf16>
    %86 = vector.extract_strided_slice %85 {offsets = [0, 0, 0, 0], sizes = [4, 8, 8, 4], strides = [1, 1, 1, 1]} : vector<4x8x10x4xbf16> to vector<4x8x8x4xbf16>
    %87 = vector.extract_strided_slice %85 {offsets = [0, 0, 1, 0], sizes = [4, 8, 8, 4], strides = [1, 1, 1, 1]} : vector<4x8x10x4xbf16> to vector<4x8x8x4xbf16>
    %88 = vector.extract_strided_slice %85 {offsets = [0, 0, 2, 0], sizes = [4, 8, 8, 4], strides = [1, 1, 1, 1]} : vector<4x8x10x4xbf16> to vector<4x8x8x4xbf16>
    %89 = tpu.concatenate %86, %87, %88 in 3 : vector<4x8x8x4xbf16>, vector<4x8x8x4xbf16>, vector<4x8x8x4xbf16> -> vector<4x8x8x12xbf16>
    %90 = vector.shape_cast %89 : vector<4x8x8x12xbf16> to vector<256x12xbf16>
    %c8 = arith.constant 8 : index
    %c0_28 = arith.constant 0 : index
    %c0_29 = arith.constant 0 : index
    %91 = vector.load %arg3[%c8, %c0_28, %c0_29] : memref<9x12x8xbf16, #tpu.memory_space<vmem>>, vector<1x12x8xbf16>
    %92 = vector.shape_cast %91 : vector<1x12x8xbf16> to vector<12x8xbf16>
    %cst_30 = arith.constant dense<0.000000e+00> : vector<256x8xf32>
    %93 = tpu.matmul %90, %92, %cst_30 {dimension_numbers = #tpu.dot_dimension_numbers<[1], [0], [0], [1], [0, 0, 1, 1], [], []>} : vector<256x12xbf16>, vector<12x8xbf16>, vector<256x8xf32> -> vector<256x8xf32>
    %94 = arith.addf %84, %93 : vector<256x8xf32>
    %c0_31 = arith.constant 0 : index
    %c0_32 = arith.constant 0 : index
    %95 = vector.load %arg4[%c0_31, %c0_32] : memref<1x8xf32, #tpu.memory_space<vmem>>, vector<1x8xf32>
    %96 = vector.broadcast %95 : vector<1x8xf32> to vector<256x8xf32>
    %97 = arith.addf %94, %96 : vector<256x8xf32>
    %cst_33 = arith.constant 0.000000e+00 : f32
    %98 = vector.broadcast %cst_33 : f32 to vector<256x8xf32>
    %99 = arith.maximumf %97, %98 : vector<256x8xf32>
    %100 = arith.truncf %99 : vector<256x8xf32> to vector<256x8xbf16>
    %c0_34 = arith.constant 0 : index
    %c0_35 = arith.constant 0 : index
    %c0_36 = arith.constant 0 : index
    %c0_37 = arith.constant 0 : index
    %101 = vector.load %arg5[%c0_34, %c0_35, %c0_36, %c0_37] : memref<1x1x256x8xbf16, #tpu.memory_space<vmem>>, vector<1x1x256x8xbf16>
    %102 = vector.shape_cast %101 : vector<1x1x256x8xbf16> to vector<256x8xbf16>
    %103 = vector.shape_cast %100 : vector<256x8xbf16> to vector<1x1x256x8xbf16>
    tpu.vector_store %arg5[%c0_34, %c0_35, %c0_36, %c0_37], %103 {strides = array<i32>} : memref<1x1x256x8xbf16, #tpu.memory_space<vmem>>, vector<1x1x256x8xbf16>,
    return
  }
  func.func @transform_0(%arg0: i32, %arg1: i32) -> (i32, i32, i32, i32, i32) {
    %c0_i32 = arith.constant 0 : i32
    %c0_i32_0 = arith.constant 0 : i32
    %c0_i32_1 = arith.constant 0 : i32
    %c0_i32_2 = arith.constant 0 : i32
    %c0_i32_3 = arith.constant 0 : i32
    return %arg0, %c0_i32, %c0_i32_0, %c0_i32_1, %c0_i32_2 : i32, i32, i32, i32, i32
  }
  func.func @transform_1(%arg0: i32, %arg1: i32) -> (i32, i32, i32) {
    %c0_i32 = arith.constant 0 : i32
    %c0_i32_0 = arith.constant 0 : i32
    %c0_i32_1 = arith.constant 0 : i32
    %c0_i32_2 = arith.constant 0 : i32
    return %c0_i32, %c0_i32_0, %c0_i32_1 : i32, i32, i32
  }
  func.func @transform_2(%arg0: i32, %arg1: i32) -> (i32, i32) {
    %c0_i32 = arith.constant 0 : i32
    %c0_i32_0 = arith.constant 0 : i32
    %c0_i32_1 = arith.constant 0 : i32
    return %c0_i32, %c0_i32_0 : i32, i32
  }
  func.func @transform_3(%arg0: i32, %arg1: i32) -> (i32, i32, i32, i32) {
    %c0_i32 = arith.constant 0 : i32
    %c0_i32_0 = arith.constant 0 : i32
    %c0_i32_1 = arith.constant 0 : i32
    return %arg0, %arg1, %c0_i32, %c0_i32_0 : i32, i32, i32, i32
  }
}

module attributes {stable_mosaic.version = 11 : i64} {
  func.func @_conv3_relu_1x1_kernel(%arg0: i32, %arg1: i32, %arg2: memref<1x6x10x10x8xbf16, #tpu.memory_space<vmem>>, %arg3: memref<9x24x4xbf16, #tpu.memory_space<vmem>>, %arg4: memref<1x4xf32, #tpu.memory_space<vmem>>, %arg5: memref<4x4xbf16, #tpu.memory_space<vmem>>, %arg6: memref<4x1xf32, #tpu.memory_space<vmem>>, %arg7: memref<1x4x256xf32, #tpu.memory_space<vmem>>) attributes {dimension_semantics = [#tpu.dimension_semantics<parallel>, #tpu.dimension_semantics<parallel>], iteration_bounds = array<i64: 2, 1>, scalar_prefetch = 0 : i64, scratch_operands = 0 : i64, tpu.core_type = #tpu.core_type<tc>, window_params = [{pipeline_mode = #tpu.pipeline_mode<synchronous>, transform_indices = @transform_0, window_bounds = array<i64: 1, 6, 10, 10, 8>}, {pipeline_mode = #tpu.pipeline_mode<synchronous>, transform_indices = @transform_1, window_bounds = array<i64: 9, 24, 4>}, {pipeline_mode = #tpu.pipeline_mode<synchronous>, transform_indices = @transform_2, window_bounds = array<i64: 1, 4>}, {pipeline_mode = #tpu.pipeline_mode<synchronous>, transform_indices = @transform_3, window_bounds = array<i64: 4, 4>}, {pipeline_mode = #tpu.pipeline_mode<synchronous>, transform_indices = @transform_4, window_bounds = array<i64: 4, 1>}, {transform_indices = @transform_5, window_bounds = array<i64: 1, 4, 256>}]} {
    %c4_i32 = arith.constant 4 : i32
    %0 = arith.muli %arg1, %c4_i32 : i32
    %c0 = arith.constant 0 : index
    %1 = arith.index_cast %0 : i32 to index
    %c0_0 = arith.constant 0 : index
    %c0_1 = arith.constant 0 : index
    %c0_2 = arith.constant 0 : index
    %2 = vector.load %arg2[%c0, %1, %c0_0, %c0_1, %c0_2] : memref<1x6x10x10x8xbf16, #tpu.memory_space<vmem>>, vector<1x6x10x10x8xbf16>
    %3 = vector.shape_cast %2 : vector<1x6x10x10x8xbf16> to vector<6x10x10x8xbf16>
    %cst = arith.constant 0.000000e+00 : f32
    %4 = vector.broadcast %cst : f32 to vector<256x4xf32>
    %5 = vector.extract_strided_slice %3 {offsets = [0, 0, 0, 0], sizes = [4, 8, 10, 8], strides = [1, 1, 1, 1]} : vector<6x10x10x8xbf16> to vector<4x8x10x8xbf16>
    %6 = vector.extract_strided_slice %5 {offsets = [0, 0, 0, 0], sizes = [4, 8, 8, 8], strides = [1, 1, 1, 1]} : vector<4x8x10x8xbf16> to vector<4x8x8x8xbf16>
    %7 = vector.extract_strided_slice %5 {offsets = [0, 0, 1, 0], sizes = [4, 8, 8, 8], strides = [1, 1, 1, 1]} : vector<4x8x10x8xbf16> to vector<4x8x8x8xbf16>
    %8 = vector.extract_strided_slice %5 {offsets = [0, 0, 2, 0], sizes = [4, 8, 8, 8], strides = [1, 1, 1, 1]} : vector<4x8x10x8xbf16> to vector<4x8x8x8xbf16>
    %9 = tpu.concatenate %6, %7, %8 in 3 : vector<4x8x8x8xbf16>, vector<4x8x8x8xbf16>, vector<4x8x8x8xbf16> -> vector<4x8x8x24xbf16>
    %10 = vector.shape_cast %9 : vector<4x8x8x24xbf16> to vector<256x24xbf16>
    %c0_3 = arith.constant 0 : index
    %c0_4 = arith.constant 0 : index
    %c0_5 = arith.constant 0 : index
    %11 = vector.load %arg3[%c0_3, %c0_4, %c0_5] : memref<9x24x4xbf16, #tpu.memory_space<vmem>>, vector<1x24x4xbf16>
    %12 = vector.shape_cast %11 : vector<1x24x4xbf16> to vector<24x4xbf16>
    %cst_6 = arith.constant dense<0.000000e+00> : vector<256x4xf32>
    %13 = tpu.matmul %10, %12, %cst_6 {dimension_numbers = #tpu.dot_dimension_numbers<[1], [0], [0], [1], [0, 0, 1, 1], [], []>} : vector<256x24xbf16>, vector<24x4xbf16>, vector<256x4xf32> -> vector<256x4xf32>
    %14 = arith.addf %4, %13 : vector<256x4xf32>
    %15 = vector.extract_strided_slice %3 {offsets = [0, 1, 0, 0], sizes = [4, 8, 10, 8], strides = [1, 1, 1, 1]} : vector<6x10x10x8xbf16> to vector<4x8x10x8xbf16>
    %16 = vector.extract_strided_slice %15 {offsets = [0, 0, 0, 0], sizes = [4, 8, 8, 8], strides = [1, 1, 1, 1]} : vector<4x8x10x8xbf16> to vector<4x8x8x8xbf16>
    %17 = vector.extract_strided_slice %15 {offsets = [0, 0, 1, 0], sizes = [4, 8, 8, 8], strides = [1, 1, 1, 1]} : vector<4x8x10x8xbf16> to vector<4x8x8x8xbf16>
    %18 = vector.extract_strided_slice %15 {offsets = [0, 0, 2, 0], sizes = [4, 8, 8, 8], strides = [1, 1, 1, 1]} : vector<4x8x10x8xbf16> to vector<4x8x8x8xbf16>
    %19 = tpu.concatenate %16, %17, %18 in 3 : vector<4x8x8x8xbf16>, vector<4x8x8x8xbf16>, vector<4x8x8x8xbf16> -> vector<4x8x8x24xbf16>
    %20 = vector.shape_cast %19 : vector<4x8x8x24xbf16> to vector<256x24xbf16>
    %c1 = arith.constant 1 : index
    %c0_7 = arith.constant 0 : index
    %c0_8 = arith.constant 0 : index
    %21 = vector.load %arg3[%c1, %c0_7, %c0_8] : memref<9x24x4xbf16, #tpu.memory_space<vmem>>, vector<1x24x4xbf16>
    %22 = vector.shape_cast %21 : vector<1x24x4xbf16> to vector<24x4xbf16>
    %cst_9 = arith.constant dense<0.000000e+00> : vector<256x4xf32>
    %23 = tpu.matmul %20, %22, %cst_9 {dimension_numbers = #tpu.dot_dimension_numbers<[1], [0], [0], [1], [0, 0, 1, 1], [], []>} : vector<256x24xbf16>, vector<24x4xbf16>, vector<256x4xf32> -> vector<256x4xf32>
    %24 = arith.addf %14, %23 : vector<256x4xf32>
    %25 = vector.extract_strided_slice %3 {offsets = [0, 2, 0, 0], sizes = [4, 8, 10, 8], strides = [1, 1, 1, 1]} : vector<6x10x10x8xbf16> to vector<4x8x10x8xbf16>
    %26 = vector.extract_strided_slice %25 {offsets = [0, 0, 0, 0], sizes = [4, 8, 8, 8], strides = [1, 1, 1, 1]} : vector<4x8x10x8xbf16> to vector<4x8x8x8xbf16>
    %27 = vector.extract_strided_slice %25 {offsets = [0, 0, 1, 0], sizes = [4, 8, 8, 8], strides = [1, 1, 1, 1]} : vector<4x8x10x8xbf16> to vector<4x8x8x8xbf16>
    %28 = vector.extract_strided_slice %25 {offsets = [0, 0, 2, 0], sizes = [4, 8, 8, 8], strides = [1, 1, 1, 1]} : vector<4x8x10x8xbf16> to vector<4x8x8x8xbf16>
    %29 = tpu.concatenate %26, %27, %28 in 3 : vector<4x8x8x8xbf16>, vector<4x8x8x8xbf16>, vector<4x8x8x8xbf16> -> vector<4x8x8x24xbf16>
    %30 = vector.shape_cast %29 : vector<4x8x8x24xbf16> to vector<256x24xbf16>
    %c2 = arith.constant 2 : index
    %c0_10 = arith.constant 0 : index
    %c0_11 = arith.constant 0 : index
    %31 = vector.load %arg3[%c2, %c0_10, %c0_11] : memref<9x24x4xbf16, #tpu.memory_space<vmem>>, vector<1x24x4xbf16>
    %32 = vector.shape_cast %31 : vector<1x24x4xbf16> to vector<24x4xbf16>
    %cst_12 = arith.constant dense<0.000000e+00> : vector<256x4xf32>
    %33 = tpu.matmul %30, %32, %cst_12 {dimension_numbers = #tpu.dot_dimension_numbers<[1], [0], [0], [1], [0, 0, 1, 1], [], []>} : vector<256x24xbf16>, vector<24x4xbf16>, vector<256x4xf32> -> vector<256x4xf32>
    %34 = arith.addf %24, %33 : vector<256x4xf32>
    %35 = vector.extract_strided_slice %3 {offsets = [1, 0, 0, 0], sizes = [4, 8, 10, 8], strides = [1, 1, 1, 1]} : vector<6x10x10x8xbf16> to vector<4x8x10x8xbf16>
    %36 = vector.extract_strided_slice %35 {offsets = [0, 0, 0, 0], sizes = [4, 8, 8, 8], strides = [1, 1, 1, 1]} : vector<4x8x10x8xbf16> to vector<4x8x8x8xbf16>
    %37 = vector.extract_strided_slice %35 {offsets = [0, 0, 1, 0], sizes = [4, 8, 8, 8], strides = [1, 1, 1, 1]} : vector<4x8x10x8xbf16> to vector<4x8x8x8xbf16>
    %38 = vector.extract_strided_slice %35 {offsets = [0, 0, 2, 0], sizes = [4, 8, 8, 8], strides = [1, 1, 1, 1]} : vector<4x8x10x8xbf16> to vector<4x8x8x8xbf16>
    %39 = tpu.concatenate %36, %37, %38 in 3 : vector<4x8x8x8xbf16>, vector<4x8x8x8xbf16>, vector<4x8x8x8xbf16> -> vector<4x8x8x24xbf16>
    %40 = vector.shape_cast %39 : vector<4x8x8x24xbf16> to vector<256x24xbf16>
    %c3 = arith.constant 3 : index
    %c0_13 = arith.constant 0 : index
    %c0_14 = arith.constant 0 : index
    %41 = vector.load %arg3[%c3, %c0_13, %c0_14] : memref<9x24x4xbf16, #tpu.memory_space<vmem>>, vector<1x24x4xbf16>
    %42 = vector.shape_cast %41 : vector<1x24x4xbf16> to vector<24x4xbf16>
    %cst_15 = arith.constant dense<0.000000e+00> : vector<256x4xf32>
    %43 = tpu.matmul %40, %42, %cst_15 {dimension_numbers = #tpu.dot_dimension_numbers<[1], [0], [0], [1], [0, 0, 1, 1], [], []>} : vector<256x24xbf16>, vector<24x4xbf16>, vector<256x4xf32> -> vector<256x4xf32>
    %44 = arith.addf %34, %43 : vector<256x4xf32>
    %45 = vector.extract_strided_slice %3 {offsets = [1, 1, 0, 0], sizes = [4, 8, 10, 8], strides = [1, 1, 1, 1]} : vector<6x10x10x8xbf16> to vector<4x8x10x8xbf16>
    %46 = vector.extract_strided_slice %45 {offsets = [0, 0, 0, 0], sizes = [4, 8, 8, 8], strides = [1, 1, 1, 1]} : vector<4x8x10x8xbf16> to vector<4x8x8x8xbf16>
    %47 = vector.extract_strided_slice %45 {offsets = [0, 0, 1, 0], sizes = [4, 8, 8, 8], strides = [1, 1, 1, 1]} : vector<4x8x10x8xbf16> to vector<4x8x8x8xbf16>
    %48 = vector.extract_strided_slice %45 {offsets = [0, 0, 2, 0], sizes = [4, 8, 8, 8], strides = [1, 1, 1, 1]} : vector<4x8x10x8xbf16> to vector<4x8x8x8xbf16>
    %49 = tpu.concatenate %46, %47, %48 in 3 : vector<4x8x8x8xbf16>, vector<4x8x8x8xbf16>, vector<4x8x8x8xbf16> -> vector<4x8x8x24xbf16>
    %50 = vector.shape_cast %49 : vector<4x8x8x24xbf16> to vector<256x24xbf16>
    %c4 = arith.constant 4 : index
    %c0_16 = arith.constant 0 : index
    %c0_17 = arith.constant 0 : index
    %51 = vector.load %arg3[%c4, %c0_16, %c0_17] : memref<9x24x4xbf16, #tpu.memory_space<vmem>>, vector<1x24x4xbf16>
    %52 = vector.shape_cast %51 : vector<1x24x4xbf16> to vector<24x4xbf16>
    %cst_18 = arith.constant dense<0.000000e+00> : vector<256x4xf32>
    %53 = tpu.matmul %50, %52, %cst_18 {dimension_numbers = #tpu.dot_dimension_numbers<[1], [0], [0], [1], [0, 0, 1, 1], [], []>} : vector<256x24xbf16>, vector<24x4xbf16>, vector<256x4xf32> -> vector<256x4xf32>
    %54 = arith.addf %44, %53 : vector<256x4xf32>
    %55 = vector.extract_strided_slice %3 {offsets = [1, 2, 0, 0], sizes = [4, 8, 10, 8], strides = [1, 1, 1, 1]} : vector<6x10x10x8xbf16> to vector<4x8x10x8xbf16>
    %56 = vector.extract_strided_slice %55 {offsets = [0, 0, 0, 0], sizes = [4, 8, 8, 8], strides = [1, 1, 1, 1]} : vector<4x8x10x8xbf16> to vector<4x8x8x8xbf16>
    %57 = vector.extract_strided_slice %55 {offsets = [0, 0, 1, 0], sizes = [4, 8, 8, 8], strides = [1, 1, 1, 1]} : vector<4x8x10x8xbf16> to vector<4x8x8x8xbf16>
    %58 = vector.extract_strided_slice %55 {offsets = [0, 0, 2, 0], sizes = [4, 8, 8, 8], strides = [1, 1, 1, 1]} : vector<4x8x10x8xbf16> to vector<4x8x8x8xbf16>
    %59 = tpu.concatenate %56, %57, %58 in 3 : vector<4x8x8x8xbf16>, vector<4x8x8x8xbf16>, vector<4x8x8x8xbf16> -> vector<4x8x8x24xbf16>
    %60 = vector.shape_cast %59 : vector<4x8x8x24xbf16> to vector<256x24xbf16>
    %c5 = arith.constant 5 : index
    %c0_19 = arith.constant 0 : index
    %c0_20 = arith.constant 0 : index
    %61 = vector.load %arg3[%c5, %c0_19, %c0_20] : memref<9x24x4xbf16, #tpu.memory_space<vmem>>, vector<1x24x4xbf16>
    %62 = vector.shape_cast %61 : vector<1x24x4xbf16> to vector<24x4xbf16>
    %cst_21 = arith.constant dense<0.000000e+00> : vector<256x4xf32>
    %63 = tpu.matmul %60, %62, %cst_21 {dimension_numbers = #tpu.dot_dimension_numbers<[1], [0], [0], [1], [0, 0, 1, 1], [], []>} : vector<256x24xbf16>, vector<24x4xbf16>, vector<256x4xf32> -> vector<256x4xf32>
    %64 = arith.addf %54, %63 : vector<256x4xf32>
    %65 = vector.extract_strided_slice %3 {offsets = [2, 0, 0, 0], sizes = [4, 8, 10, 8], strides = [1, 1, 1, 1]} : vector<6x10x10x8xbf16> to vector<4x8x10x8xbf16>
    %66 = vector.extract_strided_slice %65 {offsets = [0, 0, 0, 0], sizes = [4, 8, 8, 8], strides = [1, 1, 1, 1]} : vector<4x8x10x8xbf16> to vector<4x8x8x8xbf16>
    %67 = vector.extract_strided_slice %65 {offsets = [0, 0, 1, 0], sizes = [4, 8, 8, 8], strides = [1, 1, 1, 1]} : vector<4x8x10x8xbf16> to vector<4x8x8x8xbf16>
    %68 = vector.extract_strided_slice %65 {offsets = [0, 0, 2, 0], sizes = [4, 8, 8, 8], strides = [1, 1, 1, 1]} : vector<4x8x10x8xbf16> to vector<4x8x8x8xbf16>
    %69 = tpu.concatenate %66, %67, %68 in 3 : vector<4x8x8x8xbf16>, vector<4x8x8x8xbf16>, vector<4x8x8x8xbf16> -> vector<4x8x8x24xbf16>
    %70 = vector.shape_cast %69 : vector<4x8x8x24xbf16> to vector<256x24xbf16>
    %c6 = arith.constant 6 : index
    %c0_22 = arith.constant 0 : index
    %c0_23 = arith.constant 0 : index
    %71 = vector.load %arg3[%c6, %c0_22, %c0_23] : memref<9x24x4xbf16, #tpu.memory_space<vmem>>, vector<1x24x4xbf16>
    %72 = vector.shape_cast %71 : vector<1x24x4xbf16> to vector<24x4xbf16>
    %cst_24 = arith.constant dense<0.000000e+00> : vector<256x4xf32>
    %73 = tpu.matmul %70, %72, %cst_24 {dimension_numbers = #tpu.dot_dimension_numbers<[1], [0], [0], [1], [0, 0, 1, 1], [], []>} : vector<256x24xbf16>, vector<24x4xbf16>, vector<256x4xf32> -> vector<256x4xf32>
    %74 = arith.addf %64, %73 : vector<256x4xf32>
    %75 = vector.extract_strided_slice %3 {offsets = [2, 1, 0, 0], sizes = [4, 8, 10, 8], strides = [1, 1, 1, 1]} : vector<6x10x10x8xbf16> to vector<4x8x10x8xbf16>
    %76 = vector.extract_strided_slice %75 {offsets = [0, 0, 0, 0], sizes = [4, 8, 8, 8], strides = [1, 1, 1, 1]} : vector<4x8x10x8xbf16> to vector<4x8x8x8xbf16>
    %77 = vector.extract_strided_slice %75 {offsets = [0, 0, 1, 0], sizes = [4, 8, 8, 8], strides = [1, 1, 1, 1]} : vector<4x8x10x8xbf16> to vector<4x8x8x8xbf16>
    %78 = vector.extract_strided_slice %75 {offsets = [0, 0, 2, 0], sizes = [4, 8, 8, 8], strides = [1, 1, 1, 1]} : vector<4x8x10x8xbf16> to vector<4x8x8x8xbf16>
    %79 = tpu.concatenate %76, %77, %78 in 3 : vector<4x8x8x8xbf16>, vector<4x8x8x8xbf16>, vector<4x8x8x8xbf16> -> vector<4x8x8x24xbf16>
    %80 = vector.shape_cast %79 : vector<4x8x8x24xbf16> to vector<256x24xbf16>
    %c7 = arith.constant 7 : index
    %c0_25 = arith.constant 0 : index
    %c0_26 = arith.constant 0 : index
    %81 = vector.load %arg3[%c7, %c0_25, %c0_26] : memref<9x24x4xbf16, #tpu.memory_space<vmem>>, vector<1x24x4xbf16>
    %82 = vector.shape_cast %81 : vector<1x24x4xbf16> to vector<24x4xbf16>
    %cst_27 = arith.constant dense<0.000000e+00> : vector<256x4xf32>
    %83 = tpu.matmul %80, %82, %cst_27 {dimension_numbers = #tpu.dot_dimension_numbers<[1], [0], [0], [1], [0, 0, 1, 1], [], []>} : vector<256x24xbf16>, vector<24x4xbf16>, vector<256x4xf32> -> vector<256x4xf32>
    %84 = arith.addf %74, %83 : vector<256x4xf32>
    %85 = vector.extract_strided_slice %3 {offsets = [2, 2, 0, 0], sizes = [4, 8, 10, 8], strides = [1, 1, 1, 1]} : vector<6x10x10x8xbf16> to vector<4x8x10x8xbf16>
    %86 = vector.extract_strided_slice %85 {offsets = [0, 0, 0, 0], sizes = [4, 8, 8, 8], strides = [1, 1, 1, 1]} : vector<4x8x10x8xbf16> to vector<4x8x8x8xbf16>
    %87 = vector.extract_strided_slice %85 {offsets = [0, 0, 1, 0], sizes = [4, 8, 8, 8], strides = [1, 1, 1, 1]} : vector<4x8x10x8xbf16> to vector<4x8x8x8xbf16>
    %88 = vector.extract_strided_slice %85 {offsets = [0, 0, 2, 0], sizes = [4, 8, 8, 8], strides = [1, 1, 1, 1]} : vector<4x8x10x8xbf16> to vector<4x8x8x8xbf16>
    %89 = tpu.concatenate %86, %87, %88 in 3 : vector<4x8x8x8xbf16>, vector<4x8x8x8xbf16>, vector<4x8x8x8xbf16> -> vector<4x8x8x24xbf16>
    %90 = vector.shape_cast %89 : vector<4x8x8x24xbf16> to vector<256x24xbf16>
    %c8 = arith.constant 8 : index
    %c0_28 = arith.constant 0 : index
    %c0_29 = arith.constant 0 : index
    %91 = vector.load %arg3[%c8, %c0_28, %c0_29] : memref<9x24x4xbf16, #tpu.memory_space<vmem>>, vector<1x24x4xbf16>
    %92 = vector.shape_cast %91 : vector<1x24x4xbf16> to vector<24x4xbf16>
    %cst_30 = arith.constant dense<0.000000e+00> : vector<256x4xf32>
    %93 = tpu.matmul %90, %92, %cst_30 {dimension_numbers = #tpu.dot_dimension_numbers<[1], [0], [0], [1], [0, 0, 1, 1], [], []>} : vector<256x24xbf16>, vector<24x4xbf16>, vector<256x4xf32> -> vector<256x4xf32>
    %94 = arith.addf %84, %93 : vector<256x4xf32>
    %c0_31 = arith.constant 0 : index
    %c0_32 = arith.constant 0 : index
    %95 = vector.load %arg4[%c0_31, %c0_32] : memref<1x4xf32, #tpu.memory_space<vmem>>, vector<1x4xf32>
    %96 = vector.broadcast %95 : vector<1x4xf32> to vector<256x4xf32>
    %97 = arith.addf %94, %96 : vector<256x4xf32>
    %cst_33 = arith.constant 0.000000e+00 : f32
    %98 = vector.broadcast %cst_33 : f32 to vector<256x4xf32>
    %99 = arith.maximumf %97, %98 : vector<256x4xf32>
    %100 = arith.truncf %99 : vector<256x4xf32> to vector<256x4xbf16>
    %c0_34 = arith.constant 0 : index
    %c0_35 = arith.constant 0 : index
    %101 = vector.load %arg5[%c0_34, %c0_35] : memref<4x4xbf16, #tpu.memory_space<vmem>>, vector<4x4xbf16>
    %102 = tpu.transpose %100, [1, 0] : vector<256x4xbf16> -> vector<4x256xbf16>
    %cst_36 = arith.constant dense<0.000000e+00> : vector<4x256xf32>
    %103 = tpu.matmul %101, %102, %cst_36 {dimension_numbers = #tpu.dot_dimension_numbers<[1], [0], [0], [1], [0, 0, 1, 1], [], []>} : vector<4x4xbf16>, vector<4x256xbf16>, vector<4x256xf32> -> vector<4x256xf32>
    %c0_37 = arith.constant 0 : index
    %c0_38 = arith.constant 0 : index
    %104 = vector.load %arg6[%c0_37, %c0_38] : memref<4x1xf32, #tpu.memory_space<vmem>>, vector<4x1xf32>
    %105 = vector.broadcast %104 : vector<4x1xf32> to vector<4x256xf32>
    %106 = arith.addf %103, %105 : vector<4x256xf32>
    %c0_39 = arith.constant 0 : index
    %c0_40 = arith.constant 0 : index
    %c0_41 = arith.constant 0 : index
    %107 = vector.load %arg7[%c0_39, %c0_40, %c0_41] : memref<1x4x256xf32, #tpu.memory_space<vmem>>, vector<1x4x256xf32>
    %108 = vector.shape_cast %107 : vector<1x4x256xf32> to vector<4x256xf32>
    %109 = vector.shape_cast %106 : vector<4x256xf32> to vector<1x4x256xf32>
    tpu.vector_store %arg7[%c0_39, %c0_40, %c0_41], %109 {strides = array<i32>} : memref<1x4x256xf32, #tpu.memory_space<vmem>>, vector<1x4x256xf32>,
    return
  }
  func.func @transform_0(%arg0: i32, %arg1: i32) -> (i32, i32, i32, i32, i32) {
    %c0_i32 = arith.constant 0 : i32
    %c0_i32_0 = arith.constant 0 : i32
    %c0_i32_1 = arith.constant 0 : i32
    %c0_i32_2 = arith.constant 0 : i32
    %c0_i32_3 = arith.constant 0 : i32
    return %arg0, %c0_i32, %c0_i32_0, %c0_i32_1, %c0_i32_2 : i32, i32, i32, i32, i32
  }
  func.func @transform_1(%arg0: i32, %arg1: i32) -> (i32, i32, i32) {
    %c0_i32 = arith.constant 0 : i32
    %c0_i32_0 = arith.constant 0 : i32
    %c0_i32_1 = arith.constant 0 : i32
    %c0_i32_2 = arith.constant 0 : i32
    return %c0_i32, %c0_i32_0, %c0_i32_1 : i32, i32, i32
  }
  func.func @transform_2(%arg0: i32, %arg1: i32) -> (i32, i32) {
    %c0_i32 = arith.constant 0 : i32
    %c0_i32_0 = arith.constant 0 : i32
    %c0_i32_1 = arith.constant 0 : i32
    return %c0_i32, %c0_i32_0 : i32, i32
  }
  func.func @transform_3(%arg0: i32, %arg1: i32) -> (i32, i32) {
    %c0_i32 = arith.constant 0 : i32
    %c0_i32_0 = arith.constant 0 : i32
    %c0_i32_1 = arith.constant 0 : i32
    return %c0_i32, %c0_i32_0 : i32, i32
  }
  func.func @transform_4(%arg0: i32, %arg1: i32) -> (i32, i32) {
    %c0_i32 = arith.constant 0 : i32
    %c0_i32_0 = arith.constant 0 : i32
    %c0_i32_1 = arith.constant 0 : i32
    return %c0_i32, %c0_i32_0 : i32, i32
  }
  func.func @transform_5(%arg0: i32, %arg1: i32) -> (i32, i32, i32) {
    %c0_i32 = arith.constant 0 : i32
    %c0_i32_0 = arith.constant 0 : i32
    return %arg0, %c0_i32, %arg1 : i32, i32, i32
  }
}

</mosaic_0001>

<llo_original>
// kernel: basic_adapter_forward.2
$region0: #{basic_adapter_forward.2}
  #allocation0 [shape = 'u32[]', space=smem, size = 0x4, offset = 0x4, fixed_abs, tag = 'smem constant byte address 0x4 - core index']
  #allocation1 [shape = 'u32[144,128]{1,0:T(1,128)}', space=vmem, size = 0x12000, scoped, tag = 'internal scratch']
  %s0 = inlined_call_operand.vmem [shape: bf16[2,6,10,10,4], index: 0, kind: input, shape index: {}]
  %s1 = inlined_call_operand.vmem [shape: bf16[9,12,8], index: 1, kind: input, shape index: {}]
  %s2 = inlined_call_operand.vmem [shape: f32[1,8], index: 2, kind: input, shape index: {}]
  %s3 = inlined_call_operand.vmem [shape: bf16[2,1,256,8], index: 3, kind: output, shape index: {}]
  %s4 = sld [smem:[#allocation0]]
  $region45: #{basic_adapter_forward.2} parent=0
    _
  %s6 = ssub.s32 1, %s4
  %s7 = scalar_select 0, %s6, %s4
  loop: start=0, step=1, limit=4
  $region2: #{basic_adapter_forward.2} parent=0 // loop_pre_header
    _
  $region3: #{basic_adapter_forward.2} parent=0 // loop_header
    %s9 = sphi 0, %s13
    %p10 = scmp.ge.s32.totalorder %s9, 4
    %s16 = sphi 0, %s28
    %s17 = sphi 0, %s24
    %s18 = sphi 0, %s16
    %s19 = sphi 0, %s17
    %s20 = sphi 0, %s18
    %s21 = sphi 0, %s19
    %s31 = sphi 0, %s33
    %s34 = sphi 0, %s31
    %s35 = sphi 0, %s34
    %s51 = sphi 0, %s35
    %s55 = sphi 0, %s55
    %s57 = sphi 0, %s55
    %s58 = sphi 0, %s57
    %s72 = sphi 0, %s58
    %s76 = sphi 0, %s76
    %s78 = sphi 0, %s76
    %s79 = sphi 0, %s78
    %s93 = sphi 0, %s79
    %s101 = sphi 0, %s103
    %s104 = sphi 0, %s101
    %s105 = sphi 0, %s104
    %s121 = sphi 0, %s105
  $region4: #{basic_adapter_forward.2} parent=0 // loop_header_branch
    %12 = sbr.rel (%p10) target = $region8
  $region5: #{basic_adapter_forward.2} parent=0 // loop_body
    %s14 = ssub.s32 %s9, 1
    %s15 = ssub.s32 %s9, 2
    %s22 = sadd.s32 1, %s17
    %p23 = scmp.ge.s32.totalorder %s22, 1
    %s24 = scalar_select %p23, 0, %s22
    %s25 = sadd.s32 1, %s16
    %s26 = scalar_select %p23, %s25, %s16
    %p27 = scmp.ge.s32.totalorder %s26, 2
    %s28 = scalar_select %p27, 0, %s26
    %s29 = ssub.s32 %s16, %s28
    %p30 = scmp.eq.s32.totalorder %s29, 0
    %s32 = sadd.s32 %s31, 1
    %s33 = scalar_select %p30, %s31, %s32
    %p36 = pneg %p30
    %p37 = scmp.eq.s32.totalorder %s9, 1
    %p38 = por %p36, %p37
    %p39 = scmp.ne.s32.totalorder %s31, %s34
    %p40 = scmp.eq.s32.totalorder %s9, 0
    %p41 = por %p39, %p40
    %p42 = scmp.ne.s32.totalorder %s31, %s34
    %p43 = scmp.eq.s32.totalorder %s14, 1
    %p44 = por %p42, %p43
    %p45 = scmp.ne.s32.totalorder %s34, %s35
    %p46 = scmp.eq.s32.totalorder %s14, 0
    %p47 = por %p45, %p46
    %p48 = scmp.ne.s32.totalorder %s34, %s35
    %p49 = scmp.eq.s32.totalorder %s15, 1
    %p50 = por %p48, %p49
    %p52 = scmp.ne.s32.totalorder %s35, %s51
    %p53 = scmp.eq.s32.totalorder %s15, 0
    %p54 = por %p52, %p53
    %s56 = sadd.s32 %s55, 1
    %p59 = scmp.eq.s32.totalorder %s9, 1
    %p60 = scmp.ne.s32.totalorder %s55, %s57
    %p61 = scmp.eq.s32.totalorder %s9, 0
    %p62 = por %p60, %p61
    %p63 = scmp.ne.s32.totalorder %s55, %s57
    %p64 = scmp.eq.s32.totalorder %s14, 1
    %p65 = por %p63, %p64
    %p66 = scmp.ne.s32.totalorder %s57, %s58
    %p67 = scmp.eq.s32.totalorder %s14, 0
    %p68 = por %p66, %p67
    %p69 = scmp.ne.s32.totalorder %s57, %s58
    %p70 = scmp.eq.s32.totalorder %s15, 1
    %p71 = por %p69, %p70
    %p73 = scmp.ne.s32.totalorder %s58, %s72
    %p74 = scmp.eq.s32.totalorder %s15, 0
    %p75 = por %p73, %p74
    %s77 = sadd.s32 %s76, 1
    %p80 = scmp.eq.s32.totalorder %s9, 1
    %p81 = scmp.ne.s32.totalorder %s76, %s78
    %p82 = scmp.eq.s32.totalorder %s9, 0
    %p83 = por %p81, %p82
    %p84 = scmp.ne.s32.totalorder %s76, %s78
    %p85 = scmp.eq.s32.totalorder %s14, 1
    %p86 = por %p84, %p85
    %p87 = scmp.ne.s32.totalorder %s78, %s79
    %p88 = scmp.eq.s32.totalorder %s14, 0
    %p89 = por %p87, %p88
    %p90 = scmp.ne.s32.totalorder %s78, %s79
    %p91 = scmp.eq.s32.totalorder %s15, 1
    %p92 = por %p90, %p91
    %p94 = scmp.ne.s32.totalorder %s79, %s93
    %p95 = scmp.eq.s32.totalorder %s15, 0
    %p96 = por %p94, %p95
    %s97 = ssub.s32 %s16, %s28
    %s98 = ssub.s32 %s17, %s24
    %s99 = sor.u32 %s97, %s98
    %p100 = scmp.eq.s32.totalorder %s99, 0
    %s102 = sadd.s32 %s101, 1
    %s103 = scalar_select %p100, %s101, %s102
    %p106 = pneg %p100
    %p107 = scmp.eq.s32.totalorder %s9, 1
    %p108 = por %p106, %p107
    %p109 = scmp.ne.s32.totalorder %s101, %s104
    %p110 = scmp.eq.s32.totalorder %s9, 0
    %p111 = por %p109, %p110
    %p112 = scmp.ne.s32.totalorder %s101, %s104
    %p113 = scmp.eq.s32.totalorder %s14, 1
    %p114 = por %p112, %p113
    %p115 = scmp.ne.s32.totalorder %s104, %s105
    %p116 = scmp.eq.s32.totalorder %s14, 0
    %p117 = por %p115, %p116
    %p118 = scmp.ne.s32.totalorder %s104, %s105
    %p119 = scmp.eq.s32.totalorder %s15, 1
    %p120 = por %p118, %p119
    %p122 = scmp.ne.s32.totalorder %s105, %s121
    %p123 = scmp.eq.s32.totalorder %s15, 0
    %p124 = por %p122, %p123
    %p125 = scmp.le.s32.totalorder 1, %s9
    %p126 = scmp.lt.s32.totalorder %s9, 3
    %p127 = pnand %p125, %p126
    %p128 = pneg %p127
    // Predicated region
    $region9: #{basic_adapter_forward.2} parent=5 // pred_check
      _
    $region10: #{basic_adapter_forward.2} parent=5 // pred_check_branch
      %130 = sbr.rel (%p127) target = $region12
    $region11: #{basic_adapter_forward.2} parent=5 // pred_region
      %s131 = ssub.s32 %s9, 1
      // Predicated region
      $region13: #{basic_adapter_forward.2} parent=11 // pred_check
        %p132 = pneg %p47
      $region14: #{basic_adapter_forward.2} parent=11 // pred_check_branch
        %134 = sbr.rel (%p132) target = $region16
      $region15: #{basic_adapter_forward.2} parent=11 // pred_region
        %p135 = scmp.lt.s32.totalorder %s18, 1
        %s136 = scalar_select %p135, %s18, 1
        %s137 = smul.addr %s136, 120
        %s138 = smul.addr %s137, 4
        %s139 = scalar_lea.vmem %s0, %s138
      $region16: #{basic_adapter_forward.2} parent=11 // pred_fallthru
        _
      // Predicated region
      $region17: #{basic_adapter_forward.2} parent=11 // pred_check
        %p140 = pneg %p68
      $region18: #{basic_adapter_forward.2} parent=11 // pred_check_branch
        %142 = sbr.rel (%p140) target = $region20
      $region19: #{basic_adapter_forward.2} parent=11 // pred_region
        _
      $region20: #{basic_adapter_forward.2} parent=11 // pred_fallthru
        _
      // Predicated region
      $region21: #{basic_adapter_forward.2} parent=11 // pred_check
        %p143 = pneg %p89
      $region22: #{basic_adapter_forward.2} parent=11 // pred_check_branch
        %145 = sbr.rel (%p143) target = $region24
      $region23: #{basic_adapter_forward.2} parent=11 // pred_region
        _
      $region24: #{basic_adapter_forward.2} parent=11 // pred_fallthru
        _
    $region12: #{basic_adapter_forward.2} parent=5 // pred_fallthru
      _
    %p146 = scmp.lt.s32.totalorder %s9, 2
    // Predicated region
    $region25: #{basic_adapter_forward.2} parent=5 // pred_check
      %p147 = pneg %p146
    $region26: #{basic_adapter_forward.2} parent=5 // pred_check_branch
      %149 = sbr.rel (%p147) target = $region28
    $region27: #{basic_adapter_forward.2} parent=5 // pred_region
      _
    $region28: #{basic_adapter_forward.2} parent=5 // pred_fallthru
      _
    %p150 = scmp.le.s32.totalorder 1, %s9
    %p151 = scmp.lt.s32.totalorder %s9, 3
    %p152 = pnand %p150, %p151
    %p153 = pneg %p152
    // Predicated region
    $region29: #{basic_adapter_forward.2} parent=5 // pred_check
      _
    $region30: #{basic_adapter_forward.2} parent=5 // pred_check_branch
      %155 = sbr.rel (%p152) target = $region32
    $region31: #{basic_adapter_forward.2} parent=5 // pred_region
      %s156 = ssub.s32 %s9, 1
      %p157 = scmp.lt.s32.totalorder %s18, 1
      %s158 = scalar_select %p157, %s18, 1
      %s159 = smul.addr %s158, 120
      %s160 = smul.addr %s159, 4
      %s161 = scalar_lea.vmem %s0, %s160
      %p162 = pneg %p47
      %p163 = pneg %p44
      %p164 = pneg %p68
      %p165 = pneg %p65
      %p166 = pneg %p89
      %p167 = pneg %p86
      %p168 = pneg %p117
      %p169 = pneg %p114
      %p170 = scmp.lt.s32.totalorder %s18, 1
      %s171 = scalar_select %p170, %s18, 1
      %p172 = scmp.lt.s32.totalorder %s19, 0
      %s173 = scalar_select %p172, %s19, 0
      %s174 = smul.addr %s173, 32
      %s175 = smul.addr %s171, 32
      %s176 = sadd.s32 %s174, %s175
      %s177 = smul.addr %s176, 4
      %s178 = scalar_lea.vmem %s3, %s177
      %p179 = scmp.lt.s32.totalorder %s18, 1
      %s180 = scalar_select %p179, %s18, 1
      %s181 = smul.addr %s180, 120
      %s182 = smul.addr %s181, 4
      %s183 = scalar_lea.vmem %s0, %s182
      %p184 = scmp.lt.s32.totalorder %s18, 1
      %s185 = scalar_select %p184, %s18, 1
      %p186 = scmp.lt.s32.totalorder %s19, 0
      %s187 = scalar_select %p186, %s19, 0
      %s188 = smul.addr %s187, 32
      %s189 = smul.addr %s185, 32
      %s190 = sadd.s32 %s188, %s189
      %s191 = smul.addr %s190, 4
      %s192 = scalar_lea.vmem %s3, %s191
      %s194 = smul.u32 %s19, 4
      %s195 = smul.u32 %s194, 20
      %s196 = smul.addr %s195, 4
      %s197 = scalar_lea.vmem %s183, %s196
      %v198 = vld [vmem:[%s197] sm:$0xf]
      %v199 = vld [vmem:[%s197 + $0x4] sm:$0x1]
      %v200 = vld [vmem:[%s197 + $0x8] sm:$0xf]
      %v201 = vld [vmem:[%s197 + $0xc] sm:$0x1]
      %v202 = vld [vmem:[%s197 + $0x10] sm:$0xf]
      %v203 = vld [vmem:[%s197 + $0x14] sm:$0x1]
      %v204 = vld [vmem:[%s197 + $0x18] sm:$0xf]
      %v205 = vld [vmem:[%s197 + $0x1c] sm:$0x1]
      %v206 = vld [vmem:[%s197 + $0x20] sm:$0xf]
      %v207 = vld [vmem:[%s197 + $0x24] sm:$0x1]
      %v208 = vld [vmem:[%s197 + $0x28] sm:$0xf]
      %v209 = vld [vmem:[%s197 + $0x2c] sm:$0x1]
      %v210 = vld [vmem:[%s197 + $0x30] sm:$0xf]
      %v211 = vld [vmem:[%s197 + $0x34] sm:$0x1]
      %v212 = vld [vmem:[%s197 + $0x38] sm:$0xf]
      %v213 = vld [vmem:[%s197 + $0x3c] sm:$0x1]
      %v214 = vld [vmem:[%s197 + $0x40] sm:$0xf]
      %v215 = vld [vmem:[%s197 + $0x44] sm:$0x1]
      %v216 = vld [vmem:[%s197 + $0x48] sm:$0xf]
      %v217 = vld [vmem:[%s197 + $0x4c] sm:$0x1]
      %v218 = vld [vmem:[%s197 + $0x50] sm:$0xf]
      %v219 = vld [vmem:[%s197 + $0x54] sm:$0x1]
      %v220 = vld [vmem:[%s197 + $0x58] sm:$0xf]
      %v221 = vld [vmem:[%s197 + $0x5c] sm:$0x1]
      %v222 = vld [vmem:[%s197 + $0x60] sm:$0xf]
      %v223 = vld [vmem:[%s197 + $0x64] sm:$0x1]
      %v224 = vld [vmem:[%s197 + $0x68] sm:$0xf]
      %v225 = vld [vmem:[%s197 + $0x6c] sm:$0x1]
      %v226 = vld [vmem:[%s197 + $0x70] sm:$0xf]
      %v227 = vld [vmem:[%s197 + $0x74] sm:$0x1]
      %v228 = vld [vmem:[%s197 + $0x78] sm:$0xf]
      %v229 = vld [vmem:[%s197 + $0x7c] sm:$0x1]
      %v230 = vld [vmem:[%s197 + $0x80] sm:$0xf]
      %v231 = vld [vmem:[%s197 + $0x84] sm:$0x1]
      %v232 = vld [vmem:[%s197 + $0x88] sm:$0xf]
      %v233 = vld [vmem:[%s197 + $0x8c] sm:$0x1]
      %v234 = vld [vmem:[%s197 + $0x90] sm:$0xf]
      %v235 = vld [vmem:[%s197 + $0x94] sm:$0x1]
      %v236 = vld [vmem:[%s197 + $0x98] sm:$0xf]
      %v237 = vld [vmem:[%s197 + $0x9c] sm:$0x1]
      %v238 = vld [vmem:[%s197 + $0xa0] sm:$0xf]
      %v239 = vld [vmem:[%s197 + $0xa4] sm:$0x1]
      %v240 = vld [vmem:[%s197 + $0xa8] sm:$0xf]
      %v241 = vld [vmem:[%s197 + $0xac] sm:$0x1]
      %v242 = vld [vmem:[%s197 + $0xb0] sm:$0xf]
      %v243 = vld [vmem:[%s197 + $0xb4] sm:$0x1]
      %v244 = vld [vmem:[%s197 + $0xb8] sm:$0xf]
      %v245 = vld [vmem:[%s197 + $0xbc] sm:$0x1]
      %v246 = vld [vmem:[%s197 + $0xc0] sm:$0xf]
      %v247 = vld [vmem:[%s197 + $0xc4] sm:$0x1]
      %v248 = vld [vmem:[%s197 + $0xc8] sm:$0xf]
      %v249 = vld [vmem:[%s197 + $0xcc] sm:$0x1]
      %v250 = vld [vmem:[%s197 + $0xd0] sm:$0xf]
      %v251 = vld [vmem:[%s197 + $0xd4] sm:$0x1]
      %v252 = vld [vmem:[%s197 + $0xd8] sm:$0xf]
      %v253 = vld [vmem:[%s197 + $0xdc] sm:$0x1]
      %v254 = vld [vmem:[%s197 + $0xe0] sm:$0xf]
      %v255 = vld [vmem:[%s197 + $0xe4] sm:$0x1]
      %v256 = vld [vmem:[%s197 + $0xe8] sm:$0xf]
      %v257 = vld [vmem:[%s197 + $0xec] sm:$0x1]
      %v258 = vld [vmem:[%s197 + $0xf0] sm:$0xf]
      %v259 = vld [vmem:[%s197 + $0xf4] sm:$0x1]
      %v260 = vld [vmem:[%s197 + $0xf8] sm:$0xf]
      %v261 = vld [vmem:[%s197 + $0xfc] sm:$0x1]
      %v262 = vld [vmem:[%s197 + $0x100] sm:$0xf]
      %v263 = vld [vmem:[%s197 + $0x104] sm:$0x1]
      %v264 = vld [vmem:[%s197 + $0x108] sm:$0xf]
      %v265 = vld [vmem:[%s197 + $0x10c] sm:$0x1]
      %v266 = vld [vmem:[%s197 + $0x110] sm:$0xf]
      %v267 = vld [vmem:[%s197 + $0x114] sm:$0x1]
      %v268 = vld [vmem:[%s197 + $0x118] sm:$0xf]
      %v269 = vld [vmem:[%s197 + $0x11c] sm:$0x1]
      %v270 = vld [vmem:[%s197 + $0x120] sm:$0xf]
      %v271 = vld [vmem:[%s197 + $0x124] sm:$0x1]
      %v272 = vld [vmem:[%s197 + $0x128] sm:$0xf]
      %v273 = vld [vmem:[%s197 + $0x12c] sm:$0x1]
      %v274 = vld [vmem:[%s197 + $0x130] sm:$0xf]
      %v275 = vld [vmem:[%s197 + $0x134] sm:$0x1]
      %v276 = vld [vmem:[%s197 + $0x138] sm:$0xf]
      %v277 = vld [vmem:[%s197 + $0x13c] sm:$0x1]
      %v278 = vld [vmem:[%s197 + $0x140] sm:$0xf]
      %v279 = vld [vmem:[%s197 + $0x144] sm:$0x1]
      %v280 = vld [vmem:[%s197 + $0x148] sm:$0xf]
      %v281 = vld [vmem:[%s197 + $0x14c] sm:$0x1]
      %v282 = vld [vmem:[%s197 + $0x150] sm:$0xf]
      %v283 = vld [vmem:[%s197 + $0x154] sm:$0x1]
      %v284 = vld [vmem:[%s197 + $0x158] sm:$0xf]
      %v285 = vld [vmem:[%s197 + $0x15c] sm:$0x1]
      %v286 = vld [vmem:[%s197 + $0x160] sm:$0xf]
      %v287 = vld [vmem:[%s197 + $0x164] sm:$0x1]
      %v288 = vld [vmem:[%s197 + $0x168] sm:$0xf]
      %v289 = vld [vmem:[%s197 + $0x16c] sm:$0x1]
      %v290 = vld [vmem:[%s197 + $0x170] sm:$0xf]
      %v291 = vld [vmem:[%s197 + $0x174] sm:$0x1]
      %v292 = vld [vmem:[%s197 + $0x178] sm:$0xf]
      %v293 = vld [vmem:[%s197 + $0x17c] sm:$0x1]
      %v294 = vld [vmem:[%s197 + $0x180] sm:$0xf]
      %v295 = vld [vmem:[%s197 + $0x184] sm:$0x1]
      %v296 = vld [vmem:[%s197 + $0x188] sm:$0xf]
      %v297 = vld [vmem:[%s197 + $0x18c] sm:$0x1]
      %v298 = vld [vmem:[%s197 + $0x190] sm:$0xf]
      %v299 = vld [vmem:[%s197 + $0x194] sm:$0x1]
      %v300 = vld [vmem:[%s197 + $0x198] sm:$0xf]
      %v301 = vld [vmem:[%s197 + $0x19c] sm:$0x1]
      %v302 = vld [vmem:[%s197 + $0x1a0] sm:$0xf]
      %v303 = vld [vmem:[%s197 + $0x1a4] sm:$0x1]
      %v304 = vld [vmem:[%s197 + $0x1a8] sm:$0xf]
      %v305 = vld [vmem:[%s197 + $0x1ac] sm:$0x1]
      %v306 = vld [vmem:[%s197 + $0x1b0] sm:$0xf]
      %v307 = vld [vmem:[%s197 + $0x1b4] sm:$0x1]
      %v308 = vld [vmem:[%s197 + $0x1b8] sm:$0xf]
      %v309 = vld [vmem:[%s197 + $0x1bc] sm:$0x1]
      %v310 = vld [vmem:[%s197 + $0x1c0] sm:$0xf]
      %v311 = vld [vmem:[%s197 + $0x1c4] sm:$0x1]
      %v312 = vld [vmem:[%s197 + $0x1c8] sm:$0xf]
      %v313 = vld [vmem:[%s197 + $0x1cc] sm:$0x1]
      %v314 = vld [vmem:[%s197 + $0x1d0] sm:$0xf]
      %v315 = vld [vmem:[%s197 + $0x1d4] sm:$0x1]
      %v316 = vld [vmem:[%s197 + $0x1d8] sm:$0xf]
      %v317 = vld [vmem:[%s197 + $0x1dc] sm:$0x1]
      %v382 = vunpack.c.l.b16 %v198
      %v383 = vunpack.c.l.b16 %v199
      %v384 = vunpack.c.l.b16 %v200
      %v385 = vunpack.c.l.b16 %v201
      %v386 = vunpack.c.l.b16 %v202
      %v387 = vunpack.c.l.b16 %v203
      %v388 = vunpack.c.l.b16 %v204
      %v389 = vunpack.c.l.b16 %v205
      %v390 = vunpack.c.l.b16 %v206
      %v391 = vunpack.c.l.b16 %v207
      %v392 = vunpack.c.l.b16 %v208
      %v393 = vunpack.c.l.b16 %v209
      %v394 = vunpack.c.l.b16 %v210
      %v395 = vunpack.c.l.b16 %v211
      %v396 = vunpack.c.l.b16 %v212
      %v397 = vunpack.c.l.b16 %v213
      %v398 = vunpack.c.l.b16 %v218
      %v399 = vunpack.c.l.b16 %v219
      %v400 = vunpack.c.l.b16 %v220
      %v401 = vunpack.c.l.b16 %v221
      %v402 = vunpack.c.l.b16 %v222
      %v403 = vunpack.c.l.b16 %v223
      %v404 = vunpack.c.l.b16 %v224
      %v405 = vunpack.c.l.b16 %v225
      %v406 = vunpack.c.l.b16 %v226
      %v407 = vunpack.c.l.b16 %v227
      %v408 = vunpack.c.l.b16 %v228
      %v409 = vunpack.c.l.b16 %v229
      %v410 = vunpack.c.l.b16 %v230
      %v411 = vunpack.c.l.b16 %v231
      %v412 = vunpack.c.l.b16 %v232
      %v413 = vunpack.c.l.b16 %v233
      %v414 = vunpack.c.l.b16 %v238
      %v415 = vunpack.c.l.b16 %v239
      %v416 = vunpack.c.l.b16 %v240
      %v417 = vunpack.c.l.b16 %v241
      %v418 = vunpack.c.l.b16 %v242
      %v419 = vunpack.c.l.b16 %v243
      %v420 = vunpack.c.l.b16 %v244
      %v421 = vunpack.c.l.b16 %v245
      %v422 = vunpack.c.l.b16 %v246
      %v423 = vunpack.c.l.b16 %v247
      %v424 = vunpack.c.l.b16 %v248
      %v425 = vunpack.c.l.b16 %v249
      %v426 = vunpack.c.l.b16 %v250
      %v427 = vunpack.c.l.b16 %v251
      %v428 = vunpack.c.l.b16 %v252
      %v429 = vunpack.c.l.b16 %v253
      %v430 = vunpack.c.l.b16 %v258
      %v431 = vunpack.c.l.b16 %v259
      %v432 = vunpack.c.l.b16 %v260
      %v433 = vunpack.c.l.b16 %v261
      %v434 = vunpack.c.l.b16 %v262
      %v435 = vunpack.c.l.b16 %v263
      %v436 = vunpack.c.l.b16 %v264
      %v437 = vunpack.c.l.b16 %v265
      %v438 = vunpack.c.l.b16 %v266
      %v439 = vunpack.c.l.b16 %v267
      %v440 = vunpack.c.l.b16 %v268
      %v441 = vunpack.c.l.b16 %v269
      %v442 = vunpack.c.l.b16 %v270
      %v443 = vunpack.c.l.b16 %v271
      %v444 = vunpack.c.l.b16 %v272
      %v445 = vunpack.c.l.b16 %v273
      %v446 = vpack.c.b16 %v383, %v382
      %v447 = vpack.c.b16 %v385, %v384
      %v448 = vpack.c.b16 %v387, %v386
      %v449 = vpack.c.b16 %v389, %v388
      %v450 = vpack.c.b16 %v391, %v390
      %v451 = vpack.c.b16 %v393, %v392
      %v452 = vpack.c.b16 %v395, %v394
      %v453 = vpack.c.b16 %v397, %v396
      %v454 = vpack.c.b16 %v399, %v398
      %v455 = vpack.c.b16 %v401, %v400
      %v456 = vpack.c.b16 %v403, %v402
      %v457 = vpack.c.b16 %v405, %v404
      %v458 = vpack.c.b16 %v407, %v406
      %v459 = vpack.c.b16 %v409, %v408
      %v460 = vpack.c.b16 %v411, %v410
      %v461 = vpack.c.b16 %v413, %v412
      %v462 = vpack.c.b16 %v415, %v414
      %v463 = vpack.c.b16 %v417, %v416
      %v464 = vpack.c.b16 %v419, %v418
      %v465 = vpack.c.b16 %v421, %v420
      %v466 = vpack.c.b16 %v423, %v422
      %v467 = vpack.c.b16 %v425, %v424
      %v468 = vpack.c.b16 %v427, %v426
      %v469 = vpack.c.b16 %v429, %v428
      %v470 = vpack.c.b16 %v431, %v430
      %v471 = vpack.c.b16 %v433, %v432
      %v472 = vpack.c.b16 %v435, %v434
      %v473 = vpack.c.b16 %v437, %v436
      %v474 = vpack.c.b16 %v439, %v438
      %v475 = vpack.c.b16 %v441, %v440
      %v476 = vpack.c.b16 %v443, %v442
      %v477 = vpack.c.b16 %v445, %v444
      %v479 = vshrl.u32 %v446, 16
      %v481 = vshll.u32 %v446, 16
      %v483 = vrot.slane %v481, 1
      %v484 = vor.u32 %v479, %v483
      %v486 = vshrl.u32 %v447, 16
      %v488 = vshll.u32 %v447, 16
      %v490 = vrot.slane %v488, 1
      %v491 = vor.u32 %v486, %v490
      %v493 = vshrl.u32 %v448, 16
      %v495 = vshll.u32 %v448, 16
      %v497 = vrot.slane %v495, 1
      %v498 = vor.u32 %v493, %v497
      %v500 = vshrl.u32 %v449, 16
      %v502 = vshll.u32 %v449, 16
      %v504 = vrot.slane %v502, 1
      %v505 = vor.u32 %v500, %v504
      %v507 = vshrl.u32 %v450, 16
      %v509 = vshll.u32 %v450, 16
      %v511 = vrot.slane %v509, 1
      %v512 = vor.u32 %v507, %v511
      %v514 = vshrl.u32 %v451, 16
      %v516 = vshll.u32 %v451, 16
      %v518 = vrot.slane %v516, 1
      %v519 = vor.u32 %v514, %v518
      %v521 = vshrl.u32 %v452, 16
      %v523 = vshll.u32 %v452, 16
      %v525 = vrot.slane %v523, 1
      %v526 = vor.u32 %v521, %v525
      %v528 = vshrl.u32 %v453, 16
      %v530 = vshll.u32 %v453, 16
      %v532 = vrot.slane %v530, 1
      %v533 = vor.u32 %v528, %v532
      %v535 = vshrl.u32 %v454, 16
      %v537 = vshll.u32 %v454, 16
      %v539 = vrot.slane %v537, 1
      %v540 = vor.u32 %v535, %v539
      %v542 = vshrl.u32 %v455, 16
      %v544 = vshll.u32 %v455, 16
      %v546 = vrot.slane %v544, 1
      %v547 = vor.u32 %v542, %v546
      %v549 = vshrl.u32 %v456, 16
      %v551 = vshll.u32 %v456, 16
      %v553 = vrot.slane %v551, 1
      %v554 = vor.u32 %v549, %v553
      %v556 = vshrl.u32 %v457, 16
      %v558 = vshll.u32 %v457, 16
      %v560 = vrot.slane %v558, 1
      %v561 = vor.u32 %v556, %v560
      %v563 = vshrl.u32 %v458, 16
      %v565 = vshll.u32 %v458, 16
      %v567 = vrot.slane %v565, 1
      %v568 = vor.u32 %v563, %v567
      %v570 = vshrl.u32 %v459, 16
      %v572 = vshll.u32 %v459, 16
      %v574 = vrot.slane %v572, 1
      %v575 = vor.u32 %v570, %v574
      %v577 = vshrl.u32 %v460, 16
      %v579 = vshll.u32 %v460, 16
      %v581 = vrot.slane %v579, 1
      %v582 = vor.u32 %v577, %v581
      %v584 = vshrl.u32 %v461, 16
      %v586 = vshll.u32 %v461, 16
      %v588 = vrot.slane %v586, 1
      %v589 = vor.u32 %v584, %v588
      %v591 = vshrl.u32 %v462, 16
      %v593 = vshll.u32 %v462, 16
      %v595 = vrot.slane %v593, 1
      %v596 = vor.u32 %v591, %v595
      %v598 = vshrl.u32 %v463, 16
      %v600 = vshll.u32 %v463, 16
      %v602 = vrot.slane %v600, 1
      %v603 = vor.u32 %v598, %v602
      %v605 = vshrl.u32 %v464, 16
      %v607 = vshll.u32 %v464, 16
      %v609 = vrot.slane %v607, 1
      %v610 = vor.u32 %v605, %v609
      %v612 = vshrl.u32 %v465, 16
      %v614 = vshll.u32 %v465, 16
      %v616 = vrot.slane %v614, 1
      %v617 = vor.u32 %v612, %v616
      %v619 = vshrl.u32 %v466, 16
      %v621 = vshll.u32 %v466, 16
      %v623 = vrot.slane %v621, 1
      %v624 = vor.u32 %v619, %v623
      %v626 = vshrl.u32 %v467, 16
      %v628 = vshll.u32 %v467, 16
      %v630 = vrot.slane %v628, 1
      %v631 = vor.u32 %v626, %v630
      %v633 = vshrl.u32 %v468, 16
      %v635 = vshll.u32 %v468, 16
      %v637 = vrot.slane %v635, 1
      %v638 = vor.u32 %v633, %v637
      %v640 = vshrl.u32 %v469, 16
      %v642 = vshll.u32 %v469, 16
      %v644 = vrot.slane %v642, 1
      %v645 = vor.u32 %v640, %v644
      %v647 = vshrl.u32 %v470, 16
      %v649 = vshll.u32 %v470, 16
      %v651 = vrot.slane %v649, 1
      %v652 = vor.u32 %v647, %v651
      %v654 = vshrl.u32 %v471, 16
      %v656 = vshll.u32 %v471, 16
      %v658 = vrot.slane %v656, 1
      %v659 = vor.u32 %v654, %v658
      %v661 = vshrl.u32 %v472, 16
      %v663 = vshll.u32 %v472, 16
      %v665 = vrot.slane %v663, 1
      %v666 = vor.u32 %v661, %v665
      %v668 = vshrl.u32 %v473, 16
      %v670 = vshll.u32 %v473, 16
      %v672 = vrot.slane %v670, 1
      %v673 = vor.u32 %v668, %v672
      %v675 = vshrl.u32 %v474, 16
      %v677 = vshll.u32 %v474, 16
      %v679 = vrot.slane %v677, 1
      %v680 = vor.u32 %v675, %v679
      %v682 = vshrl.u32 %v475, 16
      %v684 = vshll.u32 %v475, 16
      %v686 = vrot.slane %v684, 1
      %v687 = vor.u32 %v682, %v686
      %v689 = vshrl.u32 %v476, 16
      %v691 = vshll.u32 %v476, 16
      %v693 = vrot.slane %v691, 1
      %v694 = vor.u32 %v689, %v693
      %v696 = vshrl.u32 %v477, 16
      %v698 = vshll.u32 %v477, 16
      %v700 = vrot.slane %v698, 1
      %v701 = vor.u32 %v696, %v700
      %702 = vrot.lane.b32.xlu0 %v484, 4
      %v703 = vpop.permute.xlu0 %702
      %704 = vrot.lane.b32.xlu0 %v491, 4
      %v705 = vpop.permute.xlu0 %704
      %706 = vrot.lane.b32.xlu0 %v498, 4
      %v707 = vpop.permute.xlu0 %706
      %708 = vrot.lane.b32.xlu0 %v505, 4
      %v709 = vpop.permute.xlu0 %708
      %710 = vrot.lane.b32.xlu0 %v512, 4
      %v711 = vpop.permute.xlu0 %710
      %712 = vrot.lane.b32.xlu0 %v519, 4
      %v713 = vpop.permute.xlu0 %712
      %714 = vrot.lane.b32.xlu0 %v526, 4
      %v715 = vpop.permute.xlu0 %714
      %716 = vrot.lane.b32.xlu0 %v533, 4
      %v717 = vpop.permute.xlu0 %716
      %718 = vrot.lane.b32.xlu0 %v540, 4
      %v719 = vpop.permute.xlu0 %718
      %720 = vrot.lane.b32.xlu0 %v547, 4
      %v721 = vpop.permute.xlu0 %720
      %722 = vrot.lane.b32.xlu0 %v554, 4
      %v723 = vpop.permute.xlu0 %722
      %724 = vrot.lane.b32.xlu0 %v561, 4
      %v725 = vpop.permute.xlu0 %724
      %726 = vrot.lane.b32.xlu0 %v568, 4
      %v727 = vpop.permute.xlu0 %726
      %728 = vrot.lane.b32.xlu0 %v575, 4
      %v729 = vpop.permute.xlu0 %728
      %730 = vrot.lane.b32.xlu0 %v582, 4
      %v731 = vpop.permute.xlu0 %730
      %732 = vrot.lane.b32.xlu0 %v589, 4
      %v733 = vpop.permute.xlu0 %732
      %734 = vrot.lane.b32.xlu0 %v596, 4
      %v735 = vpop.permute.xlu0 %734
      %736 = vrot.lane.b32.xlu0 %v603, 4
      %v737 = vpop.permute.xlu0 %736
      %738 = vrot.lane.b32.xlu0 %v610, 4
      %v739 = vpop.permute.xlu0 %738
      %740 = vrot.lane.b32.xlu0 %v617, 4
      %v741 = vpop.permute.xlu0 %740
      %742 = vrot.lane.b32.xlu0 %v624, 4
      %v743 = vpop.permute.xlu0 %742
      %744 = vrot.lane.b32.xlu0 %v631, 4
      %v745 = vpop.permute.xlu0 %744
      %746 = vrot.lane.b32.xlu0 %v638, 4
      %v747 = vpop.permute.xlu0 %746
      %748 = vrot.lane.b32.xlu0 %v645, 4
      %v749 = vpop.permute.xlu0 %748
      %750 = vrot.lane.b32.xlu0 %v652, 4
      %v751 = vpop.permute.xlu0 %750
      %752 = vrot.lane.b32.xlu0 %v659, 4
      %v753 = vpop.permute.xlu0 %752
      %754 = vrot.lane.b32.xlu0 %v666, 4
      %v755 = vpop.permute.xlu0 %754
      %756 = vrot.lane.b32.xlu0 %v673, 4
      %v757 = vpop.permute.xlu0 %756
      %758 = vrot.lane.b32.xlu0 %v680, 4
      %v759 = vpop.permute.xlu0 %758
      %760 = vrot.lane.b32.xlu0 %v687, 4
      %v761 = vpop.permute.xlu0 %760
      %762 = vrot.lane.b32.xlu0 %v694, 4
      %v763 = vpop.permute.xlu0 %762
      %764 = vrot.lane.b32.xlu0 %v701, 4
      %v765 = vpop.permute.xlu0 %764
      %v766 = vrot.slane %v446, 1
      %v767 = vrot.slane %v447, 1
      %v768 = vrot.slane %v448, 1
      %v769 = vrot.slane %v449, 1
      %v770 = vrot.slane %v450, 1
      %v771 = vrot.slane %v451, 1
      %v772 = vrot.slane %v452, 1
      %v773 = vrot.slane %v453, 1
      %v774 = vrot.slane %v454, 1
      %v775 = vrot.slane %v455, 1
      %v776 = vrot.slane %v456, 1
      %v777 = vrot.slane %v457, 1
      %v778 = vrot.slane %v458, 1
      %v779 = vrot.slane %v459, 1
      %v780 = vrot.slane %v460, 1
      %v781 = vrot.slane %v461, 1
      %v782 = vrot.slane %v462, 1
      %v783 = vrot.slane %v463, 1
      %v784 = vrot.slane %v464, 1
      %v785 = vrot.slane %v465, 1
      %v786 = vrot.slane %v466, 1
      %v787 = vrot.slane %v467, 1
      %v788 = vrot.slane %v468, 1
      %v789 = vrot.slane %v469, 1
      %v790 = vrot.slane %v470, 1
      %v791 = vrot.slane %v471, 1
      %v792 = vrot.slane %v472, 1
      %v793 = vrot.slane %v473, 1
      %v794 = vrot.slane %v474, 1
      %v795 = vrot.slane %v475, 1
      %v796 = vrot.slane %v476, 1
      %v797 = vrot.slane %v477, 1
      %798 = vrot.lane.b32.xlu0 %v766, 8
      %v799 = vpop.permute.xlu0 %798
      %800 = vrot.lane.b32.xlu0 %v767, 8
      %v801 = vpop.permute.xlu0 %800
      %802 = vrot.lane.b32.xlu0 %v768, 8
      %v803 = vpop.permute.xlu0 %802
      %804 = vrot.lane.b32.xlu0 %v769, 8
      %v805 = vpop.permute.xlu0 %804
      %806 = vrot.lane.b32.xlu0 %v770, 8
      %v807 = vpop.permute.xlu0 %806
      %808 = vrot.lane.b32.xlu0 %v771, 8
      %v809 = vpop.permute.xlu0 %808
      %810 = vrot.lane.b32.xlu0 %v772, 8
      %v811 = vpop.permute.xlu0 %810
      %812 = vrot.lane.b32.xlu0 %v773, 8
      %v813 = vpop.permute.xlu0 %812
      %814 = vrot.lane.b32.xlu0 %v774, 8
      %v815 = vpop.permute.xlu0 %814
      %816 = vrot.lane.b32.xlu0 %v775, 8
      %v817 = vpop.permute.xlu0 %816
      %818 = vrot.lane.b32.xlu0 %v776, 8
      %v819 = vpop.permute.xlu0 %818
      %820 = vrot.lane.b32.xlu0 %v777, 8
      %v821 = vpop.permute.xlu0 %820
      %822 = vrot.lane.b32.xlu0 %v778, 8
      %v823 = vpop.permute.xlu0 %822
      %824 = vrot.lane.b32.xlu0 %v779, 8
      %v825 = vpop.permute.xlu0 %824
      %826 = vrot.lane.b32.xlu0 %v780, 8
      %v827 = vpop.permute.xlu0 %826
      %828 = vrot.lane.b32.xlu0 %v781, 8
      %v829 = vpop.permute.xlu0 %828
      %830 = vrot.lane.b32.xlu0 %v782, 8
      %v831 = vpop.permute.xlu0 %830
      %832 = vrot.lane.b32.xlu0 %v783, 8
      %v833 = vpop.permute.xlu0 %832
      %834 = vrot.lane.b32.xlu0 %v784, 8
      %v835 = vpop.permute.xlu0 %834
      %836 = vrot.lane.b32.xlu0 %v785, 8
      %v837 = vpop.permute.xlu0 %836
      %838 = vrot.lane.b32.xlu0 %v786, 8
      %v839 = vpop.permute.xlu0 %838
      %840 = vrot.lane.b32.xlu0 %v787, 8
      %v841 = vpop.permute.xlu0 %840
      %842 = vrot.lane.b32.xlu0 %v788, 8
      %v843 = vpop.permute.xlu0 %842
      %844 = vrot.lane.b32.xlu0 %v789, 8
      %v845 = vpop.permute.xlu0 %844
      %846 = vrot.lane.b32.xlu0 %v790, 8
      %v847 = vpop.permute.xlu0 %846
      %848 = vrot.lane.b32.xlu0 %v791, 8
      %v849 = vpop.permute.xlu0 %848
      %850 = vrot.lane.b32.xlu0 %v792, 8
      %v851 = vpop.permute.xlu0 %850
      %852 = vrot.lane.b32.xlu0 %v793, 8
      %v853 = vpop.permute.xlu0 %852
      %854 = vrot.lane.b32.xlu0 %v794, 8
      %v855 = vpop.permute.xlu0 %854
      %856 = vrot.lane.b32.xlu0 %v795, 8
      %v857 = vpop.permute.xlu0 %856
      %858 = vrot.lane.b32.xlu0 %v796, 8
      %v859 = vpop.permute.xlu0 %858
      %860 = vrot.lane.b32.xlu0 %v797, 8
      %v861 = vpop.permute.xlu0 %860
      %vm862 = vcmask 31744
      %v865 = vsel %vm862, %v198, %v703
      %v868 = vsel %vm862, %v200, %v705
      %v871 = vsel %vm862, %v202, %v707
      %v874 = vsel %vm862, %v204, %v709
      %v877 = vsel %vm862, %v206, %v711
      %v880 = vsel %vm862, %v208, %v713
      %v883 = vsel %vm862, %v210, %v715
      %v886 = vsel %vm862, %v212, %v717
      %v889 = vsel %vm862, %v218, %v719
      %v892 = vsel %vm862, %v220, %v721
      %v895 = vsel %vm862, %v222, %v723
      %v898 = vsel %vm862, %v224, %v725
      %v901 = vsel %vm862, %v226, %v727
      %v904 = vsel %vm862, %v228, %v729
      %v907 = vsel %vm862, %v230, %v731
      %v910 = vsel %vm862, %v232, %v733
      %v913 = vsel %vm862, %v238, %v735
      %v916 = vsel %vm862, %v240, %v737
      %v919 = vsel %vm862, %v242, %v739
      %v922 = vsel %vm862, %v244, %v741
      %v925 = vsel %vm862, %v246, %v743
      %v928 = vsel %vm862, %v248, %v745
      %v931 = vsel %vm862, %v250, %v747
      %v934 = vsel %vm862, %v252, %v749
      %v937 = vsel %vm862, %v258, %v751
      %v940 = vsel %vm862, %v260, %v753
      %v943 = vsel %vm862, %v262, %v755
      %v946 = vsel %vm862, %v264, %v757
      %v949 = vsel %vm862, %v266, %v759
      %v952 = vsel %vm862, %v268, %v761
      %v955 = vsel %vm862, %v270, %v763
      %v958 = vsel %vm862, %v272, %v765
      %vm959 = vcmask 64512
      %v961 = vsel %vm959, %v865, %v799
      %v963 = vsel %vm959, %v868, %v801
      %v965 = vsel %vm959, %v871, %v803
      %v967 = vsel %vm959, %v874, %v805
      %v969 = vsel %vm959, %v877, %v807
      %v971 = vsel %vm959, %v880, %v809
      %v973 = vsel %vm959, %v883, %v811
      %v975 = vsel %vm959, %v886, %v813
      %v977 = vsel %vm959, %v889, %v815
      %v979 = vsel %vm959, %v892, %v817
      %v981 = vsel %vm959, %v895, %v819
      %v983 = vsel %vm959, %v898, %v821
      %v985 = vsel %vm959, %v901, %v823
      %v987 = vsel %vm959, %v904, %v825
      %v989 = vsel %vm959, %v907, %v827
      %v991 = vsel %vm959, %v910, %v829
      %v993 = vsel %vm959, %v913, %v831
      %v995 = vsel %vm959, %v916, %v833
      %v997 = vsel %vm959, %v919, %v835
      %v999 = vsel %vm959, %v922, %v837
      %v1001 = vsel %vm959, %v925, %v839
      %v1003 = vsel %vm959, %v928, %v841
      %v1005 = vsel %vm959, %v931, %v843
      %v1007 = vsel %vm959, %v934, %v845
      %v1009 = vsel %vm959, %v937, %v847
      %v1011 = vsel %vm959, %v940, %v849
      %v1013 = vsel %vm959, %v943, %v851
      %v1015 = vsel %vm959, %v946, %v853
      %v1017 = vsel %vm959, %v949, %v855
      %v1019 = vsel %vm959, %v952, %v857
      %v1021 = vsel %vm959, %v955, %v859
      %v1023 = vsel %vm959, %v958, %v861
      %v1024 = vld [vmem:[%s1] sm:$0xf]
      %v1025 = vld [vmem:[%s1 + $0x4] sm:$0x3]
      %v1034 = vunpack.c.l.b16 %v214
      %v1035 = vunpack.c.l.b16 %v215
      %v1036 = vunpack.c.l.b16 %v234
      %v1037 = vunpack.c.l.b16 %v235
      %v1038 = vunpack.c.l.b16 %v254
      %v1039 = vunpack.c.l.b16 %v255
      %v1040 = vunpack.c.l.b16 %v274
      %v1041 = vunpack.c.l.b16 %v275
      %v1042 = vpack.c.b16 %v1035, %v1034
      %v1043 = vpack.c.b16 %v1037, %v1036
      %v1044 = vpack.c.b16 %v1039, %v1038
      %v1045 = vpack.c.b16 %v1041, %v1040
      %v1047 = vshrl.u32 %v1042, 16
      %v1049 = vshll.u32 %v1042, 16
      %v1051 = vrot.slane %v1049, 1
      %v1052 = vor.u32 %v1047, %v1051
      %v1054 = vshrl.u32 %v1043, 16
      %v1056 = vshll.u32 %v1043, 16
      %v1058 = vrot.slane %v1056, 1
      %v1059 = vor.u32 %v1054, %v1058
      %v1061 = vshrl.u32 %v1044, 16
      %v1063 = vshll.u32 %v1044, 16
      %v1065 = vrot.slane %v1063, 1
      %v1066 = vor.u32 %v1061, %v1065
      %v1068 = vshrl.u32 %v1045, 16
      %v1070 = vshll.u32 %v1045, 16
      %v1072 = vrot.slane %v1070, 1
      %v1073 = vor.u32 %v1068, %v1072
      %1074 = vrot.lane.b32.xlu0 %v1052, 4
      %v1075 = vpop.permute.xlu0 %1074
      %1076 = vrot.lane.b32.xlu0 %v1059, 4
      %v1077 = vpop.permute.xlu0 %1076
      %1078 = vrot.lane.b32.xlu0 %v1066, 4
      %v1079 = vpop.permute.xlu0 %1078
      %1080 = vrot.lane.b32.xlu0 %v1073, 4
      %v1081 = vpop.permute.xlu0 %1080
      %v1082 = vrot.slane %v1042, 1
      %v1083 = vrot.slane %v1043, 1
      %v1084 = vrot.slane %v1044, 1
      %v1085 = vrot.slane %v1045, 1
      %1086 = vrot.lane.b32.xlu0 %v1082, 8
      %v1087 = vpop.permute.xlu0 %1086
      %1088 = vrot.lane.b32.xlu0 %v1083, 8
      %v1089 = vpop.permute.xlu0 %1088
      %1090 = vrot.lane.b32.xlu0 %v1084, 8
      %v1091 = vpop.permute.xlu0 %1090
      %1092 = vrot.lane.b32.xlu0 %v1085, 8
      %v1093 = vpop.permute.xlu0 %1092
      %v1096 = vsel %vm862, %v214, %v1075
      %v1099 = vsel %vm862, %v234, %v1077
      %v1102 = vsel %vm862, %v254, %v1079
      %v1105 = vsel %vm862, %v274, %v1081
      %v1107 = vsel %vm959, %v1096, %v1087
      %v1109 = vsel %vm959, %v1099, %v1089
      %v1111 = vsel %vm959, %v1102, %v1091
      %v1113 = vsel %vm959, %v1105, %v1093
      %s1114 = scalar_lea.vmem %s1, 8
      %v1115 = vld [vmem:[%s1114] sm:$0xf]
      %v1116 = vld [vmem:[%s1114 + $0x4] sm:$0x3]
      %v1149 = vunpack.c.l.b16 %v963
      %v1150 = vunpack.c.l.b16 %v965
      %v1151 = vunpack.c.l.b16 %v967
      %v1152 = vunpack.c.l.b16 %v969
      %v1153 = vunpack.c.l.b16 %v971
      %v1154 = vunpack.c.l.b16 %v973
      %v1155 = vunpack.c.l.b16 %v975
      %v1156 = vunpack.c.l.b16 %v1107
      %v1157 = vunpack.c.l.b16 %v979
      %v1158 = vunpack.c.l.b16 %v981
      %v1159 = vunpack.c.l.b16 %v983
      %v1160 = vunpack.c.l.b16 %v985
      %v1161 = vunpack.c.l.b16 %v987
      %v1162 = vunpack.c.l.b16 %v989
      %v1163 = vunpack.c.l.b16 %v991
      %v1164 = vunpack.c.l.b16 %v1109
      %v1165 = vunpack.c.l.b16 %v995
      %v1166 = vunpack.c.l.b16 %v997
      %v1167 = vunpack.c.l.b16 %v999
      %v1168 = vunpack.c.l.b16 %v1001
      %v1169 = vunpack.c.l.b16 %v1003
      %v1170 = vunpack.c.l.b16 %v1005
      %v1171 = vunpack.c.l.b16 %v1007
      %v1172 = vunpack.c.l.b16 %v1111
      %v1173 = vunpack.c.l.b16 %v1011
      %v1174 = vunpack.c.l.b16 %v1013
      %v1175 = vunpack.c.l.b16 %v1015
      %v1176 = vunpack.c.l.b16 %v1017
      %v1177 = vunpack.c.l.b16 %v1019
      %v1178 = vunpack.c.l.b16 %v1021
      %v1179 = vunpack.c.l.b16 %v1023
      %v1180 = vunpack.c.l.b16 %v1113
      %v1181 = vpack.c.b16 %v1150, %v1149
      %v1182 = vpack.c.b16 %v1152, %v1151
      %v1183 = vpack.c.b16 %v1154, %v1153
      %v1184 = vpack.c.b16 %v1156, %v1155
      %v1185 = vpack.c.b16 %v1158, %v1157
      %v1186 = vpack.c.b16 %v1160, %v1159
      %v1187 = vpack.c.b16 %v1162, %v1161
      %v1188 = vpack.c.b16 %v1164, %v1163
      %v1189 = vpack.c.b16 %v1166, %v1165
      %v1190 = vpack.c.b16 %v1168, %v1167
      %v1191 = vpack.c.b16 %v1170, %v1169
      %v1192 = vpack.c.b16 %v1172, %v1171
      %v1193 = vpack.c.b16 %v1174, %v1173
      %v1194 = vpack.c.b16 %v1176, %v1175
      %v1195 = vpack.c.b16 %v1178, %v1177
      %v1196 = vpack.c.b16 %v1180, %v1179
      %v1199 = vunpack.c.l.b16 %v1115
      %v1200 = vunpack.c.l.b16 %v1116
      %v1201 = vpack.c.b16 %v1200, %v1199
      %vm1202 = vcmask 97280
      %v1204 = vsel %vm1202, %v1181, 0
      %v1207 = vsel %vm1202, %v1182, 0
      %v1210 = vsel %vm1202, %v1183, 0
      %v1213 = vsel %vm1202, %v1184, 0
      %v1216 = vsel %vm1202, %v1185, 0
      %v1219 = vsel %vm1202, %v1186, 0
      %v1222 = vsel %vm1202, %v1187, 0
      %v1225 = vsel %vm1202, %v1188, 0
      %v1228 = vsel %vm1202, %v1189, 0
      %v1231 = vsel %vm1202, %v1190, 0
      %v1234 = vsel %vm1202, %v1191, 0
      %v1237 = vsel %vm1202, %v1192, 0
      %v1240 = vsel %vm1202, %v1193, 0
      %v1243 = vsel %vm1202, %v1194, 0
      %v1246 = vsel %vm1202, %v1195, 0
      %v1249 = vsel %vm1202, %v1196, 0
      %vm1251 = vcmask 1045504
      %v1253 = vsel %vm1251, %v1201, 0
      %1255 = vmatprep.subr.bf16.mxu0 0
      %1256 = vmatpush1.bf16.msra.mxu0 %v1253
      %1257 = vmatprep.subr.bf16.mxu0 0
      %1258 = vmatpush1.bf16.msra.mxu0 0
      %1259 = vmatprep.subr.bf16.mxu0 0
      %1260 = vmatpush1.bf16.msra.mxu0 0
      %1261 = vmatprep.subr.bf16.mxu0 0
      %1262 = vmatpush1.bf16.msra.mxu0 0
      %1263 = vmatprep.subr.bf16.mxu0 0
      %1264 = vmatpush1.bf16.msra.mxu0 0
      %1265 = vmatprep.subr.bf16.mxu0 0
      %1266 = vmatpush1.bf16.msra.mxu0 0
      %1267 = vmatprep.subr.bf16.mxu0 0
      %1268 = vmatpush1.bf16.msra.mxu0 0
      %1269 = vmatprep.subr.bf16.mxu0 0
      %1270 = vmatpush1.bf16.msra.mxu0 0
      %1271 = vmatprep.subr.bf16.mxu0 0
      %1272 = vmatpush1.bf16.msra.mxu0 0
      %1273 = vmatprep.subr.bf16.mxu0 0
      %1274 = vmatpush1.bf16.msra.mxu0 0
      %1275 = vmatprep.subr.bf16.mxu0 0
      %1276 = vmatpush1.bf16.msra.mxu0 0
      %1277 = vmatprep.subr.bf16.mxu0 0
      %1278 = vmatpush1.bf16.msra.mxu0 0
      %1279 = vmatprep.subr.bf16.mxu0 0
      %1280 = vmatpush1.bf16.msra.mxu0 0
      %1281 = vmatprep.subr.bf16.mxu0 0
      %1282 = vmatpush1.bf16.msra.mxu0 0
      %1283 = vmatprep.subr.bf16.mxu0 0
      %1284 = vmatpush1.bf16.msra.mxu0 0
      %1285 = vmatprep.subr.bf16.mxu0 0
      %1286 = vmatpush1.bf16.msra.mxu0 0
      %1287 = vmatprep.mubr.bf16.mxu0 0
      %1288 = vmatmul.mubr.bf16.gmra.mrb[0].mxu0 %v1204
      %v1289 = vpop.f32.mrb[0].mxu0
      %v1290 = vadd.f32 0.0, %v1289
      %v1291 = vpop.f32.mrb[0].mxu0
      %v1292 = vpop.f32.mrb[0].mxu0
      %v1293 = vadd.f32 0.0, %v1292
      %v1294 = vpop.f32.mrb[0].mxu0
      %1295 = vmatprep.mubr.bf16.mxu0 0
      %1296 = vmatmul.mubr.bf16.gmra.mrb[0].mxu0 %v1207
      %v1297 = vpop.f32.mrb[0].mxu0
      %v1298 = vadd.f32 0.0, %v1297
      %v1299 = vpop.f32.mrb[0].mxu0
      %v1300 = vpop.f32.mrb[0].mxu0
      %v1301 = vadd.f32 0.0, %v1300
      %v1302 = vpop.f32.mrb[0].mxu0
      %1303 = vmatprep.mubr.bf16.mxu0 0
      %1304 = vmatmul.mubr.bf16.gmra.mrb[0].mxu0 %v1210
      %v1305 = vpop.f32.mrb[0].mxu0
      %v1306 = vadd.f32 0.0, %v1305
      %v1307 = vpop.f32.mrb[0].mxu0
      %v1308 = vpop.f32.mrb[0].mxu0
      %v1309 = vadd.f32 0.0, %v1308
      %v1310 = vpop.f32.mrb[0].mxu0
      %1311 = vmatprep.mubr.bf16.mxu0 0
      %1312 = vmatmul.mubr.bf16.gmra.mrb[0].mxu0 %v1213
      %v1313 = vpop.f32.mrb[0].mxu0
      %v1314 = vadd.f32 0.0, %v1313
      %v1315 = vpop.f32.mrb[0].mxu0
      %v1316 = vpop.f32.mrb[0].mxu0
      %v1317 = vadd.f32 0.0, %v1316
      %v1318 = vpop.f32.mrb[0].mxu0
      %1319 = vmatprep.mubr.bf16.mxu0 0
      %1320 = vmatmul.mubr.bf16.gmra.mrb[0].mxu0 %v1216
      %v1321 = vpop.f32.mrb[0].mxu0
      %v1322 = vadd.f32 0.0, %v1321
      %v1323 = vpop.f32.mrb[0].mxu0
      %v1324 = vpop.f32.mrb[0].mxu0
      %v1325 = vadd.f32 0.0, %v1324
      %v1326 = vpop.f32.mrb[0].mxu0
      %1327 = vmatprep.mubr.bf16.mxu0 0
      %1328 = vmatmul.mubr.bf16.gmra.mrb[0].mxu0 %v1219
      %v1329 = vpop.f32.mrb[0].mxu0
      %v1330 = vadd.f32 0.0, %v1329
      %v1331 = vpop.f32.mrb[0].mxu0
      %v1332 = vpop.f32.mrb[0].mxu0
      %v1333 = vadd.f32 0.0, %v1332
      %v1334 = vpop.f32.mrb[0].mxu0
      %1335 = vmatprep.mubr.bf16.mxu0 0
      %1336 = vmatmul.mubr.bf16.gmra.mrb[0].mxu0 %v1222
      %v1337 = vpop.f32.mrb[0].mxu0
      %v1338 = vadd.f32 0.0, %v1337
      %v1339 = vpop.f32.mrb[0].mxu0
      %v1340 = vpop.f32.mrb[0].mxu0
      %v1341 = vadd.f32 0.0, %v1340
      %v1342 = vpop.f32.mrb[0].mxu0
      %1343 = vmatprep.mubr.bf16.mxu0 0
      %1344 = vmatmul.mubr.bf16.gmra.mrb[0].mxu0 %v1225
      %v1345 = vpop.f32.mrb[0].mxu0
      %v1346 = vadd.f32 0.0, %v1345
      %v1347 = vpop.f32.mrb[0].mxu0
      %v1348 = vpop.f32.mrb[0].mxu0
      %v1349 = vadd.f32 0.0, %v1348
      %v1350 = vpop.f32.mrb[0].mxu0
      %1351 = vmatprep.mubr.bf16.mxu0 0
      %1352 = vmatmul.mubr.bf16.gmra.mrb[0].mxu0 %v1228
      %v1353 = vpop.f32.mrb[0].mxu0
      %v1354 = vadd.f32 0.0, %v1353
      %v1355 = vpop.f32.mrb[0].mxu0
      %v1356 = vpop.f32.mrb[0].mxu0
      %v1357 = vadd.f32 0.0, %v1356
      %v1358 = vpop.f32.mrb[0].mxu0
      %1359 = vmatprep.mubr.bf16.mxu0 0
      %1360 = vmatmul.mubr.bf16.gmra.mrb[0].mxu0 %v1231
      %v1361 = vpop.f32.mrb[0].mxu0
      %v1362 = vadd.f32 0.0, %v1361
      %v1363 = vpop.f32.mrb[0].mxu0
      %v1364 = vpop.f32.mrb[0].mxu0
      %v1365 = vadd.f32 0.0, %v1364
      %v1366 = vpop.f32.mrb[0].mxu0
      %1367 = vmatprep.mubr.bf16.mxu0 0
      %1368 = vmatmul.mubr.bf16.gmra.mrb[0].mxu0 %v1234
      %v1369 = vpop.f32.mrb[0].mxu0
      %v1370 = vadd.f32 0.0, %v1369
      %v1371 = vpop.f32.mrb[0].mxu0
      %v1372 = vpop.f32.mrb[0].mxu0
      %v1373 = vadd.f32 0.0, %v1372
      %v1374 = vpop.f32.mrb[0].mxu0
      %1375 = vmatprep.mubr.bf16.mxu0 0
      %1376 = vmatmul.mubr.bf16.gmra.mrb[0].mxu0 %v1237
      %v1377 = vpop.f32.mrb[0].mxu0
      %v1378 = vadd.f32 0.0, %v1377
      %v1379 = vpop.f32.mrb[0].mxu0
      %v1380 = vpop.f32.mrb[0].mxu0
      %v1381 = vadd.f32 0.0, %v1380
      %v1382 = vpop.f32.mrb[0].mxu0
      %1383 = vmatprep.mubr.bf16.mxu0 0
      %1384 = vmatmul.mubr.bf16.gmra.mrb[0].mxu0 %v1240
      %v1385 = vpop.f32.mrb[0].mxu0
      %v1386 = vadd.f32 0.0, %v1385
      %v1387 = vpop.f32.mrb[0].mxu0
      %v1388 = vpop.f32.mrb[0].mxu0
      %v1389 = vadd.f32 0.0, %v1388
      %v1390 = vpop.f32.mrb[0].mxu0
      %1391 = vmatprep.mubr.bf16.mxu0 0
      %1392 = vmatmul.mubr.bf16.gmra.mrb[0].mxu0 %v1243
      %v1393 = vpop.f32.mrb[0].mxu0
      %v1394 = vadd.f32 0.0, %v1393
      %v1395 = vpop.f32.mrb[0].mxu0
      %v1396 = vpop.f32.mrb[0].mxu0
      %v1397 = vadd.f32 0.0, %v1396
      %v1398 = vpop.f32.mrb[0].mxu0
      %1399 = vmatprep.mubr.bf16.mxu0 0
      %1400 = vmatmul.mubr.bf16.gmra.mrb[0].mxu0 %v1246
      %v1401 = vpop.f32.mrb[0].mxu0
      %v1402 = vadd.f32 0.0, %v1401
      %v1403 = vpop.f32.mrb[0].mxu0
      %v1404 = vpop.f32.mrb[0].mxu0
      %v1405 = vadd.f32 0.0, %v1404
      %v1406 = vpop.f32.mrb[0].mxu0
      %1407 = vmatprep.mubr.bf16.mxu0 0
      %1408 = vmatmul.mubr.bf16.gmra.mrb[0].mxu0 %v1249
      %v1409 = vpop.f32.mrb[0].mxu0
      %v1410 = vadd.f32 0.0, %v1409
      %v1411 = vpop.f32.mrb[0].mxu0
      %v1412 = vpop.f32.mrb[0].mxu0
      %v1413 = vadd.f32 0.0, %v1412
      %v1414 = vpop.f32.mrb[0].mxu0
      %1415 = vdwg.mxu0
      %v1420 = vunpack.c.l.b16 %v961
      %v1421 = vunpack.c.l.b16 %v977
      %v1422 = vunpack.c.l.b16 %v993
      %v1423 = vunpack.c.l.b16 %v1009
      %v1424 = vpack.c.b16 %v1149, %v1420
      %v1425 = vpack.c.b16 %v1151, %v1150
      %v1426 = vpack.c.b16 %v1153, %v1152
      %v1427 = vpack.c.b16 %v1155, %v1154
      %v1428 = vpack.c.b16 %v1157, %v1421
      %v1429 = vpack.c.b16 %v1159, %v1158
      %v1430 = vpack.c.b16 %v1161, %v1160
      %v1431 = vpack.c.b16 %v1163, %v1162
      %v1432 = vpack.c.b16 %v1165, %v1422
      %v1433 = vpack.c.b16 %v1167, %v1166
      %v1434 = vpack.c.b16 %v1169, %v1168
      %v1435 = vpack.c.b16 %v1171, %v1170
      %v1436 = vpack.c.b16 %v1173, %v1423
      %v1437 = vpack.c.b16 %v1175, %v1174
      %v1438 = vpack.c.b16 %v1177, %v1176
      %v1439 = vpack.c.b16 %v1179, %v1178
      %v1442 = vunpack.c.l.b16 %v1024
      %v1443 = vunpack.c.l.b16 %v1025
      %v1444 = vpack.c.b16 %v1443, %v1442
      %v1446 = vsel %vm1202, %v1424, 0
      %v1449 = vsel %vm1202, %v1425, 0
      %v1452 = vsel %vm1202, %v1426, 0
      %v1455 = vsel %vm1202, %v1427, 0
      %v1458 = vsel %vm1202, %v1428, 0
      %v1461 = vsel %vm1202, %v1429, 0
      %v1464 = vsel %vm1202, %v1430, 0
      %v1467 = vsel %vm1202, %v1431, 0
      %v1470 = vsel %vm1202, %v1432, 0
      %v1473 = vsel %vm1202, %v1433, 0
      %v1476 = vsel %vm1202, %v1434, 0
      %v1479 = vsel %vm1202, %v1435, 0
      %v1482 = vsel %vm1202, %v1436, 0
      %v1485 = vsel %vm1202, %v1437, 0
      %v1488 = vsel %vm1202, %v1438, 0
      %v1491 = vsel %vm1202, %v1439, 0
      %v1494 = vsel %vm1251, %v1444, 0
      %1496 = vmatprep.subr.bf16.mxu0 0
      %1497 = vmatpush1.bf16.msra.mxu0 %v1494
      %1498 = vmatprep.subr.bf16.mxu0 0
      %1499 = vmatpush1.bf16.msra.mxu0 0
      %1500 = vmatprep.subr.bf16.mxu0 0
      %1501 = vmatpush1.bf16.msra.mxu0 0
      %1502 = vmatprep.subr.bf16.mxu0 0
      %1503 = vmatpush1.bf16.msra.mxu0 0
      %1504 = vmatprep.subr.bf16.mxu0 0
      %1505 = vmatpush1.bf16.msra.mxu0 0
      %1506 = vmatprep.subr.bf16.mxu0 0
      %1507 = vmatpush1.bf16.msra.mxu0 0
      %1508 = vmatprep.subr.bf16.mxu0 0
      %1509 = vmatpush1.bf16.msra.mxu0 0
      %1510 = vmatprep.subr.bf16.mxu0 0
      %1511 = vmatpush1.bf16.msra.mxu0 0
      %1512 = vmatprep.subr.bf16.mxu0 0
      %1513 = vmatpush1.bf16.msra.mxu0 0
      %1514 = vmatprep.subr.bf16.mxu0 0
      %1515 = vmatpush1.bf16.msra.mxu0 0
      %1516 = vmatprep.subr.bf16.mxu0 0
      %1517 = vmatpush1.bf16.msra.mxu0 0
      %1518 = vmatprep.subr.bf16.mxu0 0
      %1519 = vmatpush1.bf16.msra.mxu0 0
      %1520 = vmatprep.subr.bf16.mxu0 0
      %1521 = vmatpush1.bf16.msra.mxu0 0
      %1522 = vmatprep.subr.bf16.mxu0 0
      %1523 = vmatpush1.bf16.msra.mxu0 0
      %1524 = vmatprep.subr.bf16.mxu0 0
      %1525 = vmatpush1.bf16.msra.mxu0 0
      %1526 = vmatprep.subr.bf16.mxu0 0
      %1527 = vmatpush1.bf16.msra.mxu0 0
      %1528 = vmatprep.mubr.bf16.mxu0 0
      %1529 = vmatmul.mubr.bf16.gmra.mrb[0].mxu0 %v1446
      %v1530 = vpop.f32.mrb[0].mxu0
      %v1531 = vadd.f32 %v1290, %v1530
      %v1532 = vpop.f32.mrb[0].mxu0
      %v1533 = vpop.f32.mrb[0].mxu0
      %v1534 = vadd.f32 %v1293, %v1533
      %v1535 = vpop.f32.mrb[0].mxu0
      %1536 = vmatprep.mubr.bf16.mxu0 0
      %1537 = vmatmul.mubr.bf16.gmra.mrb[0].mxu0 %v1449
      %v1538 = vpop.f32.mrb[0].mxu0
      %v1539 = vadd.f32 %v1298, %v1538
      %v1540 = vpop.f32.mrb[0].mxu0
      %v1541 = vpop.f32.mrb[0].mxu0
      %v1542 = vadd.f32 %v1301, %v1541
      %v1543 = vpop.f32.mrb[0].mxu0
      %1544 = vmatprep.mubr.bf16.mxu0 0
      %1545 = vmatmul.mubr.bf16.gmra.mrb[0].mxu0 %v1452
      %v1546 = vpop.f32.mrb[0].mxu0
      %v1547 = vadd.f32 %v1306, %v1546
      %v1548 = vpop.f32.mrb[0].mxu0
      %v1549 = vpop.f32.mrb[0].mxu0
      %v1550 = vadd.f32 %v1309, %v1549
      %v1551 = vpop.f32.mrb[0].mxu0
      %1552 = vmatprep.mubr.bf16.mxu0 0
      %1553 = vmatmul.mubr.bf16.gmra.mrb[0].mxu0 %v1455
      %v1554 = vpop.f32.mrb[0].mxu0
      %v1555 = vadd.f32 %v1314, %v1554
      %v1556 = vpop.f32.mrb[0].mxu0
      %v1557 = vpop.f32.mrb[0].mxu0
      %v1558 = vadd.f32 %v1317, %v1557
      %v1559 = vpop.f32.mrb[0].mxu0
      %1560 = vmatprep.mubr.bf16.mxu0 0
      %1561 = vmatmul.mubr.bf16.gmra.mrb[0].mxu0 %v1458
      %v1562 = vpop.f32.mrb[0].mxu0
      %v1563 = vadd.f32 %v1322, %v1562
      %v1564 = vpop.f32.mrb[0].mxu0
      %v1565 = vpop.f32.mrb[0].mxu0
      %v1566 = vadd.f32 %v1325, %v1565
      %v1567 = vpop.f32.mrb[0].mxu0
      %1568 = vmatprep.mubr.bf16.mxu0 0
      %1569 = vmatmul.mubr.bf16.gmra.mrb[0].mxu0 %v1461
      %v1570 = vpop.f32.mrb[0].mxu0
      %v1571 = vadd.f32 %v1330, %v1570
      %v1572 = vpop.f32.mrb[0].mxu0
      %v1573 = vpop.f32.mrb[0].mxu0
      %v1574 = vadd.f32 %v1333, %v1573
      %v1575 = vpop.f32.mrb[0].mxu0
      %1576 = vmatprep.mubr.bf16.mxu0 0
      %1577 = vmatmul.mubr.bf16.gmra.mrb[0].mxu0 %v1464
      %v1578 = vpop.f32.mrb[0].mxu0
      %v1579 = vadd.f32 %v1338, %v1578
      %v1580 = vpop.f32.mrb[0].mxu0
      %v1581 = vpop.f32.mrb[0].mxu0
      %v1582 = vadd.f32 %v1341, %v1581
      %v1583 = vpop.f32.mrb[0].mxu0
      %1584 = vmatprep.mubr.bf16.mxu0 0
      %1585 = vmatmul.mubr.bf16.gmra.mrb[0].mxu0 %v1467
      %v1586 = vpop.f32.mrb[0].mxu0
      %v1587 = vadd.f32 %v1346, %v1586
      %v1588 = vpop.f32.mrb[0].mxu0
      %v1589 = vpop.f32.mrb[0].mxu0
      %v1590 = vadd.f32 %v1349, %v1589
      %v1591 = vpop.f32.mrb[0].mxu0
      %1592 = vmatprep.mubr.bf16.mxu0 0
      %1593 = vmatmul.mubr.bf16.gmra.mrb[0].mxu0 %v1470
      %v1594 = vpop.f32.mrb[0].mxu0
      %v1595 = vadd.f32 %v1354, %v1594
      %v1596 = vpop.f32.mrb[0].mxu0
      %v1597 = vpop.f32.mrb[0].mxu0
      %v1598 = vadd.f32 %v1357, %v1597
      %v1599 = vpop.f32.mrb[0].mxu0
      %1600 = vmatprep.mubr.bf16.mxu0 0
      %1601 = vmatmul.mubr.bf16.gmra.mrb[0].mxu0 %v1473
      %v1602 = vpop.f32.mrb[0].mxu0
      %v1603 = vadd.f32 %v1362, %v1602
      %v1604 = vpop.f32.mrb[0].mxu0
      %v1605 = vpop.f32.mrb[0].mxu0
      %v1606 = vadd.f32 %v1365, %v1605
      %v1607 = vpop.f32.mrb[0].mxu0
      %1608 = vmatprep.mubr.bf16.mxu0 0
      %1609 = vmatmul.mubr.bf16.gmra.mrb[0].mxu0 %v1476
      %v1610 = vpop.f32.mrb[0].mxu0
      %v1611 = vadd.f32 %v1370, %v1610
      %v1612 = vpop.f32.mrb[0].mxu0
      %v1613 = vpop.f32.mrb[0].mxu0
      %v1614 = vadd.f32 %v1373, %v1613
      %v1615 = vpop.f32.mrb[0].mxu0
      %1616 = vmatprep.mubr.bf16.mxu0 0
      %1617 = vmatmul.mubr.bf16.gmra.mrb[0].mxu0 %v1479
      %v1618 = vpop.f32.mrb[0].mxu0
      %v1619 = vadd.f32 %v1378, %v1618
      %v1620 = vpop.f32.mrb[0].mxu0
      %v1621 = vpop.f32.mrb[0].mxu0
      %v1622 = vadd.f32 %v1381, %v1621
      %v1623 = vpop.f32.mrb[0].mxu0
      %1624 = vmatprep.mubr.bf16.mxu0 0
      %1625 = vmatmul.mubr.bf16.gmra.mrb[0].mxu0 %v1482
      %v1626 = vpop.f32.mrb[0].mxu0
      %v1627 = vadd.f32 %v1386, %v1626
      %v1628 = vpop.f32.mrb[0].mxu0
      %v1629 = vpop.f32.mrb[0].mxu0
      %v1630 = vadd.f32 %v1389, %v1629
      %v1631 = vpop.f32.mrb[0].mxu0
      %1632 = vmatprep.mubr.bf16.mxu0 0
      %1633 = vmatmul.mubr.bf16.gmra.mrb[0].mxu0 %v1485
      %v1634 = vpop.f32.mrb[0].mxu0
      %v1635 = vadd.f32 %v1394, %v1634
      %v1636 = vpop.f32.mrb[0].mxu0
      %v1637 = vpop.f32.mrb[0].mxu0
      %v1638 = vadd.f32 %v1397, %v1637
      %v1639 = vpop.f32.mrb[0].mxu0
      %1640 = vmatprep.mubr.bf16.mxu0 0
      %1641 = vmatmul.mubr.bf16.gmra.mrb[0].mxu0 %v1488
      %v1642 = vpop.f32.mrb[0].mxu0
      %v1643 = vadd.f32 %v1402, %v1642
      %v1644 = vpop.f32.mrb[0].mxu0
      %v1645 = vpop.f32.mrb[0].mxu0
      %v1646 = vadd.f32 %v1405, %v1645
      %v1647 = vpop.f32.mrb[0].mxu0
      %1648 = vmatprep.mubr.bf16.mxu0 0
      %1649 = vmatmul.mubr.bf16.gmra.mrb[0].mxu0 %v1491
      %v1650 = vpop.f32.mrb[0].mxu0
      %v1651 = vadd.f32 %v1410, %v1650
      %v1652 = vpop.f32.mrb[0].mxu0
      %v1653 = vpop.f32.mrb[0].mxu0
      %v1654 = vadd.f32 %v1413, %v1653
      %v1655 = vpop.f32.mrb[0].mxu0
      %1656 = vdwg.mxu0
      %v1665 = vunpack.c.l.b16 %v216
      %v1666 = vunpack.c.l.b16 %v217
      %v1667 = vunpack.c.l.b16 %v236
      %v1668 = vunpack.c.l.b16 %v237
      %v1669 = vunpack.c.l.b16 %v256
      %v1670 = vunpack.c.l.b16 %v257
      %v1671 = vunpack.c.l.b16 %v276
      %v1672 = vunpack.c.l.b16 %v277
      %v1673 = vpack.c.b16 %v1666, %v1665
      %v1674 = vpack.c.b16 %v1668, %v1667
      %v1675 = vpack.c.b16 %v1670, %v1669
      %v1676 = vpack.c.b16 %v1672, %v1671
      %v1678 = vshrl.u32 %v1673, 16
      %v1680 = vshll.u32 %v1673, 16
      %v1682 = vrot.slane %v1680, 1
      %v1683 = vor.u32 %v1678, %v1682
      %v1685 = vshrl.u32 %v1674, 16
      %v1687 = vshll.u32 %v1674, 16
      %v1689 = vrot.slane %v1687, 1
      %v1690 = vor.u32 %v1685, %v1689
      %v1692 = vshrl.u32 %v1675, 16
      %v1694 = vshll.u32 %v1675, 16
      %v1696 = vrot.slane %v1694, 1
      %v1697 = vor.u32 %v1692, %v1696
      %v1699 = vshrl.u32 %v1676, 16
      %v1701 = vshll.u32 %v1676, 16
      %v1703 = vrot.slane %v1701, 1
      %v1704 = vor.u32 %v1699, %v1703
      %1705 = vrot.lane.b32.xlu0 %v1683, 4
      %v1706 = vpop.permute.xlu0 %1705
      %1707 = vrot.lane.b32.xlu0 %v1690, 4
      %v1708 = vpop.permute.xlu0 %1707
      %1709 = vrot.lane.b32.xlu0 %v1697, 4
      %v1710 = vpop.permute.xlu0 %1709
      %1711 = vrot.lane.b32.xlu0 %v1704, 4
      %v1712 = vpop.permute.xlu0 %1711
      %v1713 = vrot.slane %v1673, 1
      %v1714 = vrot.slane %v1674, 1
      %v1715 = vrot.slane %v1675, 1
      %v1716 = vrot.slane %v1676, 1
      %1717 = vrot.lane.b32.xlu0 %v1713, 8
      %v1718 = vpop.permute.xlu0 %1717
      %1719 = vrot.lane.b32.xlu0 %v1714, 8
      %v1720 = vpop.permute.xlu0 %1719
      %1721 = vrot.lane.b32.xlu0 %v1715, 8
      %v1722 = vpop.permute.xlu0 %1721
      %1723 = vrot.lane.b32.xlu0 %v1716, 8
      %v1724 = vpop.permute.xlu0 %1723
      %v1727 = vsel %vm862, %v216, %v1706
      %v1730 = vsel %vm862, %v236, %v1708
      %v1733 = vsel %vm862, %v256, %v1710
      %v1736 = vsel %vm862, %v276, %v1712
      %v1738 = vsel %vm959, %v1727, %v1718
      %v1740 = vsel %vm959, %v1730, %v1720
      %v1742 = vsel %vm959, %v1733, %v1722
      %v1744 = vsel %vm959, %v1736, %v1724
      %s1745 = scalar_lea.vmem %s1, 16
      %v1746 = vld [vmem:[%s1745] sm:$0xf]
      %v1747 = vld [vmem:[%s1745 + $0x4] sm:$0x3]
      %v1752 = vunpack.c.l.b16 %v1738
      %v1753 = vunpack.c.l.b16 %v1740
      %v1754 = vunpack.c.l.b16 %v1742
      %v1755 = vunpack.c.l.b16 %v1744
      %v1756 = vpack.c.b16 %v1752, %v1156
      %v1757 = vpack.c.b16 %v1753, %v1164
      %v1758 = vpack.c.b16 %v1754, %v1172
      %v1759 = vpack.c.b16 %v1755, %v1180
      %v1762 = vunpack.c.l.b16 %v1746
      %v1763 = vunpack.c.l.b16 %v1747
      %v1764 = vpack.c.b16 %v1763, %v1762
      %v1766 = vsel %vm1202, %v1756, 0
      %v1769 = vsel %vm1202, %v1757, 0
      %v1772 = vsel %vm1202, %v1758, 0
      %v1775 = vsel %vm1202, %v1759, 0
      %v1778 = vsel %vm1251, %v1764, 0
      %1780 = vmatprep.subr.bf16.mxu0 0
      %1781 = vmatpush1.bf16.msra.mxu0 %v1778
      %1782 = vmatprep.subr.bf16.mxu0 0
      %1783 = vmatpush1.bf16.msra.mxu0 0
      %1784 = vmatprep.subr.bf16.mxu0 0
      %1785 = vmatpush1.bf16.msra.mxu0 0
      %1786 = vmatprep.subr.bf16.mxu0 0
      %1787 = vmatpush1.bf16.msra.mxu0 0
      %1788 = vmatprep.subr.bf16.mxu0 0
      %1789 = vmatpush1.bf16.msra.mxu0 0
      %1790 = vmatprep.subr.bf16.mxu0 0
      %1791 = vmatpush1.bf16.msra.mxu0 0
      %1792 = vmatprep.subr.bf16.mxu0 0
      %1793 = vmatpush1.bf16.msra.mxu0 0
      %1794 = vmatprep.subr.bf16.mxu0 0
      %1795 = vmatpush1.bf16.msra.mxu0 0
      %1796 = vmatprep.subr.bf16.mxu0 0
      %1797 = vmatpush1.bf16.msra.mxu0 0
      %1798 = vmatprep.subr.bf16.mxu0 0
      %1799 = vmatpush1.bf16.msra.mxu0 0
      %1800 = vmatprep.subr.bf16.mxu0 0
      %1801 = vmatpush1.bf16.msra.mxu0 0
      %1802 = vmatprep.subr.bf16.mxu0 0
      %1803 = vmatpush1.bf16.msra.mxu0 0
      %1804 = vmatprep.subr.bf16.mxu0 0
      %1805 = vmatpush1.bf16.msra.mxu0 0
      %1806 = vmatprep.subr.bf16.mxu0 0
      %1807 = vmatpush1.bf16.msra.mxu0 0
      %1808 = vmatprep.subr.bf16.mxu0 0
      %1809 = vmatpush1.bf16.msra.mxu0 0
      %1810 = vmatprep.subr.bf16.mxu0 0
      %1811 = vmatpush1.bf16.msra.mxu0 0
      %1812 = vmatprep.mubr.bf16.mxu0 0
      %1813 = vmatmul.mubr.bf16.gmra.mrb[0].mxu0 %v1449
      %v1814 = vpop.f32.mrb[0].mxu0
      %v1815 = vadd.f32 0.0, %v1814
      %v1816 = vpop.f32.mrb[0].mxu0
      %v1817 = vpop.f32.mrb[0].mxu0
      %v1818 = vadd.f32 0.0, %v1817
      %v1819 = vpop.f32.mrb[0].mxu0
      %1820 = vmatprep.mubr.bf16.mxu0 0
      %1821 = vmatmul.mubr.bf16.gmra.mrb[0].mxu0 %v1452
      %v1822 = vpop.f32.mrb[0].mxu0
      %v1823 = vadd.f32 0.0, %v1822
      %v1824 = vpop.f32.mrb[0].mxu0
      %v1825 = vpop.f32.mrb[0].mxu0
      %v1826 = vadd.f32 0.0, %v1825
      %v1827 = vpop.f32.mrb[0].mxu0
      %1828 = vmatprep.mubr.bf16.mxu0 0
      %1829 = vmatmul.mubr.bf16.gmra.mrb[0].mxu0 %v1455
      %v1830 = vpop.f32.mrb[0].mxu0
      %v1831 = vadd.f32 0.0, %v1830
      %v1832 = vpop.f32.mrb[0].mxu0
      %v1833 = vpop.f32.mrb[0].mxu0
      %v1834 = vadd.f32 0.0, %v1833
      %v1835 = vpop.f32.mrb[0].mxu0
      %1836 = vmatprep.mubr.bf16.mxu0 0
      %1837 = vmatmul.mubr.bf16.gmra.mrb[0].mxu0 %v1766
      %v1838 = vpop.f32.mrb[0].mxu0
      %v1839 = vadd.f32 0.0, %v1838
      %v1840 = vpop.f32.mrb[0].mxu0
      %v1841 = vpop.f32.mrb[0].mxu0
      %v1842 = vadd.f32 0.0, %v1841
      %v1843 = vpop.f32.mrb[0].mxu0
      %1844 = vmatprep.mubr.bf16.mxu0 0
      %1845 = vmatmul.mubr.bf16.gmra.mrb[0].mxu0 %v1461
      %v1846 = vpop.f32.mrb[0].mxu0
      %v1847 = vadd.f32 0.0, %v1846
      %v1848 = vpop.f32.mrb[0].mxu0
      %v1849 = vpop.f32.mrb[0].mxu0
      %v1850 = vadd.f32 0.0, %v1849
      %v1851 = vpop.f32.mrb[0].mxu0
      %1852 = vmatprep.mubr.bf16.mxu0 0
      %1853 = vmatmul.mubr.bf16.gmra.mrb[0].mxu0 %v1464
      %v1854 = vpop.f32.mrb[0].mxu0
      %v1855 = vadd.f32 0.0, %v1854
      %v1856 = vpop.f32.mrb[0].mxu0
      %v1857 = vpop.f32.mrb[0].mxu0
      %v1858 = vadd.f32 0.0, %v1857
      %v1859 = vpop.f32.mrb[0].mxu0
      %1860 = vmatprep.mubr.bf16.mxu0 0
      %1861 = vmatmul.mubr.bf16.gmra.mrb[0].mxu0 %v1467
      %v1862 = vpop.f32.mrb[0].mxu0
      %v1863 = vadd.f32 0.0, %v1862
      %v1864 = vpop.f32.mrb[0].mxu0
      %v1865 = vpop.f32.mrb[0].mxu0
      %v1866 = vadd.f32 0.0, %v1865
      %v1867 = vpop.f32.mrb[0].mxu0
      %1868 = vmatprep.mubr.bf16.mxu0 0
      %1869 = vmatmul.mubr.bf16.gmra.mrb[0].mxu0 %v1769
      %v1870 = vpop.f32.mrb[0].mxu0
      %v1871 = vadd.f32 0.0, %v1870
      %v1872 = vpop.f32.mrb[0].mxu0
      %v1873 = vpop.f32.mrb[0].mxu0
      %v1874 = vadd.f32 0.0, %v1873
      %v1875 = vpop.f32.mrb[0].mxu0
      %1876 = vmatprep.mubr.bf16.mxu0 0
      %1877 = vmatmul.mubr.bf16.gmra.mrb[0].mxu0 %v1473
      %v1878 = vpop.f32.mrb[0].mxu0
      %v1879 = vadd.f32 0.0, %v1878
      %v1880 = vpop.f32.mrb[0].mxu0
      %v1881 = vpop.f32.mrb[0].mxu0
      %v1882 = vadd.f32 0.0, %v1881
      %v1883 = vpop.f32.mrb[0].mxu0
      %1884 = vmatprep.mubr.bf16.mxu0 0
      %1885 = vmatmul.mubr.bf16.gmra.mrb[0].mxu0 %v1476
      %v1886 = vpop.f32.mrb[0].mxu0
      %v1887 = vadd.f32 0.0, %v1886
      %v1888 = vpop.f32.mrb[0].mxu0
      %v1889 = vpop.f32.mrb[0].mxu0
      %v1890 = vadd.f32 0.0, %v1889
      %v1891 = vpop.f32.mrb[0].mxu0
      %1892 = vmatprep.mubr.bf16.mxu0 0
      %1893 = vmatmul.mubr.bf16.gmra.mrb[0].mxu0 %v1479
      %v1894 = vpop.f32.mrb[0].mxu0
      %v1895 = vadd.f32 0.0, %v1894
      %v1896 = vpop.f32.mrb[0].mxu0
      %v1897 = vpop.f32.mrb[0].mxu0
      %v1898 = vadd.f32 0.0, %v1897
      %v1899 = vpop.f32.mrb[0].mxu0
      %1900 = vmatprep.mubr.bf16.mxu0 0
      %1901 = vmatmul.mubr.bf16.gmra.mrb[0].mxu0 %v1772
      %v1902 = vpop.f32.mrb[0].mxu0
      %v1903 = vadd.f32 0.0, %v1902
      %v1904 = vpop.f32.mrb[0].mxu0
      %v1905 = vpop.f32.mrb[0].mxu0
      %v1906 = vadd.f32 0.0, %v1905
      %v1907 = vpop.f32.mrb[0].mxu0
      %1908 = vmatprep.mubr.bf16.mxu0 0
      %1909 = vmatmul.mubr.bf16.gmra.mrb[0].mxu0 %v1485
      %v1910 = vpop.f32.mrb[0].mxu0
      %v1911 = vadd.f32 0.0, %v1910
      %v1912 = vpop.f32.mrb[0].mxu0
      %v1913 = vpop.f32.mrb[0].mxu0
      %v1914 = vadd.f32 0.0, %v1913
      %v1915 = vpop.f32.mrb[0].mxu0
      %1916 = vmatprep.mubr.bf16.mxu0 0
      %1917 = vmatmul.mubr.bf16.gmra.mrb[0].mxu0 %v1488
      %v1918 = vpop.f32.mrb[0].mxu0
      %v1919 = vadd.f32 0.0, %v1918
      %v1920 = vpop.f32.mrb[0].mxu0
      %v1921 = vpop.f32.mrb[0].mxu0
      %v1922 = vadd.f32 0.0, %v1921
      %v1923 = vpop.f32.mrb[0].mxu0
      %1924 = vmatprep.mubr.bf16.mxu0 0
      %1925 = vmatmul.mubr.bf16.gmra.mrb[0].mxu0 %v1491
      %v1926 = vpop.f32.mrb[0].mxu0
      %v1927 = vadd.f32 0.0, %v1926
      %v1928 = vpop.f32.mrb[0].mxu0
      %v1929 = vpop.f32.mrb[0].mxu0
      %v1930 = vadd.f32 0.0, %v1929
      %v1931 = vpop.f32.mrb[0].mxu0
      %1932 = vmatprep.mubr.bf16.mxu0 0
      %1933 = vmatmul.mubr.bf16.gmra.mrb[0].mxu0 %v1775
      %v1934 = vpop.f32.mrb[0].mxu0
      %v1935 = vadd.f32 0.0, %v1934
      %v1936 = vpop.f32.mrb[0].mxu0
      %v1937 = vpop.f32.mrb[0].mxu0
      %v1938 = vadd.f32 0.0, %v1937
      %v1939 = vpop.f32.mrb[0].mxu0
      %1940 = vdwg.mxu0
      %v1941 = vadd.f32 %v1531, %v1815
      %v1942 = vadd.f32 %v1534, %v1818
      %v1943 = vadd.f32 %v1539, %v1823
      %v1944 = vadd.f32 %v1542, %v1826
      %v1945 = vadd.f32 %v1547, %v1831
      %v1946 = vadd.f32 %v1550, %v1834
      %v1947 = vadd.f32 %v1555, %v1839
      %v1948 = vadd.f32 %v1558, %v1842
      %v1949 = vadd.f32 %v1563, %v1847
      %v1950 = vadd.f32 %v1566, %v1850
      %v1951 = vadd.f32 %v1571, %v1855
      %v1952 = vadd.f32 %v1574, %v1858
      %v1953 = vadd.f32 %v1579, %v1863
      %v1954 = vadd.f32 %v1582, %v1866
      %v1955 = vadd.f32 %v1587, %v1871
      %v1956 = vadd.f32 %v1590, %v1874
      %v1957 = vadd.f32 %v1595, %v1879
      %v1958 = vadd.f32 %v1598, %v1882
      %v1959 = vadd.f32 %v1603, %v1887
      %v1960 = vadd.f32 %v1606, %v1890
      %v1961 = vadd.f32 %v1611, %v1895
      %v1962 = vadd.f32 %v1614, %v1898
      %v1963 = vadd.f32 %v1619, %v1903
      %v1964 = vadd.f32 %v1622, %v1906
      %v1965 = vadd.f32 %v1627, %v1911
      %v1966 = vadd.f32 %v1630, %v1914
      %v1967 = vadd.f32 %v1635, %v1919
      %v1968 = vadd.f32 %v1638, %v1922
      %v1969 = vadd.f32 %v1643, %v1927
      %v1970 = vadd.f32 %v1646, %v1930
      %v1971 = vadd.f32 %v1651, %v1935
      %v1972 = vadd.f32 %v1654, %v1938
      %v1989 = vunpack.c.l.b16 %v278
      %v1990 = vunpack.c.l.b16 %v279
      %v1991 = vunpack.c.l.b16 %v280
      %v1992 = vunpack.c.l.b16 %v281
      %v1993 = vunpack.c.l.b16 %v282
      %v1994 = vunpack.c.l.b16 %v283
      %v1995 = vunpack.c.l.b16 %v284
      %v1996 = vunpack.c.l.b16 %v285
      %v1997 = vunpack.c.l.b16 %v286
      %v1998 = vunpack.c.l.b16 %v287
      %v1999 = vunpack.c.l.b16 %v288
      %v2000 = vunpack.c.l.b16 %v289
      %v2001 = vunpack.c.l.b16 %v290
      %v2002 = vunpack.c.l.b16 %v291
      %v2003 = vunpack.c.l.b16 %v292
      %v2004 = vunpack.c.l.b16 %v293
      %v2005 = vpack.c.b16 %v1990, %v1989
      %v2006 = vpack.c.b16 %v1992, %v1991
      %v2007 = vpack.c.b16 %v1994, %v1993
      %v2008 = vpack.c.b16 %v1996, %v1995
      %v2009 = vpack.c.b16 %v1998, %v1997
      %v2010 = vpack.c.b16 %v2000, %v1999
      %v2011 = vpack.c.b16 %v2002, %v2001
      %v2012 = vpack.c.b16 %v2004, %v2003
      %v2014 = vshrl.u32 %v2005, 16
      %v2016 = vshll.u32 %v2005, 16
      %v2018 = vrot.slane %v2016, 1
      %v2019 = vor.u32 %v2014, %v2018
      %v2021 = vshrl.u32 %v2006, 16
      %v2023 = vshll.u32 %v2006, 16
      %v2025 = vrot.slane %v2023, 1
      %v2026 = vor.u32 %v2021, %v2025
      %v2028 = vshrl.u32 %v2007, 16
      %v2030 = vshll.u32 %v2007, 16
      %v2032 = vrot.slane %v2030, 1
      %v2033 = vor.u32 %v2028, %v2032
      %v2035 = vshrl.u32 %v2008, 16
      %v2037 = vshll.u32 %v2008, 16
      %v2039 = vrot.slane %v2037, 1
      %v2040 = vor.u32 %v2035, %v2039
      %v2042 = vshrl.u32 %v2009, 16
      %v2044 = vshll.u32 %v2009, 16
      %v2046 = vrot.slane %v2044, 1
      %v2047 = vor.u32 %v2042, %v2046
      %v2049 = vshrl.u32 %v2010, 16
      %v2051 = vshll.u32 %v2010, 16
      %v2053 = vrot.slane %v2051, 1
      %v2054 = vor.u32 %v2049, %v2053
      %v2056 = vshrl.u32 %v2011, 16
      %v2058 = vshll.u32 %v2011, 16
      %v2060 = vrot.slane %v2058, 1
      %v2061 = vor.u32 %v2056, %v2060
      %v2063 = vshrl.u32 %v2012, 16
      %v2065 = vshll.u32 %v2012, 16
      %v2067 = vrot.slane %v2065, 1
      %v2068 = vor.u32 %v2063, %v2067
      %2069 = vrot.lane.b32.xlu0 %v2019, 4
      %v2070 = vpop.permute.xlu0 %2069
      %2071 = vrot.lane.b32.xlu0 %v2026, 4
      %v2072 = vpop.permute.xlu0 %2071
      %2073 = vrot.lane.b32.xlu0 %v2033, 4
      %v2074 = vpop.permute.xlu0 %2073
      %2075 = vrot.lane.b32.xlu0 %v2040, 4
      %v2076 = vpop.permute.xlu0 %2075
      %2077 = vrot.lane.b32.xlu0 %v2047, 4
      %v2078 = vpop.permute.xlu0 %2077
      %2079 = vrot.lane.b32.xlu0 %v2054, 4
      %v2080 = vpop.permute.xlu0 %2079
      %2081 = vrot.lane.b32.xlu0 %v2061, 4
      %v2082 = vpop.permute.xlu0 %2081
      %2083 = vrot.lane.b32.xlu0 %v2068, 4
      %v2084 = vpop.permute.xlu0 %2083
      %v2085 = vrot.slane %v2005, 1
      %v2086 = vrot.slane %v2006, 1
      %v2087 = vrot.slane %v2007, 1
      %v2088 = vrot.slane %v2008, 1
      %v2089 = vrot.slane %v2009, 1
      %v2090 = vrot.slane %v2010, 1
      %v2091 = vrot.slane %v2011, 1
      %v2092 = vrot.slane %v2012, 1
      %2093 = vrot.lane.b32.xlu0 %v2085, 8
      %v2094 = vpop.permute.xlu0 %2093
      %2095 = vrot.lane.b32.xlu0 %v2086, 8
      %v2096 = vpop.permute.xlu0 %2095
      %2097 = vrot.lane.b32.xlu0 %v2087, 8
      %v2098 = vpop.permute.xlu0 %2097
      %2099 = vrot.lane.b32.xlu0 %v2088, 8
      %v2100 = vpop.permute.xlu0 %2099
      %2101 = vrot.lane.b32.xlu0 %v2089, 8
      %v2102 = vpop.permute.xlu0 %2101
      %2103 = vrot.lane.b32.xlu0 %v2090, 8
      %v2104 = vpop.permute.xlu0 %2103
      %2105 = vrot.lane.b32.xlu0 %v2091, 8
      %v2106 = vpop.permute.xlu0 %2105
      %2107 = vrot.lane.b32.xlu0 %v2092, 8
      %v2108 = vpop.permute.xlu0 %2107
      %v2111 = vsel %vm862, %v278, %v2070
      %v2114 = vsel %vm862, %v280, %v2072
      %v2117 = vsel %vm862, %v282, %v2074
      %v2120 = vsel %vm862, %v284, %v2076
      %v2123 = vsel %vm862, %v286, %v2078
      %v2126 = vsel %vm862, %v288, %v2080
      %v2129 = vsel %vm862, %v290, %v2082
      %v2132 = vsel %vm862, %v292, %v2084
      %v2134 = vsel %vm959, %v2111, %v2094
      %v2136 = vsel %vm959, %v2114, %v2096
      %v2138 = vsel %vm959, %v2117, %v2098
      %v2140 = vsel %vm959, %v2120, %v2100
      %v2142 = vsel %vm959, %v2123, %v2102
      %v2144 = vsel %vm959, %v2126, %v2104
      %v2146 = vsel %vm959, %v2129, %v2106
      %v2148 = vsel %vm959, %v2132, %v2108
      %s2149 = scalar_lea.vmem %s1, 24
      %v2150 = vld [vmem:[%s2149] sm:$0xf]
      %v2151 = vld [vmem:[%s2149 + $0x4] sm:$0x3]
      %v2160 = vunpack.c.l.b16 %v2134
      %v2161 = vunpack.c.l.b16 %v2136
      %v2162 = vunpack.c.l.b16 %v2138
      %v2163 = vunpack.c.l.b16 %v2140
      %v2164 = vunpack.c.l.b16 %v2142
      %v2165 = vunpack.c.l.b16 %v2144
      %v2166 = vunpack.c.l.b16 %v2146
      %v2167 = vunpack.c.l.b16 %v2148
      %v2168 = vpack.c.b16 %v2161, %v2160
      %v2169 = vpack.c.b16 %v2163, %v2162
      %v2170 = vpack.c.b16 %v2165, %v2164
      %v2171 = vpack.c.b16 %v2167, %v2166
      %v2174 = vunpack.c.l.b16 %v2150
      %v2175 = vunpack.c.l.b16 %v2151
      %v2176 = vpack.c.b16 %v2175, %v2174
      %v2178 = vsel %vm1202, %v2168, 0
      %v2181 = vsel %vm1202, %v2169, 0
      %v2184 = vsel %vm1202, %v2170, 0
      %v2187 = vsel %vm1202, %v2171, 0
      %v2190 = vsel %vm1251, %v2176, 0
      %2192 = vmatprep.subr.bf16.mxu0 0
      %2193 = vmatpush1.bf16.msra.mxu0 %v2190
      %2194 = vmatprep.subr.bf16.mxu0 0
      %2195 = vmatpush1.bf16.msra.mxu0 0
      %2196 = vmatprep.subr.bf16.mxu0 0
      %2197 = vmatpush1.bf16.msra.mxu0 0
      %2198 = vmatprep.subr.bf16.mxu0 0
      %2199 = vmatpush1.bf16.msra.mxu0 0
      %2200 = vmatprep.subr.bf16.mxu0 0
      %2201 = vmatpush1.bf16.msra.mxu0 0
      %2202 = vmatprep.subr.bf16.mxu0 0
      %2203 = vmatpush1.bf16.msra.mxu0 0
      %2204 = vmatprep.subr.bf16.mxu0 0
      %2205 = vmatpush1.bf16.msra.mxu0 0
      %2206 = vmatprep.subr.bf16.mxu0 0
      %2207 = vmatpush1.bf16.msra.mxu0 0
      %2208 = vmatprep.subr.bf16.mxu0 0
      %2209 = vmatpush1.bf16.msra.mxu0 0
      %2210 = vmatprep.subr.bf16.mxu0 0
      %2211 = vmatpush1.bf16.msra.mxu0 0
      %2212 = vmatprep.subr.bf16.mxu0 0
      %2213 = vmatpush1.bf16.msra.mxu0 0
      %2214 = vmatprep.subr.bf16.mxu0 0
      %2215 = vmatpush1.bf16.msra.mxu0 0
      %2216 = vmatprep.subr.bf16.mxu0 0
      %2217 = vmatpush1.bf16.msra.mxu0 0
      %2218 = vmatprep.subr.bf16.mxu0 0
      %2219 = vmatpush1.bf16.msra.mxu0 0
      %2220 = vmatprep.subr.bf16.mxu0 0
      %2221 = vmatpush1.bf16.msra.mxu0 0
      %2222 = vmatprep.subr.bf16.mxu0 0
      %2223 = vmatpush1.bf16.msra.mxu0 0
      %2224 = vmatprep.mubr.bf16.mxu0 0
      %2225 = vmatmul.mubr.bf16.gmra.mrb[0].mxu0 %v1458
      %v2226 = vpop.f32.mrb[0].mxu0
      %v2227 = vadd.f32 0.0, %v2226
      %v2228 = vpop.f32.mrb[0].mxu0
      %v2229 = vpop.f32.mrb[0].mxu0
      %v2230 = vadd.f32 0.0, %v2229
      %v2231 = vpop.f32.mrb[0].mxu0
      %2232 = vmatprep.mubr.bf16.mxu0 0
      %2233 = vmatmul.mubr.bf16.gmra.mrb[0].mxu0 %v1461
      %v2234 = vpop.f32.mrb[0].mxu0
      %v2235 = vadd.f32 0.0, %v2234
      %v2236 = vpop.f32.mrb[0].mxu0
      %v2237 = vpop.f32.mrb[0].mxu0
      %v2238 = vadd.f32 0.0, %v2237
      %v2239 = vpop.f32.mrb[0].mxu0
      %2240 = vmatprep.mubr.bf16.mxu0 0
      %2241 = vmatmul.mubr.bf16.gmra.mrb[0].mxu0 %v1464
      %v2242 = vpop.f32.mrb[0].mxu0
      %v2243 = vadd.f32 0.0, %v2242
      %v2244 = vpop.f32.mrb[0].mxu0
      %v2245 = vpop.f32.mrb[0].mxu0
      %v2246 = vadd.f32 0.0, %v2245
      %v2247 = vpop.f32.mrb[0].mxu0
      %2248 = vmatprep.mubr.bf16.mxu0 0
      %2249 = vmatmul.mubr.bf16.gmra.mrb[0].mxu0 %v1467
      %v2250 = vpop.f32.mrb[0].mxu0
      %v2251 = vadd.f32 0.0, %v2250
      %v2252 = vpop.f32.mrb[0].mxu0
      %v2253 = vpop.f32.mrb[0].mxu0
      %v2254 = vadd.f32 0.0, %v2253
      %v2255 = vpop.f32.mrb[0].mxu0
      %2256 = vmatprep.mubr.bf16.mxu0 0
      %2257 = vmatmul.mubr.bf16.gmra.mrb[0].mxu0 %v1470
      %v2258 = vpop.f32.mrb[0].mxu0
      %v2259 = vadd.f32 0.0, %v2258
      %v2260 = vpop.f32.mrb[0].mxu0
      %v2261 = vpop.f32.mrb[0].mxu0
      %v2262 = vadd.f32 0.0, %v2261
      %v2263 = vpop.f32.mrb[0].mxu0
      %2264 = vmatprep.mubr.bf16.mxu0 0
      %2265 = vmatmul.mubr.bf16.gmra.mrb[0].mxu0 %v1473
      %v2266 = vpop.f32.mrb[0].mxu0
      %v2267 = vadd.f32 0.0, %v2266
      %v2268 = vpop.f32.mrb[0].mxu0
      %v2269 = vpop.f32.mrb[0].mxu0
      %v2270 = vadd.f32 0.0, %v2269
      %v2271 = vpop.f32.mrb[0].mxu0
      %2272 = vmatprep.mubr.bf16.mxu0 0
      %2273 = vmatmul.mubr.bf16.gmra.mrb[0].mxu0 %v1476
      %v2274 = vpop.f32.mrb[0].mxu0
      %v2275 = vadd.f32 0.0, %v2274
      %v2276 = vpop.f32.mrb[0].mxu0
      %v2277 = vpop.f32.mrb[0].mxu0
      %v2278 = vadd.f32 0.0, %v2277
      %v2279 = vpop.f32.mrb[0].mxu0
      %2280 = vmatprep.mubr.bf16.mxu0 0
      %2281 = vmatmul.mubr.bf16.gmra.mrb[0].mxu0 %v1479
      %v2282 = vpop.f32.mrb[0].mxu0
      %v2283 = vadd.f32 0.0, %v2282
      %v2284 = vpop.f32.mrb[0].mxu0
      %v2285 = vpop.f32.mrb[0].mxu0
      %v2286 = vadd.f32 0.0, %v2285
      %v2287 = vpop.f32.mrb[0].mxu0
      %2288 = vmatprep.mubr.bf16.mxu0 0
      %2289 = vmatmul.mubr.bf16.gmra.mrb[0].mxu0 %v1482
      %v2290 = vpop.f32.mrb[0].mxu0
      %v2291 = vadd.f32 0.0, %v2290
      %v2292 = vpop.f32.mrb[0].mxu0
      %v2293 = vpop.f32.mrb[0].mxu0
      %v2294 = vadd.f32 0.0, %v2293
      %v2295 = vpop.f32.mrb[0].mxu0
      %2296 = vmatprep.mubr.bf16.mxu0 0
      %2297 = vmatmul.mubr.bf16.gmra.mrb[0].mxu0 %v1485
      %v2298 = vpop.f32.mrb[0].mxu0
      %v2299 = vadd.f32 0.0, %v2298
      %v2300 = vpop.f32.mrb[0].mxu0
      %v2301 = vpop.f32.mrb[0].mxu0
      %v2302 = vadd.f32 0.0, %v2301
      %v2303 = vpop.f32.mrb[0].mxu0
      %2304 = vmatprep.mubr.bf16.mxu0 0
      %2305 = vmatmul.mubr.bf16.gmra.mrb[0].mxu0 %v1488
      %v2306 = vpop.f32.mrb[0].mxu0
      %v2307 = vadd.f32 0.0, %v2306
      %v2308 = vpop.f32.mrb[0].mxu0
      %v2309 = vpop.f32.mrb[0].mxu0
      %v2310 = vadd.f32 0.0, %v2309
      %v2311 = vpop.f32.mrb[0].mxu0
      %2312 = vmatprep.mubr.bf16.mxu0 0
      %2313 = vmatmul.mubr.bf16.gmra.mrb[0].mxu0 %v1491
      %v2314 = vpop.f32.mrb[0].mxu0
      %v2315 = vadd.f32 0.0, %v2314
      %v2316 = vpop.f32.mrb[0].mxu0
      %v2317 = vpop.f32.mrb[0].mxu0
      %v2318 = vadd.f32 0.0, %v2317
      %v2319 = vpop.f32.mrb[0].mxu0
      %2320 = vmatprep.mubr.bf16.mxu0 0
      %2321 = vmatmul.mubr.bf16.gmra.mrb[0].mxu0 %v2178
      %v2322 = vpop.f32.mrb[0].mxu0
      %v2323 = vadd.f32 0.0, %v2322
      %v2324 = vpop.f32.mrb[0].mxu0
      %v2325 = vpop.f32.mrb[0].mxu0
      %v2326 = vadd.f32 0.0, %v2325
      %v2327 = vpop.f32.mrb[0].mxu0
      %2328 = vmatprep.mubr.bf16.mxu0 0
      %2329 = vmatmul.mubr.bf16.gmra.mrb[0].mxu0 %v2181
      %v2330 = vpop.f32.mrb[0].mxu0
      %v2331 = vadd.f32 0.0, %v2330
      %v2332 = vpop.f32.mrb[0].mxu0
      %v2333 = vpop.f32.mrb[0].mxu0
      %v2334 = vadd.f32 0.0, %v2333
      %v2335 = vpop.f32.mrb[0].mxu0
      %2336 = vmatprep.mubr.bf16.mxu0 0
      %2337 = vmatmul.mubr.bf16.gmra.mrb[0].mxu0 %v2184
      %v2338 = vpop.f32.mrb[0].mxu0
      %v2339 = vadd.f32 0.0, %v2338
      %v2340 = vpop.f32.mrb[0].mxu0
      %v2341 = vpop.f32.mrb[0].mxu0
      %v2342 = vadd.f32 0.0, %v2341
      %v2343 = vpop.f32.mrb[0].mxu0
      %2344 = vmatprep.mubr.bf16.mxu0 0
      %2345 = vmatmul.mubr.bf16.gmra.mrb[0].mxu0 %v2187
      %v2346 = vpop.f32.mrb[0].mxu0
      %v2347 = vadd.f32 0.0, %v2346
      %v2348 = vpop.f32.mrb[0].mxu0
      %v2349 = vpop.f32.mrb[0].mxu0
      %v2350 = vadd.f32 0.0, %v2349
      %v2351 = vpop.f32.mrb[0].mxu0
      %2352 = vdwg.mxu0
      %v2353 = vadd.f32 %v1941, %v2227
      %v2354 = vadd.f32 %v1942, %v2230
      %v2355 = vadd.f32 %v1943, %v2235
      %v2356 = vadd.f32 %v1944, %v2238
      %v2357 = vadd.f32 %v1945, %v2243
      %v2358 = vadd.f32 %v1946, %v2246
      %v2359 = vadd.f32 %v1947, %v2251
      %v2360 = vadd.f32 %v1948, %v2254
      %v2361 = vadd.f32 %v1949, %v2259
      %v2362 = vadd.f32 %v1950, %v2262
      %v2363 = vadd.f32 %v1951, %v2267
      %v2364 = vadd.f32 %v1952, %v2270
      %v2365 = vadd.f32 %v1953, %v2275
      %v2366 = vadd.f32 %v1954, %v2278
      %v2367 = vadd.f32 %v1955, %v2283
      %v2368 = vadd.f32 %v1956, %v2286
      %v2369 = vadd.f32 %v1957, %v2291
      %v2370 = vadd.f32 %v1958, %v2294
      %v2371 = vadd.f32 %v1959, %v2299
      %v2372 = vadd.f32 %v1960, %v2302
      %v2373 = vadd.f32 %v1961, %v2307
      %v2374 = vadd.f32 %v1962, %v2310
      %v2375 = vadd.f32 %v1963, %v2315
      %v2376 = vadd.f32 %v1964, %v2318
      %v2377 = vadd.f32 %v1965, %v2323
      %v2378 = vadd.f32 %v1966, %v2326
      %v2379 = vadd.f32 %v1967, %v2331
      %v2380 = vadd.f32 %v1968, %v2334
      %v2381 = vadd.f32 %v1969, %v2339
      %v2382 = vadd.f32 %v1970, %v2342
      %v2383 = vadd.f32 %v1971, %v2347
      %v2384 = vadd.f32 %v1972, %v2350
      %v2387 = vunpack.c.l.b16 %v294
      %v2388 = vunpack.c.l.b16 %v295
      %v2389 = vpack.c.b16 %v2388, %v2387
      %v2391 = vshrl.u32 %v2389, 16
      %v2393 = vshll.u32 %v2389, 16
      %v2395 = vrot.slane %v2393, 1
      %v2396 = vor.u32 %v2391, %v2395
      %2397 = vrot.lane.b32.xlu0 %v2396, 4
      %v2398 = vpop.permute.xlu0 %2397
      %v2399 = vrot.slane %v2389, 1
      %2400 = vrot.lane.b32.xlu0 %v2399, 8
      %v2401 = vpop.permute.xlu0 %2400
      %v2404 = vsel %vm862, %v294, %v2398
      %v2406 = vsel %vm959, %v2404, %v2401
      %s2407 = scalar_lea.vmem %s1, 32
      %v2408 = vld [vmem:[%s2407] sm:$0xf]
      %v2409 = vld [vmem:[%s2407 + $0x4] sm:$0x3]
      %v2411 = vunpack.c.l.b16 %v2406
      %v2412 = vpack.c.b16 %v2162, %v2161
      %v2413 = vpack.c.b16 %v2164, %v2163
      %v2414 = vpack.c.b16 %v2166, %v2165
      %v2415 = vpack.c.b16 %v2411, %v2167
      %v2418 = vunpack.c.l.b16 %v2408
      %v2419 = vunpack.c.l.b16 %v2409
      %v2420 = vpack.c.b16 %v2419, %v2418
      %v2422 = vsel %vm1202, %v2412, 0
      %v2425 = vsel %vm1202, %v2413, 0
      %v2428 = vsel %vm1202, %v2414, 0
      %v2431 = vsel %vm1202, %v2415, 0
      %v2434 = vsel %vm1251, %v2420, 0
      %2436 = vmatprep.subr.bf16.mxu0 0
      %2437 = vmatpush1.bf16.msra.mxu0 %v2434
      %2438 = vmatprep.subr.bf16.mxu0 0
      %2439 = vmatpush1.bf16.msra.mxu0 0
      %2440 = vmatprep.subr.bf16.mxu0 0
      %2441 = vmatpush1.bf16.msra.mxu0 0
      %2442 = vmatprep.subr.bf16.mxu0 0
      %2443 = vmatpush1.bf16.msra.mxu0 0
      %2444 = vmatprep.subr.bf16.mxu0 0
      %2445 = vmatpush1.bf16.msra.mxu0 0
      %2446 = vmatprep.subr.bf16.mxu0 0
      %2447 = vmatpush1.bf16.msra.mxu0 0
      %2448 = vmatprep.subr.bf16.mxu0 0
      %2449 = vmatpush1.bf16.msra.mxu0 0
      %2450 = vmatprep.subr.bf16.mxu0 0
      %2451 = vmatpush1.bf16.msra.mxu0 0
      %2452 = vmatprep.subr.bf16.mxu0 0
      %2453 = vmatpush1.bf16.msra.mxu0 0
      %2454 = vmatprep.subr.bf16.mxu0 0
      %2455 = vmatpush1.bf16.msra.mxu0 0
      %2456 = vmatprep.subr.bf16.mxu0 0
      %2457 = vmatpush1.bf16.msra.mxu0 0
      %2458 = vmatprep.subr.bf16.mxu0 0
      %2459 = vmatpush1.bf16.msra.mxu0 0
      %2460 = vmatprep.subr.bf16.mxu0 0
      %2461 = vmatpush1.bf16.msra.mxu0 0
      %2462 = vmatprep.subr.bf16.mxu0 0
      %2463 = vmatpush1.bf16.msra.mxu0 0
      %2464 = vmatprep.subr.bf16.mxu0 0
      %2465 = vmatpush1.bf16.msra.mxu0 0
      %2466 = vmatprep.subr.bf16.mxu0 0
      %2467 = vmatpush1.bf16.msra.mxu0 0
      %2468 = vmatprep.mubr.bf16.mxu0 0
      %2469 = vmatmul.mubr.bf16.gmra.mrb[0].mxu0 %v1216
      %v2470 = vpop.f32.mrb[0].mxu0
      %v2471 = vadd.f32 0.0, %v2470
      %v2472 = vpop.f32.mrb[0].mxu0
      %v2473 = vpop.f32.mrb[0].mxu0
      %v2474 = vadd.f32 0.0, %v2473
      %v2475 = vpop.f32.mrb[0].mxu0
      %2476 = vmatprep.mubr.bf16.mxu0 0
      %2477 = vmatmul.mubr.bf16.gmra.mrb[0].mxu0 %v1219
      %v2478 = vpop.f32.mrb[0].mxu0
      %v2479 = vadd.f32 0.0, %v2478
      %v2480 = vpop.f32.mrb[0].mxu0
      %v2481 = vpop.f32.mrb[0].mxu0
      %v2482 = vadd.f32 0.0, %v2481
      %v2483 = vpop.f32.mrb[0].mxu0
      %2484 = vmatprep.mubr.bf16.mxu0 0
      %2485 = vmatmul.mubr.bf16.gmra.mrb[0].mxu0 %v1222
      %v2486 = vpop.f32.mrb[0].mxu0
      %v2487 = vadd.f32 0.0, %v2486
      %v2488 = vpop.f32.mrb[0].mxu0
      %v2489 = vpop.f32.mrb[0].mxu0
      %v2490 = vadd.f32 0.0, %v2489
      %v2491 = vpop.f32.mrb[0].mxu0
      %2492 = vmatprep.mubr.bf16.mxu0 0
      %2493 = vmatmul.mubr.bf16.gmra.mrb[0].mxu0 %v1225
      %v2494 = vpop.f32.mrb[0].mxu0
      %v2495 = vadd.f32 0.0, %v2494
      %v2496 = vpop.f32.mrb[0].mxu0
      %v2497 = vpop.f32.mrb[0].mxu0
      %v2498 = vadd.f32 0.0, %v2497
      %v2499 = vpop.f32.mrb[0].mxu0
      %2500 = vmatprep.mubr.bf16.mxu0 0
      %2501 = vmatmul.mubr.bf16.gmra.mrb[0].mxu0 %v1228
      %v2502 = vpop.f32.mrb[0].mxu0
      %v2503 = vadd.f32 0.0, %v2502
      %v2504 = vpop.f32.mrb[0].mxu0
      %v2505 = vpop.f32.mrb[0].mxu0
      %v2506 = vadd.f32 0.0, %v2505
      %v2507 = vpop.f32.mrb[0].mxu0
      %2508 = vmatprep.mubr.bf16.mxu0 0
      %2509 = vmatmul.mubr.bf16.gmra.mrb[0].mxu0 %v1231
      %v2510 = vpop.f32.mrb[0].mxu0
      %v2511 = vadd.f32 0.0, %v2510
      %v2512 = vpop.f32.mrb[0].mxu0
      %v2513 = vpop.f32.mrb[0].mxu0
      %v2514 = vadd.f32 0.0, %v2513
      %v2515 = vpop.f32.mrb[0].mxu0
      %2516 = vmatprep.mubr.bf16.mxu0 0
      %2517 = vmatmul.mubr.bf16.gmra.mrb[0].mxu0 %v1234
      %v2518 = vpop.f32.mrb[0].mxu0
      %v2519 = vadd.f32 0.0, %v2518
      %v2520 = vpop.f32.mrb[0].mxu0
      %v2521 = vpop.f32.mrb[0].mxu0
      %v2522 = vadd.f32 0.0, %v2521
      %v2523 = vpop.f32.mrb[0].mxu0
      %2524 = vmatprep.mubr.bf16.mxu0 0
      %2525 = vmatmul.mubr.bf16.gmra.mrb[0].mxu0 %v1237
      %v2526 = vpop.f32.mrb[0].mxu0
      %v2527 = vadd.f32 0.0, %v2526
      %v2528 = vpop.f32.mrb[0].mxu0
      %v2529 = vpop.f32.mrb[0].mxu0
      %v2530 = vadd.f32 0.0, %v2529
      %v2531 = vpop.f32.mrb[0].mxu0
      %2532 = vmatprep.mubr.bf16.mxu0 0
      %2533 = vmatmul.mubr.bf16.gmra.mrb[0].mxu0 %v1240
      %v2534 = vpop.f32.mrb[0].mxu0
      %v2535 = vadd.f32 0.0, %v2534
      %v2536 = vpop.f32.mrb[0].mxu0
      %v2537 = vpop.f32.mrb[0].mxu0
      %v2538 = vadd.f32 0.0, %v2537
      %v2539 = vpop.f32.mrb[0].mxu0
      %2540 = vmatprep.mubr.bf16.mxu0 0
      %2541 = vmatmul.mubr.bf16.gmra.mrb[0].mxu0 %v1243
      %v2542 = vpop.f32.mrb[0].mxu0
      %v2543 = vadd.f32 0.0, %v2542
      %v2544 = vpop.f32.mrb[0].mxu0
      %v2545 = vpop.f32.mrb[0].mxu0
      %v2546 = vadd.f32 0.0, %v2545
      %v2547 = vpop.f32.mrb[0].mxu0
      %2548 = vmatprep.mubr.bf16.mxu0 0
      %2549 = vmatmul.mubr.bf16.gmra.mrb[0].mxu0 %v1246
      %v2550 = vpop.f32.mrb[0].mxu0
      %v2551 = vadd.f32 0.0, %v2550
      %v2552 = vpop.f32.mrb[0].mxu0
      %v2553 = vpop.f32.mrb[0].mxu0
      %v2554 = vadd.f32 0.0, %v2553
      %v2555 = vpop.f32.mrb[0].mxu0
      %2556 = vmatprep.mubr.bf16.mxu0 0
      %2557 = vmatmul.mubr.bf16.gmra.mrb[0].mxu0 %v1249
      %v2558 = vpop.f32.mrb[0].mxu0
      %v2559 = vadd.f32 0.0, %v2558
      %v2560 = vpop.f32.mrb[0].mxu0
      %v2561 = vpop.f32.mrb[0].mxu0
      %v2562 = vadd.f32 0.0, %v2561
      %v2563 = vpop.f32.mrb[0].mxu0
      %2564 = vmatprep.mubr.bf16.mxu0 0
      %2565 = vmatmul.mubr.bf16.gmra.mrb[0].mxu0 %v2422
      %v2566 = vpop.f32.mrb[0].mxu0
      %v2567 = vadd.f32 0.0, %v2566
      %v2568 = vpop.f32.mrb[0].mxu0
      %v2569 = vpop.f32.mrb[0].mxu0
      %v2570 = vadd.f32 0.0, %v2569
      %v2571 = vpop.f32.mrb[0].mxu0
      %2572 = vmatprep.mubr.bf16.mxu0 0
      %2573 = vmatmul.mubr.bf16.gmra.mrb[0].mxu0 %v2425
      %v2574 = vpop.f32.mrb[0].mxu0
      %v2575 = vadd.f32 0.0, %v2574
      %v2576 = vpop.f32.mrb[0].mxu0
      %v2577 = vpop.f32.mrb[0].mxu0
      %v2578 = vadd.f32 0.0, %v2577
      %v2579 = vpop.f32.mrb[0].mxu0
      %2580 = vmatprep.mubr.bf16.mxu0 0
      %2581 = vmatmul.mubr.bf16.gmra.mrb[0].mxu0 %v2428
      %v2582 = vpop.f32.mrb[0].mxu0
      %v2583 = vadd.f32 0.0, %v2582
      %v2584 = vpop.f32.mrb[0].mxu0
      %v2585 = vpop.f32.mrb[0].mxu0
      %v2586 = vadd.f32 0.0, %v2585
      %v2587 = vpop.f32.mrb[0].mxu0
      %2588 = vmatprep.mubr.bf16.mxu0 0
      %2589 = vmatmul.mubr.bf16.gmra.mrb[0].mxu0 %v2431
      %v2590 = vpop.f32.mrb[0].mxu0
      %v2591 = vadd.f32 0.0, %v2590
      %v2592 = vpop.f32.mrb[0].mxu0
      %v2593 = vpop.f32.mrb[0].mxu0
      %v2594 = vadd.f32 0.0, %v2593
      %v2595 = vpop.f32.mrb[0].mxu0
      %2596 = vdwg.mxu0
      %v2597 = vadd.f32 %v2353, %v2471
      %v2598 = vadd.f32 %v2354, %v2474
      %v2599 = vadd.f32 %v2355, %v2479
      %v2600 = vadd.f32 %v2356, %v2482
      %v2601 = vadd.f32 %v2357, %v2487
      %v2602 = vadd.f32 %v2358, %v2490
      %v2603 = vadd.f32 %v2359, %v2495
      %v2604 = vadd.f32 %v2360, %v2498
      %v2605 = vadd.f32 %v2361, %v2503
      %v2606 = vadd.f32 %v2362, %v2506
      %v2607 = vadd.f32 %v2363, %v2511
      %v2608 = vadd.f32 %v2364, %v2514
      %v2609 = vadd.f32 %v2365, %v2519
      %v2610 = vadd.f32 %v2366, %v2522
      %v2611 = vadd.f32 %v2367, %v2527
      %v2612 = vadd.f32 %v2368, %v2530
      %v2613 = vadd.f32 %v2369, %v2535
      %v2614 = vadd.f32 %v2370, %v2538
      %v2615 = vadd.f32 %v2371, %v2543
      %v2616 = vadd.f32 %v2372, %v2546
      %v2617 = vadd.f32 %v2373, %v2551
      %v2618 = vadd.f32 %v2374, %v2554
      %v2619 = vadd.f32 %v2375, %v2559
      %v2620 = vadd.f32 %v2376, %v2562
      %v2621 = vadd.f32 %v2377, %v2567
      %v2622 = vadd.f32 %v2378, %v2570
      %v2623 = vadd.f32 %v2379, %v2575
      %v2624 = vadd.f32 %v2380, %v2578
      %v2625 = vadd.f32 %v2381, %v2583
      %v2626 = vadd.f32 %v2382, %v2586
      %v2627 = vadd.f32 %v2383, %v2591
      %v2628 = vadd.f32 %v2384, %v2594
      %v2631 = vunpack.c.l.b16 %v296
      %v2632 = vunpack.c.l.b16 %v297
      %v2633 = vpack.c.b16 %v2632, %v2631
      %v2635 = vshrl.u32 %v2633, 16
      %v2637 = vshll.u32 %v2633, 16
      %v2639 = vrot.slane %v2637, 1
      %v2640 = vor.u32 %v2635, %v2639
      %2641 = vrot.lane.b32.xlu0 %v2640, 4
      %v2642 = vpop.permute.xlu0 %2641
      %v2643 = vrot.slane %v2633, 1
      %2644 = vrot.lane.b32.xlu0 %v2643, 8
      %v2645 = vpop.permute.xlu0 %2644
      %v2648 = vsel %vm862, %v296, %v2642
      %v2650 = vsel %vm959, %v2648, %v2645
      %s2651 = scalar_lea.vmem %s1, 40
      %v2652 = vld [vmem:[%s2651] sm:$0xf]
      %v2653 = vld [vmem:[%s2651 + $0x4] sm:$0x3]
      %v2655 = vunpack.c.l.b16 %v2650
      %v2656 = vpack.c.b16 %v2655, %v2411
      %v2659 = vunpack.c.l.b16 %v2652
      %v2660 = vunpack.c.l.b16 %v2653
      %v2661 = vpack.c.b16 %v2660, %v2659
      %v2663 = vsel %vm1202, %v2656, 0
      %v2666 = vsel %vm1251, %v2661, 0
      %2668 = vmatprep.subr.bf16.mxu0 0
      %2669 = vmatpush1.bf16.msra.mxu0 %v2666
      %2670 = vmatprep.subr.bf16.mxu0 0
      %2671 = vmatpush1.bf16.msra.mxu0 0
      %2672 = vmatprep.subr.bf16.mxu0 0
      %2673 = vmatpush1.bf16.msra.mxu0 0
      %2674 = vmatprep.subr.bf16.mxu0 0
      %2675 = vmatpush1.bf16.msra.mxu0 0
      %2676 = vmatprep.subr.bf16.mxu0 0
      %2677 = vmatpush1.bf16.msra.mxu0 0
      %2678 = vmatprep.subr.bf16.mxu0 0
      %2679 = vmatpush1.bf16.msra.mxu0 0
      %2680 = vmatprep.subr.bf16.mxu0 0
      %2681 = vmatpush1.bf16.msra.mxu0 0
      %2682 = vmatprep.subr.bf16.mxu0 0
      %2683 = vmatpush1.bf16.msra.mxu0 0
      %2684 = vmatprep.subr.bf16.mxu0 0
      %2685 = vmatpush1.bf16.msra.mxu0 0
      %2686 = vmatprep.subr.bf16.mxu0 0
      %2687 = vmatpush1.bf16.msra.mxu0 0
      %2688 = vmatprep.subr.bf16.mxu0 0
      %2689 = vmatpush1.bf16.msra.mxu0 0
      %2690 = vmatprep.subr.bf16.mxu0 0
      %2691 = vmatpush1.bf16.msra.mxu0 0
      %2692 = vmatprep.subr.bf16.mxu0 0
      %2693 = vmatpush1.bf16.msra.mxu0 0
      %2694 = vmatprep.subr.bf16.mxu0 0
      %2695 = vmatpush1.bf16.msra.mxu0 0
      %2696 = vmatprep.subr.bf16.mxu0 0
      %2697 = vmatpush1.bf16.msra.mxu0 0
      %2698 = vmatprep.subr.bf16.mxu0 0
      %2699 = vmatpush1.bf16.msra.mxu0 0
      %2700 = vmatprep.mubr.bf16.mxu0 0
      %2701 = vmatmul.mubr.bf16.gmra.mrb[0].mxu0 %v1461
      %v2702 = vpop.f32.mrb[0].mxu0
      %v2703 = vadd.f32 0.0, %v2702
      %v2704 = vpop.f32.mrb[0].mxu0
      %v2705 = vpop.f32.mrb[0].mxu0
      %v2706 = vadd.f32 0.0, %v2705
      %v2707 = vpop.f32.mrb[0].mxu0
      %2708 = vmatprep.mubr.bf16.mxu0 0
      %2709 = vmatmul.mubr.bf16.gmra.mrb[0].mxu0 %v1464
      %v2710 = vpop.f32.mrb[0].mxu0
      %v2711 = vadd.f32 0.0, %v2710
      %v2712 = vpop.f32.mrb[0].mxu0
      %v2713 = vpop.f32.mrb[0].mxu0
      %v2714 = vadd.f32 0.0, %v2713
      %v2715 = vpop.f32.mrb[0].mxu0
      %2716 = vmatprep.mubr.bf16.mxu0 0
      %2717 = vmatmul.mubr.bf16.gmra.mrb[0].mxu0 %v1467
      %v2718 = vpop.f32.mrb[0].mxu0
      %v2719 = vadd.f32 0.0, %v2718
      %v2720 = vpop.f32.mrb[0].mxu0
      %v2721 = vpop.f32.mrb[0].mxu0
      %v2722 = vadd.f32 0.0, %v2721
      %v2723 = vpop.f32.mrb[0].mxu0
      %2724 = vmatprep.mubr.bf16.mxu0 0
      %2725 = vmatmul.mubr.bf16.gmra.mrb[0].mxu0 %v1769
      %v2726 = vpop.f32.mrb[0].mxu0
      %v2727 = vadd.f32 0.0, %v2726
      %v2728 = vpop.f32.mrb[0].mxu0
      %v2729 = vpop.f32.mrb[0].mxu0
      %v2730 = vadd.f32 0.0, %v2729
      %v2731 = vpop.f32.mrb[0].mxu0
      %2732 = vmatprep.mubr.bf16.mxu0 0
      %2733 = vmatmul.mubr.bf16.gmra.mrb[0].mxu0 %v1473
      %v2734 = vpop.f32.mrb[0].mxu0
      %v2735 = vadd.f32 0.0, %v2734
      %v2736 = vpop.f32.mrb[0].mxu0
      %v2737 = vpop.f32.mrb[0].mxu0
      %v2738 = vadd.f32 0.0, %v2737
      %v2739 = vpop.f32.mrb[0].mxu0
      %2740 = vmatprep.mubr.bf16.mxu0 0
      %2741 = vmatmul.mubr.bf16.gmra.mrb[0].mxu0 %v1476
      %v2742 = vpop.f32.mrb[0].mxu0
      %v2743 = vadd.f32 0.0, %v2742
      %v2744 = vpop.f32.mrb[0].mxu0
      %v2745 = vpop.f32.mrb[0].mxu0
      %v2746 = vadd.f32 0.0, %v2745
      %v2747 = vpop.f32.mrb[0].mxu0
      %2748 = vmatprep.mubr.bf16.mxu0 0
      %2749 = vmatmul.mubr.bf16.gmra.mrb[0].mxu0 %v1479
      %v2750 = vpop.f32.mrb[0].mxu0
      %v2751 = vadd.f32 0.0, %v2750
      %v2752 = vpop.f32.mrb[0].mxu0
      %v2753 = vpop.f32.mrb[0].mxu0
      %v2754 = vadd.f32 0.0, %v2753
      %v2755 = vpop.f32.mrb[0].mxu0
      %2756 = vmatprep.mubr.bf16.mxu0 0
      %2757 = vmatmul.mubr.bf16.gmra.mrb[0].mxu0 %v1772
      %v2758 = vpop.f32.mrb[0].mxu0
      %v2759 = vadd.f32 0.0, %v2758
      %v2760 = vpop.f32.mrb[0].mxu0
      %v2761 = vpop.f32.mrb[0].mxu0
      %v2762 = vadd.f32 0.0, %v2761
      %v2763 = vpop.f32.mrb[0].mxu0
      %2764 = vmatprep.mubr.bf16.mxu0 0
      %2765 = vmatmul.mubr.bf16.gmra.mrb[0].mxu0 %v1485
      %v2766 = vpop.f32.mrb[0].mxu0
      %v2767 = vadd.f32 0.0, %v2766
      %v2768 = vpop.f32.mrb[0].mxu0
      %v2769 = vpop.f32.mrb[0].mxu0
      %v2770 = vadd.f32 0.0, %v2769
      %v2771 = vpop.f32.mrb[0].mxu0
      %2772 = vmatprep.mubr.bf16.mxu0 0
      %2773 = vmatmul.mubr.bf16.gmra.mrb[0].mxu0 %v1488
      %v2774 = vpop.f32.mrb[0].mxu0
      %v2775 = vadd.f32 0.0, %v2774
      %v2776 = vpop.f32.mrb[0].mxu0
      %v2777 = vpop.f32.mrb[0].mxu0
      %v2778 = vadd.f32 0.0, %v2777
      %v2779 = vpop.f32.mrb[0].mxu0
      %2780 = vmatprep.mubr.bf16.mxu0 0
      %2781 = vmatmul.mubr.bf16.gmra.mrb[0].mxu0 %v1491
      %v2782 = vpop.f32.mrb[0].mxu0
      %v2783 = vadd.f32 0.0, %v2782
      %v2784 = vpop.f32.mrb[0].mxu0
      %v2785 = vpop.f32.mrb[0].mxu0
      %v2786 = vadd.f32 0.0, %v2785
      %v2787 = vpop.f32.mrb[0].mxu0
      %2788 = vmatprep.mubr.bf16.mxu0 0
      %2789 = vmatmul.mubr.bf16.gmra.mrb[0].mxu0 %v1775
      %v2790 = vpop.f32.mrb[0].mxu0
      %v2791 = vadd.f32 0.0, %v2790
      %v2792 = vpop.f32.mrb[0].mxu0
      %v2793 = vpop.f32.mrb[0].mxu0
      %v2794 = vadd.f32 0.0, %v2793
      %v2795 = vpop.f32.mrb[0].mxu0
      %2796 = vmatprep.mubr.bf16.mxu0 0
      %2797 = vmatmul.mubr.bf16.gmra.mrb[0].mxu0 %v2181
      %v2798 = vpop.f32.mrb[0].mxu0
      %v2799 = vadd.f32 0.0, %v2798
      %v2800 = vpop.f32.mrb[0].mxu0
      %v2801 = vpop.f32.mrb[0].mxu0
      %v2802 = vadd.f32 0.0, %v2801
      %v2803 = vpop.f32.mrb[0].mxu0
      %2804 = vmatprep.mubr.bf16.mxu0 0
      %2805 = vmatmul.mubr.bf16.gmra.mrb[0].mxu0 %v2184
      %v2806 = vpop.f32.mrb[0].mxu0
      %v2807 = vadd.f32 0.0, %v2806
      %v2808 = vpop.f32.mrb[0].mxu0
      %v2809 = vpop.f32.mrb[0].mxu0
      %v2810 = vadd.f32 0.0, %v2809
      %v2811 = vpop.f32.mrb[0].mxu0
      %2812 = vmatprep.mubr.bf16.mxu0 0
      %2813 = vmatmul.mubr.bf16.gmra.mrb[0].mxu0 %v2187
      %v2814 = vpop.f32.mrb[0].mxu0
      %v2815 = vadd.f32 0.0, %v2814
      %v2816 = vpop.f32.mrb[0].mxu0
      %v2817 = vpop.f32.mrb[0].mxu0
      %v2818 = vadd.f32 0.0, %v2817
      %v2819 = vpop.f32.mrb[0].mxu0
      %2820 = vmatprep.mubr.bf16.mxu0 0
      %2821 = vmatmul.mubr.bf16.gmra.mrb[0].mxu0 %v2663
      %v2822 = vpop.f32.mrb[0].mxu0
      %v2823 = vadd.f32 0.0, %v2822
      %v2824 = vpop.f32.mrb[0].mxu0
      %v2825 = vpop.f32.mrb[0].mxu0
      %v2826 = vadd.f32 0.0, %v2825
      %v2827 = vpop.f32.mrb[0].mxu0
      %2828 = vdwg.mxu0
      %v2829 = vadd.f32 %v2597, %v2703
      %v2830 = vadd.f32 %v2598, %v2706
      %v2831 = vadd.f32 %v2599, %v2711
      %v2832 = vadd.f32 %v2600, %v2714
      %v2833 = vadd.f32 %v2601, %v2719
      %v2834 = vadd.f32 %v2602, %v2722
      %v2835 = vadd.f32 %v2603, %v2727
      %v2836 = vadd.f32 %v2604, %v2730
      %v2837 = vadd.f32 %v2605, %v2735
      %v2838 = vadd.f32 %v2606, %v2738
      %v2839 = vadd.f32 %v2607, %v2743
      %v2840 = vadd.f32 %v2608, %v2746
      %v2841 = vadd.f32 %v2609, %v2751
      %v2842 = vadd.f32 %v2610, %v2754
      %v2843 = vadd.f32 %v2611, %v2759
      %v2844 = vadd.f32 %v2612, %v2762
      %v2845 = vadd.f32 %v2613, %v2767
      %v2846 = vadd.f32 %v2614, %v2770
      %v2847 = vadd.f32 %v2615, %v2775
      %v2848 = vadd.f32 %v2616, %v2778
      %v2849 = vadd.f32 %v2617, %v2783
      %v2850 = vadd.f32 %v2618, %v2786
      %v2851 = vadd.f32 %v2619, %v2791
      %v2852 = vadd.f32 %v2620, %v2794
      %v2853 = vadd.f32 %v2621, %v2799
      %v2854 = vadd.f32 %v2622, %v2802
      %v2855 = vadd.f32 %v2623, %v2807
      %v2856 = vadd.f32 %v2624, %v2810
      %v2857 = vadd.f32 %v2625, %v2815
      %v2858 = vadd.f32 %v2626, %v2818
      %v2859 = vadd.f32 %v2627, %v2823
      %v2860 = vadd.f32 %v2628, %v2826
      %v2877 = vunpack.c.l.b16 %v298
      %v2878 = vunpack.c.l.b16 %v299
      %v2879 = vunpack.c.l.b16 %v300
      %v2880 = vunpack.c.l.b16 %v301
      %v2881 = vunpack.c.l.b16 %v302
      %v2882 = vunpack.c.l.b16 %v303
      %v2883 = vunpack.c.l.b16 %v304
      %v2884 = vunpack.c.l.b16 %v305
      %v2885 = vunpack.c.l.b16 %v306
      %v2886 = vunpack.c.l.b16 %v307
      %v2887 = vunpack.c.l.b16 %v308
      %v2888 = vunpack.c.l.b16 %v309
      %v2889 = vunpack.c.l.b16 %v310
      %v2890 = vunpack.c.l.b16 %v311
      %v2891 = vunpack.c.l.b16 %v312
      %v2892 = vunpack.c.l.b16 %v313
      %v2893 = vpack.c.b16 %v2878, %v2877
      %v2894 = vpack.c.b16 %v2880, %v2879
      %v2895 = vpack.c.b16 %v2882, %v2881
      %v2896 = vpack.c.b16 %v2884, %v2883
      %v2897 = vpack.c.b16 %v2886, %v2885
      %v2898 = vpack.c.b16 %v2888, %v2887
      %v2899 = vpack.c.b16 %v2890, %v2889
      %v2900 = vpack.c.b16 %v2892, %v2891
      %v2902 = vshrl.u32 %v2893, 16
      %v2904 = vshll.u32 %v2893, 16
      %v2906 = vrot.slane %v2904, 1
      %v2907 = vor.u32 %v2902, %v2906
      %v2909 = vshrl.u32 %v2894, 16
      %v2911 = vshll.u32 %v2894, 16
      %v2913 = vrot.slane %v2911, 1
      %v2914 = vor.u32 %v2909, %v2913
      %v2916 = vshrl.u32 %v2895, 16
      %v2918 = vshll.u32 %v2895, 16
      %v2920 = vrot.slane %v2918, 1
      %v2921 = vor.u32 %v2916, %v2920
      %v2923 = vshrl.u32 %v2896, 16
      %v2925 = vshll.u32 %v2896, 16
      %v2927 = vrot.slane %v2925, 1
      %v2928 = vor.u32 %v2923, %v2927
      %v2930 = vshrl.u32 %v2897, 16
      %v2932 = vshll.u32 %v2897, 16
      %v2934 = vrot.slane %v2932, 1
      %v2935 = vor.u32 %v2930, %v2934
      %v2937 = vshrl.u32 %v2898, 16
      %v2939 = vshll.u32 %v2898, 16
      %v2941 = vrot.slane %v2939, 1
      %v2942 = vor.u32 %v2937, %v2941
      %v2944 = vshrl.u32 %v2899, 16
      %v2946 = vshll.u32 %v2899, 16
      %v2948 = vrot.slane %v2946, 1
      %v2949 = vor.u32 %v2944, %v2948
      %v2951 = vshrl.u32 %v2900, 16
      %v2953 = vshll.u32 %v2900, 16
      %v2955 = vrot.slane %v2953, 1
      %v2956 = vor.u32 %v2951, %v2955
      %2957 = vrot.lane.b32.xlu0 %v2907, 4
      %v2958 = vpop.permute.xlu0 %2957
      %2959 = vrot.lane.b32.xlu0 %v2914, 4
      %v2960 = vpop.permute.xlu0 %2959
      %2961 = vrot.lane.b32.xlu0 %v2921, 4
      %v2962 = vpop.permute.xlu0 %2961
      %2963 = vrot.lane.b32.xlu0 %v2928, 4
      %v2964 = vpop.permute.xlu0 %2963
      %2965 = vrot.lane.b32.xlu0 %v2935, 4
      %v2966 = vpop.permute.xlu0 %2965
      %2967 = vrot.lane.b32.xlu0 %v2942, 4
      %v2968 = vpop.permute.xlu0 %2967
      %2969 = vrot.lane.b32.xlu0 %v2949, 4
      %v2970 = vpop.permute.xlu0 %2969
      %2971 = vrot.lane.b32.xlu0 %v2956, 4
      %v2972 = vpop.permute.xlu0 %2971
      %v2973 = vrot.slane %v2893, 1
      %v2974 = vrot.slane %v2894, 1
      %v2975 = vrot.slane %v2895, 1
      %v2976 = vrot.slane %v2896, 1
      %v2977 = vrot.slane %v2897, 1
      %v2978 = vrot.slane %v2898, 1
      %v2979 = vrot.slane %v2899, 1
      %v2980 = vrot.slane %v2900, 1
      %2981 = vrot.lane.b32.xlu0 %v2973, 8
      %v2982 = vpop.permute.xlu0 %2981
      %2983 = vrot.lane.b32.xlu0 %v2974, 8
      %v2984 = vpop.permute.xlu0 %2983
      %2985 = vrot.lane.b32.xlu0 %v2975, 8
      %v2986 = vpop.permute.xlu0 %2985
      %2987 = vrot.lane.b32.xlu0 %v2976, 8
      %v2988 = vpop.permute.xlu0 %2987
      %2989 = vrot.lane.b32.xlu0 %v2977, 8
      %v2990 = vpop.permute.xlu0 %2989
      %2991 = vrot.lane.b32.xlu0 %v2978, 8
      %v2992 = vpop.permute.xlu0 %2991
      %2993 = vrot.lane.b32.xlu0 %v2979, 8
      %v2994 = vpop.permute.xlu0 %2993
      %2995 = vrot.lane.b32.xlu0 %v2980, 8
      %v2996 = vpop.permute.xlu0 %2995
      %v2999 = vsel %vm862, %v298, %v2958
      %v3002 = vsel %vm862, %v300, %v2960
      %v3005 = vsel %vm862, %v302, %v2962
      %v3008 = vsel %vm862, %v304, %v2964
      %v3011 = vsel %vm862, %v306, %v2966
      %v3014 = vsel %vm862, %v308, %v2968
      %v3017 = vsel %vm862, %v310, %v2970
      %v3020 = vsel %vm862, %v312, %v2972
      %v3022 = vsel %vm959, %v2999, %v2982
      %v3024 = vsel %vm959, %v3002, %v2984
      %v3026 = vsel %vm959, %v3005, %v2986
      %v3028 = vsel %vm959, %v3008, %v2988
      %v3030 = vsel %vm959, %v3011, %v2990
      %v3032 = vsel %vm959, %v3014, %v2992
      %v3034 = vsel %vm959, %v3017, %v2994
      %v3036 = vsel %vm959, %v3020, %v2996
      %s3037 = scalar_lea.vmem %s1, 48
      %v3038 = vld [vmem:[%s3037] sm:$0xf]
      %v3039 = vld [vmem:[%s3037 + $0x4] sm:$0x3]
      %v3048 = vunpack.c.l.b16 %v3022
      %v3049 = vunpack.c.l.b16 %v3024
      %v3050 = vunpack.c.l.b16 %v3026
      %v3051 = vunpack.c.l.b16 %v3028
      %v3052 = vunpack.c.l.b16 %v3030
      %v3053 = vunpack.c.l.b16 %v3032
      %v3054 = vunpack.c.l.b16 %v3034
      %v3055 = vunpack.c.l.b16 %v3036
      %v3056 = vpack.c.b16 %v3049, %v3048
      %v3057 = vpack.c.b16 %v3051, %v3050
      %v3058 = vpack.c.b16 %v3053, %v3052
      %v3059 = vpack.c.b16 %v3055, %v3054
      %v3062 = vunpack.c.l.b16 %v3038
      %v3063 = vunpack.c.l.b16 %v3039
      %v3064 = vpack.c.b16 %v3063, %v3062
      %v3066 = vsel %vm1202, %v3056, 0
      %v3069 = vsel %vm1202, %v3057, 0
      %v3072 = vsel %vm1202, %v3058, 0
      %v3075 = vsel %vm1202, %v3059, 0
      %v3078 = vsel %vm1251, %v3064, 0
      %3080 = vmatprep.subr.bf16.mxu0 0
      %3081 = vmatpush1.bf16.msra.mxu0 %v3078
      %3082 = vmatprep.subr.bf16.mxu0 0
      %3083 = vmatpush1.bf16.msra.mxu0 0
      %3084 = vmatprep.subr.bf16.mxu0 0
      %3085 = vmatpush1.bf16.msra.mxu0 0
      %3086 = vmatprep.subr.bf16.mxu0 0
      %3087 = vmatpush1.bf16.msra.mxu0 0
      %3088 = vmatprep.subr.bf16.mxu0 0
      %3089 = vmatpush1.bf16.msra.mxu0 0
      %3090 = vmatprep.subr.bf16.mxu0 0
      %3091 = vmatpush1.bf16.msra.mxu0 0
      %3092 = vmatprep.subr.bf16.mxu0 0
      %3093 = vmatpush1.bf16.msra.mxu0 0
      %3094 = vmatprep.subr.bf16.mxu0 0
      %3095 = vmatpush1.bf16.msra.mxu0 0
      %3096 = vmatprep.subr.bf16.mxu0 0
      %3097 = vmatpush1.bf16.msra.mxu0 0
      %3098 = vmatprep.subr.bf16.mxu0 0
      %3099 = vmatpush1.bf16.msra.mxu0 0
      %3100 = vmatprep.subr.bf16.mxu0 0
      %3101 = vmatpush1.bf16.msra.mxu0 0
      %3102 = vmatprep.subr.bf16.mxu0 0
      %3103 = vmatpush1.bf16.msra.mxu0 0
      %3104 = vmatprep.subr.bf16.mxu0 0
      %3105 = vmatpush1.bf16.msra.mxu0 0
      %3106 = vmatprep.subr.bf16.mxu0 0
      %3107 = vmatpush1.bf16.msra.mxu0 0
      %3108 = vmatprep.subr.bf16.mxu0 0
      %3109 = vmatpush1.bf16.msra.mxu0 0
      %3110 = vmatprep.subr.bf16.mxu0 0
      %3111 = vmatpush1.bf16.msra.mxu0 0
      %3112 = vmatprep.mubr.bf16.mxu0 0
      %3113 = vmatmul.mubr.bf16.gmra.mrb[0].mxu0 %v1470
      %v3114 = vpop.f32.mrb[0].mxu0
      %v3115 = vadd.f32 0.0, %v3114
      %v3116 = vpop.f32.mrb[0].mxu0
      %v3117 = vpop.f32.mrb[0].mxu0
      %v3118 = vadd.f32 0.0, %v3117
      %v3119 = vpop.f32.mrb[0].mxu0
      %3120 = vmatprep.mubr.bf16.mxu0 0
      %3121 = vmatmul.mubr.bf16.gmra.mrb[0].mxu0 %v1473
      %v3122 = vpop.f32.mrb[0].mxu0
      %v3123 = vadd.f32 0.0, %v3122
      %v3124 = vpop.f32.mrb[0].mxu0
      %v3125 = vpop.f32.mrb[0].mxu0
      %v3126 = vadd.f32 0.0, %v3125
      %v3127 = vpop.f32.mrb[0].mxu0
      %3128 = vmatprep.mubr.bf16.mxu0 0
      %3129 = vmatmul.mubr.bf16.gmra.mrb[0].mxu0 %v1476
      %v3130 = vpop.f32.mrb[0].mxu0
      %v3131 = vadd.f32 0.0, %v3130
      %v3132 = vpop.f32.mrb[0].mxu0
      %v3133 = vpop.f32.mrb[0].mxu0
      %v3134 = vadd.f32 0.0, %v3133
      %v3135 = vpop.f32.mrb[0].mxu0
      %3136 = vmatprep.mubr.bf16.mxu0 0
      %3137 = vmatmul.mubr.bf16.gmra.mrb[0].mxu0 %v1479
      %v3138 = vpop.f32.mrb[0].mxu0
      %v3139 = vadd.f32 0.0, %v3138
      %v3140 = vpop.f32.mrb[0].mxu0
      %v3141 = vpop.f32.mrb[0].mxu0
      %v3142 = vadd.f32 0.0, %v3141
      %v3143 = vpop.f32.mrb[0].mxu0
      %3144 = vmatprep.mubr.bf16.mxu0 0
      %3145 = vmatmul.mubr.bf16.gmra.mrb[0].mxu0 %v1482
      %v3146 = vpop.f32.mrb[0].mxu0
      %v3147 = vadd.f32 0.0, %v3146
      %v3148 = vpop.f32.mrb[0].mxu0
      %v3149 = vpop.f32.mrb[0].mxu0
      %v3150 = vadd.f32 0.0, %v3149
      %v3151 = vpop.f32.mrb[0].mxu0
      %3152 = vmatprep.mubr.bf16.mxu0 0
      %3153 = vmatmul.mubr.bf16.gmra.mrb[0].mxu0 %v1485
      %v3154 = vpop.f32.mrb[0].mxu0
      %v3155 = vadd.f32 0.0, %v3154
      %v3156 = vpop.f32.mrb[0].mxu0
      %v3157 = vpop.f32.mrb[0].mxu0
      %v3158 = vadd.f32 0.0, %v3157
      %v3159 = vpop.f32.mrb[0].mxu0
      %3160 = vmatprep.mubr.bf16.mxu0 0
      %3161 = vmatmul.mubr.bf16.gmra.mrb[0].mxu0 %v1488
      %v3162 = vpop.f32.mrb[0].mxu0
      %v3163 = vadd.f32 0.0, %v3162
      %v3164 = vpop.f32.mrb[0].mxu0
      %v3165 = vpop.f32.mrb[0].mxu0
      %v3166 = vadd.f32 0.0, %v3165
      %v3167 = vpop.f32.mrb[0].mxu0
      %3168 = vmatprep.mubr.bf16.mxu0 0
      %3169 = vmatmul.mubr.bf16.gmra.mrb[0].mxu0 %v1491
      %v3170 = vpop.f32.mrb[0].mxu0
      %v3171 = vadd.f32 0.0, %v3170
      %v3172 = vpop.f32.mrb[0].mxu0
      %v3173 = vpop.f32.mrb[0].mxu0
      %v3174 = vadd.f32 0.0, %v3173
      %v3175 = vpop.f32.mrb[0].mxu0
      %3176 = vmatprep.mubr.bf16.mxu0 0
      %3177 = vmatmul.mubr.bf16.gmra.mrb[0].mxu0 %v2178
      %v3178 = vpop.f32.mrb[0].mxu0
      %v3179 = vadd.f32 0.0, %v3178
      %v3180 = vpop.f32.mrb[0].mxu0
      %v3181 = vpop.f32.mrb[0].mxu0
      %v3182 = vadd.f32 0.0, %v3181
      %v3183 = vpop.f32.mrb[0].mxu0
      %3184 = vmatprep.mubr.bf16.mxu0 0
      %3185 = vmatmul.mubr.bf16.gmra.mrb[0].mxu0 %v2181
      %v3186 = vpop.f32.mrb[0].mxu0
      %v3187 = vadd.f32 0.0, %v3186
      %v3188 = vpop.f32.mrb[0].mxu0
      %v3189 = vpop.f32.mrb[0].mxu0
      %v3190 = vadd.f32 0.0, %v3189
      %v3191 = vpop.f32.mrb[0].mxu0
      %3192 = vmatprep.mubr.bf16.mxu0 0
      %3193 = vmatmul.mubr.bf16.gmra.mrb[0].mxu0 %v2184
      %v3194 = vpop.f32.mrb[0].mxu0
      %v3195 = vadd.f32 0.0, %v3194
      %v3196 = vpop.f32.mrb[0].mxu0
      %v3197 = vpop.f32.mrb[0].mxu0
      %v3198 = vadd.f32 0.0, %v3197
      %v3199 = vpop.f32.mrb[0].mxu0
      %3200 = vmatprep.mubr.bf16.mxu0 0
      %3201 = vmatmul.mubr.bf16.gmra.mrb[0].mxu0 %v2187
      %v3202 = vpop.f32.mrb[0].mxu0
      %v3203 = vadd.f32 0.0, %v3202
      %v3204 = vpop.f32.mrb[0].mxu0
      %v3205 = vpop.f32.mrb[0].mxu0
      %v3206 = vadd.f32 0.0, %v3205
      %v3207 = vpop.f32.mrb[0].mxu0
      %3208 = vmatprep.mubr.bf16.mxu0 0
      %3209 = vmatmul.mubr.bf16.gmra.mrb[0].mxu0 %v3066
      %v3210 = vpop.f32.mrb[0].mxu0
      %v3211 = vadd.f32 0.0, %v3210
      %v3212 = vpop.f32.mrb[0].mxu0
      %v3213 = vpop.f32.mrb[0].mxu0
      %v3214 = vadd.f32 0.0, %v3213
      %v3215 = vpop.f32.mrb[0].mxu0
      %3216 = vmatprep.mubr.bf16.mxu0 0
      %3217 = vmatmul.mubr.bf16.gmra.mrb[0].mxu0 %v3069
      %v3218 = vpop.f32.mrb[0].mxu0
      %v3219 = vadd.f32 0.0, %v3218
      %v3220 = vpop.f32.mrb[0].mxu0
      %v3221 = vpop.f32.mrb[0].mxu0
      %v3222 = vadd.f32 0.0, %v3221
      %v3223 = vpop.f32.mrb[0].mxu0
      %3224 = vmatprep.mubr.bf16.mxu0 0
      %3225 = vmatmul.mubr.bf16.gmra.mrb[0].mxu0 %v3072
      %v3226 = vpop.f32.mrb[0].mxu0
      %v3227 = vadd.f32 0.0, %v3226
      %v3228 = vpop.f32.mrb[0].mxu0
      %v3229 = vpop.f32.mrb[0].mxu0
      %v3230 = vadd.f32 0.0, %v3229
      %v3231 = vpop.f32.mrb[0].mxu0
      %3232 = vmatprep.mubr.bf16.mxu0 0
      %3233 = vmatmul.mubr.bf16.gmra.mrb[0].mxu0 %v3075
      %v3234 = vpop.f32.mrb[0].mxu0
      %v3235 = vadd.f32 0.0, %v3234
      %v3236 = vpop.f32.mrb[0].mxu0
      %v3237 = vpop.f32.mrb[0].mxu0
      %v3238 = vadd.f32 0.0, %v3237
      %v3239 = vpop.f32.mrb[0].mxu0
      %3240 = vdwg.mxu0
      %v3241 = vadd.f32 %v2829, %v3115
      %v3242 = vadd.f32 %v2830, %v3118
      %v3243 = vadd.f32 %v2831, %v3123
      %v3244 = vadd.f32 %v2832, %v3126
      %v3245 = vadd.f32 %v2833, %v3131
      %v3246 = vadd.f32 %v2834, %v3134
      %v3247 = vadd.f32 %v2835, %v3139
      %v3248 = vadd.f32 %v2836, %v3142
      %v3249 = vadd.f32 %v2837, %v3147
      %v3250 = vadd.f32 %v2838, %v3150
      %v3251 = vadd.f32 %v2839, %v3155
      %v3252 = vadd.f32 %v2840, %v3158
      %v3253 = vadd.f32 %v2841, %v3163
      %v3254 = vadd.f32 %v2842, %v3166
      %v3255 = vadd.f32 %v2843, %v3171
      %v3256 = vadd.f32 %v2844, %v3174
      %v3257 = vadd.f32 %v2845, %v3179
      %v3258 = vadd.f32 %v2846, %v3182
      %v3259 = vadd.f32 %v2847, %v3187
      %v3260 = vadd.f32 %v2848, %v3190
      %v3261 = vadd.f32 %v2849, %v3195
      %v3262 = vadd.f32 %v2850, %v3198
      %v3263 = vadd.f32 %v2851, %v3203
      %v3264 = vadd.f32 %v2852, %v3206
      %v3265 = vadd.f32 %v2853, %v3211
      %v3266 = vadd.f32 %v2854, %v3214
      %v3267 = vadd.f32 %v2855, %v3219
      %v3268 = vadd.f32 %v2856, %v3222
      %v3269 = vadd.f32 %v2857, %v3227
      %v3270 = vadd.f32 %v2858, %v3230
      %v3271 = vadd.f32 %v2859, %v3235
      %v3272 = vadd.f32 %v2860, %v3238
      %v3275 = vunpack.c.l.b16 %v314
      %v3276 = vunpack.c.l.b16 %v315
      %v3277 = vpack.c.b16 %v3276, %v3275
      %v3279 = vshrl.u32 %v3277, 16
      %v3281 = vshll.u32 %v3277, 16
      %v3283 = vrot.slane %v3281, 1
      %v3284 = vor.u32 %v3279, %v3283
      %3285 = vrot.lane.b32.xlu0 %v3284, 4
      %v3286 = vpop.permute.xlu0 %3285
      %v3287 = vrot.slane %v3277, 1
      %3288 = vrot.lane.b32.xlu0 %v3287, 8
      %v3289 = vpop.permute.xlu0 %3288
      %v3292 = vsel %vm862, %v314, %v3286
      %v3294 = vsel %vm959, %v3292, %v3289
      %s3295 = scalar_lea.vmem %s1, 56
      %v3296 = vld [vmem:[%s3295] sm:$0xf]
      %v3297 = vld [vmem:[%s3295 + $0x4] sm:$0x3]
      %v3299 = vunpack.c.l.b16 %v3294
      %v3300 = vpack.c.b16 %v3050, %v3049
      %v3301 = vpack.c.b16 %v3052, %v3051
      %v3302 = vpack.c.b16 %v3054, %v3053
      %v3303 = vpack.c.b16 %v3299, %v3055
      %v3306 = vunpack.c.l.b16 %v3296
      %v3307 = vunpack.c.l.b16 %v3297
      %v3308 = vpack.c.b16 %v3307, %v3306
      %v3310 = vsel %vm1202, %v3300, 0
      %v3313 = vsel %vm1202, %v3301, 0
      %v3316 = vsel %vm1202, %v3302, 0
      %v3319 = vsel %vm1202, %v3303, 0
      %v3322 = vsel %vm1251, %v3308, 0
      %3324 = vmatprep.subr.bf16.mxu0 0
      %3325 = vmatpush1.bf16.msra.mxu0 %v3322
      %3326 = vmatprep.subr.bf16.mxu0 0
      %3327 = vmatpush1.bf16.msra.mxu0 0
      %3328 = vmatprep.subr.bf16.mxu0 0
      %3329 = vmatpush1.bf16.msra.mxu0 0
      %3330 = vmatprep.subr.bf16.mxu0 0
      %3331 = vmatpush1.bf16.msra.mxu0 0
      %3332 = vmatprep.subr.bf16.mxu0 0
      %3333 = vmatpush1.bf16.msra.mxu0 0
      %3334 = vmatprep.subr.bf16.mxu0 0
      %3335 = vmatpush1.bf16.msra.mxu0 0
      %3336 = vmatprep.subr.bf16.mxu0 0
      %3337 = vmatpush1.bf16.msra.mxu0 0
      %3338 = vmatprep.subr.bf16.mxu0 0
      %3339 = vmatpush1.bf16.msra.mxu0 0
      %3340 = vmatprep.subr.bf16.mxu0 0
      %3341 = vmatpush1.bf16.msra.mxu0 0
      %3342 = vmatprep.subr.bf16.mxu0 0
      %3343 = vmatpush1.bf16.msra.mxu0 0
      %3344 = vmatprep.subr.bf16.mxu0 0
      %3345 = vmatpush1.bf16.msra.mxu0 0
      %3346 = vmatprep.subr.bf16.mxu0 0
      %3347 = vmatpush1.bf16.msra.mxu0 0
      %3348 = vmatprep.subr.bf16.mxu0 0
      %3349 = vmatpush1.bf16.msra.mxu0 0
      %3350 = vmatprep.subr.bf16.mxu0 0
      %3351 = vmatpush1.bf16.msra.mxu0 0
      %3352 = vmatprep.subr.bf16.mxu0 0
      %3353 = vmatpush1.bf16.msra.mxu0 0
      %3354 = vmatprep.subr.bf16.mxu0 0
      %3355 = vmatpush1.bf16.msra.mxu0 0
      %3356 = vmatprep.mubr.bf16.mxu0 0
      %3357 = vmatmul.mubr.bf16.gmra.mrb[0].mxu0 %v1228
      %v3358 = vpop.f32.mrb[0].mxu0
      %v3359 = vadd.f32 0.0, %v3358
      %v3360 = vpop.f32.mrb[0].mxu0
      %v3361 = vpop.f32.mrb[0].mxu0
      %v3362 = vadd.f32 0.0, %v3361
      %v3363 = vpop.f32.mrb[0].mxu0
      %3364 = vmatprep.mubr.bf16.mxu0 0
      %3365 = vmatmul.mubr.bf16.gmra.mrb[0].mxu0 %v1231
      %v3366 = vpop.f32.mrb[0].mxu0
      %v3367 = vadd.f32 0.0, %v3366
      %v3368 = vpop.f32.mrb[0].mxu0
      %v3369 = vpop.f32.mrb[0].mxu0
      %v3370 = vadd.f32 0.0, %v3369
      %v3371 = vpop.f32.mrb[0].mxu0
      %3372 = vmatprep.mubr.bf16.mxu0 0
      %3373 = vmatmul.mubr.bf16.gmra.mrb[0].mxu0 %v1234
      %v3374 = vpop.f32.mrb[0].mxu0
      %v3375 = vadd.f32 0.0, %v3374
      %v3376 = vpop.f32.mrb[0].mxu0
      %v3377 = vpop.f32.mrb[0].mxu0
      %v3378 = vadd.f32 0.0, %v3377
      %v3379 = vpop.f32.mrb[0].mxu0
      %3380 = vmatprep.mubr.bf16.mxu0 0
      %3381 = vmatmul.mubr.bf16.gmra.mrb[0].mxu0 %v1237
      %v3382 = vpop.f32.mrb[0].mxu0
      %v3383 = vadd.f32 0.0, %v3382
      %v3384 = vpop.f32.mrb[0].mxu0
      %v3385 = vpop.f32.mrb[0].mxu0
      %v3386 = vadd.f32 0.0, %v3385
      %v3387 = vpop.f32.mrb[0].mxu0
      %3388 = vmatprep.mubr.bf16.mxu0 0
      %3389 = vmatmul.mubr.bf16.gmra.mrb[0].mxu0 %v1240
      %v3390 = vpop.f32.mrb[0].mxu0
      %v3391 = vadd.f32 0.0, %v3390
      %v3392 = vpop.f32.mrb[0].mxu0
      %v3393 = vpop.f32.mrb[0].mxu0
      %v3394 = vadd.f32 0.0, %v3393
      %v3395 = vpop.f32.mrb[0].mxu0
      %3396 = vmatprep.mubr.bf16.mxu0 0
      %3397 = vmatmul.mubr.bf16.gmra.mrb[0].mxu0 %v1243
      %v3398 = vpop.f32.mrb[0].mxu0
      %v3399 = vadd.f32 0.0, %v3398
      %v3400 = vpop.f32.mrb[0].mxu0
      %v3401 = vpop.f32.mrb[0].mxu0
      %v3402 = vadd.f32 0.0, %v3401
      %v3403 = vpop.f32.mrb[0].mxu0
      %3404 = vmatprep.mubr.bf16.mxu0 0
      %3405 = vmatmul.mubr.bf16.gmra.mrb[0].mxu0 %v1246
      %v3406 = vpop.f32.mrb[0].mxu0
      %v3407 = vadd.f32 0.0, %v3406
      %v3408 = vpop.f32.mrb[0].mxu0
      %v3409 = vpop.f32.mrb[0].mxu0
      %v3410 = vadd.f32 0.0, %v3409
      %v3411 = vpop.f32.mrb[0].mxu0
      %3412 = vmatprep.mubr.bf16.mxu0 0
      %3413 = vmatmul.mubr.bf16.gmra.mrb[0].mxu0 %v1249
      %v3414 = vpop.f32.mrb[0].mxu0
      %v3415 = vadd.f32 0.0, %v3414
      %v3416 = vpop.f32.mrb[0].mxu0
      %v3417 = vpop.f32.mrb[0].mxu0
      %v3418 = vadd.f32 0.0, %v3417
      %v3419 = vpop.f32.mrb[0].mxu0
      %3420 = vmatprep.mubr.bf16.mxu0 0
      %3421 = vmatmul.mubr.bf16.gmra.mrb[0].mxu0 %v2422
      %v3422 = vpop.f32.mrb[0].mxu0
      %v3423 = vadd.f32 0.0, %v3422
      %v3424 = vpop.f32.mrb[0].mxu0
      %v3425 = vpop.f32.mrb[0].mxu0
      %v3426 = vadd.f32 0.0, %v3425
      %v3427 = vpop.f32.mrb[0].mxu0
      %3428 = vmatprep.mubr.bf16.mxu0 0
      %3429 = vmatmul.mubr.bf16.gmra.mrb[0].mxu0 %v2425
      %v3430 = vpop.f32.mrb[0].mxu0
      %v3431 = vadd.f32 0.0, %v3430
      %v3432 = vpop.f32.mrb[0].mxu0
      %v3433 = vpop.f32.mrb[0].mxu0
      %v3434 = vadd.f32 0.0, %v3433
      %v3435 = vpop.f32.mrb[0].mxu0
      %3436 = vmatprep.mubr.bf16.mxu0 0
      %3437 = vmatmul.mubr.bf16.gmra.mrb[0].mxu0 %v2428
      %v3438 = vpop.f32.mrb[0].mxu0
      %v3439 = vadd.f32 0.0, %v3438
      %v3440 = vpop.f32.mrb[0].mxu0
      %v3441 = vpop.f32.mrb[0].mxu0
      %v3442 = vadd.f32 0.0, %v3441
      %v3443 = vpop.f32.mrb[0].mxu0
      %3444 = vmatprep.mubr.bf16.mxu0 0
      %3445 = vmatmul.mubr.bf16.gmra.mrb[0].mxu0 %v2431
      %v3446 = vpop.f32.mrb[0].mxu0
      %v3447 = vadd.f32 0.0, %v3446
      %v3448 = vpop.f32.mrb[0].mxu0
      %v3449 = vpop.f32.mrb[0].mxu0
      %v3450 = vadd.f32 0.0, %v3449
      %v3451 = vpop.f32.mrb[0].mxu0
      %3452 = vmatprep.mubr.bf16.mxu0 0
      %3453 = vmatmul.mubr.bf16.gmra.mrb[0].mxu0 %v3310
      %v3454 = vpop.f32.mrb[0].mxu0
      %v3455 = vadd.f32 0.0, %v3454
      %v3456 = vpop.f32.mrb[0].mxu0
      %v3457 = vpop.f32.mrb[0].mxu0
      %v3458 = vadd.f32 0.0, %v3457
      %v3459 = vpop.f32.mrb[0].mxu0
      %3460 = vmatprep.mubr.bf16.mxu0 0
      %3461 = vmatmul.mubr.bf16.gmra.mrb[0].mxu0 %v3313
      %v3462 = vpop.f32.mrb[0].mxu0
      %v3463 = vadd.f32 0.0, %v3462
      %v3464 = vpop.f32.mrb[0].mxu0
      %v3465 = vpop.f32.mrb[0].mxu0
      %v3466 = vadd.f32 0.0, %v3465
      %v3467 = vpop.f32.mrb[0].mxu0
      %3468 = vmatprep.mubr.bf16.mxu0 0
      %3469 = vmatmul.mubr.bf16.gmra.mrb[0].mxu0 %v3316
      %v3470 = vpop.f32.mrb[0].mxu0
      %v3471 = vadd.f32 0.0, %v3470
      %v3472 = vpop.f32.mrb[0].mxu0
      %v3473 = vpop.f32.mrb[0].mxu0
      %v3474 = vadd.f32 0.0, %v3473
      %v3475 = vpop.f32.mrb[0].mxu0
      %3476 = vmatprep.mubr.bf16.mxu0 0
      %3477 = vmatmul.mubr.bf16.gmra.mrb[0].mxu0 %v3319
      %v3478 = vpop.f32.mrb[0].mxu0
      %v3479 = vadd.f32 0.0, %v3478
      %v3480 = vpop.f32.mrb[0].mxu0
      %v3481 = vpop.f32.mrb[0].mxu0
      %v3482 = vadd.f32 0.0, %v3481
      %v3483 = vpop.f32.mrb[0].mxu0
      %3484 = vdwg.mxu0
      %v3485 = vadd.f32 %v3241, %v3359
      %v3486 = vadd.f32 %v3242, %v3362
      %v3487 = vadd.f32 %v3243, %v3367
      %v3488 = vadd.f32 %v3244, %v3370
      %v3489 = vadd.f32 %v3245, %v3375
      %v3490 = vadd.f32 %v3246, %v3378
      %v3491 = vadd.f32 %v3247, %v3383
      %v3492 = vadd.f32 %v3248, %v3386
      %v3493 = vadd.f32 %v3249, %v3391
      %v3494 = vadd.f32 %v3250, %v3394
      %v3495 = vadd.f32 %v3251, %v3399
      %v3496 = vadd.f32 %v3252, %v3402
      %v3497 = vadd.f32 %v3253, %v3407
      %v3498 = vadd.f32 %v3254, %v3410
      %v3499 = vadd.f32 %v3255, %v3415
      %v3500 = vadd.f32 %v3256, %v3418
      %v3501 = vadd.f32 %v3257, %v3423
      %v3502 = vadd.f32 %v3258, %v3426
      %v3503 = vadd.f32 %v3259, %v3431
      %v3504 = vadd.f32 %v3260, %v3434
      %v3505 = vadd.f32 %v3261, %v3439
      %v3506 = vadd.f32 %v3262, %v3442
      %v3507 = vadd.f32 %v3263, %v3447
      %v3508 = vadd.f32 %v3264, %v3450
      %v3509 = vadd.f32 %v3265, %v3455
      %v3510 = vadd.f32 %v3266, %v3458
      %v3511 = vadd.f32 %v3267, %v3463
      %v3512 = vadd.f32 %v3268, %v3466
      %v3513 = vadd.f32 %v3269, %v3471
      %v3514 = vadd.f32 %v3270, %v3474
      %v3515 = vadd.f32 %v3271, %v3479
      %v3516 = vadd.f32 %v3272, %v3482
      %v3519 = vunpack.c.l.b16 %v316
      %v3520 = vunpack.c.l.b16 %v317
      %v3521 = vpack.c.b16 %v3520, %v3519
      %v3523 = vshrl.u32 %v3521, 16
      %v3525 = vshll.u32 %v3521, 16
      %v3527 = vrot.slane %v3525, 1
      %v3528 = vor.u32 %v3523, %v3527
      %3529 = vrot.lane.b32.xlu0 %v3528, 4
      %v3530 = vpop.permute.xlu0 %3529
      %v3531 = vrot.slane %v3521, 1
      %3532 = vrot.lane.b32.xlu0 %v3531, 8
      %v3533 = vpop.permute.xlu0 %3532
      %v3536 = vsel %vm862, %v316, %v3530
      %v3538 = vsel %vm959, %v3536, %v3533
      %s3539 = scalar_lea.vmem %s1, 64
      %v3540 = vld [vmem:[%s3539] sm:$0xf]
      %v3541 = vld [vmem:[%s3539 + $0x4] sm:$0x3]
      %v3543 = vunpack.c.l.b16 %v3538
      %v3544 = vpack.c.b16 %v3543, %v3299
      %v3547 = vunpack.c.l.b16 %v3540
      %v3548 = vunpack.c.l.b16 %v3541
      %v3549 = vpack.c.b16 %v3548, %v3547
      %v3551 = vsel %vm1202, %v3544, 0
      %v3554 = vsel %vm1251, %v3549, 0
      %3556 = vmatprep.subr.bf16.mxu0 0
      %3557 = vmatpush1.bf16.msra.mxu0 %v3554
      %3558 = vmatprep.subr.bf16.mxu0 0
      %3559 = vmatpush1.bf16.msra.mxu0 0
      %3560 = vmatprep.subr.bf16.mxu0 0
      %3561 = vmatpush1.bf16.msra.mxu0 0
      %3562 = vmatprep.subr.bf16.mxu0 0
      %3563 = vmatpush1.bf16.msra.mxu0 0
      %3564 = vmatprep.subr.bf16.mxu0 0
      %3565 = vmatpush1.bf16.msra.mxu0 0
      %3566 = vmatprep.subr.bf16.mxu0 0
      %3567 = vmatpush1.bf16.msra.mxu0 0
      %3568 = vmatprep.subr.bf16.mxu0 0
      %3569 = vmatpush1.bf16.msra.mxu0 0
      %3570 = vmatprep.subr.bf16.mxu0 0
      %3571 = vmatpush1.bf16.msra.mxu0 0
      %3572 = vmatprep.subr.bf16.mxu0 0
      %3573 = vmatpush1.bf16.msra.mxu0 0
      %3574 = vmatprep.subr.bf16.mxu0 0
      %3575 = vmatpush1.bf16.msra.mxu0 0
      %3576 = vmatprep.subr.bf16.mxu0 0
      %3577 = vmatpush1.bf16.msra.mxu0 0
      %3578 = vmatprep.subr.bf16.mxu0 0
      %3579 = vmatpush1.bf16.msra.mxu0 0
      %3580 = vmatprep.subr.bf16.mxu0 0
      %3581 = vmatpush1.bf16.msra.mxu0 0
      %3582 = vmatprep.subr.bf16.mxu0 0
      %3583 = vmatpush1.bf16.msra.mxu0 0
      %3584 = vmatprep.subr.bf16.mxu0 0
      %3585 = vmatpush1.bf16.msra.mxu0 0
      %3586 = vmatprep.subr.bf16.mxu0 0
      %3587 = vmatpush1.bf16.msra.mxu0 0
      %3588 = vmatprep.mubr.bf16.mxu0 0
      %3589 = vmatmul.mubr.bf16.gmra.mrb[0].mxu0 %v1473
      %v3590 = vpop.f32.mrb[0].mxu0
      %v3591 = vadd.f32 0.0, %v3590
      %v3592 = vpop.f32.mrb[0].mxu0
      %v3593 = vpop.f32.mrb[0].mxu0
      %v3594 = vadd.f32 0.0, %v3593
      %v3595 = vpop.f32.mrb[0].mxu0
      %3596 = vmatprep.mubr.bf16.mxu0 0
      %3597 = vmatmul.mubr.bf16.gmra.mrb[0].mxu0 %v1476
      %v3598 = vpop.f32.mrb[0].mxu0
      %v3599 = vadd.f32 0.0, %v3598
      %v3600 = vpop.f32.mrb[0].mxu0
      %v3601 = vpop.f32.mrb[0].mxu0
      %v3602 = vadd.f32 0.0, %v3601
      %v3603 = vpop.f32.mrb[0].mxu0
      %3604 = vmatprep.mubr.bf16.mxu0 0
      %3605 = vmatmul.mubr.bf16.gmra.mrb[0].mxu0 %v1479
      %v3606 = vpop.f32.mrb[0].mxu0
      %v3607 = vadd.f32 0.0, %v3606
      %v3608 = vpop.f32.mrb[0].mxu0
      %v3609 = vpop.f32.mrb[0].mxu0
      %v3610 = vadd.f32 0.0, %v3609
      %v3611 = vpop.f32.mrb[0].mxu0
      %3612 = vmatprep.mubr.bf16.mxu0 0
      %3613 = vmatmul.mubr.bf16.gmra.mrb[0].mxu0 %v1772
      %v3614 = vpop.f32.mrb[0].mxu0
      %v3615 = vadd.f32 0.0, %v3614
      %v3616 = vpop.f32.mrb[0].mxu0
      %v3617 = vpop.f32.mrb[0].mxu0
      %v3618 = vadd.f32 0.0, %v3617
      %v3619 = vpop.f32.mrb[0].mxu0
      %3620 = vmatprep.mubr.bf16.mxu0 0
      %3621 = vmatmul.mubr.bf16.gmra.mrb[0].mxu0 %v1485
      %v3622 = vpop.f32.mrb[0].mxu0
      %v3623 = vadd.f32 0.0, %v3622
      %v3624 = vpop.f32.mrb[0].mxu0
      %v3625 = vpop.f32.mrb[0].mxu0
      %v3626 = vadd.f32 0.0, %v3625
      %v3627 = vpop.f32.mrb[0].mxu0
      %3628 = vmatprep.mubr.bf16.mxu0 0
      %3629 = vmatmul.mubr.bf16.gmra.mrb[0].mxu0 %v1488
      %v3630 = vpop.f32.mrb[0].mxu0
      %v3631 = vadd.f32 0.0, %v3630
      %v3632 = vpop.f32.mrb[0].mxu0
      %v3633 = vpop.f32.mrb[0].mxu0
      %v3634 = vadd.f32 0.0, %v3633
      %v3635 = vpop.f32.mrb[0].mxu0
      %3636 = vmatprep.mubr.bf16.mxu0 0
      %3637 = vmatmul.mubr.bf16.gmra.mrb[0].mxu0 %v1491
      %v3638 = vpop.f32.mrb[0].mxu0
      %v3639 = vadd.f32 0.0, %v3638
      %v3640 = vpop.f32.mrb[0].mxu0
      %v3641 = vpop.f32.mrb[0].mxu0
      %v3642 = vadd.f32 0.0, %v3641
      %v3643 = vpop.f32.mrb[0].mxu0
      %3644 = vmatprep.mubr.bf16.mxu0 0
      %3645 = vmatmul.mubr.bf16.gmra.mrb[0].mxu0 %v1775
      %v3646 = vpop.f32.mrb[0].mxu0
      %v3647 = vadd.f32 0.0, %v3646
      %v3648 = vpop.f32.mrb[0].mxu0
      %v3649 = vpop.f32.mrb[0].mxu0
      %v3650 = vadd.f32 0.0, %v3649
      %v3651 = vpop.f32.mrb[0].mxu0
      %3652 = vmatprep.mubr.bf16.mxu0 0
      %3653 = vmatmul.mubr.bf16.gmra.mrb[0].mxu0 %v2181
      %v3654 = vpop.f32.mrb[0].mxu0
      %v3655 = vadd.f32 0.0, %v3654
      %v3656 = vpop.f32.mrb[0].mxu0
      %v3657 = vpop.f32.mrb[0].mxu0
      %v3658 = vadd.f32 0.0, %v3657
      %v3659 = vpop.f32.mrb[0].mxu0
      %3660 = vmatprep.mubr.bf16.mxu0 0
      %3661 = vmatmul.mubr.bf16.gmra.mrb[0].mxu0 %v2184
      %v3662 = vpop.f32.mrb[0].mxu0
      %v3663 = vadd.f32 0.0, %v3662
      %v3664 = vpop.f32.mrb[0].mxu0
      %v3665 = vpop.f32.mrb[0].mxu0
      %v3666 = vadd.f32 0.0, %v3665
      %v3667 = vpop.f32.mrb[0].mxu0
      %3668 = vmatprep.mubr.bf16.mxu0 0
      %3669 = vmatmul.mubr.bf16.gmra.mrb[0].mxu0 %v2187
      %v3670 = vpop.f32.mrb[0].mxu0
      %v3671 = vadd.f32 0.0, %v3670
      %v3672 = vpop.f32.mrb[0].mxu0
      %v3673 = vpop.f32.mrb[0].mxu0
      %v3674 = vadd.f32 0.0, %v3673
      %v3675 = vpop.f32.mrb[0].mxu0
      %3676 = vmatprep.mubr.bf16.mxu0 0
      %3677 = vmatmul.mubr.bf16.gmra.mrb[0].mxu0 %v2663
      %v3678 = vpop.f32.mrb[0].mxu0
      %v3679 = vadd.f32 0.0, %v3678
      %v3680 = vpop.f32.mrb[0].mxu0
      %v3681 = vpop.f32.mrb[0].mxu0
      %v3682 = vadd.f32 0.0, %v3681
      %v3683 = vpop.f32.mrb[0].mxu0
      %3684 = vmatprep.mubr.bf16.mxu0 0
      %3685 = vmatmul.mubr.bf16.gmra.mrb[0].mxu0 %v3069
      %v3686 = vpop.f32.mrb[0].mxu0
      %v3687 = vadd.f32 0.0, %v3686
      %v3688 = vpop.f32.mrb[0].mxu0
      %v3689 = vpop.f32.mrb[0].mxu0
      %v3690 = vadd.f32 0.0, %v3689
      %v3691 = vpop.f32.mrb[0].mxu0
      %3692 = vmatprep.mubr.bf16.mxu0 0
      %3693 = vmatmul.mubr.bf16.gmra.mrb[0].mxu0 %v3072
      %v3694 = vpop.f32.mrb[0].mxu0
      %v3695 = vadd.f32 0.0, %v3694
      %v3696 = vpop.f32.mrb[0].mxu0
      %v3697 = vpop.f32.mrb[0].mxu0
      %v3698 = vadd.f32 0.0, %v3697
      %v3699 = vpop.f32.mrb[0].mxu0
      %3700 = vmatprep.mubr.bf16.mxu0 0
      %3701 = vmatmul.mubr.bf16.gmra.mrb[0].mxu0 %v3075
      %v3702 = vpop.f32.mrb[0].mxu0
      %v3703 = vadd.f32 0.0, %v3702
      %v3704 = vpop.f32.mrb[0].mxu0
      %v3705 = vpop.f32.mrb[0].mxu0
      %v3706 = vadd.f32 0.0, %v3705
      %v3707 = vpop.f32.mrb[0].mxu0
      %3708 = vmatprep.mubr.bf16.mxu0 0
      %3709 = vmatmul.mubr.bf16.gmra.mrb[0].mxu0 %v3551
      %v3710 = vpop.f32.mrb[0].mxu0
      %v3711 = vadd.f32 0.0, %v3710
      %v3712 = vpop.f32.mrb[0].mxu0
      %v3713 = vpop.f32.mrb[0].mxu0
      %v3714 = vadd.f32 0.0, %v3713
      %v3715 = vpop.f32.mrb[0].mxu0
      %3716 = vdwg.mxu0
      %v3717 = vadd.f32 %v3485, %v3591
      %v3718 = vadd.f32 %v3486, %v3594
      %v3719 = vadd.f32 %v3487, %v3599
      %v3720 = vadd.f32 %v3488, %v3602
      %v3721 = vadd.f32 %v3489, %v3607
      %v3722 = vadd.f32 %v3490, %v3610
      %v3723 = vadd.f32 %v3491, %v3615
      %v3724 = vadd.f32 %v3492, %v3618
      %v3725 = vadd.f32 %v3493, %v3623
      %v3726 = vadd.f32 %v3494, %v3626
      %v3727 = vadd.f32 %v3495, %v3631
      %v3728 = vadd.f32 %v3496, %v3634
      %v3729 = vadd.f32 %v3497, %v3639
      %v3730 = vadd.f32 %v3498, %v3642
      %v3731 = vadd.f32 %v3499, %v3647
      %v3732 = vadd.f32 %v3500, %v3650
      %v3733 = vadd.f32 %v3501, %v3655
      %v3734 = vadd.f32 %v3502, %v3658
      %v3735 = vadd.f32 %v3503, %v3663
      %v3736 = vadd.f32 %v3504, %v3666
      %v3737 = vadd.f32 %v3505, %v3671
      %v3738 = vadd.f32 %v3506, %v3674
      %v3739 = vadd.f32 %v3507, %v3679
      %v3740 = vadd.f32 %v3508, %v3682
      %v3741 = vadd.f32 %v3509, %v3687
      %v3742 = vadd.f32 %v3510, %v3690
      %v3743 = vadd.f32 %v3511, %v3695
      %v3744 = vadd.f32 %v3512, %v3698
      %v3745 = vadd.f32 %v3513, %v3703
      %v3746 = vadd.f32 %v3514, %v3706
      %v3747 = vadd.f32 %v3515, %v3711
      %v3748 = vadd.f32 %v3516, %v3714
      %v3749 = vld [vmem:[%s2] sm:$0x1]
      %v3751 = vlaneseq
      %v3752 = vshrl.u32 %v3751, 7
      %v3753 = vsub.s32 0, %v3752
      %v3754 = vrot.slane %v3749, %v3753
      %v3756 = vadd.f32 %v3717, %v3754
      %v3757 = vadd.f32 %v3718, %v3754
      %v3758 = vadd.f32 %v3719, %v3754
      %v3759 = vadd.f32 %v3720, %v3754
      %v3760 = vadd.f32 %v3721, %v3754
      %v3761 = vadd.f32 %v3722, %v3754
      %v3762 = vadd.f32 %v3723, %v3754
      %v3763 = vadd.f32 %v3724, %v3754
      %v3764 = vadd.f32 %v3725, %v3754
      %v3765 = vadd.f32 %v3726, %v3754
      %v3766 = vadd.f32 %v3727, %v3754
      %v3767 = vadd.f32 %v3728, %v3754
      %v3768 = vadd.f32 %v3729, %v3754
      %v3769 = vadd.f32 %v3730, %v3754
      %v3770 = vadd.f32 %v3731, %v3754
      %v3771 = vadd.f32 %v3732, %v3754
      %v3772 = vadd.f32 %v3733, %v3754
      %v3773 = vadd.f32 %v3734, %v3754
      %v3774 = vadd.f32 %v3735, %v3754
      %v3775 = vadd.f32 %v3736, %v3754
      %v3776 = vadd.f32 %v3737, %v3754
      %v3777 = vadd.f32 %v3738, %v3754
      %v3778 = vadd.f32 %v3739, %v3754
      %v3779 = vadd.f32 %v3740, %v3754
      %v3780 = vadd.f32 %v3741, %v3754
      %v3781 = vadd.f32 %v3742, %v3754
      %v3782 = vadd.f32 %v3743, %v3754
      %v3783 = vadd.f32 %v3744, %v3754
      %v3784 = vadd.f32 %v3745, %v3754
      %v3785 = vadd.f32 %v3746, %v3754
      %v3786 = vadd.f32 %v3747, %v3754
      %v3787 = vadd.f32 %v3748, %v3754
      %v3788 = vmax.f32 %v3756, 0.0
      %v3789 = vmax.f32 %v3757, 0.0
      %v3790 = vmax.f32 %v3758, 0.0
      %v3791 = vmax.f32 %v3759, 0.0
      %v3792 = vmax.f32 %v3760, 0.0
      %v3793 = vmax.f32 %v3761, 0.0
      %v3794 = vmax.f32 %v3762, 0.0
      %v3795 = vmax.f32 %v3763, 0.0
      %v3796 = vmax.f32 %v3764, 0.0
      %v3797 = vmax.f32 %v3765, 0.0
      %v3798 = vmax.f32 %v3766, 0.0
      %v3799 = vmax.f32 %v3767, 0.0
      %v3800 = vmax.f32 %v3768, 0.0
      %v3801 = vmax.f32 %v3769, 0.0
      %v3802 = vmax.f32 %v3770, 0.0
      %v3803 = vmax.f32 %v3771, 0.0
      %v3804 = vmax.f32 %v3772, 0.0
      %v3805 = vmax.f32 %v3773, 0.0
      %v3806 = vmax.f32 %v3774, 0.0
      %v3807 = vmax.f32 %v3775, 0.0
      %v3808 = vmax.f32 %v3776, 0.0
      %v3809 = vmax.f32 %v3777, 0.0
      %v3810 = vmax.f32 %v3778, 0.0
      %v3811 = vmax.f32 %v3779, 0.0
      %v3812 = vmax.f32 %v3780, 0.0
      %v3813 = vmax.f32 %v3781, 0.0
      %v3814 = vmax.f32 %v3782, 0.0
      %v3815 = vmax.f32 %v3783, 0.0
      %v3816 = vmax.f32 %v3784, 0.0
      %v3817 = vmax.f32 %v3785, 0.0
      %v3818 = vmax.f32 %v3786, 0.0
      %v3819 = vmax.f32 %v3787, 0.0
      %v3820 = vpack.c.bf16 %v3789, %v3788
      %v3821 = vpack.c.bf16 %v3791, %v3790
      %v3822 = vpack.c.bf16 %v3793, %v3792
      %v3823 = vpack.c.bf16 %v3795, %v3794
      %v3824 = vpack.c.bf16 %v3797, %v3796
      %v3825 = vpack.c.bf16 %v3799, %v3798
      %v3826 = vpack.c.bf16 %v3801, %v3800
      %v3827 = vpack.c.bf16 %v3803, %v3802
      %v3828 = vpack.c.bf16 %v3805, %v3804
      %v3829 = vpack.c.bf16 %v3807, %v3806
      %v3830 = vpack.c.bf16 %v3809, %v3808
      %v3831 = vpack.c.bf16 %v3811, %v3810
      %v3832 = vpack.c.bf16 %v3813, %v3812
      %v3833 = vpack.c.bf16 %v3815, %v3814
      %v3834 = vpack.c.bf16 %v3817, %v3816
      %v3835 = vpack.c.bf16 %v3819, %v3818
      %v3852 = vunpack.c.l.b16 %v3820
      %v3853 = vunpack.c.h.b16 %v3820
      %v3854 = vunpack.c.l.b16 %v3821
      %v3855 = vunpack.c.h.b16 %v3821
      %v3856 = vunpack.c.l.b16 %v3822
      %v3857 = vunpack.c.h.b16 %v3822
      %v3858 = vunpack.c.l.b16 %v3823
      %v3859 = vunpack.c.h.b16 %v3823
      %v3860 = vunpack.c.l.b16 %v3824
      %v3861 = vunpack.c.h.b16 %v3824
      %v3862 = vunpack.c.l.b16 %v3825
      %v3863 = vunpack.c.h.b16 %v3825
      %v3864 = vunpack.c.l.b16 %v3826
      %v3865 = vunpack.c.h.b16 %v3826
      %v3866 = vunpack.c.l.b16 %v3827
      %v3867 = vunpack.c.h.b16 %v3827
      %v3868 = vunpack.c.l.b16 %v3828
      %v3869 = vunpack.c.h.b16 %v3828
      %v3870 = vunpack.c.l.b16 %v3829
      %v3871 = vunpack.c.h.b16 %v3829
      %v3872 = vunpack.c.l.b16 %v3830
      %v3873 = vunpack.c.h.b16 %v3830
      %v3874 = vunpack.c.l.b16 %v3831
      %v3875 = vunpack.c.h.b16 %v3831
      %v3876 = vunpack.c.l.b16 %v3832
      %v3877 = vunpack.c.h.b16 %v3832
      %v3878 = vunpack.c.l.b16 %v3833
      %v3879 = vunpack.c.h.b16 %v3833
      %v3880 = vunpack.c.l.b16 %v3834
      %v3881 = vunpack.c.h.b16 %v3834
      %v3882 = vunpack.c.l.b16 %v3835
      %v3883 = vunpack.c.h.b16 %v3835
      %v3884 = vpack.c.b16 %v3852, %v3852
      %v3885 = vpack.c.b16 %v3853, %v3853
      %v3886 = vpack.c.b16 %v3854, %v3854
      %v3887 = vpack.c.b16 %v3855, %v3855
      %v3888 = vpack.c.b16 %v3856, %v3856
      %v3889 = vpack.c.b16 %v3857, %v3857
      %v3890 = vpack.c.b16 %v3858, %v3858
      %v3891 = vpack.c.b16 %v3859, %v3859
      %v3892 = vpack.c.b16 %v3860, %v3860
      %v3893 = vpack.c.b16 %v3861, %v3861
      %v3894 = vpack.c.b16 %v3862, %v3862
      %v3895 = vpack.c.b16 %v3863, %v3863
      %v3896 = vpack.c.b16 %v3864, %v3864
      %v3897 = vpack.c.b16 %v3865, %v3865
      %v3898 = vpack.c.b16 %v3866, %v3866
      %v3899 = vpack.c.b16 %v3867, %v3867
      %v3900 = vpack.c.b16 %v3868, %v3868
      %v3901 = vpack.c.b16 %v3869, %v3869
      %v3902 = vpack.c.b16 %v3870, %v3870
      %v3903 = vpack.c.b16 %v3871, %v3871
      %v3904 = vpack.c.b16 %v3872, %v3872
      %v3905 = vpack.c.b16 %v3873, %v3873
      %v3906 = vpack.c.b16 %v3874, %v3874
      %v3907 = vpack.c.b16 %v3875, %v3875
      %v3908 = vpack.c.b16 %v3876, %v3876
      %v3909 = vpack.c.b16 %v3877, %v3877
      %v3910 = vpack.c.b16 %v3878, %v3878
      %v3911 = vpack.c.b16 %v3879, %v3879
      %v3912 = vpack.c.b16 %v3880, %v3880
      %v3913 = vpack.c.b16 %v3881, %v3881
      %v3914 = vpack.c.b16 %v3882, %v3882
      %v3915 = vpack.c.b16 %v3883, %v3883
      %vm3948 = vcmask 60416
      %3949 = vst.msk [vmem:[%s192] sm:$0xf] %vm3948, %v3884
      %3950 = vst.msk [vmem:[%s192 + $0x4] sm:$0xf] %vm3948, %v3885
      %3951 = vst.msk [vmem:[%s192 + $0x8] sm:$0xf] %vm3948, %v3886
      %3952 = vst.msk [vmem:[%s192 + $0xc] sm:$0xf] %vm3948, %v3887
      %3953 = vst.msk [vmem:[%s192 + $0x10] sm:$0xf] %vm3948, %v3888
      %3954 = vst.msk [vmem:[%s192 + $0x14] sm:$0xf] %vm3948, %v3889
      %3955 = vst.msk [vmem:[%s192 + $0x18] sm:$0xf] %vm3948, %v3890
      %3956 = vst.msk [vmem:[%s192 + $0x1c] sm:$0xf] %vm3948, %v3891
      %3957 = vst.msk [vmem:[%s192 + $0x20] sm:$0xf] %vm3948, %v3892
      %3958 = vst.msk [vmem:[%s192 + $0x24] sm:$0xf] %vm3948, %v3893
      %3959 = vst.msk [vmem:[%s192 + $0x28] sm:$0xf] %vm3948, %v3894
      %3960 = vst.msk [vmem:[%s192 + $0x2c] sm:$0xf] %vm3948, %v3895
      %3961 = vst.msk [vmem:[%s192 + $0x30] sm:$0xf] %vm3948, %v3896
      %3962 = vst.msk [vmem:[%s192 + $0x34] sm:$0xf] %vm3948, %v3897
      %3963 = vst.msk [vmem:[%s192 + $0x38] sm:$0xf] %vm3948, %v3898
      %3964 = vst.msk [vmem:[%s192 + $0x3c] sm:$0xf] %vm3948, %v3899
      %3965 = vst.msk [vmem:[%s192 + $0x40] sm:$0xf] %vm3948, %v3900
      %3966 = vst.msk [vmem:[%s192 + $0x44] sm:$0xf] %vm3948, %v3901
      %3967 = vst.msk [vmem:[%s192 + $0x48] sm:$0xf] %vm3948, %v3902
      %3968 = vst.msk [vmem:[%s192 + $0x4c] sm:$0xf] %vm3948, %v3903
      %3969 = vst.msk [vmem:[%s192 + $0x50] sm:$0xf] %vm3948, %v3904
      %3970 = vst.msk [vmem:[%s192 + $0x54] sm:$0xf] %vm3948, %v3905
      %3971 = vst.msk [vmem:[%s192 + $0x58] sm:$0xf] %vm3948, %v3906
      %3972 = vst.msk [vmem:[%s192 + $0x5c] sm:$0xf] %vm3948, %v3907
      %3973 = vst.msk [vmem:[%s192 + $0x60] sm:$0xf] %vm3948, %v3908
      %3974 = vst.msk [vmem:[%s192 + $0x64] sm:$0xf] %vm3948, %v3909
      %3975 = vst.msk [vmem:[%s192 + $0x68] sm:$0xf] %vm3948, %v3910
      %3976 = vst.msk [vmem:[%s192 + $0x6c] sm:$0xf] %vm3948, %v3911
      %3977 = vst.msk [vmem:[%s192 + $0x70] sm:$0xf] %vm3948, %v3912
      %3978 = vst.msk [vmem:[%s192 + $0x74] sm:$0xf] %vm3948, %v3913
      %3979 = vst.msk [vmem:[%s192 + $0x78] sm:$0xf] %vm3948, %v3914
      %3980 = vst.msk [vmem:[%s192 + $0x7c] sm:$0xf] %vm3948, %v3915
      %p3981 = scmp.lt.s32.totalorder %s18, 1
      %s3982 = scalar_select %p3981, %s18, 1
      %p3983 = scmp.lt.s32.totalorder %s19, 0
      %s3984 = scalar_select %p3983, %s19, 0
      %s3985 = smul.addr %s3984, 32
      %s3986 = smul.addr %s3982, 32
      %s3987 = sadd.s32 %s3985, %s3986
      %s3988 = smul.addr %s3987, 4
      %s3989 = scalar_lea.vmem %s3, %s3988
      // Predicated region
      $region33: #{basic_adapter_forward.2} parent=31 // pred_check
        %p3990 = pneg %p114
      $region34: #{basic_adapter_forward.2} parent=31 // pred_check_branch
        %3992 = sbr.rel (%p3990) target = $region36
      $region35: #{basic_adapter_forward.2} parent=31 // pred_region
        _
      $region36: #{basic_adapter_forward.2} parent=31 // pred_fallthru
        _
    $region32: #{basic_adapter_forward.2} parent=5 // pred_fallthru
      _
    %p3993 = scmp.le.s32.totalorder 2, %s9
    // Predicated region
    $region37: #{basic_adapter_forward.2} parent=5 // pred_check
      %p3994 = pneg %p3993
    $region38: #{basic_adapter_forward.2} parent=5 // pred_check_branch
      %3996 = sbr.rel (%p3994) target = $region40
    $region39: #{basic_adapter_forward.2} parent=5 // pred_region
      %s3997 = ssub.s32 %s9, 2
      // Predicated region
      $region41: #{basic_adapter_forward.2} parent=39 // pred_check
        %p3998 = pneg %p120
      $region42: #{basic_adapter_forward.2} parent=39 // pred_check_branch
        %4000 = sbr.rel (%p3998) target = $region44
      $region43: #{basic_adapter_forward.2} parent=39 // pred_region
        %p4001 = scmp.lt.s32.totalorder %s20, 1
        %s4002 = scalar_select %p4001, %s20, 1
        %p4003 = scmp.lt.s32.totalorder %s21, 0
        %s4004 = scalar_select %p4003, %s21, 0
        %s4005 = smul.addr %s4004, 32
        %s4006 = smul.addr %s4002, 32
        %s4007 = sadd.s32 %s4005, %s4006
        %s4008 = smul.addr %s4007, 4
        %s4009 = scalar_lea.vmem %s3, %s4008
      $region44: #{basic_adapter_forward.2} parent=39 // pred_fallthru
        _
    $region40: #{basic_adapter_forward.2} parent=5 // pred_fallthru
      _
  $region6: #{basic_adapter_forward.2} parent=0 // loop_footer
    %s13 = sadd.s32 1, %s9
  $region7: #{basic_adapter_forward.2} parent=0 // loop_footer_branch
    %8 = sbr.rel target = $region3
  $region8: #{basic_adapter_forward.2} parent=0 // loop_exit
    _

// kernel: basic_adapter_forward.3
$region0: #{basic_adapter_forward.3}
  #allocation0 [shape = 'u32[]', space=smem, size = 0x4, offset = 0x4, fixed_abs, tag = 'smem constant byte address 0x4 - core index']
  #allocation1 [shape = 'u32[144,128]{1,0:T(1,128)}', space=vmem, size = 0x12000, scoped, tag = 'internal scratch']
  %s0 = inlined_call_operand.vmem [shape: bf16[2,6,10,10,8], index: 0, kind: input, shape index: {}]
  %s1 = inlined_call_operand.vmem [shape: bf16[9,24,4], index: 1, kind: input, shape index: {}]
  %s2 = inlined_call_operand.vmem [shape: f32[1,4], index: 2, kind: input, shape index: {}]
  %s3 = inlined_call_operand.vmem [shape: bf16[4,4], index: 3, kind: input, shape index: {}]
  %s4 = inlined_call_operand.vmem [shape: f32[4,1], index: 4, kind: input, shape index: {}]
  %s5 = inlined_call_operand.vmem [shape: f32[2,4,256], index: 5, kind: output, shape index: {}]
  %s6 = sld [smem:[#allocation0]]
  $region53: #{basic_adapter_forward.3} parent=0
    _
  %s8 = ssub.s32 1, %s6
  %s9 = scalar_select 0, %s8, %s6
  loop: start=0, step=1, limit=4
  $region2: #{basic_adapter_forward.3} parent=0 // loop_pre_header
    _
  $region3: #{basic_adapter_forward.3} parent=0 // loop_header
    %s11 = sphi 0, %s15
    %p12 = scmp.ge.s32.totalorder %s11, 4
    %s18 = sphi 0, %s30
    %s19 = sphi 0, %s26
    %s20 = sphi 0, %s18
    %s21 = sphi 0, %s19
    %s22 = sphi 0, %s20
    %s23 = sphi 0, %s21
    %s33 = sphi 0, %s35
    %s36 = sphi 0, %s33
    %s37 = sphi 0, %s36
    %s53 = sphi 0, %s37
    %s57 = sphi 0, %s57
    %s59 = sphi 0, %s57
    %s60 = sphi 0, %s59
    %s74 = sphi 0, %s60
    %s78 = sphi 0, %s78
    %s80 = sphi 0, %s78
    %s81 = sphi 0, %s80
    %s95 = sphi 0, %s81
    %s99 = sphi 0, %s99
    %s101 = sphi 0, %s99
    %s102 = sphi 0, %s101
    %s116 = sphi 0, %s102
    %s120 = sphi 0, %s120
    %s122 = sphi 0, %s120
    %s123 = sphi 0, %s122
    %s137 = sphi 0, %s123
    %s145 = sphi 0, %s147
    %s148 = sphi 0, %s145
    %s149 = sphi 0, %s148
    %s165 = sphi 0, %s149
  $region4: #{basic_adapter_forward.3} parent=0 // loop_header_branch
    %14 = sbr.rel (%p12) target = $region8
  $region5: #{basic_adapter_forward.3} parent=0 // loop_body
    %s16 = ssub.s32 %s11, 1
    %s17 = ssub.s32 %s11, 2
    %s24 = sadd.s32 1, %s19
    %p25 = scmp.ge.s32.totalorder %s24, 1
    %s26 = scalar_select %p25, 0, %s24
    %s27 = sadd.s32 1, %s18
    %s28 = scalar_select %p25, %s27, %s18
    %p29 = scmp.ge.s32.totalorder %s28, 2
    %s30 = scalar_select %p29, 0, %s28
    %s31 = ssub.s32 %s18, %s30
    %p32 = scmp.eq.s32.totalorder %s31, 0
    %s34 = sadd.s32 %s33, 1
    %s35 = scalar_select %p32, %s33, %s34
    %p38 = pneg %p32
    %p39 = scmp.eq.s32.totalorder %s11, 1
    %p40 = por %p38, %p39
    %p41 = scmp.ne.s32.totalorder %s33, %s36
    %p42 = scmp.eq.s32.totalorder %s11, 0
    %p43 = por %p41, %p42
    %p44 = scmp.ne.s32.totalorder %s33, %s36
    %p45 = scmp.eq.s32.totalorder %s16, 1
    %p46 = por %p44, %p45
    %p47 = scmp.ne.s32.totalorder %s36, %s37
    %p48 = scmp.eq.s32.totalorder %s16, 0
    %p49 = por %p47, %p48
    %p50 = scmp.ne.s32.totalorder %s36, %s37
    %p51 = scmp.eq.s32.totalorder %s17, 1
    %p52 = por %p50, %p51
    %p54 = scmp.ne.s32.totalorder %s37, %s53
    %p55 = scmp.eq.s32.totalorder %s17, 0
    %p56 = por %p54, %p55
    %s58 = sadd.s32 %s57, 1
    %p61 = scmp.eq.s32.totalorder %s11, 1
    %p62 = scmp.ne.s32.totalorder %s57, %s59
    %p63 = scmp.eq.s32.totalorder %s11, 0
    %p64 = por %p62, %p63
    %p65 = scmp.ne.s32.totalorder %s57, %s59
    %p66 = scmp.eq.s32.totalorder %s16, 1
    %p67 = por %p65, %p66
    %p68 = scmp.ne.s32.totalorder %s59, %s60
    %p69 = scmp.eq.s32.totalorder %s16, 0
    %p70 = por %p68, %p69
    %p71 = scmp.ne.s32.totalorder %s59, %s60
    %p72 = scmp.eq.s32.totalorder %s17, 1
    %p73 = por %p71, %p72
    %p75 = scmp.ne.s32.totalorder %s60, %s74
    %p76 = scmp.eq.s32.totalorder %s17, 0
    %p77 = por %p75, %p76
    %s79 = sadd.s32 %s78, 1
    %p82 = scmp.eq.s32.totalorder %s11, 1
    %p83 = scmp.ne.s32.totalorder %s78, %s80
    %p84 = scmp.eq.s32.totalorder %s11, 0
    %p85 = por %p83, %p84
    %p86 = scmp.ne.s32.totalorder %s78, %s80
    %p87 = scmp.eq.s32.totalorder %s16, 1
    %p88 = por %p86, %p87
    %p89 = scmp.ne.s32.totalorder %s80, %s81
    %p90 = scmp.eq.s32.totalorder %s16, 0
    %p91 = por %p89, %p90
    %p92 = scmp.ne.s32.totalorder %s80, %s81
    %p93 = scmp.eq.s32.totalorder %s17, 1
    %p94 = por %p92, %p93
    %p96 = scmp.ne.s32.totalorder %s81, %s95
    %p97 = scmp.eq.s32.totalorder %s17, 0
    %p98 = por %p96, %p97
    %s100 = sadd.s32 %s99, 1
    %p103 = scmp.eq.s32.totalorder %s11, 1
    %p104 = scmp.ne.s32.totalorder %s99, %s101
    %p105 = scmp.eq.s32.totalorder %s11, 0
    %p106 = por %p104, %p105
    %p107 = scmp.ne.s32.totalorder %s99, %s101
    %p108 = scmp.eq.s32.totalorder %s16, 1
    %p109 = por %p107, %p108
    %p110 = scmp.ne.s32.totalorder %s101, %s102
    %p111 = scmp.eq.s32.totalorder %s16, 0
    %p112 = por %p110, %p111
    %p113 = scmp.ne.s32.totalorder %s101, %s102
    %p114 = scmp.eq.s32.totalorder %s17, 1
    %p115 = por %p113, %p114
    %p117 = scmp.ne.s32.totalorder %s102, %s116
    %p118 = scmp.eq.s32.totalorder %s17, 0
    %p119 = por %p117, %p118
    %s121 = sadd.s32 %s120, 1
    %p124 = scmp.eq.s32.totalorder %s11, 1
    %p125 = scmp.ne.s32.totalorder %s120, %s122
    %p126 = scmp.eq.s32.totalorder %s11, 0
    %p127 = por %p125, %p126
    %p128 = scmp.ne.s32.totalorder %s120, %s122
    %p129 = scmp.eq.s32.totalorder %s16, 1
    %p130 = por %p128, %p129
    %p131 = scmp.ne.s32.totalorder %s122, %s123
    %p132 = scmp.eq.s32.totalorder %s16, 0
    %p133 = por %p131, %p132
    %p134 = scmp.ne.s32.totalorder %s122, %s123
    %p135 = scmp.eq.s32.totalorder %s17, 1
    %p136 = por %p134, %p135
    %p138 = scmp.ne.s32.totalorder %s123, %s137
    %p139 = scmp.eq.s32.totalorder %s17, 0
    %p140 = por %p138, %p139
    %s141 = ssub.s32 %s18, %s30
    %s142 = ssub.s32 %s19, %s26
    %s143 = sor.u32 %s141, %s142
    %p144 = scmp.eq.s32.totalorder %s143, 0
    %s146 = sadd.s32 %s145, 1
    %s147 = scalar_select %p144, %s145, %s146
    %p150 = pneg %p144
    %p151 = scmp.eq.s32.totalorder %s11, 1
    %p152 = por %p150, %p151
    %p153 = scmp.ne.s32.totalorder %s145, %s148
    %p154 = scmp.eq.s32.totalorder %s11, 0
    %p155 = por %p153, %p154
    %p156 = scmp.ne.s32.totalorder %s145, %s148
    %p157 = scmp.eq.s32.totalorder %s16, 1
    %p158 = por %p156, %p157
    %p159 = scmp.ne.s32.totalorder %s148, %s149
    %p160 = scmp.eq.s32.totalorder %s16, 0
    %p161 = por %p159, %p160
    %p162 = scmp.ne.s32.totalorder %s148, %s149
    %p163 = scmp.eq.s32.totalorder %s17, 1
    %p164 = por %p162, %p163
    %p166 = scmp.ne.s32.totalorder %s149, %s165
    %p167 = scmp.eq.s32.totalorder %s17, 0
    %p168 = por %p166, %p167
    %p169 = scmp.le.s32.totalorder 1, %s11
    %p170 = scmp.lt.s32.totalorder %s11, 3
    %p171 = pnand %p169, %p170
    %p172 = pneg %p171
    // Predicated region
    $region9: #{basic_adapter_forward.3} parent=5 // pred_check
      _
    $region10: #{basic_adapter_forward.3} parent=5 // pred_check_branch
      %174 = sbr.rel (%p171) target = $region12
    $region11: #{basic_adapter_forward.3} parent=5 // pred_region
      %s175 = ssub.s32 %s11, 1
      // Predicated region
      $region13: #{basic_adapter_forward.3} parent=11 // pred_check
        %p176 = pneg %p49
      $region14: #{basic_adapter_forward.3} parent=11 // pred_check_branch
        %178 = sbr.rel (%p176) target = $region16
      $region15: #{basic_adapter_forward.3} parent=11 // pred_region
        %p179 = scmp.lt.s32.totalorder %s20, 1
        %s180 = scalar_select %p179, %s20, 1
        %s181 = smul.addr %s180, 120
        %s182 = smul.addr %s181, 4
        %s183 = scalar_lea.vmem %s0, %s182
      $region16: #{basic_adapter_forward.3} parent=11 // pred_fallthru
        _
      // Predicated region
      $region17: #{basic_adapter_forward.3} parent=11 // pred_check
        %p184 = pneg %p70
      $region18: #{basic_adapter_forward.3} parent=11 // pred_check_branch
        %186 = sbr.rel (%p184) target = $region20
      $region19: #{basic_adapter_forward.3} parent=11 // pred_region
        _
      $region20: #{basic_adapter_forward.3} parent=11 // pred_fallthru
        _
      // Predicated region
      $region21: #{basic_adapter_forward.3} parent=11 // pred_check
        %p187 = pneg %p91
      $region22: #{basic_adapter_forward.3} parent=11 // pred_check_branch
        %189 = sbr.rel (%p187) target = $region24
      $region23: #{basic_adapter_forward.3} parent=11 // pred_region
        _
      $region24: #{basic_adapter_forward.3} parent=11 // pred_fallthru
        _
      // Predicated region
      $region25: #{basic_adapter_forward.3} parent=11 // pred_check
        %p190 = pneg %p112
      $region26: #{basic_adapter_forward.3} parent=11 // pred_check_branch
        %192 = sbr.rel (%p190) target = $region28
      $region27: #{basic_adapter_forward.3} parent=11 // pred_region
        _
      $region28: #{basic_adapter_forward.3} parent=11 // pred_fallthru
        _
      // Predicated region
      $region29: #{basic_adapter_forward.3} parent=11 // pred_check
        %p193 = pneg %p133
      $region30: #{basic_adapter_forward.3} parent=11 // pred_check_branch
        %195 = sbr.rel (%p193) target = $region32
      $region31: #{basic_adapter_forward.3} parent=11 // pred_region
        _
      $region32: #{basic_adapter_forward.3} parent=11 // pred_fallthru
        _
    $region12: #{basic_adapter_forward.3} parent=5 // pred_fallthru
      _
    %p196 = scmp.lt.s32.totalorder %s11, 2
    // Predicated region
    $region33: #{basic_adapter_forward.3} parent=5 // pred_check
      %p197 = pneg %p196
    $region34: #{basic_adapter_forward.3} parent=5 // pred_check_branch
      %199 = sbr.rel (%p197) target = $region36
    $region35: #{basic_adapter_forward.3} parent=5 // pred_region
      _
    $region36: #{basic_adapter_forward.3} parent=5 // pred_fallthru
      _
    %p200 = scmp.le.s32.totalorder 1, %s11
    %p201 = scmp.lt.s32.totalorder %s11, 3
    %p202 = pnand %p200, %p201
    %p203 = pneg %p202
    // Predicated region
    $region37: #{basic_adapter_forward.3} parent=5 // pred_check
      _
    $region38: #{basic_adapter_forward.3} parent=5 // pred_check_branch
      %205 = sbr.rel (%p202) target = $region40
    $region39: #{basic_adapter_forward.3} parent=5 // pred_region
      %s206 = ssub.s32 %s11, 1
      %p207 = scmp.lt.s32.totalorder %s20, 1
      %s208 = scalar_select %p207, %s20, 1
      %s209 = smul.addr %s208, 120
      %s210 = smul.addr %s209, 4
      %s211 = scalar_lea.vmem %s0, %s210
      %p212 = pneg %p49
      %p213 = pneg %p46
      %p214 = pneg %p70
      %p215 = pneg %p67
      %p216 = pneg %p91
      %p217 = pneg %p88
      %p218 = pneg %p112
      %p219 = pneg %p109
      %p220 = pneg %p133
      %p221 = pneg %p130
      %p222 = pneg %p161
      %p223 = pneg %p158
      %s224 = smul.u32 2, %s21
      %p225 = scmp.lt.s32.totalorder %s20, 1
      %s226 = scalar_select %p225, %s20, 1
      %p227 = scmp.lt.s32.totalorder %s224, 1
      %s228 = scalar_select %p227, %s224, 1
      %s229 = smul.addr %s226, 2
      %s230 = sadd.s32 %s228, %s229
      %s231 = smul.addr %s230, 4
      %s232 = scalar_lea.vmem %s5, %s231
      %p233 = scmp.lt.s32.totalorder %s20, 1
      %s234 = scalar_select %p233, %s20, 1
      %s235 = smul.addr %s234, 120
      %s236 = smul.addr %s235, 4
      %s237 = scalar_lea.vmem %s0, %s236
      %s238 = smul.u32 2, %s21
      %p239 = scmp.lt.s32.totalorder %s20, 1
      %s240 = scalar_select %p239, %s20, 1
      %p241 = scmp.lt.s32.totalorder %s238, 1
      %s242 = scalar_select %p241, %s238, 1
      %s243 = smul.addr %s240, 2
      %s244 = sadd.s32 %s242, %s243
      %s245 = smul.addr %s244, 4
      %s246 = scalar_lea.vmem %s5, %s245
      %s247 = smul.u32 2, %s21
      %s249 = smul.u32 %s21, 4
      %s250 = smul.u32 %s249, 20
      %s251 = smul.addr %s250, 4
      %s252 = scalar_lea.vmem %s237, %s251
      %v253 = vld [vmem:[%s252] sm:$0xf]
      %v254 = vld [vmem:[%s252 + $0x4] sm:$0x1]
      %v255 = vld [vmem:[%s252 + $0x8] sm:$0xf]
      %v256 = vld [vmem:[%s252 + $0xc] sm:$0x1]
      %v257 = vld [vmem:[%s252 + $0x10] sm:$0xf]
      %v258 = vld [vmem:[%s252 + $0x14] sm:$0x1]
      %v259 = vld [vmem:[%s252 + $0x18] sm:$0xf]
      %v260 = vld [vmem:[%s252 + $0x1c] sm:$0x1]
      %v261 = vld [vmem:[%s252 + $0x20] sm:$0xf]
      %v262 = vld [vmem:[%s252 + $0x24] sm:$0x1]
      %v263 = vld [vmem:[%s252 + $0x28] sm:$0xf]
      %v264 = vld [vmem:[%s252 + $0x2c] sm:$0x1]
      %v265 = vld [vmem:[%s252 + $0x30] sm:$0xf]
      %v266 = vld [vmem:[%s252 + $0x34] sm:$0x1]
      %v267 = vld [vmem:[%s252 + $0x38] sm:$0xf]
      %v268 = vld [vmem:[%s252 + $0x3c] sm:$0x1]
      %v269 = vld [vmem:[%s252 + $0x40] sm:$0xf]
      %v270 = vld [vmem:[%s252 + $0x44] sm:$0x1]
      %v271 = vld [vmem:[%s252 + $0x48] sm:$0xf]
      %v272 = vld [vmem:[%s252 + $0x4c] sm:$0x1]
      %v273 = vld [vmem:[%s252 + $0x50] sm:$0xf]
      %v274 = vld [vmem:[%s252 + $0x54] sm:$0x1]
      %v275 = vld [vmem:[%s252 + $0x58] sm:$0xf]
      %v276 = vld [vmem:[%s252 + $0x5c] sm:$0x1]
      %v277 = vld [vmem:[%s252 + $0x60] sm:$0xf]
      %v278 = vld [vmem:[%s252 + $0x64] sm:$0x1]
      %v279 = vld [vmem:[%s252 + $0x68] sm:$0xf]
      %v280 = vld [vmem:[%s252 + $0x6c] sm:$0x1]
      %v281 = vld [vmem:[%s252 + $0x70] sm:$0xf]
      %v282 = vld [vmem:[%s252 + $0x74] sm:$0x1]
      %v283 = vld [vmem:[%s252 + $0x78] sm:$0xf]
      %v284 = vld [vmem:[%s252 + $0x7c] sm:$0x1]
      %v285 = vld [vmem:[%s252 + $0x80] sm:$0xf]
      %v286 = vld [vmem:[%s252 + $0x84] sm:$0x1]
      %v287 = vld [vmem:[%s252 + $0x88] sm:$0xf]
      %v288 = vld [vmem:[%s252 + $0x8c] sm:$0x1]
      %v289 = vld [vmem:[%s252 + $0x90] sm:$0xf]
      %v290 = vld [vmem:[%s252 + $0x94] sm:$0x1]
      %v291 = vld [vmem:[%s252 + $0x98] sm:$0xf]
      %v292 = vld [vmem:[%s252 + $0x9c] sm:$0x1]
      %v293 = vld [vmem:[%s252 + $0xa0] sm:$0xf]
      %v294 = vld [vmem:[%s252 + $0xa4] sm:$0x1]
      %v295 = vld [vmem:[%s252 + $0xa8] sm:$0xf]
      %v296 = vld [vmem:[%s252 + $0xac] sm:$0x1]
      %v297 = vld [vmem:[%s252 + $0xb0] sm:$0xf]
      %v298 = vld [vmem:[%s252 + $0xb4] sm:$0x1]
      %v299 = vld [vmem:[%s252 + $0xb8] sm:$0xf]
      %v300 = vld [vmem:[%s252 + $0xbc] sm:$0x1]
      %v301 = vld [vmem:[%s252 + $0xc0] sm:$0xf]
      %v302 = vld [vmem:[%s252 + $0xc4] sm:$0x1]
      %v303 = vld [vmem:[%s252 + $0xc8] sm:$0xf]
      %v304 = vld [vmem:[%s252 + $0xcc] sm:$0x1]
      %v305 = vld [vmem:[%s252 + $0xd0] sm:$0xf]
      %v306 = vld [vmem:[%s252 + $0xd4] sm:$0x1]
      %v307 = vld [vmem:[%s252 + $0xd8] sm:$0xf]
      %v308 = vld [vmem:[%s252 + $0xdc] sm:$0x1]
      %v309 = vld [vmem:[%s252 + $0xe0] sm:$0xf]
      %v310 = vld [vmem:[%s252 + $0xe4] sm:$0x1]
      %v311 = vld [vmem:[%s252 + $0xe8] sm:$0xf]
      %v312 = vld [vmem:[%s252 + $0xec] sm:$0x1]
      %v313 = vld [vmem:[%s252 + $0xf0] sm:$0xf]
      %v314 = vld [vmem:[%s252 + $0xf4] sm:$0x1]
      %v315 = vld [vmem:[%s252 + $0xf8] sm:$0xf]
      %v316 = vld [vmem:[%s252 + $0xfc] sm:$0x1]
      %v317 = vld [vmem:[%s252 + $0x100] sm:$0xf]
      %v318 = vld [vmem:[%s252 + $0x104] sm:$0x1]
      %v319 = vld [vmem:[%s252 + $0x108] sm:$0xf]
      %v320 = vld [vmem:[%s252 + $0x10c] sm:$0x1]
      %v321 = vld [vmem:[%s252 + $0x110] sm:$0xf]
      %v322 = vld [vmem:[%s252 + $0x114] sm:$0x1]
      %v323 = vld [vmem:[%s252 + $0x118] sm:$0xf]
      %v324 = vld [vmem:[%s252 + $0x11c] sm:$0x1]
      %v325 = vld [vmem:[%s252 + $0x120] sm:$0xf]
      %v326 = vld [vmem:[%s252 + $0x124] sm:$0x1]
      %v327 = vld [vmem:[%s252 + $0x128] sm:$0xf]
      %v328 = vld [vmem:[%s252 + $0x12c] sm:$0x1]
      %v329 = vld [vmem:[%s252 + $0x130] sm:$0xf]
      %v330 = vld [vmem:[%s252 + $0x134] sm:$0x1]
      %v331 = vld [vmem:[%s252 + $0x138] sm:$0xf]
      %v332 = vld [vmem:[%s252 + $0x13c] sm:$0x1]
      %v333 = vld [vmem:[%s252 + $0x140] sm:$0xf]
      %v334 = vld [vmem:[%s252 + $0x144] sm:$0x1]
      %v335 = vld [vmem:[%s252 + $0x148] sm:$0xf]
      %v336 = vld [vmem:[%s252 + $0x14c] sm:$0x1]
      %v337 = vld [vmem:[%s252 + $0x150] sm:$0xf]
      %v338 = vld [vmem:[%s252 + $0x154] sm:$0x1]
      %v339 = vld [vmem:[%s252 + $0x158] sm:$0xf]
      %v340 = vld [vmem:[%s252 + $0x15c] sm:$0x1]
      %v341 = vld [vmem:[%s252 + $0x160] sm:$0xf]
      %v342 = vld [vmem:[%s252 + $0x164] sm:$0x1]
      %v343 = vld [vmem:[%s252 + $0x168] sm:$0xf]
      %v344 = vld [vmem:[%s252 + $0x16c] sm:$0x1]
      %v345 = vld [vmem:[%s252 + $0x170] sm:$0xf]
      %v346 = vld [vmem:[%s252 + $0x174] sm:$0x1]
      %v347 = vld [vmem:[%s252 + $0x178] sm:$0xf]
      %v348 = vld [vmem:[%s252 + $0x17c] sm:$0x1]
      %v349 = vld [vmem:[%s252 + $0x180] sm:$0xf]
      %v350 = vld [vmem:[%s252 + $0x184] sm:$0x1]
      %v351 = vld [vmem:[%s252 + $0x188] sm:$0xf]
      %v352 = vld [vmem:[%s252 + $0x18c] sm:$0x1]
      %v353 = vld [vmem:[%s252 + $0x190] sm:$0xf]
      %v354 = vld [vmem:[%s252 + $0x194] sm:$0x1]
      %v355 = vld [vmem:[%s252 + $0x198] sm:$0xf]
      %v356 = vld [vmem:[%s252 + $0x19c] sm:$0x1]
      %v357 = vld [vmem:[%s252 + $0x1a0] sm:$0xf]
      %v358 = vld [vmem:[%s252 + $0x1a4] sm:$0x1]
      %v359 = vld [vmem:[%s252 + $0x1a8] sm:$0xf]
      %v360 = vld [vmem:[%s252 + $0x1ac] sm:$0x1]
      %v361 = vld [vmem:[%s252 + $0x1b0] sm:$0xf]
      %v362 = vld [vmem:[%s252 + $0x1b4] sm:$0x1]
      %v363 = vld [vmem:[%s252 + $0x1b8] sm:$0xf]
      %v364 = vld [vmem:[%s252 + $0x1bc] sm:$0x1]
      %v365 = vld [vmem:[%s252 + $0x1c0] sm:$0xf]
      %v366 = vld [vmem:[%s252 + $0x1c4] sm:$0x1]
      %v367 = vld [vmem:[%s252 + $0x1c8] sm:$0xf]
      %v368 = vld [vmem:[%s252 + $0x1cc] sm:$0x1]
      %v369 = vld [vmem:[%s252 + $0x1d0] sm:$0xf]
      %v370 = vld [vmem:[%s252 + $0x1d4] sm:$0x1]
      %v371 = vld [vmem:[%s252 + $0x1d8] sm:$0xf]
      %v372 = vld [vmem:[%s252 + $0x1dc] sm:$0x1]
      %v437 = vunpack.c.l.b16 %v253
      %v438 = vunpack.c.l.b16 %v254
      %v439 = vunpack.c.l.b16 %v255
      %v440 = vunpack.c.l.b16 %v256
      %v441 = vunpack.c.l.b16 %v257
      %v442 = vunpack.c.l.b16 %v258
      %v443 = vunpack.c.l.b16 %v259
      %v444 = vunpack.c.l.b16 %v260
      %v445 = vunpack.c.l.b16 %v261
      %v446 = vunpack.c.l.b16 %v262
      %v447 = vunpack.c.l.b16 %v263
      %v448 = vunpack.c.l.b16 %v264
      %v449 = vunpack.c.l.b16 %v265
      %v450 = vunpack.c.l.b16 %v266
      %v451 = vunpack.c.l.b16 %v267
      %v452 = vunpack.c.l.b16 %v268
      %v453 = vunpack.c.l.b16 %v273
      %v454 = vunpack.c.l.b16 %v274
      %v455 = vunpack.c.l.b16 %v275
      %v456 = vunpack.c.l.b16 %v276
      %v457 = vunpack.c.l.b16 %v277
      %v458 = vunpack.c.l.b16 %v278
      %v459 = vunpack.c.l.b16 %v279
      %v460 = vunpack.c.l.b16 %v280
      %v461 = vunpack.c.l.b16 %v281
      %v462 = vunpack.c.l.b16 %v282
      %v463 = vunpack.c.l.b16 %v283
      %v464 = vunpack.c.l.b16 %v284
      %v465 = vunpack.c.l.b16 %v285
      %v466 = vunpack.c.l.b16 %v286
      %v467 = vunpack.c.l.b16 %v287
      %v468 = vunpack.c.l.b16 %v288
      %v469 = vunpack.c.l.b16 %v293
      %v470 = vunpack.c.l.b16 %v294
      %v471 = vunpack.c.l.b16 %v295
      %v472 = vunpack.c.l.b16 %v296
      %v473 = vunpack.c.l.b16 %v297
      %v474 = vunpack.c.l.b16 %v298
      %v475 = vunpack.c.l.b16 %v299
      %v476 = vunpack.c.l.b16 %v300
      %v477 = vunpack.c.l.b16 %v301
      %v478 = vunpack.c.l.b16 %v302
      %v479 = vunpack.c.l.b16 %v303
      %v480 = vunpack.c.l.b16 %v304
      %v481 = vunpack.c.l.b16 %v305
      %v482 = vunpack.c.l.b16 %v306
      %v483 = vunpack.c.l.b16 %v307
      %v484 = vunpack.c.l.b16 %v308
      %v485 = vunpack.c.l.b16 %v313
      %v486 = vunpack.c.l.b16 %v314
      %v487 = vunpack.c.l.b16 %v315
      %v488 = vunpack.c.l.b16 %v316
      %v489 = vunpack.c.l.b16 %v317
      %v490 = vunpack.c.l.b16 %v318
      %v491 = vunpack.c.l.b16 %v319
      %v492 = vunpack.c.l.b16 %v320
      %v493 = vunpack.c.l.b16 %v321
      %v494 = vunpack.c.l.b16 %v322
      %v495 = vunpack.c.l.b16 %v323
      %v496 = vunpack.c.l.b16 %v324
      %v497 = vunpack.c.l.b16 %v325
      %v498 = vunpack.c.l.b16 %v326
      %v499 = vunpack.c.l.b16 %v327
      %v500 = vunpack.c.l.b16 %v328
      %v501 = vpack.c.b16 %v438, %v437
      %v502 = vpack.c.b16 %v440, %v439
      %v503 = vpack.c.b16 %v442, %v441
      %v504 = vpack.c.b16 %v444, %v443
      %v505 = vpack.c.b16 %v446, %v445
      %v506 = vpack.c.b16 %v448, %v447
      %v507 = vpack.c.b16 %v450, %v449
      %v508 = vpack.c.b16 %v452, %v451
      %v509 = vpack.c.b16 %v454, %v453
      %v510 = vpack.c.b16 %v456, %v455
      %v511 = vpack.c.b16 %v458, %v457
      %v512 = vpack.c.b16 %v460, %v459
      %v513 = vpack.c.b16 %v462, %v461
      %v514 = vpack.c.b16 %v464, %v463
      %v515 = vpack.c.b16 %v466, %v465
      %v516 = vpack.c.b16 %v468, %v467
      %v517 = vpack.c.b16 %v470, %v469
      %v518 = vpack.c.b16 %v472, %v471
      %v519 = vpack.c.b16 %v474, %v473
      %v520 = vpack.c.b16 %v476, %v475
      %v521 = vpack.c.b16 %v478, %v477
      %v522 = vpack.c.b16 %v480, %v479
      %v523 = vpack.c.b16 %v482, %v481
      %v524 = vpack.c.b16 %v484, %v483
      %v525 = vpack.c.b16 %v486, %v485
      %v526 = vpack.c.b16 %v488, %v487
      %v527 = vpack.c.b16 %v490, %v489
      %v528 = vpack.c.b16 %v492, %v491
      %v529 = vpack.c.b16 %v494, %v493
      %v530 = vpack.c.b16 %v496, %v495
      %v531 = vpack.c.b16 %v498, %v497
      %v532 = vpack.c.b16 %v500, %v499
      %v534 = vshrl.u32 %v501, 16
      %v536 = vshll.u32 %v501, 16
      %v538 = vrot.slane %v536, 1
      %v539 = vor.u32 %v534, %v538
      %v541 = vshrl.u32 %v502, 16
      %v543 = vshll.u32 %v502, 16
      %v545 = vrot.slane %v543, 1
      %v546 = vor.u32 %v541, %v545
      %v548 = vshrl.u32 %v503, 16
      %v550 = vshll.u32 %v503, 16
      %v552 = vrot.slane %v550, 1
      %v553 = vor.u32 %v548, %v552
      %v555 = vshrl.u32 %v504, 16
      %v557 = vshll.u32 %v504, 16
      %v559 = vrot.slane %v557, 1
      %v560 = vor.u32 %v555, %v559
      %v562 = vshrl.u32 %v505, 16
      %v564 = vshll.u32 %v505, 16
      %v566 = vrot.slane %v564, 1
      %v567 = vor.u32 %v562, %v566
      %v569 = vshrl.u32 %v506, 16
      %v571 = vshll.u32 %v506, 16
      %v573 = vrot.slane %v571, 1
      %v574 = vor.u32 %v569, %v573
      %v576 = vshrl.u32 %v507, 16
      %v578 = vshll.u32 %v507, 16
      %v580 = vrot.slane %v578, 1
      %v581 = vor.u32 %v576, %v580
      %v583 = vshrl.u32 %v508, 16
      %v585 = vshll.u32 %v508, 16
      %v587 = vrot.slane %v585, 1
      %v588 = vor.u32 %v583, %v587
      %v590 = vshrl.u32 %v509, 16
      %v592 = vshll.u32 %v509, 16
      %v594 = vrot.slane %v592, 1
      %v595 = vor.u32 %v590, %v594
      %v597 = vshrl.u32 %v510, 16
      %v599 = vshll.u32 %v510, 16
      %v601 = vrot.slane %v599, 1
      %v602 = vor.u32 %v597, %v601
      %v604 = vshrl.u32 %v511, 16
      %v606 = vshll.u32 %v511, 16
      %v608 = vrot.slane %v606, 1
      %v609 = vor.u32 %v604, %v608
      %v611 = vshrl.u32 %v512, 16
      %v613 = vshll.u32 %v512, 16
      %v615 = vrot.slane %v613, 1
      %v616 = vor.u32 %v611, %v615
      %v618 = vshrl.u32 %v513, 16
      %v620 = vshll.u32 %v513, 16
      %v622 = vrot.slane %v620, 1
      %v623 = vor.u32 %v618, %v622
      %v625 = vshrl.u32 %v514, 16
      %v627 = vshll.u32 %v514, 16
      %v629 = vrot.slane %v627, 1
      %v630 = vor.u32 %v625, %v629
      %v632 = vshrl.u32 %v515, 16
      %v634 = vshll.u32 %v515, 16
      %v636 = vrot.slane %v634, 1
      %v637 = vor.u32 %v632, %v636
      %v639 = vshrl.u32 %v516, 16
      %v641 = vshll.u32 %v516, 16
      %v643 = vrot.slane %v641, 1
      %v644 = vor.u32 %v639, %v643
      %v646 = vshrl.u32 %v517, 16
      %v648 = vshll.u32 %v517, 16
      %v650 = vrot.slane %v648, 1
      %v651 = vor.u32 %v646, %v650
      %v653 = vshrl.u32 %v518, 16
      %v655 = vshll.u32 %v518, 16
      %v657 = vrot.slane %v655, 1
      %v658 = vor.u32 %v653, %v657
      %v660 = vshrl.u32 %v519, 16
      %v662 = vshll.u32 %v519, 16
      %v664 = vrot.slane %v662, 1
      %v665 = vor.u32 %v660, %v664
      %v667 = vshrl.u32 %v520, 16
      %v669 = vshll.u32 %v520, 16
      %v671 = vrot.slane %v669, 1
      %v672 = vor.u32 %v667, %v671
      %v674 = vshrl.u32 %v521, 16
      %v676 = vshll.u32 %v521, 16
      %v678 = vrot.slane %v676, 1
      %v679 = vor.u32 %v674, %v678
      %v681 = vshrl.u32 %v522, 16
      %v683 = vshll.u32 %v522, 16
      %v685 = vrot.slane %v683, 1
      %v686 = vor.u32 %v681, %v685
      %v688 = vshrl.u32 %v523, 16
      %v690 = vshll.u32 %v523, 16
      %v692 = vrot.slane %v690, 1
      %v693 = vor.u32 %v688, %v692
      %v695 = vshrl.u32 %v524, 16
      %v697 = vshll.u32 %v524, 16
      %v699 = vrot.slane %v697, 1
      %v700 = vor.u32 %v695, %v699
      %v702 = vshrl.u32 %v525, 16
      %v704 = vshll.u32 %v525, 16
      %v706 = vrot.slane %v704, 1
      %v707 = vor.u32 %v702, %v706
      %v709 = vshrl.u32 %v526, 16
      %v711 = vshll.u32 %v526, 16
      %v713 = vrot.slane %v711, 1
      %v714 = vor.u32 %v709, %v713
      %v716 = vshrl.u32 %v527, 16
      %v718 = vshll.u32 %v527, 16
      %v720 = vrot.slane %v718, 1
      %v721 = vor.u32 %v716, %v720
      %v723 = vshrl.u32 %v528, 16
      %v725 = vshll.u32 %v528, 16
      %v727 = vrot.slane %v725, 1
      %v728 = vor.u32 %v723, %v727
      %v730 = vshrl.u32 %v529, 16
      %v732 = vshll.u32 %v529, 16
      %v734 = vrot.slane %v732, 1
      %v735 = vor.u32 %v730, %v734
      %v737 = vshrl.u32 %v530, 16
      %v739 = vshll.u32 %v530, 16
      %v741 = vrot.slane %v739, 1
      %v742 = vor.u32 %v737, %v741
      %v744 = vshrl.u32 %v531, 16
      %v746 = vshll.u32 %v531, 16
      %v748 = vrot.slane %v746, 1
      %v749 = vor.u32 %v744, %v748
      %v751 = vshrl.u32 %v532, 16
      %v753 = vshll.u32 %v532, 16
      %v755 = vrot.slane %v753, 1
      %v756 = vor.u32 %v751, %v755
      %757 = vrot.lane.b32.xlu0 %v539, 8
      %v758 = vpop.permute.xlu0 %757
      %759 = vrot.lane.b32.xlu0 %v546, 8
      %v760 = vpop.permute.xlu0 %759
      %761 = vrot.lane.b32.xlu0 %v553, 8
      %v762 = vpop.permute.xlu0 %761
      %763 = vrot.lane.b32.xlu0 %v560, 8
      %v764 = vpop.permute.xlu0 %763
      %765 = vrot.lane.b32.xlu0 %v567, 8
      %v766 = vpop.permute.xlu0 %765
      %767 = vrot.lane.b32.xlu0 %v574, 8
      %v768 = vpop.permute.xlu0 %767
      %769 = vrot.lane.b32.xlu0 %v581, 8
      %v770 = vpop.permute.xlu0 %769
      %771 = vrot.lane.b32.xlu0 %v588, 8
      %v772 = vpop.permute.xlu0 %771
      %773 = vrot.lane.b32.xlu0 %v595, 8
      %v774 = vpop.permute.xlu0 %773
      %775 = vrot.lane.b32.xlu0 %v602, 8
      %v776 = vpop.permute.xlu0 %775
      %777 = vrot.lane.b32.xlu0 %v609, 8
      %v778 = vpop.permute.xlu0 %777
      %779 = vrot.lane.b32.xlu0 %v616, 8
      %v780 = vpop.permute.xlu0 %779
      %781 = vrot.lane.b32.xlu0 %v623, 8
      %v782 = vpop.permute.xlu0 %781
      %783 = vrot.lane.b32.xlu0 %v630, 8
      %v784 = vpop.permute.xlu0 %783
      %785 = vrot.lane.b32.xlu0 %v637, 8
      %v786 = vpop.permute.xlu0 %785
      %787 = vrot.lane.b32.xlu0 %v644, 8
      %v788 = vpop.permute.xlu0 %787
      %789 = vrot.lane.b32.xlu0 %v651, 8
      %v790 = vpop.permute.xlu0 %789
      %791 = vrot.lane.b32.xlu0 %v658, 8
      %v792 = vpop.permute.xlu0 %791
      %793 = vrot.lane.b32.xlu0 %v665, 8
      %v794 = vpop.permute.xlu0 %793
      %795 = vrot.lane.b32.xlu0 %v672, 8
      %v796 = vpop.permute.xlu0 %795
      %797 = vrot.lane.b32.xlu0 %v679, 8
      %v798 = vpop.permute.xlu0 %797
      %799 = vrot.lane.b32.xlu0 %v686, 8
      %v800 = vpop.permute.xlu0 %799
      %801 = vrot.lane.b32.xlu0 %v693, 8
      %v802 = vpop.permute.xlu0 %801
      %803 = vrot.lane.b32.xlu0 %v700, 8
      %v804 = vpop.permute.xlu0 %803
      %805 = vrot.lane.b32.xlu0 %v707, 8
      %v806 = vpop.permute.xlu0 %805
      %807 = vrot.lane.b32.xlu0 %v714, 8
      %v808 = vpop.permute.xlu0 %807
      %809 = vrot.lane.b32.xlu0 %v721, 8
      %v810 = vpop.permute.xlu0 %809
      %811 = vrot.lane.b32.xlu0 %v728, 8
      %v812 = vpop.permute.xlu0 %811
      %813 = vrot.lane.b32.xlu0 %v735, 8
      %v814 = vpop.permute.xlu0 %813
      %815 = vrot.lane.b32.xlu0 %v742, 8
      %v816 = vpop.permute.xlu0 %815
      %817 = vrot.lane.b32.xlu0 %v749, 8
      %v818 = vpop.permute.xlu0 %817
      %819 = vrot.lane.b32.xlu0 %v756, 8
      %v820 = vpop.permute.xlu0 %819
      %v821 = vrot.slane %v501, 1
      %v822 = vrot.slane %v502, 1
      %v823 = vrot.slane %v503, 1
      %v824 = vrot.slane %v504, 1
      %v825 = vrot.slane %v505, 1
      %v826 = vrot.slane %v506, 1
      %v827 = vrot.slane %v507, 1
      %v828 = vrot.slane %v508, 1
      %v829 = vrot.slane %v509, 1
      %v830 = vrot.slane %v510, 1
      %v831 = vrot.slane %v511, 1
      %v832 = vrot.slane %v512, 1
      %v833 = vrot.slane %v513, 1
      %v834 = vrot.slane %v514, 1
      %v835 = vrot.slane %v515, 1
      %v836 = vrot.slane %v516, 1
      %v837 = vrot.slane %v517, 1
      %v838 = vrot.slane %v518, 1
      %v839 = vrot.slane %v519, 1
      %v840 = vrot.slane %v520, 1
      %v841 = vrot.slane %v521, 1
      %v842 = vrot.slane %v522, 1
      %v843 = vrot.slane %v523, 1
      %v844 = vrot.slane %v524, 1
      %v845 = vrot.slane %v525, 1
      %v846 = vrot.slane %v526, 1
      %v847 = vrot.slane %v527, 1
      %v848 = vrot.slane %v528, 1
      %v849 = vrot.slane %v529, 1
      %v850 = vrot.slane %v530, 1
      %v851 = vrot.slane %v531, 1
      %v852 = vrot.slane %v532, 1
      %853 = vrot.lane.b32.xlu0 %v821, 16
      %v854 = vpop.permute.xlu0 %853
      %855 = vrot.lane.b32.xlu0 %v822, 16
      %v856 = vpop.permute.xlu0 %855
      %857 = vrot.lane.b32.xlu0 %v823, 16
      %v858 = vpop.permute.xlu0 %857
      %859 = vrot.lane.b32.xlu0 %v824, 16
      %v860 = vpop.permute.xlu0 %859
      %861 = vrot.lane.b32.xlu0 %v825, 16
      %v862 = vpop.permute.xlu0 %861
      %863 = vrot.lane.b32.xlu0 %v826, 16
      %v864 = vpop.permute.xlu0 %863
      %865 = vrot.lane.b32.xlu0 %v827, 16
      %v866 = vpop.permute.xlu0 %865
      %867 = vrot.lane.b32.xlu0 %v828, 16
      %v868 = vpop.permute.xlu0 %867
      %869 = vrot.lane.b32.xlu0 %v829, 16
      %v870 = vpop.permute.xlu0 %869
      %871 = vrot.lane.b32.xlu0 %v830, 16
      %v872 = vpop.permute.xlu0 %871
      %873 = vrot.lane.b32.xlu0 %v831, 16
      %v874 = vpop.permute.xlu0 %873
      %875 = vrot.lane.b32.xlu0 %v832, 16
      %v876 = vpop.permute.xlu0 %875
      %877 = vrot.lane.b32.xlu0 %v833, 16
      %v878 = vpop.permute.xlu0 %877
      %879 = vrot.lane.b32.xlu0 %v834, 16
      %v880 = vpop.permute.xlu0 %879
      %881 = vrot.lane.b32.xlu0 %v835, 16
      %v882 = vpop.permute.xlu0 %881
      %883 = vrot.lane.b32.xlu0 %v836, 16
      %v884 = vpop.permute.xlu0 %883
      %885 = vrot.lane.b32.xlu0 %v837, 16
      %v886 = vpop.permute.xlu0 %885
      %887 = vrot.lane.b32.xlu0 %v838, 16
      %v888 = vpop.permute.xlu0 %887
      %889 = vrot.lane.b32.xlu0 %v839, 16
      %v890 = vpop.permute.xlu0 %889
      %891 = vrot.lane.b32.xlu0 %v840, 16
      %v892 = vpop.permute.xlu0 %891
      %893 = vrot.lane.b32.xlu0 %v841, 16
      %v894 = vpop.permute.xlu0 %893
      %895 = vrot.lane.b32.xlu0 %v842, 16
      %v896 = vpop.permute.xlu0 %895
      %897 = vrot.lane.b32.xlu0 %v843, 16
      %v898 = vpop.permute.xlu0 %897
      %899 = vrot.lane.b32.xlu0 %v844, 16
      %v900 = vpop.permute.xlu0 %899
      %901 = vrot.lane.b32.xlu0 %v845, 16
      %v902 = vpop.permute.xlu0 %901
      %903 = vrot.lane.b32.xlu0 %v846, 16
      %v904 = vpop.permute.xlu0 %903
      %905 = vrot.lane.b32.xlu0 %v847, 16
      %v906 = vpop.permute.xlu0 %905
      %907 = vrot.lane.b32.xlu0 %v848, 16
      %v908 = vpop.permute.xlu0 %907
      %909 = vrot.lane.b32.xlu0 %v849, 16
      %v910 = vpop.permute.xlu0 %909
      %911 = vrot.lane.b32.xlu0 %v850, 16
      %v912 = vpop.permute.xlu0 %911
      %913 = vrot.lane.b32.xlu0 %v851, 16
      %v914 = vpop.permute.xlu0 %913
      %915 = vrot.lane.b32.xlu0 %v852, 16
      %v916 = vpop.permute.xlu0 %915
      %vm917 = vcmask 64512
      %v920 = vsel %vm917, %v253, %v758
      %v923 = vsel %vm917, %v255, %v760
      %v926 = vsel %vm917, %v257, %v762
      %v929 = vsel %vm917, %v259, %v764
      %v932 = vsel %vm917, %v261, %v766
      %v935 = vsel %vm917, %v263, %v768
      %v938 = vsel %vm917, %v265, %v770
      %v941 = vsel %vm917, %v267, %v772
      %v944 = vsel %vm917, %v273, %v774
      %v947 = vsel %vm917, %v275, %v776
      %v950 = vsel %vm917, %v277, %v778
      %v953 = vsel %vm917, %v279, %v780
      %v956 = vsel %vm917, %v281, %v782
      %v959 = vsel %vm917, %v283, %v784
      %v962 = vsel %vm917, %v285, %v786
      %v965 = vsel %vm917, %v287, %v788
      %v968 = vsel %vm917, %v293, %v790
      %v971 = vsel %vm917, %v295, %v792
      %v974 = vsel %vm917, %v297, %v794
      %v977 = vsel %vm917, %v299, %v796
      %v980 = vsel %vm917, %v301, %v798
      %v983 = vsel %vm917, %v303, %v800
      %v986 = vsel %vm917, %v305, %v802
      %v989 = vsel %vm917, %v307, %v804
      %v992 = vsel %vm917, %v313, %v806
      %v995 = vsel %vm917, %v315, %v808
      %v998 = vsel %vm917, %v317, %v810
      %v1001 = vsel %vm917, %v319, %v812
      %v1004 = vsel %vm917, %v321, %v814
      %v1007 = vsel %vm917, %v323, %v816
      %v1010 = vsel %vm917, %v325, %v818
      %v1013 = vsel %vm917, %v327, %v820
      %vm1014 = vcmask 130048
      %v1016 = vsel %vm1014, %v920, %v854
      %v1018 = vsel %vm1014, %v923, %v856
      %v1020 = vsel %vm1014, %v926, %v858
      %v1022 = vsel %vm1014, %v929, %v860
      %v1024 = vsel %vm1014, %v932, %v862
      %v1026 = vsel %vm1014, %v935, %v864
      %v1028 = vsel %vm1014, %v938, %v866
      %v1030 = vsel %vm1014, %v941, %v868
      %v1032 = vsel %vm1014, %v944, %v870
      %v1034 = vsel %vm1014, %v947, %v872
      %v1036 = vsel %vm1014, %v950, %v874
      %v1038 = vsel %vm1014, %v953, %v876
      %v1040 = vsel %vm1014, %v956, %v878
      %v1042 = vsel %vm1014, %v959, %v880
      %v1044 = vsel %vm1014, %v962, %v882
      %v1046 = vsel %vm1014, %v965, %v884
      %v1048 = vsel %vm1014, %v968, %v886
      %v1050 = vsel %vm1014, %v971, %v888
      %v1052 = vsel %vm1014, %v974, %v890
      %v1054 = vsel %vm1014, %v977, %v892
      %v1056 = vsel %vm1014, %v980, %v894
      %v1058 = vsel %vm1014, %v983, %v896
      %v1060 = vsel %vm1014, %v986, %v898
      %v1062 = vsel %vm1014, %v989, %v900
      %v1064 = vsel %vm1014, %v992, %v902
      %v1066 = vsel %vm1014, %v995, %v904
      %v1068 = vsel %vm1014, %v998, %v906
      %v1070 = vsel %vm1014, %v1001, %v908
      %v1072 = vsel %vm1014, %v1004, %v910
      %v1074 = vsel %vm1014, %v1007, %v912
      %v1076 = vsel %vm1014, %v1010, %v914
      %v1078 = vsel %vm1014, %v1013, %v916
      %v1079 = vld [vmem:[%s1] sm:$0xf]
      %v1080 = vld [vmem:[%s1 + $0x4] sm:$0xf]
      %v1081 = vld [vmem:[%s1 + $0x8] sm:$0xf]
      %v1090 = vunpack.c.l.b16 %v269
      %v1091 = vunpack.c.l.b16 %v270
      %v1092 = vunpack.c.l.b16 %v289
      %v1093 = vunpack.c.l.b16 %v290
      %v1094 = vunpack.c.l.b16 %v309
      %v1095 = vunpack.c.l.b16 %v310
      %v1096 = vunpack.c.l.b16 %v329
      %v1097 = vunpack.c.l.b16 %v330
      %v1098 = vpack.c.b16 %v1091, %v1090
      %v1099 = vpack.c.b16 %v1093, %v1092
      %v1100 = vpack.c.b16 %v1095, %v1094
      %v1101 = vpack.c.b16 %v1097, %v1096
      %v1103 = vshrl.u32 %v1098, 16
      %v1105 = vshll.u32 %v1098, 16
      %v1107 = vrot.slane %v1105, 1
      %v1108 = vor.u32 %v1103, %v1107
      %v1110 = vshrl.u32 %v1099, 16
      %v1112 = vshll.u32 %v1099, 16
      %v1114 = vrot.slane %v1112, 1
      %v1115 = vor.u32 %v1110, %v1114
      %v1117 = vshrl.u32 %v1100, 16
      %v1119 = vshll.u32 %v1100, 16
      %v1121 = vrot.slane %v1119, 1
      %v1122 = vor.u32 %v1117, %v1121
      %v1124 = vshrl.u32 %v1101, 16
      %v1126 = vshll.u32 %v1101, 16
      %v1128 = vrot.slane %v1126, 1
      %v1129 = vor.u32 %v1124, %v1128
      %1130 = vrot.lane.b32.xlu0 %v1108, 8
      %v1131 = vpop.permute.xlu0 %1130
      %1132 = vrot.lane.b32.xlu0 %v1115, 8
      %v1133 = vpop.permute.xlu0 %1132
      %1134 = vrot.lane.b32.xlu0 %v1122, 8
      %v1135 = vpop.permute.xlu0 %1134
      %1136 = vrot.lane.b32.xlu0 %v1129, 8
      %v1137 = vpop.permute.xlu0 %1136
      %v1138 = vrot.slane %v1098, 1
      %v1139 = vrot.slane %v1099, 1
      %v1140 = vrot.slane %v1100, 1
      %v1141 = vrot.slane %v1101, 1
      %1142 = vrot.lane.b32.xlu0 %v1138, 16
      %v1143 = vpop.permute.xlu0 %1142
      %1144 = vrot.lane.b32.xlu0 %v1139, 16
      %v1145 = vpop.permute.xlu0 %1144
      %1146 = vrot.lane.b32.xlu0 %v1140, 16
      %v1147 = vpop.permute.xlu0 %1146
      %1148 = vrot.lane.b32.xlu0 %v1141, 16
      %v1149 = vpop.permute.xlu0 %1148
      %v1152 = vsel %vm917, %v269, %v1131
      %v1155 = vsel %vm917, %v289, %v1133
      %v1158 = vsel %vm917, %v309, %v1135
      %v1161 = vsel %vm917, %v329, %v1137
      %v1163 = vsel %vm1014, %v1152, %v1143
      %v1165 = vsel %vm1014, %v1155, %v1145
      %v1167 = vsel %vm1014, %v1158, %v1147
      %v1169 = vsel %vm1014, %v1161, %v1149
      %s1170 = scalar_lea.vmem %s1, 12
      %v1171 = vld [vmem:[%s1170] sm:$0xf]
      %v1172 = vld [vmem:[%s1170 + $0x4] sm:$0xf]
      %v1173 = vld [vmem:[%s1170 + $0x8] sm:$0xf]
      %v1206 = vunpack.c.l.b16 %v1018
      %v1207 = vunpack.c.l.b16 %v1020
      %v1208 = vunpack.c.l.b16 %v1022
      %v1209 = vunpack.c.l.b16 %v1024
      %v1210 = vunpack.c.l.b16 %v1026
      %v1211 = vunpack.c.l.b16 %v1028
      %v1212 = vunpack.c.l.b16 %v1030
      %v1213 = vunpack.c.l.b16 %v1163
      %v1214 = vunpack.c.l.b16 %v1034
      %v1215 = vunpack.c.l.b16 %v1036
      %v1216 = vunpack.c.l.b16 %v1038
      %v1217 = vunpack.c.l.b16 %v1040
      %v1218 = vunpack.c.l.b16 %v1042
      %v1219 = vunpack.c.l.b16 %v1044
      %v1220 = vunpack.c.l.b16 %v1046
      %v1221 = vunpack.c.l.b16 %v1165
      %v1222 = vunpack.c.l.b16 %v1050
      %v1223 = vunpack.c.l.b16 %v1052
      %v1224 = vunpack.c.l.b16 %v1054
      %v1225 = vunpack.c.l.b16 %v1056
      %v1226 = vunpack.c.l.b16 %v1058
      %v1227 = vunpack.c.l.b16 %v1060
      %v1228 = vunpack.c.l.b16 %v1062
      %v1229 = vunpack.c.l.b16 %v1167
      %v1230 = vunpack.c.l.b16 %v1066
      %v1231 = vunpack.c.l.b16 %v1068
      %v1232 = vunpack.c.l.b16 %v1070
      %v1233 = vunpack.c.l.b16 %v1072
      %v1234 = vunpack.c.l.b16 %v1074
      %v1235 = vunpack.c.l.b16 %v1076
      %v1236 = vunpack.c.l.b16 %v1078
      %v1237 = vunpack.c.l.b16 %v1169
      %v1238 = vpack.c.b16 %v1207, %v1206
      %v1239 = vpack.c.b16 %v1209, %v1208
      %v1240 = vpack.c.b16 %v1211, %v1210
      %v1241 = vpack.c.b16 %v1213, %v1212
      %v1242 = vpack.c.b16 %v1215, %v1214
      %v1243 = vpack.c.b16 %v1217, %v1216
      %v1244 = vpack.c.b16 %v1219, %v1218
      %v1245 = vpack.c.b16 %v1221, %v1220
      %v1246 = vpack.c.b16 %v1223, %v1222
      %v1247 = vpack.c.b16 %v1225, %v1224
      %v1248 = vpack.c.b16 %v1227, %v1226
      %v1249 = vpack.c.b16 %v1229, %v1228
      %v1250 = vpack.c.b16 %v1231, %v1230
      %v1251 = vpack.c.b16 %v1233, %v1232
      %v1252 = vpack.c.b16 %v1235, %v1234
      %v1253 = vpack.c.b16 %v1237, %v1236
      %v1257 = vunpack.c.l.b16 %v1171
      %v1258 = vunpack.c.l.b16 %v1172
      %v1259 = vunpack.c.l.b16 %v1173
      %v1260 = vpack.c.b16 %v1258, %v1257
      %v1261 = vpack.c.b16 %v1259, %v1259
      %vm1263 = vcmask 195584
      %v1265 = vsel %vm1263, %v1238, 0
      %v1268 = vsel %vm1263, %v1239, 0
      %v1271 = vsel %vm1263, %v1240, 0
      %v1274 = vsel %vm1263, %v1241, 0
      %v1277 = vsel %vm1263, %v1242, 0
      %v1280 = vsel %vm1263, %v1243, 0
      %v1283 = vsel %vm1263, %v1244, 0
      %v1286 = vsel %vm1263, %v1245, 0
      %v1289 = vsel %vm1263, %v1246, 0
      %v1292 = vsel %vm1263, %v1247, 0
      %v1295 = vsel %vm1263, %v1248, 0
      %v1298 = vsel %vm1263, %v1249, 0
      %v1301 = vsel %vm1263, %v1250, 0
      %v1304 = vsel %vm1263, %v1251, 0
      %v1307 = vsel %vm1263, %v1252, 0
      %v1310 = vsel %vm1263, %v1253, 0
      %vm1312 = vcmask 1043456
      %v1314 = vsel %vm1312, %v1261, 0
      %1316 = vmatprep.subr.bf16.mxu0 0
      %1317 = vmatpush1.bf16.msra.mxu0 %v1260
      %1318 = vmatprep.subr.bf16.mxu0 0
      %1319 = vmatpush1.bf16.msra.mxu0 %v1314
      %1320 = vmatprep.subr.bf16.mxu0 0
      %1321 = vmatpush1.bf16.msra.mxu0 0
      %1322 = vmatprep.subr.bf16.mxu0 0
      %1323 = vmatpush1.bf16.msra.mxu0 0
      %1324 = vmatprep.subr.bf16.mxu0 0
      %1325 = vmatpush1.bf16.msra.mxu0 0
      %1326 = vmatprep.subr.bf16.mxu0 0
      %1327 = vmatpush1.bf16.msra.mxu0 0
      %1328 = vmatprep.subr.bf16.mxu0 0
      %1329 = vmatpush1.bf16.msra.mxu0 0
      %1330 = vmatprep.subr.bf16.mxu0 0
      %1331 = vmatpush1.bf16.msra.mxu0 0
      %1332 = vmatprep.subr.bf16.mxu0 0
      %1333 = vmatpush1.bf16.msra.mxu0 0
      %1334 = vmatprep.subr.bf16.mxu0 0
      %1335 = vmatpush1.bf16.msra.mxu0 0
      %1336 = vmatprep.subr.bf16.mxu0 0
      %1337 = vmatpush1.bf16.msra.mxu0 0
      %1338 = vmatprep.subr.bf16.mxu0 0
      %1339 = vmatpush1.bf16.msra.mxu0 0
      %1340 = vmatprep.subr.bf16.mxu0 0
      %1341 = vmatpush1.bf16.msra.mxu0 0
      %1342 = vmatprep.subr.bf16.mxu0 0
      %1343 = vmatpush1.bf16.msra.mxu0 0
      %1344 = vmatprep.subr.bf16.mxu0 0
      %1345 = vmatpush1.bf16.msra.mxu0 0
      %1346 = vmatprep.subr.bf16.mxu0 0
      %1347 = vmatpush1.bf16.msra.mxu0 0
      %1348 = vmatprep.mubr.bf16.mxu0 0
      %1349 = vmatmul.mubr.bf16.gmra.mrb[0].mxu0 %v1265
      %v1350 = vpop.f32.mrb[0].mxu0
      %v1351 = vadd.f32 0.0, %v1350
      %v1352 = vpop.f32.mrb[0].mxu0
      %v1353 = vpop.f32.mrb[0].mxu0
      %v1354 = vadd.f32 0.0, %v1353
      %v1355 = vpop.f32.mrb[0].mxu0
      %1356 = vmatprep.mubr.bf16.mxu0 0
      %1357 = vmatmul.mubr.bf16.gmra.mrb[0].mxu0 %v1268
      %v1358 = vpop.f32.mrb[0].mxu0
      %v1359 = vadd.f32 0.0, %v1358
      %v1360 = vpop.f32.mrb[0].mxu0
      %v1361 = vpop.f32.mrb[0].mxu0
      %v1362 = vadd.f32 0.0, %v1361
      %v1363 = vpop.f32.mrb[0].mxu0
      %1364 = vmatprep.mubr.bf16.mxu0 0
      %1365 = vmatmul.mubr.bf16.gmra.mrb[0].mxu0 %v1271
      %v1366 = vpop.f32.mrb[0].mxu0
      %v1367 = vadd.f32 0.0, %v1366
      %v1368 = vpop.f32.mrb[0].mxu0
      %v1369 = vpop.f32.mrb[0].mxu0
      %v1370 = vadd.f32 0.0, %v1369
      %v1371 = vpop.f32.mrb[0].mxu0
      %1372 = vmatprep.mubr.bf16.mxu0 0
      %1373 = vmatmul.mubr.bf16.gmra.mrb[0].mxu0 %v1274
      %v1374 = vpop.f32.mrb[0].mxu0
      %v1375 = vadd.f32 0.0, %v1374
      %v1376 = vpop.f32.mrb[0].mxu0
      %v1377 = vpop.f32.mrb[0].mxu0
      %v1378 = vadd.f32 0.0, %v1377
      %v1379 = vpop.f32.mrb[0].mxu0
      %1380 = vmatprep.mubr.bf16.mxu0 0
      %1381 = vmatmul.mubr.bf16.gmra.mrb[0].mxu0 %v1277
      %v1382 = vpop.f32.mrb[0].mxu0
      %v1383 = vadd.f32 0.0, %v1382
      %v1384 = vpop.f32.mrb[0].mxu0
      %v1385 = vpop.f32.mrb[0].mxu0
      %v1386 = vadd.f32 0.0, %v1385
      %v1387 = vpop.f32.mrb[0].mxu0
      %1388 = vmatprep.mubr.bf16.mxu0 0
      %1389 = vmatmul.mubr.bf16.gmra.mrb[0].mxu0 %v1280
      %v1390 = vpop.f32.mrb[0].mxu0
      %v1391 = vadd.f32 0.0, %v1390
      %v1392 = vpop.f32.mrb[0].mxu0
      %v1393 = vpop.f32.mrb[0].mxu0
      %v1394 = vadd.f32 0.0, %v1393
      %v1395 = vpop.f32.mrb[0].mxu0
      %1396 = vmatprep.mubr.bf16.mxu0 0
      %1397 = vmatmul.mubr.bf16.gmra.mrb[0].mxu0 %v1283
      %v1398 = vpop.f32.mrb[0].mxu0
      %v1399 = vadd.f32 0.0, %v1398
      %v1400 = vpop.f32.mrb[0].mxu0
      %v1401 = vpop.f32.mrb[0].mxu0
      %v1402 = vadd.f32 0.0, %v1401
      %v1403 = vpop.f32.mrb[0].mxu0
      %1404 = vmatprep.mubr.bf16.mxu0 0
      %1405 = vmatmul.mubr.bf16.gmra.mrb[0].mxu0 %v1286
      %v1406 = vpop.f32.mrb[0].mxu0
      %v1407 = vadd.f32 0.0, %v1406
      %v1408 = vpop.f32.mrb[0].mxu0
      %v1409 = vpop.f32.mrb[0].mxu0
      %v1410 = vadd.f32 0.0, %v1409
      %v1411 = vpop.f32.mrb[0].mxu0
      %1412 = vmatprep.mubr.bf16.mxu0 0
      %1413 = vmatmul.mubr.bf16.gmra.mrb[0].mxu0 %v1289
      %v1414 = vpop.f32.mrb[0].mxu0
      %v1415 = vadd.f32 0.0, %v1414
      %v1416 = vpop.f32.mrb[0].mxu0
      %v1417 = vpop.f32.mrb[0].mxu0
      %v1418 = vadd.f32 0.0, %v1417
      %v1419 = vpop.f32.mrb[0].mxu0
      %1420 = vmatprep.mubr.bf16.mxu0 0
      %1421 = vmatmul.mubr.bf16.gmra.mrb[0].mxu0 %v1292
      %v1422 = vpop.f32.mrb[0].mxu0
      %v1423 = vadd.f32 0.0, %v1422
      %v1424 = vpop.f32.mrb[0].mxu0
      %v1425 = vpop.f32.mrb[0].mxu0
      %v1426 = vadd.f32 0.0, %v1425
      %v1427 = vpop.f32.mrb[0].mxu0
      %1428 = vmatprep.mubr.bf16.mxu0 0
      %1429 = vmatmul.mubr.bf16.gmra.mrb[0].mxu0 %v1295
      %v1430 = vpop.f32.mrb[0].mxu0
      %v1431 = vadd.f32 0.0, %v1430
      %v1432 = vpop.f32.mrb[0].mxu0
      %v1433 = vpop.f32.mrb[0].mxu0
      %v1434 = vadd.f32 0.0, %v1433
      %v1435 = vpop.f32.mrb[0].mxu0
      %1436 = vmatprep.mubr.bf16.mxu0 0
      %1437 = vmatmul.mubr.bf16.gmra.mrb[0].mxu0 %v1298
      %v1438 = vpop.f32.mrb[0].mxu0
      %v1439 = vadd.f32 0.0, %v1438
      %v1440 = vpop.f32.mrb[0].mxu0
      %v1441 = vpop.f32.mrb[0].mxu0
      %v1442 = vadd.f32 0.0, %v1441
      %v1443 = vpop.f32.mrb[0].mxu0
      %1444 = vmatprep.mubr.bf16.mxu0 0
      %1445 = vmatmul.mubr.bf16.gmra.mrb[0].mxu0 %v1301
      %v1446 = vpop.f32.mrb[0].mxu0
      %v1447 = vadd.f32 0.0, %v1446
      %v1448 = vpop.f32.mrb[0].mxu0
      %v1449 = vpop.f32.mrb[0].mxu0
      %v1450 = vadd.f32 0.0, %v1449
      %v1451 = vpop.f32.mrb[0].mxu0
      %1452 = vmatprep.mubr.bf16.mxu0 0
      %1453 = vmatmul.mubr.bf16.gmra.mrb[0].mxu0 %v1304
      %v1454 = vpop.f32.mrb[0].mxu0
      %v1455 = vadd.f32 0.0, %v1454
      %v1456 = vpop.f32.mrb[0].mxu0
      %v1457 = vpop.f32.mrb[0].mxu0
      %v1458 = vadd.f32 0.0, %v1457
      %v1459 = vpop.f32.mrb[0].mxu0
      %1460 = vmatprep.mubr.bf16.mxu0 0
      %1461 = vmatmul.mubr.bf16.gmra.mrb[0].mxu0 %v1307
      %v1462 = vpop.f32.mrb[0].mxu0
      %v1463 = vadd.f32 0.0, %v1462
      %v1464 = vpop.f32.mrb[0].mxu0
      %v1465 = vpop.f32.mrb[0].mxu0
      %v1466 = vadd.f32 0.0, %v1465
      %v1467 = vpop.f32.mrb[0].mxu0
      %1468 = vmatprep.mubr.bf16.mxu0 0
      %1469 = vmatmul.mubr.bf16.gmra.mrb[0].mxu0 %v1310
      %v1470 = vpop.f32.mrb[0].mxu0
      %v1471 = vadd.f32 0.0, %v1470
      %v1472 = vpop.f32.mrb[0].mxu0
      %v1473 = vpop.f32.mrb[0].mxu0
      %v1474 = vadd.f32 0.0, %v1473
      %v1475 = vpop.f32.mrb[0].mxu0
      %1476 = vdwg.mxu0
      %v1481 = vunpack.c.l.b16 %v1016
      %v1482 = vunpack.c.l.b16 %v1032
      %v1483 = vunpack.c.l.b16 %v1048
      %v1484 = vunpack.c.l.b16 %v1064
      %v1485 = vpack.c.b16 %v1206, %v1481
      %v1486 = vpack.c.b16 %v1208, %v1207
      %v1487 = vpack.c.b16 %v1210, %v1209
      %v1488 = vpack.c.b16 %v1212, %v1211
      %v1489 = vpack.c.b16 %v1214, %v1482
      %v1490 = vpack.c.b16 %v1216, %v1215
      %v1491 = vpack.c.b16 %v1218, %v1217
      %v1492 = vpack.c.b16 %v1220, %v1219
      %v1493 = vpack.c.b16 %v1222, %v1483
      %v1494 = vpack.c.b16 %v1224, %v1223
      %v1495 = vpack.c.b16 %v1226, %v1225
      %v1496 = vpack.c.b16 %v1228, %v1227
      %v1497 = vpack.c.b16 %v1230, %v1484
      %v1498 = vpack.c.b16 %v1232, %v1231
      %v1499 = vpack.c.b16 %v1234, %v1233
      %v1500 = vpack.c.b16 %v1236, %v1235
      %v1504 = vunpack.c.l.b16 %v1079
      %v1505 = vunpack.c.l.b16 %v1080
      %v1506 = vunpack.c.l.b16 %v1081
      %v1507 = vpack.c.b16 %v1505, %v1504
      %v1508 = vpack.c.b16 %v1506, %v1506
      %v1511 = vsel %vm1263, %v1485, 0
      %v1514 = vsel %vm1263, %v1486, 0
      %v1517 = vsel %vm1263, %v1487, 0
      %v1520 = vsel %vm1263, %v1488, 0
      %v1523 = vsel %vm1263, %v1489, 0
      %v1526 = vsel %vm1263, %v1490, 0
      %v1529 = vsel %vm1263, %v1491, 0
      %v1532 = vsel %vm1263, %v1492, 0
      %v1535 = vsel %vm1263, %v1493, 0
      %v1538 = vsel %vm1263, %v1494, 0
      %v1541 = vsel %vm1263, %v1495, 0
      %v1544 = vsel %vm1263, %v1496, 0
      %v1547 = vsel %vm1263, %v1497, 0
      %v1550 = vsel %vm1263, %v1498, 0
      %v1553 = vsel %vm1263, %v1499, 0
      %v1556 = vsel %vm1263, %v1500, 0
      %v1559 = vsel %vm1312, %v1508, 0
      %1561 = vmatprep.subr.bf16.mxu0 0
      %1562 = vmatpush1.bf16.msra.mxu0 %v1507
      %1563 = vmatprep.subr.bf16.mxu0 0
      %1564 = vmatpush1.bf16.msra.mxu0 %v1559
      %1565 = vmatprep.subr.bf16.mxu0 0
      %1566 = vmatpush1.bf16.msra.mxu0 0
      %1567 = vmatprep.subr.bf16.mxu0 0
      %1568 = vmatpush1.bf16.msra.mxu0 0
      %1569 = vmatprep.subr.bf16.mxu0 0
      %1570 = vmatpush1.bf16.msra.mxu0 0
      %1571 = vmatprep.subr.bf16.mxu0 0
      %1572 = vmatpush1.bf16.msra.mxu0 0
      %1573 = vmatprep.subr.bf16.mxu0 0
      %1574 = vmatpush1.bf16.msra.mxu0 0
      %1575 = vmatprep.subr.bf16.mxu0 0
      %1576 = vmatpush1.bf16.msra.mxu0 0
      %1577 = vmatprep.subr.bf16.mxu0 0
      %1578 = vmatpush1.bf16.msra.mxu0 0
      %1579 = vmatprep.subr.bf16.mxu0 0
      %1580 = vmatpush1.bf16.msra.mxu0 0
      %1581 = vmatprep.subr.bf16.mxu0 0
      %1582 = vmatpush1.bf16.msra.mxu0 0
      %1583 = vmatprep.subr.bf16.mxu0 0
      %1584 = vmatpush1.bf16.msra.mxu0 0
      %1585 = vmatprep.subr.bf16.mxu0 0
      %1586 = vmatpush1.bf16.msra.mxu0 0
      %1587 = vmatprep.subr.bf16.mxu0 0
      %1588 = vmatpush1.bf16.msra.mxu0 0
      %1589 = vmatprep.subr.bf16.mxu0 0
      %1590 = vmatpush1.bf16.msra.mxu0 0
      %1591 = vmatprep.subr.bf16.mxu0 0
      %1592 = vmatpush1.bf16.msra.mxu0 0
      %1593 = vmatprep.mubr.bf16.mxu0 0
      %1594 = vmatmul.mubr.bf16.gmra.mrb[0].mxu0 %v1511
      %v1595 = vpop.f32.mrb[0].mxu0
      %v1596 = vadd.f32 %v1351, %v1595
      %v1597 = vpop.f32.mrb[0].mxu0
      %v1598 = vpop.f32.mrb[0].mxu0
      %v1599 = vadd.f32 %v1354, %v1598
      %v1600 = vpop.f32.mrb[0].mxu0
      %1601 = vmatprep.mubr.bf16.mxu0 0
      %1602 = vmatmul.mubr.bf16.gmra.mrb[0].mxu0 %v1514
      %v1603 = vpop.f32.mrb[0].mxu0
      %v1604 = vadd.f32 %v1359, %v1603
      %v1605 = vpop.f32.mrb[0].mxu0
      %v1606 = vpop.f32.mrb[0].mxu0
      %v1607 = vadd.f32 %v1362, %v1606
      %v1608 = vpop.f32.mrb[0].mxu0
      %1609 = vmatprep.mubr.bf16.mxu0 0
      %1610 = vmatmul.mubr.bf16.gmra.mrb[0].mxu0 %v1517
      %v1611 = vpop.f32.mrb[0].mxu0
      %v1612 = vadd.f32 %v1367, %v1611
      %v1613 = vpop.f32.mrb[0].mxu0
      %v1614 = vpop.f32.mrb[0].mxu0
      %v1615 = vadd.f32 %v1370, %v1614
      %v1616 = vpop.f32.mrb[0].mxu0
      %1617 = vmatprep.mubr.bf16.mxu0 0
      %1618 = vmatmul.mubr.bf16.gmra.mrb[0].mxu0 %v1520
      %v1619 = vpop.f32.mrb[0].mxu0
      %v1620 = vadd.f32 %v1375, %v1619
      %v1621 = vpop.f32.mrb[0].mxu0
      %v1622 = vpop.f32.mrb[0].mxu0
      %v1623 = vadd.f32 %v1378, %v1622
      %v1624 = vpop.f32.mrb[0].mxu0
      %1625 = vmatprep.mubr.bf16.mxu0 0
      %1626 = vmatmul.mubr.bf16.gmra.mrb[0].mxu0 %v1523
      %v1627 = vpop.f32.mrb[0].mxu0
      %v1628 = vadd.f32 %v1383, %v1627
      %v1629 = vpop.f32.mrb[0].mxu0
      %v1630 = vpop.f32.mrb[0].mxu0
      %v1631 = vadd.f32 %v1386, %v1630
      %v1632 = vpop.f32.mrb[0].mxu0
      %1633 = vmatprep.mubr.bf16.mxu0 0
      %1634 = vmatmul.mubr.bf16.gmra.mrb[0].mxu0 %v1526
      %v1635 = vpop.f32.mrb[0].mxu0
      %v1636 = vadd.f32 %v1391, %v1635
      %v1637 = vpop.f32.mrb[0].mxu0
      %v1638 = vpop.f32.mrb[0].mxu0
      %v1639 = vadd.f32 %v1394, %v1638
      %v1640 = vpop.f32.mrb[0].mxu0
      %1641 = vmatprep.mubr.bf16.mxu0 0
      %1642 = vmatmul.mubr.bf16.gmra.mrb[0].mxu0 %v1529
      %v1643 = vpop.f32.mrb[0].mxu0
      %v1644 = vadd.f32 %v1399, %v1643
      %v1645 = vpop.f32.mrb[0].mxu0
      %v1646 = vpop.f32.mrb[0].mxu0
      %v1647 = vadd.f32 %v1402, %v1646
      %v1648 = vpop.f32.mrb[0].mxu0
      %1649 = vmatprep.mubr.bf16.mxu0 0
      %1650 = vmatmul.mubr.bf16.gmra.mrb[0].mxu0 %v1532
      %v1651 = vpop.f32.mrb[0].mxu0
      %v1652 = vadd.f32 %v1407, %v1651
      %v1653 = vpop.f32.mrb[0].mxu0
      %v1654 = vpop.f32.mrb[0].mxu0
      %v1655 = vadd.f32 %v1410, %v1654
      %v1656 = vpop.f32.mrb[0].mxu0
      %1657 = vmatprep.mubr.bf16.mxu0 0
      %1658 = vmatmul.mubr.bf16.gmra.mrb[0].mxu0 %v1535
      %v1659 = vpop.f32.mrb[0].mxu0
      %v1660 = vadd.f32 %v1415, %v1659
      %v1661 = vpop.f32.mrb[0].mxu0
      %v1662 = vpop.f32.mrb[0].mxu0
      %v1663 = vadd.f32 %v1418, %v1662
      %v1664 = vpop.f32.mrb[0].mxu0
      %1665 = vmatprep.mubr.bf16.mxu0 0
      %1666 = vmatmul.mubr.bf16.gmra.mrb[0].mxu0 %v1538
      %v1667 = vpop.f32.mrb[0].mxu0
      %v1668 = vadd.f32 %v1423, %v1667
      %v1669 = vpop.f32.mrb[0].mxu0
      %v1670 = vpop.f32.mrb[0].mxu0
      %v1671 = vadd.f32 %v1426, %v1670
      %v1672 = vpop.f32.mrb[0].mxu0
      %1673 = vmatprep.mubr.bf16.mxu0 0
      %1674 = vmatmul.mubr.bf16.gmra.mrb[0].mxu0 %v1541
      %v1675 = vpop.f32.mrb[0].mxu0
      %v1676 = vadd.f32 %v1431, %v1675
      %v1677 = vpop.f32.mrb[0].mxu0
      %v1678 = vpop.f32.mrb[0].mxu0
      %v1679 = vadd.f32 %v1434, %v1678
      %v1680 = vpop.f32.mrb[0].mxu0
      %1681 = vmatprep.mubr.bf16.mxu0 0
      %1682 = vmatmul.mubr.bf16.gmra.mrb[0].mxu0 %v1544
      %v1683 = vpop.f32.mrb[0].mxu0
      %v1684 = vadd.f32 %v1439, %v1683
      %v1685 = vpop.f32.mrb[0].mxu0
      %v1686 = vpop.f32.mrb[0].mxu0
      %v1687 = vadd.f32 %v1442, %v1686
      %v1688 = vpop.f32.mrb[0].mxu0
      %1689 = vmatprep.mubr.bf16.mxu0 0
      %1690 = vmatmul.mubr.bf16.gmra.mrb[0].mxu0 %v1547
      %v1691 = vpop.f32.mrb[0].mxu0
      %v1692 = vadd.f32 %v1447, %v1691
      %v1693 = vpop.f32.mrb[0].mxu0
      %v1694 = vpop.f32.mrb[0].mxu0
      %v1695 = vadd.f32 %v1450, %v1694
      %v1696 = vpop.f32.mrb[0].mxu0
      %1697 = vmatprep.mubr.bf16.mxu0 0
      %1698 = vmatmul.mubr.bf16.gmra.mrb[0].mxu0 %v1550
      %v1699 = vpop.f32.mrb[0].mxu0
      %v1700 = vadd.f32 %v1455, %v1699
      %v1701 = vpop.f32.mrb[0].mxu0
      %v1702 = vpop.f32.mrb[0].mxu0
      %v1703 = vadd.f32 %v1458, %v1702
      %v1704 = vpop.f32.mrb[0].mxu0
      %1705 = vmatprep.mubr.bf16.mxu0 0
      %1706 = vmatmul.mubr.bf16.gmra.mrb[0].mxu0 %v1553
      %v1707 = vpop.f32.mrb[0].mxu0
      %v1708 = vadd.f32 %v1463, %v1707
      %v1709 = vpop.f32.mrb[0].mxu0
      %v1710 = vpop.f32.mrb[0].mxu0
      %v1711 = vadd.f32 %v1466, %v1710
      %v1712 = vpop.f32.mrb[0].mxu0
      %1713 = vmatprep.mubr.bf16.mxu0 0
      %1714 = vmatmul.mubr.bf16.gmra.mrb[0].mxu0 %v1556
      %v1715 = vpop.f32.mrb[0].mxu0
      %v1716 = vadd.f32 %v1471, %v1715
      %v1717 = vpop.f32.mrb[0].mxu0
      %v1718 = vpop.f32.mrb[0].mxu0
      %v1719 = vadd.f32 %v1474, %v1718
      %v1720 = vpop.f32.mrb[0].mxu0
      %1721 = vdwg.mxu0
      %v1730 = vunpack.c.l.b16 %v271
      %v1731 = vunpack.c.l.b16 %v272
      %v1732 = vunpack.c.l.b16 %v291
      %v1733 = vunpack.c.l.b16 %v292
      %v1734 = vunpack.c.l.b16 %v311
      %v1735 = vunpack.c.l.b16 %v312
      %v1736 = vunpack.c.l.b16 %v331
      %v1737 = vunpack.c.l.b16 %v332
      %v1738 = vpack.c.b16 %v1731, %v1730
      %v1739 = vpack.c.b16 %v1733, %v1732
      %v1740 = vpack.c.b16 %v1735, %v1734
      %v1741 = vpack.c.b16 %v1737, %v1736
      %v1743 = vshrl.u32 %v1738, 16
      %v1745 = vshll.u32 %v1738, 16
      %v1747 = vrot.slane %v1745, 1
      %v1748 = vor.u32 %v1743, %v1747
      %v1750 = vshrl.u32 %v1739, 16
      %v1752 = vshll.u32 %v1739, 16
      %v1754 = vrot.slane %v1752, 1
      %v1755 = vor.u32 %v1750, %v1754
      %v1757 = vshrl.u32 %v1740, 16
      %v1759 = vshll.u32 %v1740, 16
      %v1761 = vrot.slane %v1759, 1
      %v1762 = vor.u32 %v1757, %v1761
      %v1764 = vshrl.u32 %v1741, 16
      %v1766 = vshll.u32 %v1741, 16
      %v1768 = vrot.slane %v1766, 1
      %v1769 = vor.u32 %v1764, %v1768
      %1770 = vrot.lane.b32.xlu0 %v1748, 8
      %v1771 = vpop.permute.xlu0 %1770
      %1772 = vrot.lane.b32.xlu0 %v1755, 8
      %v1773 = vpop.permute.xlu0 %1772
      %1774 = vrot.lane.b32.xlu0 %v1762, 8
      %v1775 = vpop.permute.xlu0 %1774
      %1776 = vrot.lane.b32.xlu0 %v1769, 8
      %v1777 = vpop.permute.xlu0 %1776
      %v1778 = vrot.slane %v1738, 1
      %v1779 = vrot.slane %v1739, 1
      %v1780 = vrot.slane %v1740, 1
      %v1781 = vrot.slane %v1741, 1
      %1782 = vrot.lane.b32.xlu0 %v1778, 16
      %v1783 = vpop.permute.xlu0 %1782
      %1784 = vrot.lane.b32.xlu0 %v1779, 16
      %v1785 = vpop.permute.xlu0 %1784
      %1786 = vrot.lane.b32.xlu0 %v1780, 16
      %v1787 = vpop.permute.xlu0 %1786
      %1788 = vrot.lane.b32.xlu0 %v1781, 16
      %v1789 = vpop.permute.xlu0 %1788
      %v1792 = vsel %vm917, %v271, %v1771
      %v1795 = vsel %vm917, %v291, %v1773
      %v1798 = vsel %vm917, %v311, %v1775
      %v1801 = vsel %vm917, %v331, %v1777
      %v1803 = vsel %vm1014, %v1792, %v1783
      %v1805 = vsel %vm1014, %v1795, %v1785
      %v1807 = vsel %vm1014, %v1798, %v1787
      %v1809 = vsel %vm1014, %v1801, %v1789
      %s1810 = scalar_lea.vmem %s1, 24
      %v1811 = vld [vmem:[%s1810] sm:$0xf]
      %v1812 = vld [vmem:[%s1810 + $0x4] sm:$0xf]
      %v1813 = vld [vmem:[%s1810 + $0x8] sm:$0xf]
      %v1818 = vunpack.c.l.b16 %v1803
      %v1819 = vunpack.c.l.b16 %v1805
      %v1820 = vunpack.c.l.b16 %v1807
      %v1821 = vunpack.c.l.b16 %v1809
      %v1822 = vpack.c.b16 %v1818, %v1213
      %v1823 = vpack.c.b16 %v1819, %v1221
      %v1824 = vpack.c.b16 %v1820, %v1229
      %v1825 = vpack.c.b16 %v1821, %v1237
      %v1829 = vunpack.c.l.b16 %v1811
      %v1830 = vunpack.c.l.b16 %v1812
      %v1831 = vunpack.c.l.b16 %v1813
      %v1832 = vpack.c.b16 %v1830, %v1829
      %v1833 = vpack.c.b16 %v1831, %v1831
      %v1836 = vsel %vm1263, %v1822, 0
      %v1839 = vsel %vm1263, %v1823, 0
      %v1842 = vsel %vm1263, %v1824, 0
      %v1845 = vsel %vm1263, %v1825, 0
      %v1848 = vsel %vm1312, %v1833, 0
      %1850 = vmatprep.subr.bf16.mxu0 0
      %1851 = vmatpush1.bf16.msra.mxu0 %v1832
      %1852 = vmatprep.subr.bf16.mxu0 0
      %1853 = vmatpush1.bf16.msra.mxu0 %v1848
      %1854 = vmatprep.subr.bf16.mxu0 0
      %1855 = vmatpush1.bf16.msra.mxu0 0
      %1856 = vmatprep.subr.bf16.mxu0 0
      %1857 = vmatpush1.bf16.msra.mxu0 0
      %1858 = vmatprep.subr.bf16.mxu0 0
      %1859 = vmatpush1.bf16.msra.mxu0 0
      %1860 = vmatprep.subr.bf16.mxu0 0
      %1861 = vmatpush1.bf16.msra.mxu0 0
      %1862 = vmatprep.subr.bf16.mxu0 0
      %1863 = vmatpush1.bf16.msra.mxu0 0
      %1864 = vmatprep.subr.bf16.mxu0 0
      %1865 = vmatpush1.bf16.msra.mxu0 0
      %1866 = vmatprep.subr.bf16.mxu0 0
      %1867 = vmatpush1.bf16.msra.mxu0 0
      %1868 = vmatprep.subr.bf16.mxu0 0
      %1869 = vmatpush1.bf16.msra.mxu0 0
      %1870 = vmatprep.subr.bf16.mxu0 0
      %1871 = vmatpush1.bf16.msra.mxu0 0
      %1872 = vmatprep.subr.bf16.mxu0 0
      %1873 = vmatpush1.bf16.msra.mxu0 0
      %1874 = vmatprep.subr.bf16.mxu0 0
      %1875 = vmatpush1.bf16.msra.mxu0 0
      %1876 = vmatprep.subr.bf16.mxu0 0
      %1877 = vmatpush1.bf16.msra.mxu0 0
      %1878 = vmatprep.subr.bf16.mxu0 0
      %1879 = vmatpush1.bf16.msra.mxu0 0
      %1880 = vmatprep.subr.bf16.mxu0 0
      %1881 = vmatpush1.bf16.msra.mxu0 0
      %1882 = vmatprep.mubr.bf16.mxu0 0
      %1883 = vmatmul.mubr.bf16.gmra.mrb[0].mxu0 %v1514
      %v1884 = vpop.f32.mrb[0].mxu0
      %v1885 = vadd.f32 0.0, %v1884
      %v1886 = vpop.f32.mrb[0].mxu0
      %v1887 = vpop.f32.mrb[0].mxu0
      %v1888 = vadd.f32 0.0, %v1887
      %v1889 = vpop.f32.mrb[0].mxu0
      %1890 = vmatprep.mubr.bf16.mxu0 0
      %1891 = vmatmul.mubr.bf16.gmra.mrb[0].mxu0 %v1517
      %v1892 = vpop.f32.mrb[0].mxu0
      %v1893 = vadd.f32 0.0, %v1892
      %v1894 = vpop.f32.mrb[0].mxu0
      %v1895 = vpop.f32.mrb[0].mxu0
      %v1896 = vadd.f32 0.0, %v1895
      %v1897 = vpop.f32.mrb[0].mxu0
      %1898 = vmatprep.mubr.bf16.mxu0 0
      %1899 = vmatmul.mubr.bf16.gmra.mrb[0].mxu0 %v1520
      %v1900 = vpop.f32.mrb[0].mxu0
      %v1901 = vadd.f32 0.0, %v1900
      %v1902 = vpop.f32.mrb[0].mxu0
      %v1903 = vpop.f32.mrb[0].mxu0
      %v1904 = vadd.f32 0.0, %v1903
      %v1905 = vpop.f32.mrb[0].mxu0
      %1906 = vmatprep.mubr.bf16.mxu0 0
      %1907 = vmatmul.mubr.bf16.gmra.mrb[0].mxu0 %v1836
      %v1908 = vpop.f32.mrb[0].mxu0
      %v1909 = vadd.f32 0.0, %v1908
      %v1910 = vpop.f32.mrb[0].mxu0
      %v1911 = vpop.f32.mrb[0].mxu0
      %v1912 = vadd.f32 0.0, %v1911
      %v1913 = vpop.f32.mrb[0].mxu0
      %1914 = vmatprep.mubr.bf16.mxu0 0
      %1915 = vmatmul.mubr.bf16.gmra.mrb[0].mxu0 %v1526
      %v1916 = vpop.f32.mrb[0].mxu0
      %v1917 = vadd.f32 0.0, %v1916
      %v1918 = vpop.f32.mrb[0].mxu0
      %v1919 = vpop.f32.mrb[0].mxu0
      %v1920 = vadd.f32 0.0, %v1919
      %v1921 = vpop.f32.mrb[0].mxu0
      %1922 = vmatprep.mubr.bf16.mxu0 0
      %1923 = vmatmul.mubr.bf16.gmra.mrb[0].mxu0 %v1529
      %v1924 = vpop.f32.mrb[0].mxu0
      %v1925 = vadd.f32 0.0, %v1924
      %v1926 = vpop.f32.mrb[0].mxu0
      %v1927 = vpop.f32.mrb[0].mxu0
      %v1928 = vadd.f32 0.0, %v1927
      %v1929 = vpop.f32.mrb[0].mxu0
      %1930 = vmatprep.mubr.bf16.mxu0 0
      %1931 = vmatmul.mubr.bf16.gmra.mrb[0].mxu0 %v1532
      %v1932 = vpop.f32.mrb[0].mxu0
      %v1933 = vadd.f32 0.0, %v1932
      %v1934 = vpop.f32.mrb[0].mxu0
      %v1935 = vpop.f32.mrb[0].mxu0
      %v1936 = vadd.f32 0.0, %v1935
      %v1937 = vpop.f32.mrb[0].mxu0
      %1938 = vmatprep.mubr.bf16.mxu0 0
      %1939 = vmatmul.mubr.bf16.gmra.mrb[0].mxu0 %v1839
      %v1940 = vpop.f32.mrb[0].mxu0
      %v1941 = vadd.f32 0.0, %v1940
      %v1942 = vpop.f32.mrb[0].mxu0
      %v1943 = vpop.f32.mrb[0].mxu0
      %v1944 = vadd.f32 0.0, %v1943
      %v1945 = vpop.f32.mrb[0].mxu0
      %1946 = vmatprep.mubr.bf16.mxu0 0
      %1947 = vmatmul.mubr.bf16.gmra.mrb[0].mxu0 %v1538
      %v1948 = vpop.f32.mrb[0].mxu0
      %v1949 = vadd.f32 0.0, %v1948
      %v1950 = vpop.f32.mrb[0].mxu0
      %v1951 = vpop.f32.mrb[0].mxu0
      %v1952 = vadd.f32 0.0, %v1951
      %v1953 = vpop.f32.mrb[0].mxu0
      %1954 = vmatprep.mubr.bf16.mxu0 0
      %1955 = vmatmul.mubr.bf16.gmra.mrb[0].mxu0 %v1541
      %v1956 = vpop.f32.mrb[0].mxu0
      %v1957 = vadd.f32 0.0, %v1956
      %v1958 = vpop.f32.mrb[0].mxu0
      %v1959 = vpop.f32.mrb[0].mxu0
      %v1960 = vadd.f32 0.0, %v1959
      %v1961 = vpop.f32.mrb[0].mxu0
      %1962 = vmatprep.mubr.bf16.mxu0 0
      %1963 = vmatmul.mubr.bf16.gmra.mrb[0].mxu0 %v1544
      %v1964 = vpop.f32.mrb[0].mxu0
      %v1965 = vadd.f32 0.0, %v1964
      %v1966 = vpop.f32.mrb[0].mxu0
      %v1967 = vpop.f32.mrb[0].mxu0
      %v1968 = vadd.f32 0.0, %v1967
      %v1969 = vpop.f32.mrb[0].mxu0
      %1970 = vmatprep.mubr.bf16.mxu0 0
      %1971 = vmatmul.mubr.bf16.gmra.mrb[0].mxu0 %v1842
      %v1972 = vpop.f32.mrb[0].mxu0
      %v1973 = vadd.f32 0.0, %v1972
      %v1974 = vpop.f32.mrb[0].mxu0
      %v1975 = vpop.f32.mrb[0].mxu0
      %v1976 = vadd.f32 0.0, %v1975
      %v1977 = vpop.f32.mrb[0].mxu0
      %1978 = vmatprep.mubr.bf16.mxu0 0
      %1979 = vmatmul.mubr.bf16.gmra.mrb[0].mxu0 %v1550
      %v1980 = vpop.f32.mrb[0].mxu0
      %v1981 = vadd.f32 0.0, %v1980
      %v1982 = vpop.f32.mrb[0].mxu0
      %v1983 = vpop.f32.mrb[0].mxu0
      %v1984 = vadd.f32 0.0, %v1983
      %v1985 = vpop.f32.mrb[0].mxu0
      %1986 = vmatprep.mubr.bf16.mxu0 0
      %1987 = vmatmul.mubr.bf16.gmra.mrb[0].mxu0 %v1553
      %v1988 = vpop.f32.mrb[0].mxu0
      %v1989 = vadd.f32 0.0, %v1988
      %v1990 = vpop.f32.mrb[0].mxu0
      %v1991 = vpop.f32.mrb[0].mxu0
      %v1992 = vadd.f32 0.0, %v1991
      %v1993 = vpop.f32.mrb[0].mxu0
      %1994 = vmatprep.mubr.bf16.mxu0 0
      %1995 = vmatmul.mubr.bf16.gmra.mrb[0].mxu0 %v1556
      %v1996 = vpop.f32.mrb[0].mxu0
      %v1997 = vadd.f32 0.0, %v1996
      %v1998 = vpop.f32.mrb[0].mxu0
      %v1999 = vpop.f32.mrb[0].mxu0
      %v2000 = vadd.f32 0.0, %v1999
      %v2001 = vpop.f32.mrb[0].mxu0
      %2002 = vmatprep.mubr.bf16.mxu0 0
      %2003 = vmatmul.mubr.bf16.gmra.mrb[0].mxu0 %v1845
      %v2004 = vpop.f32.mrb[0].mxu0
      %v2005 = vadd.f32 0.0, %v2004
      %v2006 = vpop.f32.mrb[0].mxu0
      %v2007 = vpop.f32.mrb[0].mxu0
      %v2008 = vadd.f32 0.0, %v2007
      %v2009 = vpop.f32.mrb[0].mxu0
      %2010 = vdwg.mxu0
      %v2011 = vadd.f32 %v1596, %v1885
      %v2012 = vadd.f32 %v1599, %v1888
      %v2013 = vadd.f32 %v1604, %v1893
      %v2014 = vadd.f32 %v1607, %v1896
      %v2015 = vadd.f32 %v1612, %v1901
      %v2016 = vadd.f32 %v1615, %v1904
      %v2017 = vadd.f32 %v1620, %v1909
      %v2018 = vadd.f32 %v1623, %v1912
      %v2019 = vadd.f32 %v1628, %v1917
      %v2020 = vadd.f32 %v1631, %v1920
      %v2021 = vadd.f32 %v1636, %v1925
      %v2022 = vadd.f32 %v1639, %v1928
      %v2023 = vadd.f32 %v1644, %v1933
      %v2024 = vadd.f32 %v1647, %v1936
      %v2025 = vadd.f32 %v1652, %v1941
      %v2026 = vadd.f32 %v1655, %v1944
      %v2027 = vadd.f32 %v1660, %v1949
      %v2028 = vadd.f32 %v1663, %v1952
      %v2029 = vadd.f32 %v1668, %v1957
      %v2030 = vadd.f32 %v1671, %v1960
      %v2031 = vadd.f32 %v1676, %v1965
      %v2032 = vadd.f32 %v1679, %v1968
      %v2033 = vadd.f32 %v1684, %v1973
      %v2034 = vadd.f32 %v1687, %v1976
      %v2035 = vadd.f32 %v1692, %v1981
      %v2036 = vadd.f32 %v1695, %v1984
      %v2037 = vadd.f32 %v1700, %v1989
      %v2038 = vadd.f32 %v1703, %v1992
      %v2039 = vadd.f32 %v1708, %v1997
      %v2040 = vadd.f32 %v1711, %v2000
      %v2041 = vadd.f32 %v1716, %v2005
      %v2042 = vadd.f32 %v1719, %v2008
      %v2059 = vunpack.c.l.b16 %v333
      %v2060 = vunpack.c.l.b16 %v334
      %v2061 = vunpack.c.l.b16 %v335
      %v2062 = vunpack.c.l.b16 %v336
      %v2063 = vunpack.c.l.b16 %v337
      %v2064 = vunpack.c.l.b16 %v338
      %v2065 = vunpack.c.l.b16 %v339
      %v2066 = vunpack.c.l.b16 %v340
      %v2067 = vunpack.c.l.b16 %v341
      %v2068 = vunpack.c.l.b16 %v342
      %v2069 = vunpack.c.l.b16 %v343
      %v2070 = vunpack.c.l.b16 %v344
      %v2071 = vunpack.c.l.b16 %v345
      %v2072 = vunpack.c.l.b16 %v346
      %v2073 = vunpack.c.l.b16 %v347
      %v2074 = vunpack.c.l.b16 %v348
      %v2075 = vpack.c.b16 %v2060, %v2059
      %v2076 = vpack.c.b16 %v2062, %v2061
      %v2077 = vpack.c.b16 %v2064, %v2063
      %v2078 = vpack.c.b16 %v2066, %v2065
      %v2079 = vpack.c.b16 %v2068, %v2067
      %v2080 = vpack.c.b16 %v2070, %v2069
      %v2081 = vpack.c.b16 %v2072, %v2071
      %v2082 = vpack.c.b16 %v2074, %v2073
      %v2084 = vshrl.u32 %v2075, 16
      %v2086 = vshll.u32 %v2075, 16
      %v2088 = vrot.slane %v2086, 1
      %v2089 = vor.u32 %v2084, %v2088
      %v2091 = vshrl.u32 %v2076, 16
      %v2093 = vshll.u32 %v2076, 16
      %v2095 = vrot.slane %v2093, 1
      %v2096 = vor.u32 %v2091, %v2095
      %v2098 = vshrl.u32 %v2077, 16
      %v2100 = vshll.u32 %v2077, 16
      %v2102 = vrot.slane %v2100, 1
      %v2103 = vor.u32 %v2098, %v2102
      %v2105 = vshrl.u32 %v2078, 16
      %v2107 = vshll.u32 %v2078, 16
      %v2109 = vrot.slane %v2107, 1
      %v2110 = vor.u32 %v2105, %v2109
      %v2112 = vshrl.u32 %v2079, 16
      %v2114 = vshll.u32 %v2079, 16
      %v2116 = vrot.slane %v2114, 1
      %v2117 = vor.u32 %v2112, %v2116
      %v2119 = vshrl.u32 %v2080, 16
      %v2121 = vshll.u32 %v2080, 16
      %v2123 = vrot.slane %v2121, 1
      %v2124 = vor.u32 %v2119, %v2123
      %v2126 = vshrl.u32 %v2081, 16
      %v2128 = vshll.u32 %v2081, 16
      %v2130 = vrot.slane %v2128, 1
      %v2131 = vor.u32 %v2126, %v2130
      %v2133 = vshrl.u32 %v2082, 16
      %v2135 = vshll.u32 %v2082, 16
      %v2137 = vrot.slane %v2135, 1
      %v2138 = vor.u32 %v2133, %v2137
      %2139 = vrot.lane.b32.xlu0 %v2089, 8
      %v2140 = vpop.permute.xlu0 %2139
      %2141 = vrot.lane.b32.xlu0 %v2096, 8
      %v2142 = vpop.permute.xlu0 %2141
      %2143 = vrot.lane.b32.xlu0 %v2103, 8
      %v2144 = vpop.permute.xlu0 %2143
      %2145 = vrot.lane.b32.xlu0 %v2110, 8
      %v2146 = vpop.permute.xlu0 %2145
      %2147 = vrot.lane.b32.xlu0 %v2117, 8
      %v2148 = vpop.permute.xlu0 %2147
      %2149 = vrot.lane.b32.xlu0 %v2124, 8
      %v2150 = vpop.permute.xlu0 %2149
      %2151 = vrot.lane.b32.xlu0 %v2131, 8
      %v2152 = vpop.permute.xlu0 %2151
      %2153 = vrot.lane.b32.xlu0 %v2138, 8
      %v2154 = vpop.permute.xlu0 %2153
      %v2155 = vrot.slane %v2075, 1
      %v2156 = vrot.slane %v2076, 1
      %v2157 = vrot.slane %v2077, 1
      %v2158 = vrot.slane %v2078, 1
      %v2159 = vrot.slane %v2079, 1
      %v2160 = vrot.slane %v2080, 1
      %v2161 = vrot.slane %v2081, 1
      %v2162 = vrot.slane %v2082, 1
      %2163 = vrot.lane.b32.xlu0 %v2155, 16
      %v2164 = vpop.permute.xlu0 %2163
      %2165 = vrot.lane.b32.xlu0 %v2156, 16
      %v2166 = vpop.permute.xlu0 %2165
      %2167 = vrot.lane.b32.xlu0 %v2157, 16
      %v2168 = vpop.permute.xlu0 %2167
      %2169 = vrot.lane.b32.xlu0 %v2158, 16
      %v2170 = vpop.permute.xlu0 %2169
      %2171 = vrot.lane.b32.xlu0 %v2159, 16
      %v2172 = vpop.permute.xlu0 %2171
      %2173 = vrot.lane.b32.xlu0 %v2160, 16
      %v2174 = vpop.permute.xlu0 %2173
      %2175 = vrot.lane.b32.xlu0 %v2161, 16
      %v2176 = vpop.permute.xlu0 %2175
      %2177 = vrot.lane.b32.xlu0 %v2162, 16
      %v2178 = vpop.permute.xlu0 %2177
      %v2181 = vsel %vm917, %v333, %v2140
      %v2184 = vsel %vm917, %v335, %v2142
      %v2187 = vsel %vm917, %v337, %v2144
      %v2190 = vsel %vm917, %v339, %v2146
      %v2193 = vsel %vm917, %v341, %v2148
      %v2196 = vsel %vm917, %v343, %v2150
      %v2199 = vsel %vm917, %v345, %v2152
      %v2202 = vsel %vm917, %v347, %v2154
      %v2204 = vsel %vm1014, %v2181, %v2164
      %v2206 = vsel %vm1014, %v2184, %v2166
      %v2208 = vsel %vm1014, %v2187, %v2168
      %v2210 = vsel %vm1014, %v2190, %v2170
      %v2212 = vsel %vm1014, %v2193, %v2172
      %v2214 = vsel %vm1014, %v2196, %v2174
      %v2216 = vsel %vm1014, %v2199, %v2176
      %v2218 = vsel %vm1014, %v2202, %v2178
      %s2219 = scalar_lea.vmem %s1, 36
      %v2220 = vld [vmem:[%s2219] sm:$0xf]
      %v2221 = vld [vmem:[%s2219 + $0x4] sm:$0xf]
      %v2222 = vld [vmem:[%s2219 + $0x8] sm:$0xf]
      %v2231 = vunpack.c.l.b16 %v2204
      %v2232 = vunpack.c.l.b16 %v2206
      %v2233 = vunpack.c.l.b16 %v2208
      %v2234 = vunpack.c.l.b16 %v2210
      %v2235 = vunpack.c.l.b16 %v2212
      %v2236 = vunpack.c.l.b16 %v2214
      %v2237 = vunpack.c.l.b16 %v2216
      %v2238 = vunpack.c.l.b16 %v2218
      %v2239 = vpack.c.b16 %v2232, %v2231
      %v2240 = vpack.c.b16 %v2234, %v2233
      %v2241 = vpack.c.b16 %v2236, %v2235
      %v2242 = vpack.c.b16 %v2238, %v2237
      %v2246 = vunpack.c.l.b16 %v2220
      %v2247 = vunpack.c.l.b16 %v2221
      %v2248 = vunpack.c.l.b16 %v2222
      %v2249 = vpack.c.b16 %v2247, %v2246
      %v2250 = vpack.c.b16 %v2248, %v2248
      %v2253 = vsel %vm1263, %v2239, 0
      %v2256 = vsel %vm1263, %v2240, 0
      %v2259 = vsel %vm1263, %v2241, 0
      %v2262 = vsel %vm1263, %v2242, 0
      %v2265 = vsel %vm1312, %v2250, 0
      %2267 = vmatprep.subr.bf16.mxu0 0
      %2268 = vmatpush1.bf16.msra.mxu0 %v2249
      %2269 = vmatprep.subr.bf16.mxu0 0
      %2270 = vmatpush1.bf16.msra.mxu0 %v2265
      %2271 = vmatprep.subr.bf16.mxu0 0
      %2272 = vmatpush1.bf16.msra.mxu0 0
      %2273 = vmatprep.subr.bf16.mxu0 0
      %2274 = vmatpush1.bf16.msra.mxu0 0
      %2275 = vmatprep.subr.bf16.mxu0 0
      %2276 = vmatpush1.bf16.msra.mxu0 0
      %2277 = vmatprep.subr.bf16.mxu0 0
      %2278 = vmatpush1.bf16.msra.mxu0 0
      %2279 = vmatprep.subr.bf16.mxu0 0
      %2280 = vmatpush1.bf16.msra.mxu0 0
      %2281 = vmatprep.subr.bf16.mxu0 0
      %2282 = vmatpush1.bf16.msra.mxu0 0
      %2283 = vmatprep.subr.bf16.mxu0 0
      %2284 = vmatpush1.bf16.msra.mxu0 0
      %2285 = vmatprep.subr.bf16.mxu0 0
      %2286 = vmatpush1.bf16.msra.mxu0 0
      %2287 = vmatprep.subr.bf16.mxu0 0
      %2288 = vmatpush1.bf16.msra.mxu0 0
      %2289 = vmatprep.subr.bf16.mxu0 0
      %2290 = vmatpush1.bf16.msra.mxu0 0
      %2291 = vmatprep.subr.bf16.mxu0 0
      %2292 = vmatpush1.bf16.msra.mxu0 0
      %2293 = vmatprep.subr.bf16.mxu0 0
      %2294 = vmatpush1.bf16.msra.mxu0 0
      %2295 = vmatprep.subr.bf16.mxu0 0
      %2296 = vmatpush1.bf16.msra.mxu0 0
      %2297 = vmatprep.subr.bf16.mxu0 0
      %2298 = vmatpush1.bf16.msra.mxu0 0
      %2299 = vmatprep.mubr.bf16.mxu0 0
      %2300 = vmatmul.mubr.bf16.gmra.mrb[0].mxu0 %v1523
      %v2301 = vpop.f32.mrb[0].mxu0
      %v2302 = vadd.f32 0.0, %v2301
      %v2303 = vpop.f32.mrb[0].mxu0
      %v2304 = vpop.f32.mrb[0].mxu0
      %v2305 = vadd.f32 0.0, %v2304
      %v2306 = vpop.f32.mrb[0].mxu0
      %2307 = vmatprep.mubr.bf16.mxu0 0
      %2308 = vmatmul.mubr.bf16.gmra.mrb[0].mxu0 %v1526
      %v2309 = vpop.f32.mrb[0].mxu0
      %v2310 = vadd.f32 0.0, %v2309
      %v2311 = vpop.f32.mrb[0].mxu0
      %v2312 = vpop.f32.mrb[0].mxu0
      %v2313 = vadd.f32 0.0, %v2312
      %v2314 = vpop.f32.mrb[0].mxu0
      %2315 = vmatprep.mubr.bf16.mxu0 0
      %2316 = vmatmul.mubr.bf16.gmra.mrb[0].mxu0 %v1529
      %v2317 = vpop.f32.mrb[0].mxu0
      %v2318 = vadd.f32 0.0, %v2317
      %v2319 = vpop.f32.mrb[0].mxu0
      %v2320 = vpop.f32.mrb[0].mxu0
      %v2321 = vadd.f32 0.0, %v2320
      %v2322 = vpop.f32.mrb[0].mxu0
      %2323 = vmatprep.mubr.bf16.mxu0 0
      %2324 = vmatmul.mubr.bf16.gmra.mrb[0].mxu0 %v1532
      %v2325 = vpop.f32.mrb[0].mxu0
      %v2326 = vadd.f32 0.0, %v2325
      %v2327 = vpop.f32.mrb[0].mxu0
      %v2328 = vpop.f32.mrb[0].mxu0
      %v2329 = vadd.f32 0.0, %v2328
      %v2330 = vpop.f32.mrb[0].mxu0
      %2331 = vmatprep.mubr.bf16.mxu0 0
      %2332 = vmatmul.mubr.bf16.gmra.mrb[0].mxu0 %v1535
      %v2333 = vpop.f32.mrb[0].mxu0
      %v2334 = vadd.f32 0.0, %v2333
      %v2335 = vpop.f32.mrb[0].mxu0
      %v2336 = vpop.f32.mrb[0].mxu0
      %v2337 = vadd.f32 0.0, %v2336
      %v2338 = vpop.f32.mrb[0].mxu0
      %2339 = vmatprep.mubr.bf16.mxu0 0
      %2340 = vmatmul.mubr.bf16.gmra.mrb[0].mxu0 %v1538
      %v2341 = vpop.f32.mrb[0].mxu0
      %v2342 = vadd.f32 0.0, %v2341
      %v2343 = vpop.f32.mrb[0].mxu0
      %v2344 = vpop.f32.mrb[0].mxu0
      %v2345 = vadd.f32 0.0, %v2344
      %v2346 = vpop.f32.mrb[0].mxu0
      %2347 = vmatprep.mubr.bf16.mxu0 0
      %2348 = vmatmul.mubr.bf16.gmra.mrb[0].mxu0 %v1541
      %v2349 = vpop.f32.mrb[0].mxu0
      %v2350 = vadd.f32 0.0, %v2349
      %v2351 = vpop.f32.mrb[0].mxu0
      %v2352 = vpop.f32.mrb[0].mxu0
      %v2353 = vadd.f32 0.0, %v2352
      %v2354 = vpop.f32.mrb[0].mxu0
      %2355 = vmatprep.mubr.bf16.mxu0 0
      %2356 = vmatmul.mubr.bf16.gmra.mrb[0].mxu0 %v1544
      %v2357 = vpop.f32.mrb[0].mxu0
      %v2358 = vadd.f32 0.0, %v2357
      %v2359 = vpop.f32.mrb[0].mxu0
      %v2360 = vpop.f32.mrb[0].mxu0
      %v2361 = vadd.f32 0.0, %v2360
      %v2362 = vpop.f32.mrb[0].mxu0
      %2363 = vmatprep.mubr.bf16.mxu0 0
      %2364 = vmatmul.mubr.bf16.gmra.mrb[0].mxu0 %v1547
      %v2365 = vpop.f32.mrb[0].mxu0
      %v2366 = vadd.f32 0.0, %v2365
      %v2367 = vpop.f32.mrb[0].mxu0
      %v2368 = vpop.f32.mrb[0].mxu0
      %v2369 = vadd.f32 0.0, %v2368
      %v2370 = vpop.f32.mrb[0].mxu0
      %2371 = vmatprep.mubr.bf16.mxu0 0
      %2372 = vmatmul.mubr.bf16.gmra.mrb[0].mxu0 %v1550
      %v2373 = vpop.f32.mrb[0].mxu0
      %v2374 = vadd.f32 0.0, %v2373
      %v2375 = vpop.f32.mrb[0].mxu0
      %v2376 = vpop.f32.mrb[0].mxu0
      %v2377 = vadd.f32 0.0, %v2376
      %v2378 = vpop.f32.mrb[0].mxu0
      %2379 = vmatprep.mubr.bf16.mxu0 0
      %2380 = vmatmul.mubr.bf16.gmra.mrb[0].mxu0 %v1553
      %v2381 = vpop.f32.mrb[0].mxu0
      %v2382 = vadd.f32 0.0, %v2381
      %v2383 = vpop.f32.mrb[0].mxu0
      %v2384 = vpop.f32.mrb[0].mxu0
      %v2385 = vadd.f32 0.0, %v2384
      %v2386 = vpop.f32.mrb[0].mxu0
      %2387 = vmatprep.mubr.bf16.mxu0 0
      %2388 = vmatmul.mubr.bf16.gmra.mrb[0].mxu0 %v1556
      %v2389 = vpop.f32.mrb[0].mxu0
      %v2390 = vadd.f32 0.0, %v2389
      %v2391 = vpop.f32.mrb[0].mxu0
      %v2392 = vpop.f32.mrb[0].mxu0
      %v2393 = vadd.f32 0.0, %v2392
      %v2394 = vpop.f32.mrb[0].mxu0
      %2395 = vmatprep.mubr.bf16.mxu0 0
      %2396 = vmatmul.mubr.bf16.gmra.mrb[0].mxu0 %v2253
      %v2397 = vpop.f32.mrb[0].mxu0
      %v2398 = vadd.f32 0.0, %v2397
      %v2399 = vpop.f32.mrb[0].mxu0
      %v2400 = vpop.f32.mrb[0].mxu0
      %v2401 = vadd.f32 0.0, %v2400
      %v2402 = vpop.f32.mrb[0].mxu0
      %2403 = vmatprep.mubr.bf16.mxu0 0
      %2404 = vmatmul.mubr.bf16.gmra.mrb[0].mxu0 %v2256
      %v2405 = vpop.f32.mrb[0].mxu0
      %v2406 = vadd.f32 0.0, %v2405
      %v2407 = vpop.f32.mrb[0].mxu0
      %v2408 = vpop.f32.mrb[0].mxu0
      %v2409 = vadd.f32 0.0, %v2408
      %v2410 = vpop.f32.mrb[0].mxu0
      %2411 = vmatprep.mubr.bf16.mxu0 0
      %2412 = vmatmul.mubr.bf16.gmra.mrb[0].mxu0 %v2259
      %v2413 = vpop.f32.mrb[0].mxu0
      %v2414 = vadd.f32 0.0, %v2413
      %v2415 = vpop.f32.mrb[0].mxu0
      %v2416 = vpop.f32.mrb[0].mxu0
      %v2417 = vadd.f32 0.0, %v2416
      %v2418 = vpop.f32.mrb[0].mxu0
      %2419 = vmatprep.mubr.bf16.mxu0 0
      %2420 = vmatmul.mubr.bf16.gmra.mrb[0].mxu0 %v2262
      %v2421 = vpop.f32.mrb[0].mxu0
      %v2422 = vadd.f32 0.0, %v2421
      %v2423 = vpop.f32.mrb[0].mxu0
      %v2424 = vpop.f32.mrb[0].mxu0
      %v2425 = vadd.f32 0.0, %v2424
      %v2426 = vpop.f32.mrb[0].mxu0
      %2427 = vdwg.mxu0
      %v2428 = vadd.f32 %v2011, %v2302
      %v2429 = vadd.f32 %v2012, %v2305
      %v2430 = vadd.f32 %v2013, %v2310
      %v2431 = vadd.f32 %v2014, %v2313
      %v2432 = vadd.f32 %v2015, %v2318
      %v2433 = vadd.f32 %v2016, %v2321
      %v2434 = vadd.f32 %v2017, %v2326
      %v2435 = vadd.f32 %v2018, %v2329
      %v2436 = vadd.f32 %v2019, %v2334
      %v2437 = vadd.f32 %v2020, %v2337
      %v2438 = vadd.f32 %v2021, %v2342
      %v2439 = vadd.f32 %v2022, %v2345
      %v2440 = vadd.f32 %v2023, %v2350
      %v2441 = vadd.f32 %v2024, %v2353
      %v2442 = vadd.f32 %v2025, %v2358
      %v2443 = vadd.f32 %v2026, %v2361
      %v2444 = vadd.f32 %v2027, %v2366
      %v2445 = vadd.f32 %v2028, %v2369
      %v2446 = vadd.f32 %v2029, %v2374
      %v2447 = vadd.f32 %v2030, %v2377
      %v2448 = vadd.f32 %v2031, %v2382
      %v2449 = vadd.f32 %v2032, %v2385
      %v2450 = vadd.f32 %v2033, %v2390
      %v2451 = vadd.f32 %v2034, %v2393
      %v2452 = vadd.f32 %v2035, %v2398
      %v2453 = vadd.f32 %v2036, %v2401
      %v2454 = vadd.f32 %v2037, %v2406
      %v2455 = vadd.f32 %v2038, %v2409
      %v2456 = vadd.f32 %v2039, %v2414
      %v2457 = vadd.f32 %v2040, %v2417
      %v2458 = vadd.f32 %v2041, %v2422
      %v2459 = vadd.f32 %v2042, %v2425
      %v2462 = vunpack.c.l.b16 %v349
      %v2463 = vunpack.c.l.b16 %v350
      %v2464 = vpack.c.b16 %v2463, %v2462
      %v2466 = vshrl.u32 %v2464, 16
      %v2468 = vshll.u32 %v2464, 16
      %v2470 = vrot.slane %v2468, 1
      %v2471 = vor.u32 %v2466, %v2470
      %2472 = vrot.lane.b32.xlu0 %v2471, 8
      %v2473 = vpop.permute.xlu0 %2472
      %v2474 = vrot.slane %v2464, 1
      %2475 = vrot.lane.b32.xlu0 %v2474, 16
      %v2476 = vpop.permute.xlu0 %2475
      %v2479 = vsel %vm917, %v349, %v2473
      %v2481 = vsel %vm1014, %v2479, %v2476
      %s2482 = scalar_lea.vmem %s1, 48
      %v2483 = vld [vmem:[%s2482] sm:$0xf]
      %v2484 = vld [vmem:[%s2482 + $0x4] sm:$0xf]
      %v2485 = vld [vmem:[%s2482 + $0x8] sm:$0xf]
      %v2487 = vunpack.c.l.b16 %v2481
      %v2488 = vpack.c.b16 %v2233, %v2232
      %v2489 = vpack.c.b16 %v2235, %v2234
      %v2490 = vpack.c.b16 %v2237, %v2236
      %v2491 = vpack.c.b16 %v2487, %v2238
      %v2495 = vunpack.c.l.b16 %v2483
      %v2496 = vunpack.c.l.b16 %v2484
      %v2497 = vunpack.c.l.b16 %v2485
      %v2498 = vpack.c.b16 %v2496, %v2495
      %v2499 = vpack.c.b16 %v2497, %v2497
      %v2502 = vsel %vm1263, %v2488, 0
      %v2505 = vsel %vm1263, %v2489, 0
      %v2508 = vsel %vm1263, %v2490, 0
      %v2511 = vsel %vm1263, %v2491, 0
      %v2514 = vsel %vm1312, %v2499, 0
      %2516 = vmatprep.subr.bf16.mxu0 0
      %2517 = vmatpush1.bf16.msra.mxu0 %v2498
      %2518 = vmatprep.subr.bf16.mxu0 0
      %2519 = vmatpush1.bf16.msra.mxu0 %v2514
      %2520 = vmatprep.subr.bf16.mxu0 0
      %2521 = vmatpush1.bf16.msra.mxu0 0
      %2522 = vmatprep.subr.bf16.mxu0 0
      %2523 = vmatpush1.bf16.msra.mxu0 0
      %2524 = vmatprep.subr.bf16.mxu0 0
      %2525 = vmatpush1.bf16.msra.mxu0 0
      %2526 = vmatprep.subr.bf16.mxu0 0
      %2527 = vmatpush1.bf16.msra.mxu0 0
      %2528 = vmatprep.subr.bf16.mxu0 0
      %2529 = vmatpush1.bf16.msra.mxu0 0
      %2530 = vmatprep.subr.bf16.mxu0 0
      %2531 = vmatpush1.bf16.msra.mxu0 0
      %2532 = vmatprep.subr.bf16.mxu0 0
      %2533 = vmatpush1.bf16.msra.mxu0 0
      %2534 = vmatprep.subr.bf16.mxu0 0
      %2535 = vmatpush1.bf16.msra.mxu0 0
      %2536 = vmatprep.subr.bf16.mxu0 0
      %2537 = vmatpush1.bf16.msra.mxu0 0
      %2538 = vmatprep.subr.bf16.mxu0 0
      %2539 = vmatpush1.bf16.msra.mxu0 0
      %2540 = vmatprep.subr.bf16.mxu0 0
      %2541 = vmatpush1.bf16.msra.mxu0 0
      %2542 = vmatprep.subr.bf16.mxu0 0
      %2543 = vmatpush1.bf16.msra.mxu0 0
      %2544 = vmatprep.subr.bf16.mxu0 0
      %2545 = vmatpush1.bf16.msra.mxu0 0
      %2546 = vmatprep.subr.bf16.mxu0 0
      %2547 = vmatpush1.bf16.msra.mxu0 0
      %2548 = vmatprep.mubr.bf16.mxu0 0
      %2549 = vmatmul.mubr.bf16.gmra.mrb[0].mxu0 %v1277
      %v2550 = vpop.f32.mrb[0].mxu0
      %v2551 = vadd.f32 0.0, %v2550
      %v2552 = vpop.f32.mrb[0].mxu0
      %v2553 = vpop.f32.mrb[0].mxu0
      %v2554 = vadd.f32 0.0, %v2553
      %v2555 = vpop.f32.mrb[0].mxu0
      %2556 = vmatprep.mubr.bf16.mxu0 0
      %2557 = vmatmul.mubr.bf16.gmra.mrb[0].mxu0 %v1280
      %v2558 = vpop.f32.mrb[0].mxu0
      %v2559 = vadd.f32 0.0, %v2558
      %v2560 = vpop.f32.mrb[0].mxu0
      %v2561 = vpop.f32.mrb[0].mxu0
      %v2562 = vadd.f32 0.0, %v2561
      %v2563 = vpop.f32.mrb[0].mxu0
      %2564 = vmatprep.mubr.bf16.mxu0 0
      %2565 = vmatmul.mubr.bf16.gmra.mrb[0].mxu0 %v1283
      %v2566 = vpop.f32.mrb[0].mxu0
      %v2567 = vadd.f32 0.0, %v2566
      %v2568 = vpop.f32.mrb[0].mxu0
      %v2569 = vpop.f32.mrb[0].mxu0
      %v2570 = vadd.f32 0.0, %v2569
      %v2571 = vpop.f32.mrb[0].mxu0
      %2572 = vmatprep.mubr.bf16.mxu0 0
      %2573 = vmatmul.mubr.bf16.gmra.mrb[0].mxu0 %v1286
      %v2574 = vpop.f32.mrb[0].mxu0
      %v2575 = vadd.f32 0.0, %v2574
      %v2576 = vpop.f32.mrb[0].mxu0
      %v2577 = vpop.f32.mrb[0].mxu0
      %v2578 = vadd.f32 0.0, %v2577
      %v2579 = vpop.f32.mrb[0].mxu0
      %2580 = vmatprep.mubr.bf16.mxu0 0
      %2581 = vmatmul.mubr.bf16.gmra.mrb[0].mxu0 %v1289
      %v2582 = vpop.f32.mrb[0].mxu0
      %v2583 = vadd.f32 0.0, %v2582
      %v2584 = vpop.f32.mrb[0].mxu0
      %v2585 = vpop.f32.mrb[0].mxu0
      %v2586 = vadd.f32 0.0, %v2585
      %v2587 = vpop.f32.mrb[0].mxu0
      %2588 = vmatprep.mubr.bf16.mxu0 0
      %2589 = vmatmul.mubr.bf16.gmra.mrb[0].mxu0 %v1292
      %v2590 = vpop.f32.mrb[0].mxu0
      %v2591 = vadd.f32 0.0, %v2590
      %v2592 = vpop.f32.mrb[0].mxu0
      %v2593 = vpop.f32.mrb[0].mxu0
      %v2594 = vadd.f32 0.0, %v2593
      %v2595 = vpop.f32.mrb[0].mxu0
      %2596 = vmatprep.mubr.bf16.mxu0 0
      %2597 = vmatmul.mubr.bf16.gmra.mrb[0].mxu0 %v1295
      %v2598 = vpop.f32.mrb[0].mxu0
      %v2599 = vadd.f32 0.0, %v2598
      %v2600 = vpop.f32.mrb[0].mxu0
      %v2601 = vpop.f32.mrb[0].mxu0
      %v2602 = vadd.f32 0.0, %v2601
      %v2603 = vpop.f32.mrb[0].mxu0
      %2604 = vmatprep.mubr.bf16.mxu0 0
      %2605 = vmatmul.mubr.bf16.gmra.mrb[0].mxu0 %v1298
      %v2606 = vpop.f32.mrb[0].mxu0
      %v2607 = vadd.f32 0.0, %v2606
      %v2608 = vpop.f32.mrb[0].mxu0
      %v2609 = vpop.f32.mrb[0].mxu0
      %v2610 = vadd.f32 0.0, %v2609
      %v2611 = vpop.f32.mrb[0].mxu0
      %2612 = vmatprep.mubr.bf16.mxu0 0
      %2613 = vmatmul.mubr.bf16.gmra.mrb[0].mxu0 %v1301
      %v2614 = vpop.f32.mrb[0].mxu0
      %v2615 = vadd.f32 0.0, %v2614
      %v2616 = vpop.f32.mrb[0].mxu0
      %v2617 = vpop.f32.mrb[0].mxu0
      %v2618 = vadd.f32 0.0, %v2617
      %v2619 = vpop.f32.mrb[0].mxu0
      %2620 = vmatprep.mubr.bf16.mxu0 0
      %2621 = vmatmul.mubr.bf16.gmra.mrb[0].mxu0 %v1304
      %v2622 = vpop.f32.mrb[0].mxu0
      %v2623 = vadd.f32 0.0, %v2622
      %v2624 = vpop.f32.mrb[0].mxu0
      %v2625 = vpop.f32.mrb[0].mxu0
      %v2626 = vadd.f32 0.0, %v2625
      %v2627 = vpop.f32.mrb[0].mxu0
      %2628 = vmatprep.mubr.bf16.mxu0 0
      %2629 = vmatmul.mubr.bf16.gmra.mrb[0].mxu0 %v1307
      %v2630 = vpop.f32.mrb[0].mxu0
      %v2631 = vadd.f32 0.0, %v2630
      %v2632 = vpop.f32.mrb[0].mxu0
      %v2633 = vpop.f32.mrb[0].mxu0
      %v2634 = vadd.f32 0.0, %v2633
      %v2635 = vpop.f32.mrb[0].mxu0
      %2636 = vmatprep.mubr.bf16.mxu0 0
      %2637 = vmatmul.mubr.bf16.gmra.mrb[0].mxu0 %v1310
      %v2638 = vpop.f32.mrb[0].mxu0
      %v2639 = vadd.f32 0.0, %v2638
      %v2640 = vpop.f32.mrb[0].mxu0
      %v2641 = vpop.f32.mrb[0].mxu0
      %v2642 = vadd.f32 0.0, %v2641
      %v2643 = vpop.f32.mrb[0].mxu0
      %2644 = vmatprep.mubr.bf16.mxu0 0
      %2645 = vmatmul.mubr.bf16.gmra.mrb[0].mxu0 %v2502
      %v2646 = vpop.f32.mrb[0].mxu0
      %v2647 = vadd.f32 0.0, %v2646
      %v2648 = vpop.f32.mrb[0].mxu0
      %v2649 = vpop.f32.mrb[0].mxu0
      %v2650 = vadd.f32 0.0, %v2649
      %v2651 = vpop.f32.mrb[0].mxu0
      %2652 = vmatprep.mubr.bf16.mxu0 0
      %2653 = vmatmul.mubr.bf16.gmra.mrb[0].mxu0 %v2505
      %v2654 = vpop.f32.mrb[0].mxu0
      %v2655 = vadd.f32 0.0, %v2654
      %v2656 = vpop.f32.mrb[0].mxu0
      %v2657 = vpop.f32.mrb[0].mxu0
      %v2658 = vadd.f32 0.0, %v2657
      %v2659 = vpop.f32.mrb[0].mxu0
      %2660 = vmatprep.mubr.bf16.mxu0 0
      %2661 = vmatmul.mubr.bf16.gmra.mrb[0].mxu0 %v2508
      %v2662 = vpop.f32.mrb[0].mxu0
      %v2663 = vadd.f32 0.0, %v2662
      %v2664 = vpop.f32.mrb[0].mxu0
      %v2665 = vpop.f32.mrb[0].mxu0
      %v2666 = vadd.f32 0.0, %v2665
      %v2667 = vpop.f32.mrb[0].mxu0
      %2668 = vmatprep.mubr.bf16.mxu0 0
      %2669 = vmatmul.mubr.bf16.gmra.mrb[0].mxu0 %v2511
      %v2670 = vpop.f32.mrb[0].mxu0
      %v2671 = vadd.f32 0.0, %v2670
      %v2672 = vpop.f32.mrb[0].mxu0
      %v2673 = vpop.f32.mrb[0].mxu0
      %v2674 = vadd.f32 0.0, %v2673
      %v2675 = vpop.f32.mrb[0].mxu0
      %2676 = vdwg.mxu0
      %v2677 = vadd.f32 %v2428, %v2551
      %v2678 = vadd.f32 %v2429, %v2554
      %v2679 = vadd.f32 %v2430, %v2559
      %v2680 = vadd.f32 %v2431, %v2562
      %v2681 = vadd.f32 %v2432, %v2567
      %v2682 = vadd.f32 %v2433, %v2570
      %v2683 = vadd.f32 %v2434, %v2575
      %v2684 = vadd.f32 %v2435, %v2578
      %v2685 = vadd.f32 %v2436, %v2583
      %v2686 = vadd.f32 %v2437, %v2586
      %v2687 = vadd.f32 %v2438, %v2591
      %v2688 = vadd.f32 %v2439, %v2594
      %v2689 = vadd.f32 %v2440, %v2599
      %v2690 = vadd.f32 %v2441, %v2602
      %v2691 = vadd.f32 %v2442, %v2607
      %v2692 = vadd.f32 %v2443, %v2610
      %v2693 = vadd.f32 %v2444, %v2615
      %v2694 = vadd.f32 %v2445, %v2618
      %v2695 = vadd.f32 %v2446, %v2623
      %v2696 = vadd.f32 %v2447, %v2626
      %v2697 = vadd.f32 %v2448, %v2631
      %v2698 = vadd.f32 %v2449, %v2634
      %v2699 = vadd.f32 %v2450, %v2639
      %v2700 = vadd.f32 %v2451, %v2642
      %v2701 = vadd.f32 %v2452, %v2647
      %v2702 = vadd.f32 %v2453, %v2650
      %v2703 = vadd.f32 %v2454, %v2655
      %v2704 = vadd.f32 %v2455, %v2658
      %v2705 = vadd.f32 %v2456, %v2663
      %v2706 = vadd.f32 %v2457, %v2666
      %v2707 = vadd.f32 %v2458, %v2671
      %v2708 = vadd.f32 %v2459, %v2674
      %v2711 = vunpack.c.l.b16 %v351
      %v2712 = vunpack.c.l.b16 %v352
      %v2713 = vpack.c.b16 %v2712, %v2711
      %v2715 = vshrl.u32 %v2713, 16
      %v2717 = vshll.u32 %v2713, 16
      %v2719 = vrot.slane %v2717, 1
      %v2720 = vor.u32 %v2715, %v2719
      %2721 = vrot.lane.b32.xlu0 %v2720, 8
      %v2722 = vpop.permute.xlu0 %2721
      %v2723 = vrot.slane %v2713, 1
      %2724 = vrot.lane.b32.xlu0 %v2723, 16
      %v2725 = vpop.permute.xlu0 %2724
      %v2728 = vsel %vm917, %v351, %v2722
      %v2730 = vsel %vm1014, %v2728, %v2725
      %s2731 = scalar_lea.vmem %s1, 60
      %v2732 = vld [vmem:[%s2731] sm:$0xf]
      %v2733 = vld [vmem:[%s2731 + $0x4] sm:$0xf]
      %v2734 = vld [vmem:[%s2731 + $0x8] sm:$0xf]
      %v2736 = vunpack.c.l.b16 %v2730
      %v2737 = vpack.c.b16 %v2736, %v2487
      %v2741 = vunpack.c.l.b16 %v2732
      %v2742 = vunpack.c.l.b16 %v2733
      %v2743 = vunpack.c.l.b16 %v2734
      %v2744 = vpack.c.b16 %v2742, %v2741
      %v2745 = vpack.c.b16 %v2743, %v2743
      %v2748 = vsel %vm1263, %v2737, 0
      %v2751 = vsel %vm1312, %v2745, 0
      %2753 = vmatprep.subr.bf16.mxu0 0
      %2754 = vmatpush1.bf16.msra.mxu0 %v2744
      %2755 = vmatprep.subr.bf16.mxu0 0
      %2756 = vmatpush1.bf16.msra.mxu0 %v2751
      %2757 = vmatprep.subr.bf16.mxu0 0
      %2758 = vmatpush1.bf16.msra.mxu0 0
      %2759 = vmatprep.subr.bf16.mxu0 0
      %2760 = vmatpush1.bf16.msra.mxu0 0
      %2761 = vmatprep.subr.bf16.mxu0 0
      %2762 = vmatpush1.bf16.msra.mxu0 0
      %2763 = vmatprep.subr.bf16.mxu0 0
      %2764 = vmatpush1.bf16.msra.mxu0 0
      %2765 = vmatprep.subr.bf16.mxu0 0
      %2766 = vmatpush1.bf16.msra.mxu0 0
      %2767 = vmatprep.subr.bf16.mxu0 0
      %2768 = vmatpush1.bf16.msra.mxu0 0
      %2769 = vmatprep.subr.bf16.mxu0 0
      %2770 = vmatpush1.bf16.msra.mxu0 0
      %2771 = vmatprep.subr.bf16.mxu0 0
      %2772 = vmatpush1.bf16.msra.mxu0 0
      %2773 = vmatprep.subr.bf16.mxu0 0
      %2774 = vmatpush1.bf16.msra.mxu0 0
      %2775 = vmatprep.subr.bf16.mxu0 0
      %2776 = vmatpush1.bf16.msra.mxu0 0
      %2777 = vmatprep.subr.bf16.mxu0 0
      %2778 = vmatpush1.bf16.msra.mxu0 0
      %2779 = vmatprep.subr.bf16.mxu0 0
      %2780 = vmatpush1.bf16.msra.mxu0 0
      %2781 = vmatprep.subr.bf16.mxu0 0
      %2782 = vmatpush1.bf16.msra.mxu0 0
      %2783 = vmatprep.subr.bf16.mxu0 0
      %2784 = vmatpush1.bf16.msra.mxu0 0
      %2785 = vmatprep.mubr.bf16.mxu0 0
      %2786 = vmatmul.mubr.bf16.gmra.mrb[0].mxu0 %v1526
      %v2787 = vpop.f32.mrb[0].mxu0
      %v2788 = vadd.f32 0.0, %v2787
      %v2789 = vpop.f32.mrb[0].mxu0
      %v2790 = vpop.f32.mrb[0].mxu0
      %v2791 = vadd.f32 0.0, %v2790
      %v2792 = vpop.f32.mrb[0].mxu0
      %2793 = vmatprep.mubr.bf16.mxu0 0
      %2794 = vmatmul.mubr.bf16.gmra.mrb[0].mxu0 %v1529
      %v2795 = vpop.f32.mrb[0].mxu0
      %v2796 = vadd.f32 0.0, %v2795
      %v2797 = vpop.f32.mrb[0].mxu0
      %v2798 = vpop.f32.mrb[0].mxu0
      %v2799 = vadd.f32 0.0, %v2798
      %v2800 = vpop.f32.mrb[0].mxu0
      %2801 = vmatprep.mubr.bf16.mxu0 0
      %2802 = vmatmul.mubr.bf16.gmra.mrb[0].mxu0 %v1532
      %v2803 = vpop.f32.mrb[0].mxu0
      %v2804 = vadd.f32 0.0, %v2803
      %v2805 = vpop.f32.mrb[0].mxu0
      %v2806 = vpop.f32.mrb[0].mxu0
      %v2807 = vadd.f32 0.0, %v2806
      %v2808 = vpop.f32.mrb[0].mxu0
      %2809 = vmatprep.mubr.bf16.mxu0 0
      %2810 = vmatmul.mubr.bf16.gmra.mrb[0].mxu0 %v1839
      %v2811 = vpop.f32.mrb[0].mxu0
      %v2812 = vadd.f32 0.0, %v2811
      %v2813 = vpop.f32.mrb[0].mxu0
      %v2814 = vpop.f32.mrb[0].mxu0
      %v2815 = vadd.f32 0.0, %v2814
      %v2816 = vpop.f32.mrb[0].mxu0
      %2817 = vmatprep.mubr.bf16.mxu0 0
      %2818 = vmatmul.mubr.bf16.gmra.mrb[0].mxu0 %v1538
      %v2819 = vpop.f32.mrb[0].mxu0
      %v2820 = vadd.f32 0.0, %v2819
      %v2821 = vpop.f32.mrb[0].mxu0
      %v2822 = vpop.f32.mrb[0].mxu0
      %v2823 = vadd.f32 0.0, %v2822
      %v2824 = vpop.f32.mrb[0].mxu0
      %2825 = vmatprep.mubr.bf16.mxu0 0
      %2826 = vmatmul.mubr.bf16.gmra.mrb[0].mxu0 %v1541
      %v2827 = vpop.f32.mrb[0].mxu0
      %v2828 = vadd.f32 0.0, %v2827
      %v2829 = vpop.f32.mrb[0].mxu0
      %v2830 = vpop.f32.mrb[0].mxu0
      %v2831 = vadd.f32 0.0, %v2830
      %v2832 = vpop.f32.mrb[0].mxu0
      %2833 = vmatprep.mubr.bf16.mxu0 0
      %2834 = vmatmul.mubr.bf16.gmra.mrb[0].mxu0 %v1544
      %v2835 = vpop.f32.mrb[0].mxu0
      %v2836 = vadd.f32 0.0, %v2835
      %v2837 = vpop.f32.mrb[0].mxu0
      %v2838 = vpop.f32.mrb[0].mxu0
      %v2839 = vadd.f32 0.0, %v2838
      %v2840 = vpop.f32.mrb[0].mxu0
      %2841 = vmatprep.mubr.bf16.mxu0 0
      %2842 = vmatmul.mubr.bf16.gmra.mrb[0].mxu0 %v1842
      %v2843 = vpop.f32.mrb[0].mxu0
      %v2844 = vadd.f32 0.0, %v2843
      %v2845 = vpop.f32.mrb[0].mxu0
      %v2846 = vpop.f32.mrb[0].mxu0
      %v2847 = vadd.f32 0.0, %v2846
      %v2848 = vpop.f32.mrb[0].mxu0
      %2849 = vmatprep.mubr.bf16.mxu0 0
      %2850 = vmatmul.mubr.bf16.gmra.mrb[0].mxu0 %v1550
      %v2851 = vpop.f32.mrb[0].mxu0
      %v2852 = vadd.f32 0.0, %v2851
      %v2853 = vpop.f32.mrb[0].mxu0
      %v2854 = vpop.f32.mrb[0].mxu0
      %v2855 = vadd.f32 0.0, %v2854
      %v2856 = vpop.f32.mrb[0].mxu0
      %2857 = vmatprep.mubr.bf16.mxu0 0
      %2858 = vmatmul.mubr.bf16.gmra.mrb[0].mxu0 %v1553
      %v2859 = vpop.f32.mrb[0].mxu0
      %v2860 = vadd.f32 0.0, %v2859
      %v2861 = vpop.f32.mrb[0].mxu0
      %v2862 = vpop.f32.mrb[0].mxu0
      %v2863 = vadd.f32 0.0, %v2862
      %v2864 = vpop.f32.mrb[0].mxu0
      %2865 = vmatprep.mubr.bf16.mxu0 0
      %2866 = vmatmul.mubr.bf16.gmra.mrb[0].mxu0 %v1556
      %v2867 = vpop.f32.mrb[0].mxu0
      %v2868 = vadd.f32 0.0, %v2867
      %v2869 = vpop.f32.mrb[0].mxu0
      %v2870 = vpop.f32.mrb[0].mxu0
      %v2871 = vadd.f32 0.0, %v2870
      %v2872 = vpop.f32.mrb[0].mxu0
      %2873 = vmatprep.mubr.bf16.mxu0 0
      %2874 = vmatmul.mubr.bf16.gmra.mrb[0].mxu0 %v1845
      %v2875 = vpop.f32.mrb[0].mxu0
      %v2876 = vadd.f32 0.0, %v2875
      %v2877 = vpop.f32.mrb[0].mxu0
      %v2878 = vpop.f32.mrb[0].mxu0
      %v2879 = vadd.f32 0.0, %v2878
      %v2880 = vpop.f32.mrb[0].mxu0
      %2881 = vmatprep.mubr.bf16.mxu0 0
      %2882 = vmatmul.mubr.bf16.gmra.mrb[0].mxu0 %v2256
      %v2883 = vpop.f32.mrb[0].mxu0
      %v2884 = vadd.f32 0.0, %v2883
      %v2885 = vpop.f32.mrb[0].mxu0
      %v2886 = vpop.f32.mrb[0].mxu0
      %v2887 = vadd.f32 0.0, %v2886
      %v2888 = vpop.f32.mrb[0].mxu0
      %2889 = vmatprep.mubr.bf16.mxu0 0
      %2890 = vmatmul.mubr.bf16.gmra.mrb[0].mxu0 %v2259
      %v2891 = vpop.f32.mrb[0].mxu0
      %v2892 = vadd.f32 0.0, %v2891
      %v2893 = vpop.f32.mrb[0].mxu0
      %v2894 = vpop.f32.mrb[0].mxu0
      %v2895 = vadd.f32 0.0, %v2894
      %v2896 = vpop.f32.mrb[0].mxu0
      %2897 = vmatprep.mubr.bf16.mxu0 0
      %2898 = vmatmul.mubr.bf16.gmra.mrb[0].mxu0 %v2262
      %v2899 = vpop.f32.mrb[0].mxu0
      %v2900 = vadd.f32 0.0, %v2899
      %v2901 = vpop.f32.mrb[0].mxu0
      %v2902 = vpop.f32.mrb[0].mxu0
      %v2903 = vadd.f32 0.0, %v2902
      %v2904 = vpop.f32.mrb[0].mxu0
      %2905 = vmatprep.mubr.bf16.mxu0 0
      %2906 = vmatmul.mubr.bf16.gmra.mrb[0].mxu0 %v2748
      %v2907 = vpop.f32.mrb[0].mxu0
      %v2908 = vadd.f32 0.0, %v2907
      %v2909 = vpop.f32.mrb[0].mxu0
      %v2910 = vpop.f32.mrb[0].mxu0
      %v2911 = vadd.f32 0.0, %v2910
      %v2912 = vpop.f32.mrb[0].mxu0
      %2913 = vdwg.mxu0
      %v2914 = vadd.f32 %v2677, %v2788
      %v2915 = vadd.f32 %v2678, %v2791
      %v2916 = vadd.f32 %v2679, %v2796
      %v2917 = vadd.f32 %v2680, %v2799
      %v2918 = vadd.f32 %v2681, %v2804
      %v2919 = vadd.f32 %v2682, %v2807
      %v2920 = vadd.f32 %v2683, %v2812
      %v2921 = vadd.f32 %v2684, %v2815
      %v2922 = vadd.f32 %v2685, %v2820
      %v2923 = vadd.f32 %v2686, %v2823
      %v2924 = vadd.f32 %v2687, %v2828
      %v2925 = vadd.f32 %v2688, %v2831
      %v2926 = vadd.f32 %v2689, %v2836
      %v2927 = vadd.f32 %v2690, %v2839
      %v2928 = vadd.f32 %v2691, %v2844
      %v2929 = vadd.f32 %v2692, %v2847
      %v2930 = vadd.f32 %v2693, %v2852
      %v2931 = vadd.f32 %v2694, %v2855
      %v2932 = vadd.f32 %v2695, %v2860
      %v2933 = vadd.f32 %v2696, %v2863
      %v2934 = vadd.f32 %v2697, %v2868
      %v2935 = vadd.f32 %v2698, %v2871
      %v2936 = vadd.f32 %v2699, %v2876
      %v2937 = vadd.f32 %v2700, %v2879
      %v2938 = vadd.f32 %v2701, %v2884
      %v2939 = vadd.f32 %v2702, %v2887
      %v2940 = vadd.f32 %v2703, %v2892
      %v2941 = vadd.f32 %v2704, %v2895
      %v2942 = vadd.f32 %v2705, %v2900
      %v2943 = vadd.f32 %v2706, %v2903
      %v2944 = vadd.f32 %v2707, %v2908
      %v2945 = vadd.f32 %v2708, %v2911
      %v2962 = vunpack.c.l.b16 %v353
      %v2963 = vunpack.c.l.b16 %v354
      %v2964 = vunpack.c.l.b16 %v355
      %v2965 = vunpack.c.l.b16 %v356
      %v2966 = vunpack.c.l.b16 %v357
      %v2967 = vunpack.c.l.b16 %v358
      %v2968 = vunpack.c.l.b16 %v359
      %v2969 = vunpack.c.l.b16 %v360
      %v2970 = vunpack.c.l.b16 %v361
      %v2971 = vunpack.c.l.b16 %v362
      %v2972 = vunpack.c.l.b16 %v363
      %v2973 = vunpack.c.l.b16 %v364
      %v2974 = vunpack.c.l.b16 %v365
      %v2975 = vunpack.c.l.b16 %v366
      %v2976 = vunpack.c.l.b16 %v367
      %v2977 = vunpack.c.l.b16 %v368
      %v2978 = vpack.c.b16 %v2963, %v2962
      %v2979 = vpack.c.b16 %v2965, %v2964
      %v2980 = vpack.c.b16 %v2967, %v2966
      %v2981 = vpack.c.b16 %v2969, %v2968
      %v2982 = vpack.c.b16 %v2971, %v2970
      %v2983 = vpack.c.b16 %v2973, %v2972
      %v2984 = vpack.c.b16 %v2975, %v2974
      %v2985 = vpack.c.b16 %v2977, %v2976
      %v2987 = vshrl.u32 %v2978, 16
      %v2989 = vshll.u32 %v2978, 16
      %v2991 = vrot.slane %v2989, 1
      %v2992 = vor.u32 %v2987, %v2991
      %v2994 = vshrl.u32 %v2979, 16
      %v2996 = vshll.u32 %v2979, 16
      %v2998 = vrot.slane %v2996, 1
      %v2999 = vor.u32 %v2994, %v2998
      %v3001 = vshrl.u32 %v2980, 16
      %v3003 = vshll.u32 %v2980, 16
      %v3005 = vrot.slane %v3003, 1
      %v3006 = vor.u32 %v3001, %v3005
      %v3008 = vshrl.u32 %v2981, 16
      %v3010 = vshll.u32 %v2981, 16
      %v3012 = vrot.slane %v3010, 1
      %v3013 = vor.u32 %v3008, %v3012
      %v3015 = vshrl.u32 %v2982, 16
      %v3017 = vshll.u32 %v2982, 16
      %v3019 = vrot.slane %v3017, 1
      %v3020 = vor.u32 %v3015, %v3019
      %v3022 = vshrl.u32 %v2983, 16
      %v3024 = vshll.u32 %v2983, 16
      %v3026 = vrot.slane %v3024, 1
      %v3027 = vor.u32 %v3022, %v3026
      %v3029 = vshrl.u32 %v2984, 16
      %v3031 = vshll.u32 %v2984, 16
      %v3033 = vrot.slane %v3031, 1
      %v3034 = vor.u32 %v3029, %v3033
      %v3036 = vshrl.u32 %v2985, 16
      %v3038 = vshll.u32 %v2985, 16
      %v3040 = vrot.slane %v3038, 1
      %v3041 = vor.u32 %v3036, %v3040
      %3042 = vrot.lane.b32.xlu0 %v2992, 8
      %v3043 = vpop.permute.xlu0 %3042
      %3044 = vrot.lane.b32.xlu0 %v2999, 8
      %v3045 = vpop.permute.xlu0 %3044
      %3046 = vrot.lane.b32.xlu0 %v3006, 8
      %v3047 = vpop.permute.xlu0 %3046
      %3048 = vrot.lane.b32.xlu0 %v3013, 8
      %v3049 = vpop.permute.xlu0 %3048
      %3050 = vrot.lane.b32.xlu0 %v3020, 8
      %v3051 = vpop.permute.xlu0 %3050
      %3052 = vrot.lane.b32.xlu0 %v3027, 8
      %v3053 = vpop.permute.xlu0 %3052
      %3054 = vrot.lane.b32.xlu0 %v3034, 8
      %v3055 = vpop.permute.xlu0 %3054
      %3056 = vrot.lane.b32.xlu0 %v3041, 8
      %v3057 = vpop.permute.xlu0 %3056
      %v3058 = vrot.slane %v2978, 1
      %v3059 = vrot.slane %v2979, 1
      %v3060 = vrot.slane %v2980, 1
      %v3061 = vrot.slane %v2981, 1
      %v3062 = vrot.slane %v2982, 1
      %v3063 = vrot.slane %v2983, 1
      %v3064 = vrot.slane %v2984, 1
      %v3065 = vrot.slane %v2985, 1
      %3066 = vrot.lane.b32.xlu0 %v3058, 16
      %v3067 = vpop.permute.xlu0 %3066
      %3068 = vrot.lane.b32.xlu0 %v3059, 16
      %v3069 = vpop.permute.xlu0 %3068
      %3070 = vrot.lane.b32.xlu0 %v3060, 16
      %v3071 = vpop.permute.xlu0 %3070
      %3072 = vrot.lane.b32.xlu0 %v3061, 16
      %v3073 = vpop.permute.xlu0 %3072
      %3074 = vrot.lane.b32.xlu0 %v3062, 16
      %v3075 = vpop.permute.xlu0 %3074
      %3076 = vrot.lane.b32.xlu0 %v3063, 16
      %v3077 = vpop.permute.xlu0 %3076
      %3078 = vrot.lane.b32.xlu0 %v3064, 16
      %v3079 = vpop.permute.xlu0 %3078
      %3080 = vrot.lane.b32.xlu0 %v3065, 16
      %v3081 = vpop.permute.xlu0 %3080
      %v3084 = vsel %vm917, %v353, %v3043
      %v3087 = vsel %vm917, %v355, %v3045
      %v3090 = vsel %vm917, %v357, %v3047
      %v3093 = vsel %vm917, %v359, %v3049
      %v3096 = vsel %vm917, %v361, %v3051
      %v3099 = vsel %vm917, %v363, %v3053
      %v3102 = vsel %vm917, %v365, %v3055
      %v3105 = vsel %vm917, %v367, %v3057
      %v3107 = vsel %vm1014, %v3084, %v3067
      %v3109 = vsel %vm1014, %v3087, %v3069
      %v3111 = vsel %vm1014, %v3090, %v3071
      %v3113 = vsel %vm1014, %v3093, %v3073
      %v3115 = vsel %vm1014, %v3096, %v3075
      %v3117 = vsel %vm1014, %v3099, %v3077
      %v3119 = vsel %vm1014, %v3102, %v3079
      %v3121 = vsel %vm1014, %v3105, %v3081
      %s3122 = scalar_lea.vmem %s1, 72
      %v3123 = vld [vmem:[%s3122] sm:$0xf]
      %v3124 = vld [vmem:[%s3122 + $0x4] sm:$0xf]
      %v3125 = vld [vmem:[%s3122 + $0x8] sm:$0xf]
      %v3134 = vunpack.c.l.b16 %v3107
      %v3135 = vunpack.c.l.b16 %v3109
      %v3136 = vunpack.c.l.b16 %v3111
      %v3137 = vunpack.c.l.b16 %v3113
      %v3138 = vunpack.c.l.b16 %v3115
      %v3139 = vunpack.c.l.b16 %v3117
      %v3140 = vunpack.c.l.b16 %v3119
      %v3141 = vunpack.c.l.b16 %v3121
      %v3142 = vpack.c.b16 %v3135, %v3134
      %v3143 = vpack.c.b16 %v3137, %v3136
      %v3144 = vpack.c.b16 %v3139, %v3138
      %v3145 = vpack.c.b16 %v3141, %v3140
      %v3149 = vunpack.c.l.b16 %v3123
      %v3150 = vunpack.c.l.b16 %v3124
      %v3151 = vunpack.c.l.b16 %v3125
      %v3152 = vpack.c.b16 %v3150, %v3149
      %v3153 = vpack.c.b16 %v3151, %v3151
      %v3156 = vsel %vm1263, %v3142, 0
      %v3159 = vsel %vm1263, %v3143, 0
      %v3162 = vsel %vm1263, %v3144, 0
      %v3165 = vsel %vm1263, %v3145, 0
      %v3168 = vsel %vm1312, %v3153, 0
      %3170 = vmatprep.subr.bf16.mxu0 0
      %3171 = vmatpush1.bf16.msra.mxu0 %v3152
      %3172 = vmatprep.subr.bf16.mxu0 0
      %3173 = vmatpush1.bf16.msra.mxu0 %v3168
      %3174 = vmatprep.subr.bf16.mxu0 0
      %3175 = vmatpush1.bf16.msra.mxu0 0
      %3176 = vmatprep.subr.bf16.mxu0 0
      %3177 = vmatpush1.bf16.msra.mxu0 0
      %3178 = vmatprep.subr.bf16.mxu0 0
      %3179 = vmatpush1.bf16.msra.mxu0 0
      %3180 = vmatprep.subr.bf16.mxu0 0
      %3181 = vmatpush1.bf16.msra.mxu0 0
      %3182 = vmatprep.subr.bf16.mxu0 0
      %3183 = vmatpush1.bf16.msra.mxu0 0
      %3184 = vmatprep.subr.bf16.mxu0 0
      %3185 = vmatpush1.bf16.msra.mxu0 0
      %3186 = vmatprep.subr.bf16.mxu0 0
      %3187 = vmatpush1.bf16.msra.mxu0 0
      %3188 = vmatprep.subr.bf16.mxu0 0
      %3189 = vmatpush1.bf16.msra.mxu0 0
      %3190 = vmatprep.subr.bf16.mxu0 0
      %3191 = vmatpush1.bf16.msra.mxu0 0
      %3192 = vmatprep.subr.bf16.mxu0 0
      %3193 = vmatpush1.bf16.msra.mxu0 0
      %3194 = vmatprep.subr.bf16.mxu0 0
      %3195 = vmatpush1.bf16.msra.mxu0 0
      %3196 = vmatprep.subr.bf16.mxu0 0
      %3197 = vmatpush1.bf16.msra.mxu0 0
      %3198 = vmatprep.subr.bf16.mxu0 0
      %3199 = vmatpush1.bf16.msra.mxu0 0
      %3200 = vmatprep.subr.bf16.mxu0 0
      %3201 = vmatpush1.bf16.msra.mxu0 0
      %3202 = vmatprep.mubr.bf16.mxu0 0
      %3203 = vmatmul.mubr.bf16.gmra.mrb[0].mxu0 %v1535
      %v3204 = vpop.f32.mrb[0].mxu0
      %v3205 = vadd.f32 0.0, %v3204
      %v3206 = vpop.f32.mrb[0].mxu0
      %v3207 = vpop.f32.mrb[0].mxu0
      %v3208 = vadd.f32 0.0, %v3207
      %v3209 = vpop.f32.mrb[0].mxu0
      %3210 = vmatprep.mubr.bf16.mxu0 0
      %3211 = vmatmul.mubr.bf16.gmra.mrb[0].mxu0 %v1538
      %v3212 = vpop.f32.mrb[0].mxu0
      %v3213 = vadd.f32 0.0, %v3212
      %v3214 = vpop.f32.mrb[0].mxu0
      %v3215 = vpop.f32.mrb[0].mxu0
      %v3216 = vadd.f32 0.0, %v3215
      %v3217 = vpop.f32.mrb[0].mxu0
      %3218 = vmatprep.mubr.bf16.mxu0 0
      %3219 = vmatmul.mubr.bf16.gmra.mrb[0].mxu0 %v1541
      %v3220 = vpop.f32.mrb[0].mxu0
      %v3221 = vadd.f32 0.0, %v3220
      %v3222 = vpop.f32.mrb[0].mxu0
      %v3223 = vpop.f32.mrb[0].mxu0
      %v3224 = vadd.f32 0.0, %v3223
      %v3225 = vpop.f32.mrb[0].mxu0
      %3226 = vmatprep.mubr.bf16.mxu0 0
      %3227 = vmatmul.mubr.bf16.gmra.mrb[0].mxu0 %v1544
      %v3228 = vpop.f32.mrb[0].mxu0
      %v3229 = vadd.f32 0.0, %v3228
      %v3230 = vpop.f32.mrb[0].mxu0
      %v3231 = vpop.f32.mrb[0].mxu0
      %v3232 = vadd.f32 0.0, %v3231
      %v3233 = vpop.f32.mrb[0].mxu0
      %3234 = vmatprep.mubr.bf16.mxu0 0
      %3235 = vmatmul.mubr.bf16.gmra.mrb[0].mxu0 %v1547
      %v3236 = vpop.f32.mrb[0].mxu0
      %v3237 = vadd.f32 0.0, %v3236
      %v3238 = vpop.f32.mrb[0].mxu0
      %v3239 = vpop.f32.mrb[0].mxu0
      %v3240 = vadd.f32 0.0, %v3239
      %v3241 = vpop.f32.mrb[0].mxu0
      %3242 = vmatprep.mubr.bf16.mxu0 0
      %3243 = vmatmul.mubr.bf16.gmra.mrb[0].mxu0 %v1550
      %v3244 = vpop.f32.mrb[0].mxu0
      %v3245 = vadd.f32 0.0, %v3244
      %v3246 = vpop.f32.mrb[0].mxu0
      %v3247 = vpop.f32.mrb[0].mxu0
      %v3248 = vadd.f32 0.0, %v3247
      %v3249 = vpop.f32.mrb[0].mxu0
      %3250 = vmatprep.mubr.bf16.mxu0 0
      %3251 = vmatmul.mubr.bf16.gmra.mrb[0].mxu0 %v1553
      %v3252 = vpop.f32.mrb[0].mxu0
      %v3253 = vadd.f32 0.0, %v3252
      %v3254 = vpop.f32.mrb[0].mxu0
      %v3255 = vpop.f32.mrb[0].mxu0
      %v3256 = vadd.f32 0.0, %v3255
      %v3257 = vpop.f32.mrb[0].mxu0
      %3258 = vmatprep.mubr.bf16.mxu0 0
      %3259 = vmatmul.mubr.bf16.gmra.mrb[0].mxu0 %v1556
      %v3260 = vpop.f32.mrb[0].mxu0
      %v3261 = vadd.f32 0.0, %v3260
      %v3262 = vpop.f32.mrb[0].mxu0
      %v3263 = vpop.f32.mrb[0].mxu0
      %v3264 = vadd.f32 0.0, %v3263
      %v3265 = vpop.f32.mrb[0].mxu0
      %3266 = vmatprep.mubr.bf16.mxu0 0
      %3267 = vmatmul.mubr.bf16.gmra.mrb[0].mxu0 %v2253
      %v3268 = vpop.f32.mrb[0].mxu0
      %v3269 = vadd.f32 0.0, %v3268
      %v3270 = vpop.f32.mrb[0].mxu0
      %v3271 = vpop.f32.mrb[0].mxu0
      %v3272 = vadd.f32 0.0, %v3271
      %v3273 = vpop.f32.mrb[0].mxu0
      %3274 = vmatprep.mubr.bf16.mxu0 0
      %3275 = vmatmul.mubr.bf16.gmra.mrb[0].mxu0 %v2256
      %v3276 = vpop.f32.mrb[0].mxu0
      %v3277 = vadd.f32 0.0, %v3276
      %v3278 = vpop.f32.mrb[0].mxu0
      %v3279 = vpop.f32.mrb[0].mxu0
      %v3280 = vadd.f32 0.0, %v3279
      %v3281 = vpop.f32.mrb[0].mxu0
      %3282 = vmatprep.mubr.bf16.mxu0 0
      %3283 = vmatmul.mubr.bf16.gmra.mrb[0].mxu0 %v2259
      %v3284 = vpop.f32.mrb[0].mxu0
      %v3285 = vadd.f32 0.0, %v3284
      %v3286 = vpop.f32.mrb[0].mxu0
      %v3287 = vpop.f32.mrb[0].mxu0
      %v3288 = vadd.f32 0.0, %v3287
      %v3289 = vpop.f32.mrb[0].mxu0
      %3290 = vmatprep.mubr.bf16.mxu0 0
      %3291 = vmatmul.mubr.bf16.gmra.mrb[0].mxu0 %v2262
      %v3292 = vpop.f32.mrb[0].mxu0
      %v3293 = vadd.f32 0.0, %v3292
      %v3294 = vpop.f32.mrb[0].mxu0
      %v3295 = vpop.f32.mrb[0].mxu0
      %v3296 = vadd.f32 0.0, %v3295
      %v3297 = vpop.f32.mrb[0].mxu0
      %3298 = vmatprep.mubr.bf16.mxu0 0
      %3299 = vmatmul.mubr.bf16.gmra.mrb[0].mxu0 %v3156
      %v3300 = vpop.f32.mrb[0].mxu0
      %v3301 = vadd.f32 0.0, %v3300
      %v3302 = vpop.f32.mrb[0].mxu0
      %v3303 = vpop.f32.mrb[0].mxu0
      %v3304 = vadd.f32 0.0, %v3303
      %v3305 = vpop.f32.mrb[0].mxu0
      %3306 = vmatprep.mubr.bf16.mxu0 0
      %3307 = vmatmul.mubr.bf16.gmra.mrb[0].mxu0 %v3159
      %v3308 = vpop.f32.mrb[0].mxu0
      %v3309 = vadd.f32 0.0, %v3308
      %v3310 = vpop.f32.mrb[0].mxu0
      %v3311 = vpop.f32.mrb[0].mxu0
      %v3312 = vadd.f32 0.0, %v3311
      %v3313 = vpop.f32.mrb[0].mxu0
      %3314 = vmatprep.mubr.bf16.mxu0 0
      %3315 = vmatmul.mubr.bf16.gmra.mrb[0].mxu0 %v3162
      %v3316 = vpop.f32.mrb[0].mxu0
      %v3317 = vadd.f32 0.0, %v3316
      %v3318 = vpop.f32.mrb[0].mxu0
      %v3319 = vpop.f32.mrb[0].mxu0
      %v3320 = vadd.f32 0.0, %v3319
      %v3321 = vpop.f32.mrb[0].mxu0
      %3322 = vmatprep.mubr.bf16.mxu0 0
      %3323 = vmatmul.mubr.bf16.gmra.mrb[0].mxu0 %v3165
      %v3324 = vpop.f32.mrb[0].mxu0
      %v3325 = vadd.f32 0.0, %v3324
      %v3326 = vpop.f32.mrb[0].mxu0
      %v3327 = vpop.f32.mrb[0].mxu0
      %v3328 = vadd.f32 0.0, %v3327
      %v3329 = vpop.f32.mrb[0].mxu0
      %3330 = vdwg.mxu0
      %v3331 = vadd.f32 %v2914, %v3205
      %v3332 = vadd.f32 %v2915, %v3208
      %v3333 = vadd.f32 %v2916, %v3213
      %v3334 = vadd.f32 %v2917, %v3216
      %v3335 = vadd.f32 %v2918, %v3221
      %v3336 = vadd.f32 %v2919, %v3224
      %v3337 = vadd.f32 %v2920, %v3229
      %v3338 = vadd.f32 %v2921, %v3232
      %v3339 = vadd.f32 %v2922, %v3237
      %v3340 = vadd.f32 %v2923, %v3240
      %v3341 = vadd.f32 %v2924, %v3245
      %v3342 = vadd.f32 %v2925, %v3248
      %v3343 = vadd.f32 %v2926, %v3253
      %v3344 = vadd.f32 %v2927, %v3256
      %v3345 = vadd.f32 %v2928, %v3261
      %v3346 = vadd.f32 %v2929, %v3264
      %v3347 = vadd.f32 %v2930, %v3269
      %v3348 = vadd.f32 %v2931, %v3272
      %v3349 = vadd.f32 %v2932, %v3277
      %v3350 = vadd.f32 %v2933, %v3280
      %v3351 = vadd.f32 %v2934, %v3285
      %v3352 = vadd.f32 %v2935, %v3288
      %v3353 = vadd.f32 %v2936, %v3293
      %v3354 = vadd.f32 %v2937, %v3296
      %v3355 = vadd.f32 %v2938, %v3301
      %v3356 = vadd.f32 %v2939, %v3304
      %v3357 = vadd.f32 %v2940, %v3309
      %v3358 = vadd.f32 %v2941, %v3312
      %v3359 = vadd.f32 %v2942, %v3317
      %v3360 = vadd.f32 %v2943, %v3320
      %v3361 = vadd.f32 %v2944, %v3325
      %v3362 = vadd.f32 %v2945, %v3328
      %v3365 = vunpack.c.l.b16 %v369
      %v3366 = vunpack.c.l.b16 %v370
      %v3367 = vpack.c.b16 %v3366, %v3365
      %v3369 = vshrl.u32 %v3367, 16
      %v3371 = vshll.u32 %v3367, 16
      %v3373 = vrot.slane %v3371, 1
      %v3374 = vor.u32 %v3369, %v3373
      %3375 = vrot.lane.b32.xlu0 %v3374, 8
      %v3376 = vpop.permute.xlu0 %3375
      %v3377 = vrot.slane %v3367, 1
      %3378 = vrot.lane.b32.xlu0 %v3377, 16
      %v3379 = vpop.permute.xlu0 %3378
      %v3382 = vsel %vm917, %v369, %v3376
      %v3384 = vsel %vm1014, %v3382, %v3379
      %s3385 = scalar_lea.vmem %s1, 84
      %v3386 = vld [vmem:[%s3385] sm:$0xf]
      %v3387 = vld [vmem:[%s3385 + $0x4] sm:$0xf]
      %v3388 = vld [vmem:[%s3385 + $0x8] sm:$0xf]
      %v3390 = vunpack.c.l.b16 %v3384
      %v3391 = vpack.c.b16 %v3136, %v3135
      %v3392 = vpack.c.b16 %v3138, %v3137
      %v3393 = vpack.c.b16 %v3140, %v3139
      %v3394 = vpack.c.b16 %v3390, %v3141
      %v3398 = vunpack.c.l.b16 %v3386
      %v3399 = vunpack.c.l.b16 %v3387
      %v3400 = vunpack.c.l.b16 %v3388
      %v3401 = vpack.c.b16 %v3399, %v3398
      %v3402 = vpack.c.b16 %v3400, %v3400
      %v3405 = vsel %vm1263, %v3391, 0
      %v3408 = vsel %vm1263, %v3392, 0
      %v3411 = vsel %vm1263, %v3393, 0
      %v3414 = vsel %vm1263, %v3394, 0
      %v3417 = vsel %vm1312, %v3402, 0
      %3419 = vmatprep.subr.bf16.mxu0 0
      %3420 = vmatpush1.bf16.msra.mxu0 %v3401
      %3421 = vmatprep.subr.bf16.mxu0 0
      %3422 = vmatpush1.bf16.msra.mxu0 %v3417
      %3423 = vmatprep.subr.bf16.mxu0 0
      %3424 = vmatpush1.bf16.msra.mxu0 0
      %3425 = vmatprep.subr.bf16.mxu0 0
      %3426 = vmatpush1.bf16.msra.mxu0 0
      %3427 = vmatprep.subr.bf16.mxu0 0
      %3428 = vmatpush1.bf16.msra.mxu0 0
      %3429 = vmatprep.subr.bf16.mxu0 0
      %3430 = vmatpush1.bf16.msra.mxu0 0
      %3431 = vmatprep.subr.bf16.mxu0 0
      %3432 = vmatpush1.bf16.msra.mxu0 0
      %3433 = vmatprep.subr.bf16.mxu0 0
      %3434 = vmatpush1.bf16.msra.mxu0 0
      %3435 = vmatprep.subr.bf16.mxu0 0
      %3436 = vmatpush1.bf16.msra.mxu0 0
      %3437 = vmatprep.subr.bf16.mxu0 0
      %3438 = vmatpush1.bf16.msra.mxu0 0
      %3439 = vmatprep.subr.bf16.mxu0 0
      %3440 = vmatpush1.bf16.msra.mxu0 0
      %3441 = vmatprep.subr.bf16.mxu0 0
      %3442 = vmatpush1.bf16.msra.mxu0 0
      %3443 = vmatprep.subr.bf16.mxu0 0
      %3444 = vmatpush1.bf16.msra.mxu0 0
      %3445 = vmatprep.subr.bf16.mxu0 0
      %3446 = vmatpush1.bf16.msra.mxu0 0
      %3447 = vmatprep.subr.bf16.mxu0 0
      %3448 = vmatpush1.bf16.msra.mxu0 0
      %3449 = vmatprep.subr.bf16.mxu0 0
      %3450 = vmatpush1.bf16.msra.mxu0 0
      %3451 = vmatprep.mubr.bf16.mxu0 0
      %3452 = vmatmul.mubr.bf16.gmra.mrb[0].mxu0 %v1289
      %v3453 = vpop.f32.mrb[0].mxu0
      %v3454 = vadd.f32 0.0, %v3453
      %v3455 = vpop.f32.mrb[0].mxu0
      %v3456 = vpop.f32.mrb[0].mxu0
      %v3457 = vadd.f32 0.0, %v3456
      %v3458 = vpop.f32.mrb[0].mxu0
      %3459 = vmatprep.mubr.bf16.mxu0 0
      %3460 = vmatmul.mubr.bf16.gmra.mrb[0].mxu0 %v1292
      %v3461 = vpop.f32.mrb[0].mxu0
      %v3462 = vadd.f32 0.0, %v3461
      %v3463 = vpop.f32.mrb[0].mxu0
      %v3464 = vpop.f32.mrb[0].mxu0
      %v3465 = vadd.f32 0.0, %v3464
      %v3466 = vpop.f32.mrb[0].mxu0
      %3467 = vmatprep.mubr.bf16.mxu0 0
      %3468 = vmatmul.mubr.bf16.gmra.mrb[0].mxu0 %v1295
      %v3469 = vpop.f32.mrb[0].mxu0
      %v3470 = vadd.f32 0.0, %v3469
      %v3471 = vpop.f32.mrb[0].mxu0
      %v3472 = vpop.f32.mrb[0].mxu0
      %v3473 = vadd.f32 0.0, %v3472
      %v3474 = vpop.f32.mrb[0].mxu0
      %3475 = vmatprep.mubr.bf16.mxu0 0
      %3476 = vmatmul.mubr.bf16.gmra.mrb[0].mxu0 %v1298
      %v3477 = vpop.f32.mrb[0].mxu0
      %v3478 = vadd.f32 0.0, %v3477
      %v3479 = vpop.f32.mrb[0].mxu0
      %v3480 = vpop.f32.mrb[0].mxu0
      %v3481 = vadd.f32 0.0, %v3480
      %v3482 = vpop.f32.mrb[0].mxu0
      %3483 = vmatprep.mubr.bf16.mxu0 0
      %3484 = vmatmul.mubr.bf16.gmra.mrb[0].mxu0 %v1301
      %v3485 = vpop.f32.mrb[0].mxu0
      %v3486 = vadd.f32 0.0, %v3485
      %v3487 = vpop.f32.mrb[0].mxu0
      %v3488 = vpop.f32.mrb[0].mxu0
      %v3489 = vadd.f32 0.0, %v3488
      %v3490 = vpop.f32.mrb[0].mxu0
      %3491 = vmatprep.mubr.bf16.mxu0 0
      %3492 = vmatmul.mubr.bf16.gmra.mrb[0].mxu0 %v1304
      %v3493 = vpop.f32.mrb[0].mxu0
      %v3494 = vadd.f32 0.0, %v3493
      %v3495 = vpop.f32.mrb[0].mxu0
      %v3496 = vpop.f32.mrb[0].mxu0
      %v3497 = vadd.f32 0.0, %v3496
      %v3498 = vpop.f32.mrb[0].mxu0
      %3499 = vmatprep.mubr.bf16.mxu0 0
      %3500 = vmatmul.mubr.bf16.gmra.mrb[0].mxu0 %v1307
      %v3501 = vpop.f32.mrb[0].mxu0
      %v3502 = vadd.f32 0.0, %v3501
      %v3503 = vpop.f32.mrb[0].mxu0
      %v3504 = vpop.f32.mrb[0].mxu0
      %v3505 = vadd.f32 0.0, %v3504
      %v3506 = vpop.f32.mrb[0].mxu0
      %3507 = vmatprep.mubr.bf16.mxu0 0
      %3508 = vmatmul.mubr.bf16.gmra.mrb[0].mxu0 %v1310
      %v3509 = vpop.f32.mrb[0].mxu0
      %v3510 = vadd.f32 0.0, %v3509
      %v3511 = vpop.f32.mrb[0].mxu0
      %v3512 = vpop.f32.mrb[0].mxu0
      %v3513 = vadd.f32 0.0, %v3512
      %v3514 = vpop.f32.mrb[0].mxu0
      %3515 = vmatprep.mubr.bf16.mxu0 0
      %3516 = vmatmul.mubr.bf16.gmra.mrb[0].mxu0 %v2502
      %v3517 = vpop.f32.mrb[0].mxu0
      %v3518 = vadd.f32 0.0, %v3517
      %v3519 = vpop.f32.mrb[0].mxu0
      %v3520 = vpop.f32.mrb[0].mxu0
      %v3521 = vadd.f32 0.0, %v3520
      %v3522 = vpop.f32.mrb[0].mxu0
      %3523 = vmatprep.mubr.bf16.mxu0 0
      %3524 = vmatmul.mubr.bf16.gmra.mrb[0].mxu0 %v2505
      %v3525 = vpop.f32.mrb[0].mxu0
      %v3526 = vadd.f32 0.0, %v3525
      %v3527 = vpop.f32.mrb[0].mxu0
      %v3528 = vpop.f32.mrb[0].mxu0
      %v3529 = vadd.f32 0.0, %v3528
      %v3530 = vpop.f32.mrb[0].mxu0
      %3531 = vmatprep.mubr.bf16.mxu0 0
      %3532 = vmatmul.mubr.bf16.gmra.mrb[0].mxu0 %v2508
      %v3533 = vpop.f32.mrb[0].mxu0
      %v3534 = vadd.f32 0.0, %v3533
      %v3535 = vpop.f32.mrb[0].mxu0
      %v3536 = vpop.f32.mrb[0].mxu0
      %v3537 = vadd.f32 0.0, %v3536
      %v3538 = vpop.f32.mrb[0].mxu0
      %3539 = vmatprep.mubr.bf16.mxu0 0
      %3540 = vmatmul.mubr.bf16.gmra.mrb[0].mxu0 %v2511
      %v3541 = vpop.f32.mrb[0].mxu0
      %v3542 = vadd.f32 0.0, %v3541
      %v3543 = vpop.f32.mrb[0].mxu0
      %v3544 = vpop.f32.mrb[0].mxu0
      %v3545 = vadd.f32 0.0, %v3544
      %v3546 = vpop.f32.mrb[0].mxu0
      %3547 = vmatprep.mubr.bf16.mxu0 0
      %3548 = vmatmul.mubr.bf16.gmra.mrb[0].mxu0 %v3405
      %v3549 = vpop.f32.mrb[0].mxu0
      %v3550 = vadd.f32 0.0, %v3549
      %v3551 = vpop.f32.mrb[0].mxu0
      %v3552 = vpop.f32.mrb[0].mxu0
      %v3553 = vadd.f32 0.0, %v3552
      %v3554 = vpop.f32.mrb[0].mxu0
      %3555 = vmatprep.mubr.bf16.mxu0 0
      %3556 = vmatmul.mubr.bf16.gmra.mrb[0].mxu0 %v3408
      %v3557 = vpop.f32.mrb[0].mxu0
      %v3558 = vadd.f32 0.0, %v3557
      %v3559 = vpop.f32.mrb[0].mxu0
      %v3560 = vpop.f32.mrb[0].mxu0
      %v3561 = vadd.f32 0.0, %v3560
      %v3562 = vpop.f32.mrb[0].mxu0
      %3563 = vmatprep.mubr.bf16.mxu0 0
      %3564 = vmatmul.mubr.bf16.gmra.mrb[0].mxu0 %v3411
      %v3565 = vpop.f32.mrb[0].mxu0
      %v3566 = vadd.f32 0.0, %v3565
      %v3567 = vpop.f32.mrb[0].mxu0
      %v3568 = vpop.f32.mrb[0].mxu0
      %v3569 = vadd.f32 0.0, %v3568
      %v3570 = vpop.f32.mrb[0].mxu0
      %3571 = vmatprep.mubr.bf16.mxu0 0
      %3572 = vmatmul.mubr.bf16.gmra.mrb[0].mxu0 %v3414
      %v3573 = vpop.f32.mrb[0].mxu0
      %v3574 = vadd.f32 0.0, %v3573
      %v3575 = vpop.f32.mrb[0].mxu0
      %v3576 = vpop.f32.mrb[0].mxu0
      %v3577 = vadd.f32 0.0, %v3576
      %v3578 = vpop.f32.mrb[0].mxu0
      %3579 = vdwg.mxu0
      %v3580 = vadd.f32 %v3331, %v3454
      %v3581 = vadd.f32 %v3332, %v3457
      %v3582 = vadd.f32 %v3333, %v3462
      %v3583 = vadd.f32 %v3334, %v3465
      %v3584 = vadd.f32 %v3335, %v3470
      %v3585 = vadd.f32 %v3336, %v3473
      %v3586 = vadd.f32 %v3337, %v3478
      %v3587 = vadd.f32 %v3338, %v3481
      %v3588 = vadd.f32 %v3339, %v3486
      %v3589 = vadd.f32 %v3340, %v3489
      %v3590 = vadd.f32 %v3341, %v3494
      %v3591 = vadd.f32 %v3342, %v3497
      %v3592 = vadd.f32 %v3343, %v3502
      %v3593 = vadd.f32 %v3344, %v3505
      %v3594 = vadd.f32 %v3345, %v3510
      %v3595 = vadd.f32 %v3346, %v3513
      %v3596 = vadd.f32 %v3347, %v3518
      %v3597 = vadd.f32 %v3348, %v3521
      %v3598 = vadd.f32 %v3349, %v3526
      %v3599 = vadd.f32 %v3350, %v3529
      %v3600 = vadd.f32 %v3351, %v3534
      %v3601 = vadd.f32 %v3352, %v3537
      %v3602 = vadd.f32 %v3353, %v3542
      %v3603 = vadd.f32 %v3354, %v3545
      %v3604 = vadd.f32 %v3355, %v3550
      %v3605 = vadd.f32 %v3356, %v3553
      %v3606 = vadd.f32 %v3357, %v3558
      %v3607 = vadd.f32 %v3358, %v3561
      %v3608 = vadd.f32 %v3359, %v3566
      %v3609 = vadd.f32 %v3360, %v3569
      %v3610 = vadd.f32 %v3361, %v3574
      %v3611 = vadd.f32 %v3362, %v3577
      %v3614 = vunpack.c.l.b16 %v371
      %v3615 = vunpack.c.l.b16 %v372
      %v3616 = vpack.c.b16 %v3615, %v3614
      %v3618 = vshrl.u32 %v3616, 16
      %v3620 = vshll.u32 %v3616, 16
      %v3622 = vrot.slane %v3620, 1
      %v3623 = vor.u32 %v3618, %v3622
      %3624 = vrot.lane.b32.xlu0 %v3623, 8
      %v3625 = vpop.permute.xlu0 %3624
      %v3626 = vrot.slane %v3616, 1
      %3627 = vrot.lane.b32.xlu0 %v3626, 16
      %v3628 = vpop.permute.xlu0 %3627
      %v3631 = vsel %vm917, %v371, %v3625
      %v3633 = vsel %vm1014, %v3631, %v3628
      %s3634 = scalar_lea.vmem %s1, 96
      %v3635 = vld [vmem:[%s3634] sm:$0xf]
      %v3636 = vld [vmem:[%s3634 + $0x4] sm:$0xf]
      %v3637 = vld [vmem:[%s3634 + $0x8] sm:$0xf]
      %v3639 = vunpack.c.l.b16 %v3633
      %v3640 = vpack.c.b16 %v3639, %v3390
      %v3644 = vunpack.c.l.b16 %v3635
      %v3645 = vunpack.c.l.b16 %v3636
      %v3646 = vunpack.c.l.b16 %v3637
      %v3647 = vpack.c.b16 %v3645, %v3644
      %v3648 = vpack.c.b16 %v3646, %v3646
      %v3651 = vsel %vm1263, %v3640, 0
      %v3654 = vsel %vm1312, %v3648, 0
      %3656 = vmatprep.subr.bf16.mxu0 0
      %3657 = vmatpush1.bf16.msra.mxu0 %v3647
      %3658 = vmatprep.subr.bf16.mxu0 0
      %3659 = vmatpush1.bf16.msra.mxu0 %v3654
      %3660 = vmatprep.subr.bf16.mxu0 0
      %3661 = vmatpush1.bf16.msra.mxu0 0
      %3662 = vmatprep.subr.bf16.mxu0 0
      %3663 = vmatpush1.bf16.msra.mxu0 0
      %3664 = vmatprep.subr.bf16.mxu0 0
      %3665 = vmatpush1.bf16.msra.mxu0 0
      %3666 = vmatprep.subr.bf16.mxu0 0
      %3667 = vmatpush1.bf16.msra.mxu0 0
      %3668 = vmatprep.subr.bf16.mxu0 0
      %3669 = vmatpush1.bf16.msra.mxu0 0
      %3670 = vmatprep.subr.bf16.mxu0 0
      %3671 = vmatpush1.bf16.msra.mxu0 0
      %3672 = vmatprep.subr.bf16.mxu0 0
      %3673 = vmatpush1.bf16.msra.mxu0 0
      %3674 = vmatprep.subr.bf16.mxu0 0
      %3675 = vmatpush1.bf16.msra.mxu0 0
      %3676 = vmatprep.subr.bf16.mxu0 0
      %3677 = vmatpush1.bf16.msra.mxu0 0
      %3678 = vmatprep.subr.bf16.mxu0 0
      %3679 = vmatpush1.bf16.msra.mxu0 0
      %3680 = vmatprep.subr.bf16.mxu0 0
      %3681 = vmatpush1.bf16.msra.mxu0 0
      %3682 = vmatprep.subr.bf16.mxu0 0
      %3683 = vmatpush1.bf16.msra.mxu0 0
      %3684 = vmatprep.subr.bf16.mxu0 0
      %3685 = vmatpush1.bf16.msra.mxu0 0
      %3686 = vmatprep.subr.bf16.mxu0 0
      %3687 = vmatpush1.bf16.msra.mxu0 0
      %3688 = vmatprep.mubr.bf16.mxu0 0
      %3689 = vmatmul.mubr.bf16.gmra.mrb[0].mxu0 %v1538
      %v3690 = vpop.f32.mrb[0].mxu0
      %v3691 = vadd.f32 0.0, %v3690
      %v3692 = vpop.f32.mrb[0].mxu0
      %v3693 = vpop.f32.mrb[0].mxu0
      %v3694 = vadd.f32 0.0, %v3693
      %v3695 = vpop.f32.mrb[0].mxu0
      %3696 = vmatprep.mubr.bf16.mxu0 0
      %3697 = vmatmul.mubr.bf16.gmra.mrb[0].mxu0 %v1541
      %v3698 = vpop.f32.mrb[0].mxu0
      %v3699 = vadd.f32 0.0, %v3698
      %v3700 = vpop.f32.mrb[0].mxu0
      %v3701 = vpop.f32.mrb[0].mxu0
      %v3702 = vadd.f32 0.0, %v3701
      %v3703 = vpop.f32.mrb[0].mxu0
      %3704 = vmatprep.mubr.bf16.mxu0 0
      %3705 = vmatmul.mubr.bf16.gmra.mrb[0].mxu0 %v1544
      %v3706 = vpop.f32.mrb[0].mxu0
      %v3707 = vadd.f32 0.0, %v3706
      %v3708 = vpop.f32.mrb[0].mxu0
      %v3709 = vpop.f32.mrb[0].mxu0
      %v3710 = vadd.f32 0.0, %v3709
      %v3711 = vpop.f32.mrb[0].mxu0
      %3712 = vmatprep.mubr.bf16.mxu0 0
      %3713 = vmatmul.mubr.bf16.gmra.mrb[0].mxu0 %v1842
      %v3714 = vpop.f32.mrb[0].mxu0
      %v3715 = vadd.f32 0.0, %v3714
      %v3716 = vpop.f32.mrb[0].mxu0
      %v3717 = vpop.f32.mrb[0].mxu0
      %v3718 = vadd.f32 0.0, %v3717
      %v3719 = vpop.f32.mrb[0].mxu0
      %3720 = vmatprep.mubr.bf16.mxu0 0
      %3721 = vmatmul.mubr.bf16.gmra.mrb[0].mxu0 %v1550
      %v3722 = vpop.f32.mrb[0].mxu0
      %v3723 = vadd.f32 0.0, %v3722
      %v3724 = vpop.f32.mrb[0].mxu0
      %v3725 = vpop.f32.mrb[0].mxu0
      %v3726 = vadd.f32 0.0, %v3725
      %v3727 = vpop.f32.mrb[0].mxu0
      %3728 = vmatprep.mubr.bf16.mxu0 0
      %3729 = vmatmul.mubr.bf16.gmra.mrb[0].mxu0 %v1553
      %v3730 = vpop.f32.mrb[0].mxu0
      %v3731 = vadd.f32 0.0, %v3730
      %v3732 = vpop.f32.mrb[0].mxu0
      %v3733 = vpop.f32.mrb[0].mxu0
      %v3734 = vadd.f32 0.0, %v3733
      %v3735 = vpop.f32.mrb[0].mxu0
      %3736 = vmatprep.mubr.bf16.mxu0 0
      %3737 = vmatmul.mubr.bf16.gmra.mrb[0].mxu0 %v1556
      %v3738 = vpop.f32.mrb[0].mxu0
      %v3739 = vadd.f32 0.0, %v3738
      %v3740 = vpop.f32.mrb[0].mxu0
      %v3741 = vpop.f32.mrb[0].mxu0
      %v3742 = vadd.f32 0.0, %v3741
      %v3743 = vpop.f32.mrb[0].mxu0
      %3744 = vmatprep.mubr.bf16.mxu0 0
      %3745 = vmatmul.mubr.bf16.gmra.mrb[0].mxu0 %v1845
      %v3746 = vpop.f32.mrb[0].mxu0
      %v3747 = vadd.f32 0.0, %v3746
      %v3748 = vpop.f32.mrb[0].mxu0
      %v3749 = vpop.f32.mrb[0].mxu0
      %v3750 = vadd.f32 0.0, %v3749
      %v3751 = vpop.f32.mrb[0].mxu0
      %3752 = vmatprep.mubr.bf16.mxu0 0
      %3753 = vmatmul.mubr.bf16.gmra.mrb[0].mxu0 %v2256
      %v3754 = vpop.f32.mrb[0].mxu0
      %v3755 = vadd.f32 0.0, %v3754
      %v3756 = vpop.f32.mrb[0].mxu0
      %v3757 = vpop.f32.mrb[0].mxu0
      %v3758 = vadd.f32 0.0, %v3757
      %v3759 = vpop.f32.mrb[0].mxu0
      %3760 = vmatprep.mubr.bf16.mxu0 0
      %3761 = vmatmul.mubr.bf16.gmra.mrb[0].mxu0 %v2259
      %v3762 = vpop.f32.mrb[0].mxu0
      %v3763 = vadd.f32 0.0, %v3762
      %v3764 = vpop.f32.mrb[0].mxu0
      %v3765 = vpop.f32.mrb[0].mxu0
      %v3766 = vadd.f32 0.0, %v3765
      %v3767 = vpop.f32.mrb[0].mxu0
      %3768 = vmatprep.mubr.bf16.mxu0 0
      %3769 = vmatmul.mubr.bf16.gmra.mrb[0].mxu0 %v2262
      %v3770 = vpop.f32.mrb[0].mxu0
      %v3771 = vadd.f32 0.0, %v3770
      %v3772 = vpop.f32.mrb[0].mxu0
      %v3773 = vpop.f32.mrb[0].mxu0
      %v3774 = vadd.f32 0.0, %v3773
      %v3775 = vpop.f32.mrb[0].mxu0
      %3776 = vmatprep.mubr.bf16.mxu0 0
      %3777 = vmatmul.mubr.bf16.gmra.mrb[0].mxu0 %v2748
      %v3778 = vpop.f32.mrb[0].mxu0
      %v3779 = vadd.f32 0.0, %v3778
      %v3780 = vpop.f32.mrb[0].mxu0
      %v3781 = vpop.f32.mrb[0].mxu0
      %v3782 = vadd.f32 0.0, %v3781
      %v3783 = vpop.f32.mrb[0].mxu0
      %3784 = vmatprep.mubr.bf16.mxu0 0
      %3785 = vmatmul.mubr.bf16.gmra.mrb[0].mxu0 %v3159
      %v3786 = vpop.f32.mrb[0].mxu0
      %v3787 = vadd.f32 0.0, %v3786
      %v3788 = vpop.f32.mrb[0].mxu0
      %v3789 = vpop.f32.mrb[0].mxu0
      %v3790 = vadd.f32 0.0, %v3789
      %v3791 = vpop.f32.mrb[0].mxu0
      %3792 = vmatprep.mubr.bf16.mxu0 0
      %3793 = vmatmul.mubr.bf16.gmra.mrb[0].mxu0 %v3162
      %v3794 = vpop.f32.mrb[0].mxu0
      %v3795 = vadd.f32 0.0, %v3794
      %v3796 = vpop.f32.mrb[0].mxu0
      %v3797 = vpop.f32.mrb[0].mxu0
      %v3798 = vadd.f32 0.0, %v3797
      %v3799 = vpop.f32.mrb[0].mxu0
      %3800 = vmatprep.mubr.bf16.mxu0 0
      %3801 = vmatmul.mubr.bf16.gmra.mrb[0].mxu0 %v3165
      %v3802 = vpop.f32.mrb[0].mxu0
      %v3803 = vadd.f32 0.0, %v3802
      %v3804 = vpop.f32.mrb[0].mxu0
      %v3805 = vpop.f32.mrb[0].mxu0
      %v3806 = vadd.f32 0.0, %v3805
      %v3807 = vpop.f32.mrb[0].mxu0
      %3808 = vmatprep.mubr.bf16.mxu0 0
      %3809 = vmatmul.mubr.bf16.gmra.mrb[0].mxu0 %v3651
      %v3810 = vpop.f32.mrb[0].mxu0
      %v3811 = vadd.f32 0.0, %v3810
      %v3812 = vpop.f32.mrb[0].mxu0
      %v3813 = vpop.f32.mrb[0].mxu0
      %v3814 = vadd.f32 0.0, %v3813
      %v3815 = vpop.f32.mrb[0].mxu0
      %3816 = vdwg.mxu0
      %v3817 = vadd.f32 %v3580, %v3691
      %v3818 = vadd.f32 %v3581, %v3694
      %v3819 = vadd.f32 %v3582, %v3699
      %v3820 = vadd.f32 %v3583, %v3702
      %v3821 = vadd.f32 %v3584, %v3707
      %v3822 = vadd.f32 %v3585, %v3710
      %v3823 = vadd.f32 %v3586, %v3715
      %v3824 = vadd.f32 %v3587, %v3718
      %v3825 = vadd.f32 %v3588, %v3723
      %v3826 = vadd.f32 %v3589, %v3726
      %v3827 = vadd.f32 %v3590, %v3731
      %v3828 = vadd.f32 %v3591, %v3734
      %v3829 = vadd.f32 %v3592, %v3739
      %v3830 = vadd.f32 %v3593, %v3742
      %v3831 = vadd.f32 %v3594, %v3747
      %v3832 = vadd.f32 %v3595, %v3750
      %v3833 = vadd.f32 %v3596, %v3755
      %v3834 = vadd.f32 %v3597, %v3758
      %v3835 = vadd.f32 %v3598, %v3763
      %v3836 = vadd.f32 %v3599, %v3766
      %v3837 = vadd.f32 %v3600, %v3771
      %v3838 = vadd.f32 %v3601, %v3774
      %v3839 = vadd.f32 %v3602, %v3779
      %v3840 = vadd.f32 %v3603, %v3782
      %v3841 = vadd.f32 %v3604, %v3787
      %v3842 = vadd.f32 %v3605, %v3790
      %v3843 = vadd.f32 %v3606, %v3795
      %v3844 = vadd.f32 %v3607, %v3798
      %v3845 = vadd.f32 %v3608, %v3803
      %v3846 = vadd.f32 %v3609, %v3806
      %v3847 = vadd.f32 %v3610, %v3811
      %v3848 = vadd.f32 %v3611, %v3814
      %v3849 = vld [vmem:[%s2] sm:$0x1]
      %v3851 = vlaneseq
      %v3852 = vshrl.u32 %v3851, 7
      %v3853 = vsub.s32 0, %v3852
      %v3854 = vrot.slane %v3849, %v3853
      %v3856 = vadd.f32 %v3817, %v3854
      %v3857 = vadd.f32 %v3818, %v3854
      %v3858 = vadd.f32 %v3819, %v3854
      %v3859 = vadd.f32 %v3820, %v3854
      %v3860 = vadd.f32 %v3821, %v3854
      %v3861 = vadd.f32 %v3822, %v3854
      %v3862 = vadd.f32 %v3823, %v3854
      %v3863 = vadd.f32 %v3824, %v3854
      %v3864 = vadd.f32 %v3825, %v3854
      %v3865 = vadd.f32 %v3826, %v3854
      %v3866 = vadd.f32 %v3827, %v3854
      %v3867 = vadd.f32 %v3828, %v3854
      %v3868 = vadd.f32 %v3829, %v3854
      %v3869 = vadd.f32 %v3830, %v3854
      %v3870 = vadd.f32 %v3831, %v3854
      %v3871 = vadd.f32 %v3832, %v3854
      %v3872 = vadd.f32 %v3833, %v3854
      %v3873 = vadd.f32 %v3834, %v3854
      %v3874 = vadd.f32 %v3835, %v3854
      %v3875 = vadd.f32 %v3836, %v3854
      %v3876 = vadd.f32 %v3837, %v3854
      %v3877 = vadd.f32 %v3838, %v3854
      %v3878 = vadd.f32 %v3839, %v3854
      %v3879 = vadd.f32 %v3840, %v3854
      %v3880 = vadd.f32 %v3841, %v3854
      %v3881 = vadd.f32 %v3842, %v3854
      %v3882 = vadd.f32 %v3843, %v3854
      %v3883 = vadd.f32 %v3844, %v3854
      %v3884 = vadd.f32 %v3845, %v3854
      %v3885 = vadd.f32 %v3846, %v3854
      %v3886 = vadd.f32 %v3847, %v3854
      %v3887 = vadd.f32 %v3848, %v3854
      %v3888 = vmax.f32 %v3856, 0.0
      %v3889 = vmax.f32 %v3857, 0.0
      %v3890 = vmax.f32 %v3858, 0.0
      %v3891 = vmax.f32 %v3859, 0.0
      %v3892 = vmax.f32 %v3860, 0.0
      %v3893 = vmax.f32 %v3861, 0.0
      %v3894 = vmax.f32 %v3862, 0.0
      %v3895 = vmax.f32 %v3863, 0.0
      %v3896 = vmax.f32 %v3864, 0.0
      %v3897 = vmax.f32 %v3865, 0.0
      %v3898 = vmax.f32 %v3866, 0.0
      %v3899 = vmax.f32 %v3867, 0.0
      %v3900 = vmax.f32 %v3868, 0.0
      %v3901 = vmax.f32 %v3869, 0.0
      %v3902 = vmax.f32 %v3870, 0.0
      %v3903 = vmax.f32 %v3871, 0.0
      %v3904 = vmax.f32 %v3872, 0.0
      %v3905 = vmax.f32 %v3873, 0.0
      %v3906 = vmax.f32 %v3874, 0.0
      %v3907 = vmax.f32 %v3875, 0.0
      %v3908 = vmax.f32 %v3876, 0.0
      %v3909 = vmax.f32 %v3877, 0.0
      %v3910 = vmax.f32 %v3878, 0.0
      %v3911 = vmax.f32 %v3879, 0.0
      %v3912 = vmax.f32 %v3880, 0.0
      %v3913 = vmax.f32 %v3881, 0.0
      %v3914 = vmax.f32 %v3882, 0.0
      %v3915 = vmax.f32 %v3883, 0.0
      %v3916 = vmax.f32 %v3884, 0.0
      %v3917 = vmax.f32 %v3885, 0.0
      %v3918 = vmax.f32 %v3886, 0.0
      %v3919 = vmax.f32 %v3887, 0.0
      %v3920 = vpack.c.bf16 %v3889, %v3888
      %v3921 = vpack.c.bf16 %v3891, %v3890
      %v3922 = vpack.c.bf16 %v3893, %v3892
      %v3923 = vpack.c.bf16 %v3895, %v3894
      %v3924 = vpack.c.bf16 %v3897, %v3896
      %v3925 = vpack.c.bf16 %v3899, %v3898
      %v3926 = vpack.c.bf16 %v3901, %v3900
      %v3927 = vpack.c.bf16 %v3903, %v3902
      %v3928 = vpack.c.bf16 %v3905, %v3904
      %v3929 = vpack.c.bf16 %v3907, %v3906
      %v3930 = vpack.c.bf16 %v3909, %v3908
      %v3931 = vpack.c.bf16 %v3911, %v3910
      %v3932 = vpack.c.bf16 %v3913, %v3912
      %v3933 = vpack.c.bf16 %v3915, %v3914
      %v3934 = vpack.c.bf16 %v3917, %v3916
      %v3935 = vpack.c.bf16 %v3919, %v3918
      %v3936 = vld [vmem:[%s3] sm:$0x3]
      %v3937 = vld [vmem:[%s4] sm:$0xf]
      %3939 = vset.pattern.permute.xlu0 0
      %3940 = vperm.xlu0 %3939, %v3937
      %v3941 = vpop.permute.xlu0 %3940
      %vm3943 = vcmask 31744
      %v3945 = vsel %vm3943, %v3936, 0
      %v3948 = vsel %vm3943, %v3920, 0
      %v3951 = vsel %vm3943, %v3921, 0
      %v3954 = vsel %vm3943, %v3922, 0
      %v3957 = vsel %vm3943, %v3923, 0
      %v3960 = vsel %vm3943, %v3924, 0
      %v3963 = vsel %vm3943, %v3925, 0
      %v3966 = vsel %vm3943, %v3926, 0
      %v3969 = vsel %vm3943, %v3927, 0
      %v3972 = vsel %vm3943, %v3928, 0
      %v3975 = vsel %vm3943, %v3929, 0
      %v3978 = vsel %vm3943, %v3930, 0
      %v3981 = vsel %vm3943, %v3931, 0
      %v3984 = vsel %vm3943, %v3932, 0
      %v3987 = vsel %vm3943, %v3933, 0
      %v3990 = vsel %vm3943, %v3934, 0
      %v3993 = vsel %vm3943, %v3935, 0
      %3995 = vmatprep.subr.bf16.mxu0 0
      %3996 = vmatpush1.bf16.xpose.msra.mxu0 %v3948
      %3997 = vmatprep.subr.bf16.mxu0 0
      %3998 = vmatpush1.bf16.xpose.msra.mxu0 %v3951
      %3999 = vmatprep.subr.bf16.mxu0 0
      %4000 = vmatpush1.bf16.xpose.msra.mxu0 %v3954
      %4001 = vmatprep.subr.bf16.mxu0 0
      %4002 = vmatpush1.bf16.xpose.msra.mxu0 %v3957
      %4003 = vmatprep.subr.bf16.mxu0 0
      %4004 = vmatpush1.bf16.xpose.msra.mxu0 %v3960
      %4005 = vmatprep.subr.bf16.mxu0 0
      %4006 = vmatpush1.bf16.xpose.msra.mxu0 %v3963
      %4007 = vmatprep.subr.bf16.mxu0 0
      %4008 = vmatpush1.bf16.xpose.msra.mxu0 %v3966
      %4009 = vmatprep.subr.bf16.mxu0 0
      %4010 = vmatpush1.bf16.xpose.msra.mxu0 %v3969
      %4011 = vmatprep.subr.bf16.mxu0 0
      %4012 = vmatpush1.bf16.xpose.msra.mxu0 %v3972
      %4013 = vmatprep.subr.bf16.mxu0 0
      %4014 = vmatpush1.bf16.xpose.msra.mxu0 %v3975
      %4015 = vmatprep.subr.bf16.mxu0 0
      %4016 = vmatpush1.bf16.xpose.msra.mxu0 %v3978
      %4017 = vmatprep.subr.bf16.mxu0 0
      %4018 = vmatpush1.bf16.xpose.msra.mxu0 %v3981
      %4019 = vmatprep.subr.bf16.mxu0 0
      %4020 = vmatpush1.bf16.xpose.msra.mxu0 %v3984
      %4021 = vmatprep.subr.bf16.mxu0 0
      %4022 = vmatpush1.bf16.xpose.msra.mxu0 %v3987
      %4023 = vmatprep.subr.bf16.mxu0 0
      %4024 = vmatpush1.bf16.xpose.msra.mxu0 %v3990
      %4025 = vmatprep.subr.bf16.mxu0 0
      %4026 = vmatpush1.bf16.xpose.msra.mxu0 %v3993
      %4027 = vmatprep.mubr.bf16.mxu0 0
      %4028 = vmatmul.mubr.bf16.gmra.mrb[0].mxu0 %v3945
      %v4029 = vpop.f32.mrb[0].mxu0
      %v4030 = vadd.f32 %v3941, %v4029
      %v4031 = vpop.f32.mrb[0].mxu0
      %v4032 = vadd.f32 %v3941, %v4031
      %v4033 = vpop.f32.mrb[0].mxu0
      %v4034 = vpop.f32.mrb[0].mxu0
      %4035 = vdwg.mxu0
      %v4038 = vcombine.low %v4030, %v4032
      %4040 = vst [vmem:[%s246] sm:$0xff] %v4038
      %s4041 = smul.u32 2, %s21
      %p4042 = scmp.lt.s32.totalorder %s20, 1
      %s4043 = scalar_select %p4042, %s20, 1
      %p4044 = scmp.lt.s32.totalorder %s4041, 1
      %s4045 = scalar_select %p4044, %s4041, 1
      %s4046 = smul.addr %s4043, 2
      %s4047 = sadd.s32 %s4045, %s4046
      %s4048 = smul.addr %s4047, 4
      %s4049 = scalar_lea.vmem %s5, %s4048
      // Predicated region
      $region41: #{basic_adapter_forward.3} parent=39 // pred_check
        %p4050 = pneg %p158
      $region42: #{basic_adapter_forward.3} parent=39 // pred_check_branch
        %4052 = sbr.rel (%p4050) target = $region44
      $region43: #{basic_adapter_forward.3} parent=39 // pred_region
        %s4053 = smul.u32 2, %s21
      $region44: #{basic_adapter_forward.3} parent=39 // pred_fallthru
        _
    $region40: #{basic_adapter_forward.3} parent=5 // pred_fallthru
      _
    %p4054 = scmp.le.s32.totalorder 2, %s11
    // Predicated region
    $region45: #{basic_adapter_forward.3} parent=5 // pred_check
      %p4055 = pneg %p4054
    $region46: #{basic_adapter_forward.3} parent=5 // pred_check_branch
      %4057 = sbr.rel (%p4055) target = $region48
    $region47: #{basic_adapter_forward.3} parent=5 // pred_region
      %s4058 = ssub.s32 %s11, 2
      // Predicated region
      $region49: #{basic_adapter_forward.3} parent=47 // pred_check
        %p4059 = pneg %p164
      $region50: #{basic_adapter_forward.3} parent=47 // pred_check_branch
        %4061 = sbr.rel (%p4059) target = $region52
      $region51: #{basic_adapter_forward.3} parent=47 // pred_region
        %s4062 = smul.u32 2, %s23
        %p4063 = scmp.lt.s32.totalorder %s22, 1
        %s4064 = scalar_select %p4063, %s22, 1
        %p4065 = scmp.lt.s32.totalorder %s4062, 1
        %s4066 = scalar_select %p4065, %s4062, 1
        %s4067 = smul.addr %s4064, 2
        %s4068 = sadd.s32 %s4066, %s4067
        %s4069 = smul.addr %s4068, 4
        %s4070 = scalar_lea.vmem %s5, %s4069
      $region52: #{basic_adapter_forward.3} parent=47 // pred_fallthru
        _
    $region48: #{basic_adapter_forward.3} parent=5 // pred_fallthru
      _
  $region6: #{basic_adapter_forward.3} parent=0 // loop_footer
    %s15 = sadd.s32 1, %s11
  $region7: #{basic_adapter_forward.3} parent=0 // loop_footer_branch
    %10 = sbr.rel target = $region3
  $region8: #{basic_adapter_forward.3} parent=0 // loop_exit
    _

</llo_original>
